<compile_context>
chip_gen: v7x
topology: tpu7x:2x2x1
jax: 0.10.0
libtpu: 0.0.40
codegen_flags: <defaults>
</compile_context>

<pallas_src>
import functools

import jax
import jax.numpy as jnp
from jax.experimental import pallas as pl
from jax.experimental.pallas import tpu as pltpu


C1, C2, C3 = 32, 64, 128          # Audio_Block output channels (fixed by the module)


# --------------------------------------------------------------------------
# In-kernel helpers (all shapes static; arguments are values, not Refs).
# --------------------------------------------------------------------------
def _shift_w(v, d):
    """out[:, w] = v[:, w + d], zero padded.  Leading-axis concat only."""
    if d == 0:
        return v
    nb, W, H, C = v.shape
    z = jnp.zeros((nb, abs(d), H, C), v.dtype)
    if d > 0:
        return jnp.concatenate([v[:, d:], z], axis=1)
    return jnp.concatenate([z, v[:, :d]], axis=1)


def _shift_h(v, d):
    """out[:, :, h] = v[:, :, h + d], zero padded (Conv2d zero padding over H)."""
    if d == 0:
        return v
    nb, W, H, C = v.shape
    z = jnp.zeros((nb, W, abs(d), C), v.dtype)
    if d > 0:
        return jnp.concatenate([v[:, :, d:], z], axis=2)
    return jnp.concatenate([z, v[:, :, :d]], axis=2)


def _dot(cols, w):
    """im2col matmul: bf16 operands, f32 accumulation on the MXU."""
    nb, W, H, K = cols.shape
    y = jnp.dot(cols.reshape(nb * W * H, K), w, preferred_element_type=jnp.float32)
    return y.reshape(nb, W, H, w.shape[1])


def _run_block(cols, w_ref, km, km_pad, cout):
    """One Audio_Block given its stage-1 im2col `cols` (bf16, K=km lanes) and the
    packed weight ref [wm(padded to km_pad rows) ; blockdiag(t3,t5) ; [wl|0]]."""
    wm = w_ref[0:km, :]
    wt = w_ref[km_pad:km_pad + 8 * cout, :]
    wl = w_ref[km_pad + 8 * cout:km_pad + 9 * cout, :]

    # Stage 1: m_3 (3,1) and m_5 (5,1) convs merged in one matmul (cols order
    # d = -2..2; 3-tap weights zero-padded to 5 taps inside wm).
    y = jnp.maximum(_dot(cols, wm), 0.0)                 # (nb, W, H, 2*cout) f32
    yb = y.astype(jnp.bfloat16)                          # cast BEFORE replication
    x3, x5 = yb[..., :cout], yb[..., cout:]

    # Stage 2: t_3 (1,3) and t_5 (1,5) convs over W, merged via block-diag weight.
    c = jnp.concatenate(
        [_shift_w(x3, -1), x3, _shift_w(x3, 1),
         _shift_w(x5, -2), _shift_w(x5, -1), x5, _shift_w(x5, 1), _shift_w(x5, 2)],
        axis=-1)                                         # (nb, W, H, 8*cout) bf16
    z = jnp.maximum(_dot(c, wt), 0.0)                    # (nb, W, H, 2*cout) f32

    # 1x1 conv on the branch sum (wl packed as [wl | 0]; drop the zero half).
    s = (z[..., :cout] + z[..., cout:]).astype(jnp.bfloat16)
    out = jnp.maximum(_dot(s, wl), 0.0)
    return out[..., :cout]                               # (nb, W, H, cout) f32


def _conv_block(x_f32, w_ref, cin, cout):
    """Audio_Block for cin>1: build the stage-1 H-tap im2col in bf16 in-kernel."""
    xb = x_f32.astype(jnp.bfloat16)                      # cast BEFORE replication
    cols = jnp.concatenate([_shift_h(xb, d) for d in (-2, -1, 0, 1, 2)], axis=-1)
    km = 5 * cin
    return _run_block(cols, w_ref, km=km, km_pad=km, cout=cout)


def _maxpool_w(y):
    """MaxPool over time: kernel 3, stride 2, pad 1.  Requires even W and
    nonnegative y (post-ReLU), so zero padding == -inf padding."""
    nb, W, H, C = y.shape
    m = jnp.maximum(jnp.maximum(_shift_w(y, -1), y), _shift_w(y, 1))
    return m.reshape(nb, W // 2, 2, H, C)[:, :, 0]       # keep even time steps


def _audio_encoder_kernel(x_ref, w1_ref, w2_ref, w3_ref, o_ref):
    # Block 1 stage-1 im2col was built in the wrapper: (NB, W, H, 8) bf16,
    # lanes 0..4 = H-taps d=-2..2 of the single input channel, lanes 5..7 zero.
    # TODO(synk): on v5e this K=8 dot could be 5 broadcast VPU FMAs instead.
    cols1 = x_ref[...]
    x = _run_block(cols1, w1_ref, km=8, km_pad=16, cout=C1)
    x = _maxpool_w(x)
    x = _conv_block(x, w2_ref, cin=C1, cout=C2)
    x = _maxpool_w(x)
    x = _conv_block(x, w3_ref, cin=C2, cout=C3)
    o_ref[...] = jnp.mean(x, axis=2)                     # mean over mel bins (torch dim=2)


# --------------------------------------------------------------------------
# Parameter init: kaiming-normal conv weights (layout w[k, ci, co] ==
# conv.weight[co, ci, k(, 0)]), BN folded in, then packed into ONE bf16 array
# per block with 16-row-aligned segments: [wm ; blockdiag(t3,t5) ; [wl|0]].
# --------------------------------------------------------------------------
def init_block_params(key, cin, cout, eps=1e-3):
    ks = jax.random.split(key, 5)

    def kaiming(k, shape, fan_in):                       # torch.nn.init.kaiming_normal_
        return jax.random.normal(k, shape, jnp.float32) * jnp.sqrt(2.0 / fan_in)

    w3 = kaiming(ks[0], (3, cin, cout), 3 * cin)
    w5 = kaiming(ks[1], (5, cin, cout), 5 * cin)
    t3 = kaiming(ks[2], (3, cout, cout), 3 * cout)
    t5 = kaiming(ks[3], (5, cout, cout), 5 * cout)
    wl = kaiming(ks[4], (cout, cout), cout)

    # Fold inference BatchNorm (gamma=1, beta=0, mean=0, var=1, eps) into the
    # conv weights: scale = 1/sqrt(1+eps), bias = 0.
    # TODO(synk): re-fold from real running stats (and add a bias term) when
    # loading trained checkpoints.
    scale = 1.0 / jnp.sqrt(1.0 + eps)
    raw = {k: (v * scale).astype(jnp.bfloat16)
           for k, v in dict(w3=w3, w5=w5, t3=t3, t5=t5, wl=wl).items()}

    km = 5 * cin
    km_pad = ((km + 15) // 16) * 16                      # 16 / 160 / 320 — bf16-tile aligned
    # Stage 1: [w3 zero-padded to 5 taps | w5], rows = tap-major (d = -2..2).
    w3p = jnp.pad(raw["w3"], ((1, 1), (0, 0), (0, 0)))
    wm = jnp.concatenate([w3p, raw["w5"]], axis=2).reshape(km, 2 * cout)
    wm = jnp.pad(wm, ((0, km_pad - km), (0, 0)))
    # Stage 2: block-diagonal [[t3, 0], [0, t5]], rows tap-major per branch.
    t3m = raw["t3"].reshape(3 * cout, cout)
    t5m = raw["t5"].reshape(5 * cout, cout)
    wt = jnp.concatenate(
        [jnp.concatenate([t3m, jnp.zeros_like(t3m)], axis=1),
         jnp.concatenate([jnp.zeros_like(t5m), t5m], axis=1)], axis=0)
    # 1x1 conv: [wl | 0] (zero half of the output is discarded in-kernel).
    wlp = jnp.concatenate([raw["wl"], jnp.zeros_like(raw["wl"])], axis=1)

    packed = jnp.concatenate([wm, wt, wlp], axis=0).astype(jnp.bfloat16)
    return dict(raw=raw, packed=packed)


def init_params(key):
    k1, k2, k3 = jax.random.split(key, 3)
    return dict(block1=init_block_params(k1, 1, C1),
                block2=init_block_params(k2, C1, C2),
                block3=init_block_params(k3, C2, C3))


# --------------------------------------------------------------------------
# Single fused pallas_call (grid over batch blocks).
# --------------------------------------------------------------------------
@functools.partial(jax.jit, static_argnames=("batch_block",))
def audio_encoder_forward(x_nchw, params, batch_block=4):
    """x_nchw: (N, 1, H, W) float32 (PyTorch NCHW) -> (N, W//4, 128)."""
    N, Cin, H, W = x_nchw.shape
    assert Cin == 1, "audio_encoder expects a single input channel"
    assert W % 4 == 0, "time axis must be divisible by 4 (two stride-2 pools)"
    assert H % 8 == 0, "mel axis must be a multiple of 8 (sublane tiling)"
    # TODO(synk): ragged/odd time lengths and W-tiling with halos for long audio.

    nb = max(1, min(batch_block, N))
    while N % nb:                                        # largest divisor of N <= batch_block
        nb -= 1

    # Block-1 stage-1 im2col on the host side: NCHW -> (N, W, H) time-major,
    # then 5 H-taps (d=-2..2) into lanes 0..4, lanes 5..7 zero, bf16.
    x_wh = jnp.transpose(x_nchw[:, 0], (0, 2, 1)).astype(jnp.float32)   # (N, W, H)

    def tap(a, d):
        if d == 0:
            return a
        z = jnp.zeros(a.shape[:-1] + (abs(d),), a.dtype)
        if d > 0:
            return jnp.concatenate([a[..., d:], z], axis=-1)
        return jnp.concatenate([z, a[..., :d]], axis=-1)

    taps = [tap(x_wh, d) for d in (-2, -1, 0, 1, 2)] + [jnp.zeros_like(x_wh)] * 3
    x_cols = jnp.stack(taps, axis=-1).astype(jnp.bfloat16)              # (N, W, H, 8)

    w1 = params["block1"]["packed"]      # (304, 64)
    w2 = params["block2"]["packed"]      # (736, 128)
    w3 = params["block3"]["packed"]      # (1472, 256)
    w_out, c_out = W // 4, C3

    def full_spec(a):                                    # whole (small) weight array
        idx = (0,) * a.ndim
        return pl.BlockSpec(a.shape, lambda n, _idx=idx: _idx)

    return pl.pallas_call(
        _audio_encoder_kernel,
        out_shape=jax.ShapeDtypeStruct((N, w_out, c_out), jnp.float32),
        grid=(N // nb,),
        in_specs=[pl.BlockSpec((nb, W, H, 8), lambda n: (n, 0, 0, 0)),
                  full_spec(w1), full_spec(w2), full_spec(w3)],
        out_specs=pl.BlockSpec((nb, w_out, c_out), lambda n: (n, 0, 0)),
        compiler_params=pltpu.CompilerParams(
            dimension_semantics=("parallel",),           # batch blocks across v7x TCs
            vmem_limit_bytes=32 * 1024 * 1024),
    )(x_cols, w1, w2, w3)


# --------------------------------------------------------------------------
# Pure-JAX/XLA reference (lax convs) with matching bf16-matmul numerics.
# --------------------------------------------------------------------------
@jax.jit
def reference_forward(x_nchw, params):
    def conv(x, rhs, pad):
        return jax.lax.conv_general_dilated(
            x.astype(jnp.bfloat16), rhs, window_strides=(1, 1), padding=pad,
            dimension_numbers=("NCHW", "HWIO", "NCHW"),
            preferred_element_type=jnp.float32)

    def block(x, r):
        x3 = jnp.maximum(conv(x, r["w3"][:, None], ((1, 1), (0, 0))), 0.0)
        x3 = jnp.maximum(conv(x3, r["t3"][None], ((0, 0), (1, 1))), 0.0)
        x5 = jnp.maximum(conv(x, r["w5"][:, None], ((2, 2), (0, 0))), 0.0)
        x5 = jnp.maximum(conv(x5, r["t5"][None], ((0, 0), (2, 2))), 0.0)
        return jnp.maximum(conv(x3 + x5, r["wl"][None, None], ((0, 0), (0, 0))), 0.0)

    def pool(x):
        return jax.lax.reduce_window(x, -jnp.inf, jax.lax.max,
                                     (1, 1, 1, 3), (1, 1, 1, 2),
                                     ((0, 0), (0, 0), (0, 0), (1, 1)))

    x = x_nchw.astype(jnp.float32)
    x = pool(block(x, params["block1"]["raw"]))
    x = pool(block(x, params["block2"]["raw"]))
    x = block(x, params["block3"]["raw"])
    return jnp.transpose(jnp.mean(x, axis=2), (0, 2, 1))


if __name__ == "__main__":
    key = jax.random.PRNGKey(0)
    kx, kp = jax.random.split(key)

    N, Cin, H, W = 2, 1, 16, 32          # small MFCC-like input (N, C, mel, time)
    x = jax.random.normal(kx, (N, Cin, H, W), jnp.float32)
    params = init_params(kp)

    out = jax.block_until_ready(audio_encoder_forward(x, params))
    ref = jax.block_until_ready(reference_forward(x, params))

    assert out.shape == (N, W // 4, C3), out.shape
    assert bool(jnp.all(jnp.isfinite(out)))
    err = float(jnp.max(jnp.abs(out - ref)) / (jnp.max(jnp.abs(ref)) + 1e-6))
    assert err < 1e-2, f"kernel/reference mismatch: normalized max err {err:.2e}"
    print("KERNEL_OK")
</pallas_src>

<mosaic_0001>
module attributes {stable_mosaic.version = 11 : i64} {
  func.func @_audio_encoder_kernel(%arg0: i32, %arg1: memref<2x32x16x8xbf16, #tpu.memory_space<vmem>>, %arg2: memref<304x64xbf16, #tpu.memory_space<vmem>>, %arg3: memref<736x128xbf16, #tpu.memory_space<vmem>>, %arg4: memref<1472x256xbf16, #tpu.memory_space<vmem>>, %arg5: memref<2x8x128xf32, #tpu.memory_space<vmem>>) attributes {dimension_semantics = [#tpu.dimension_semantics<parallel>], iteration_bounds = array<i64: 1>, scalar_prefetch = 0 : i64, scratch_operands = 0 : i64, tpu.core_type = #tpu.core_type<tc>, window_params = [{transform_indices = @transform_0, window_bounds = array<i64: 2, 32, 16, 8>}, {pipeline_mode = #tpu.pipeline_mode<synchronous>, transform_indices = @transform_1, window_bounds = array<i64: 304, 64>}, {pipeline_mode = #tpu.pipeline_mode<synchronous>, transform_indices = @transform_2, window_bounds = array<i64: 736, 128>}, {pipeline_mode = #tpu.pipeline_mode<synchronous>, transform_indices = @transform_3, window_bounds = array<i64: 1472, 256>}, {transform_indices = @transform_4, window_bounds = array<i64: 2, 8, 128>}]} {
    %c0 = arith.constant 0 : index
    %c0_0 = arith.constant 0 : index
    %c0_1 = arith.constant 0 : index
    %c0_2 = arith.constant 0 : index
    %0 = vector.load %arg1[%c0, %c0_0, %c0_1, %c0_2] : memref<2x32x16x8xbf16, #tpu.memory_space<vmem>>, vector<2x32x16x8xbf16>
    %c0_3 = arith.constant 0 : index
    %c0_4 = arith.constant 0 : index
    %1 = vector.load %arg2[%c0_3, %c0_4] : memref<304x64xbf16, #tpu.memory_space<vmem>>, vector<8x64xbf16>
    %c16 = arith.constant 16 : index
    %c0_5 = arith.constant 0 : index
    %2 = vector.load %arg2[%c16, %c0_5] : memref<304x64xbf16, #tpu.memory_space<vmem>>, vector<256x64xbf16>
    %c272 = arith.constant 272 : index
    %c0_6 = arith.constant 0 : index
    %3 = vector.load %arg2[%c272, %c0_6] : memref<304x64xbf16, #tpu.memory_space<vmem>>, vector<32x64xbf16>
    %4 = vector.shape_cast %0 : vector<2x32x16x8xbf16> to vector<1024x8xbf16>
    %cst = arith.constant dense<0.000000e+00> : vector<1024x64xf32>
    %5 = tpu.matmul %4, %1, %cst {dimension_numbers = #tpu.dot_dimension_numbers<[1], [0], [0], [1], [0, 0, 1, 1], [], []>} : vector<1024x8xbf16>, vector<8x64xbf16>, vector<1024x64xf32> -> vector<1024x64xf32>
    %6 = vector.shape_cast %5 : vector<1024x64xf32> to vector<2x32x16x64xf32>
    %cst_7 = arith.constant 0.000000e+00 : f32
    %7 = vector.broadcast %cst_7 : f32 to vector<2x32x16x64xf32>
    %8 = arith.maximumf %6, %7 : vector<2x32x16x64xf32>
    %9 = arith.truncf %8 : vector<2x32x16x64xf32> to vector<2x32x16x64xbf16>
    %10 = vector.extract_strided_slice %9 {offsets = [0, 0, 0, 0], sizes = [2, 32, 16, 32], strides = [1, 1, 1, 1]} : vector<2x32x16x64xbf16> to vector<2x32x16x32xbf16>
    %11 = vector.extract_strided_slice %9 {offsets = [0, 0, 0, 32], sizes = [2, 32, 16, 32], strides = [1, 1, 1, 1]} : vector<2x32x16x64xbf16> to vector<2x32x16x32xbf16>
    %cst_8 = arith.constant 0.000000e+00 : bf16
    %12 = vector.broadcast %cst_8 : bf16 to vector<2x1x16x32xbf16>
    %13 = vector.extract_strided_slice %10 {offsets = [0, 0, 0, 0], sizes = [2, 31, 16, 32], strides = [1, 1, 1, 1]} : vector<2x32x16x32xbf16> to vector<2x31x16x32xbf16>
    %14 = tpu.concatenate %12, %13 in 1 : vector<2x1x16x32xbf16>, vector<2x31x16x32xbf16> -> vector<2x32x16x32xbf16>
    %cst_9 = arith.constant 0.000000e+00 : bf16
    %15 = vector.broadcast %cst_9 : bf16 to vector<2x1x16x32xbf16>
    %16 = vector.extract_strided_slice %10 {offsets = [0, 1, 0, 0], sizes = [2, 31, 16, 32], strides = [1, 1, 1, 1]} : vector<2x32x16x32xbf16> to vector<2x31x16x32xbf16>
    %17 = tpu.concatenate %16, %15 in 1 : vector<2x31x16x32xbf16>, vector<2x1x16x32xbf16> -> vector<2x32x16x32xbf16>
    %cst_10 = arith.constant 0.000000e+00 : bf16
    %18 = vector.broadcast %cst_10 : bf16 to vector<2x2x16x32xbf16>
    %19 = vector.extract_strided_slice %11 {offsets = [0, 0, 0, 0], sizes = [2, 30, 16, 32], strides = [1, 1, 1, 1]} : vector<2x32x16x32xbf16> to vector<2x30x16x32xbf16>
    %20 = tpu.concatenate %18, %19 in 1 : vector<2x2x16x32xbf16>, vector<2x30x16x32xbf16> -> vector<2x32x16x32xbf16>
    %cst_11 = arith.constant 0.000000e+00 : bf16
    %21 = vector.broadcast %cst_11 : bf16 to vector<2x1x16x32xbf16>
    %22 = vector.extract_strided_slice %11 {offsets = [0, 0, 0, 0], sizes = [2, 31, 16, 32], strides = [1, 1, 1, 1]} : vector<2x32x16x32xbf16> to vector<2x31x16x32xbf16>
    %23 = tpu.concatenate %21, %22 in 1 : vector<2x1x16x32xbf16>, vector<2x31x16x32xbf16> -> vector<2x32x16x32xbf16>
    %cst_12 = arith.constant 0.000000e+00 : bf16
    %24 = vector.broadcast %cst_12 : bf16 to vector<2x1x16x32xbf16>
    %25 = vector.extract_strided_slice %11 {offsets = [0, 1, 0, 0], sizes = [2, 31, 16, 32], strides = [1, 1, 1, 1]} : vector<2x32x16x32xbf16> to vector<2x31x16x32xbf16>
    %26 = tpu.concatenate %25, %24 in 1 : vector<2x31x16x32xbf16>, vector<2x1x16x32xbf16> -> vector<2x32x16x32xbf16>
    %cst_13 = arith.constant 0.000000e+00 : bf16
    %27 = vector.broadcast %cst_13 : bf16 to vector<2x2x16x32xbf16>
    %28 = vector.extract_strided_slice %11 {offsets = [0, 2, 0, 0], sizes = [2, 30, 16, 32], strides = [1, 1, 1, 1]} : vector<2x32x16x32xbf16> to vector<2x30x16x32xbf16>
    %29 = tpu.concatenate %28, %27 in 1 : vector<2x30x16x32xbf16>, vector<2x2x16x32xbf16> -> vector<2x32x16x32xbf16>
    %30 = tpu.concatenate %14, %10, %17, %20, %23, %11, %26, %29 in 3 : vector<2x32x16x32xbf16>, vector<2x32x16x32xbf16>, vector<2x32x16x32xbf16>, vector<2x32x16x32xbf16>, vector<2x32x16x32xbf16>, vector<2x32x16x32xbf16>, vector<2x32x16x32xbf16>, vector<2x32x16x32xbf16> -> vector<2x32x16x256xbf16>
    %31 = vector.shape_cast %30 : vector<2x32x16x256xbf16> to vector<1024x256xbf16>
    %cst_14 = arith.constant dense<0.000000e+00> : vector<1024x64xf32>
    %32 = tpu.matmul %31, %2, %cst_14 {dimension_numbers = #tpu.dot_dimension_numbers<[1], [0], [0], [1], [0, 0, 1, 1], [], []>} : vector<1024x256xbf16>, vector<256x64xbf16>, vector<1024x64xf32> -> vector<1024x64xf32>
    %33 = vector.shape_cast %32 : vector<1024x64xf32> to vector<2x32x16x64xf32>
    %cst_15 = arith.constant 0.000000e+00 : f32
    %34 = vector.broadcast %cst_15 : f32 to vector<2x32x16x64xf32>
    %35 = arith.maximumf %33, %34 : vector<2x32x16x64xf32>
    %36 = vector.extract_strided_slice %35 {offsets = [0, 0, 0, 0], sizes = [2, 32, 16, 32], strides = [1, 1, 1, 1]} : vector<2x32x16x64xf32> to vector<2x32x16x32xf32>
    %37 = vector.extract_strided_slice %35 {offsets = [0, 0, 0, 32], sizes = [2, 32, 16, 32], strides = [1, 1, 1, 1]} : vector<2x32x16x64xf32> to vector<2x32x16x32xf32>
    %38 = arith.addf %36, %37 : vector<2x32x16x32xf32>
    %39 = arith.truncf %38 : vector<2x32x16x32xf32> to vector<2x32x16x32xbf16>
    %40 = vector.shape_cast %39 : vector<2x32x16x32xbf16> to vector<1024x32xbf16>
    %cst_16 = arith.constant dense<0.000000e+00> : vector<1024x64xf32>
    %41 = tpu.matmul %40, %3, %cst_16 {dimension_numbers = #tpu.dot_dimension_numbers<[1], [0], [0], [1], [0, 0, 1, 1], [], []>} : vector<1024x32xbf16>, vector<32x64xbf16>, vector<1024x64xf32> -> vector<1024x64xf32>
    %42 = vector.shape_cast %41 : vector<1024x64xf32> to vector<2x32x16x64xf32>
    %cst_17 = arith.constant 0.000000e+00 : f32
    %43 = vector.broadcast %cst_17 : f32 to vector<2x32x16x64xf32>
    %44 = arith.maximumf %42, %43 : vector<2x32x16x64xf32>
    %45 = vector.extract_strided_slice %44 {offsets = [0, 0, 0, 0], sizes = [2, 32, 16, 32], strides = [1, 1, 1, 1]} : vector<2x32x16x64xf32> to vector<2x32x16x32xf32>
    %cst_18 = arith.constant 0.000000e+00 : f32
    %46 = vector.broadcast %cst_18 : f32 to vector<2x1x16x32xf32>
    %47 = vector.extract_strided_slice %45 {offsets = [0, 0, 0, 0], sizes = [2, 31, 16, 32], strides = [1, 1, 1, 1]} : vector<2x32x16x32xf32> to vector<2x31x16x32xf32>
    %48 = tpu.concatenate %46, %47 in 1 : vector<2x1x16x32xf32>, vector<2x31x16x32xf32> -> vector<2x32x16x32xf32>
    %49 = arith.maximumf %48, %45 : vector<2x32x16x32xf32>
    %cst_19 = arith.constant 0.000000e+00 : f32
    %50 = vector.broadcast %cst_19 : f32 to vector<2x1x16x32xf32>
    %51 = vector.extract_strided_slice %45 {offsets = [0, 1, 0, 0], sizes = [2, 31, 16, 32], strides = [1, 1, 1, 1]} : vector<2x32x16x32xf32> to vector<2x31x16x32xf32>
    %52 = tpu.concatenate %51, %50 in 1 : vector<2x31x16x32xf32>, vector<2x1x16x32xf32> -> vector<2x32x16x32xf32>
    %53 = arith.maximumf %49, %52 : vector<2x32x16x32xf32>
    %54 = vector.shape_cast %53 : vector<2x32x16x32xf32> to vector<2x16x2x16x32xf32>
    %55 = vector.extract_strided_slice %54 {offsets = [0, 0, 0, 0, 0], sizes = [2, 16, 1, 16, 32], strides = [1, 1, 1, 1, 1]} : vector<2x16x2x16x32xf32> to vector<2x16x1x16x32xf32>
    %56 = vector.shape_cast %55 : vector<2x16x1x16x32xf32> to vector<2x16x16x32xf32>
    %57 = arith.truncf %56 : vector<2x16x16x32xf32> to vector<2x16x16x32xbf16>
    %cst_20 = arith.constant 0.000000e+00 : bf16
    %58 = vector.broadcast %cst_20 : bf16 to vector<2x16x2x32xbf16>
    %59 = vector.extract_strided_slice %57 {offsets = [0, 0, 0, 0], sizes = [2, 16, 14, 32], strides = [1, 1, 1, 1]} : vector<2x16x16x32xbf16> to vector<2x16x14x32xbf16>
    %60 = tpu.concatenate %58, %59 in 2 : vector<2x16x2x32xbf16>, vector<2x16x14x32xbf16> -> vector<2x16x16x32xbf16>
    %cst_21 = arith.constant 0.000000e+00 : bf16
    %61 = vector.broadcast %cst_21 : bf16 to vector<2x16x1x32xbf16>
    %62 = vector.extract_strided_slice %57 {offsets = [0, 0, 0, 0], sizes = [2, 16, 15, 32], strides = [1, 1, 1, 1]} : vector<2x16x16x32xbf16> to vector<2x16x15x32xbf16>
    %63 = tpu.concatenate %61, %62 in 2 : vector<2x16x1x32xbf16>, vector<2x16x15x32xbf16> -> vector<2x16x16x32xbf16>
    %cst_22 = arith.constant 0.000000e+00 : bf16
    %64 = vector.broadcast %cst_22 : bf16 to vector<2x16x1x32xbf16>
    %65 = vector.extract_strided_slice %57 {offsets = [0, 0, 1, 0], sizes = [2, 16, 15, 32], strides = [1, 1, 1, 1]} : vector<2x16x16x32xbf16> to vector<2x16x15x32xbf16>
    %66 = tpu.concatenate %65, %64 in 2 : vector<2x16x15x32xbf16>, vector<2x16x1x32xbf16> -> vector<2x16x16x32xbf16>
    %cst_23 = arith.constant 0.000000e+00 : bf16
    %67 = vector.broadcast %cst_23 : bf16 to vector<2x16x2x32xbf16>
    %68 = vector.extract_strided_slice %57 {offsets = [0, 0, 2, 0], sizes = [2, 16, 14, 32], strides = [1, 1, 1, 1]} : vector<2x16x16x32xbf16> to vector<2x16x14x32xbf16>
    %69 = tpu.concatenate %68, %67 in 2 : vector<2x16x14x32xbf16>, vector<2x16x2x32xbf16> -> vector<2x16x16x32xbf16>
    %70 = tpu.concatenate %60, %63, %57, %66, %69 in 3 : vector<2x16x16x32xbf16>, vector<2x16x16x32xbf16>, vector<2x16x16x32xbf16>, vector<2x16x16x32xbf16>, vector<2x16x16x32xbf16> -> vector<2x16x16x160xbf16>
    %c0_24 = arith.constant 0 : index
    %c0_25 = arith.constant 0 : index
    %71 = vector.load %arg3[%c0_24, %c0_25] : memref<736x128xbf16, #tpu.memory_space<vmem>>, vector<160x128xbf16>
    %c160 = arith.constant 160 : index
    %c0_26 = arith.constant 0 : index
    %72 = vector.load %arg3[%c160, %c0_26] : memref<736x128xbf16, #tpu.memory_space<vmem>>, vector<512x128xbf16>
    %c672 = arith.constant 672 : index
    %c0_27 = arith.constant 0 : index
    %73 = vector.load %arg3[%c672, %c0_27] : memref<736x128xbf16, #tpu.memory_space<vmem>>, vector<64x128xbf16>
    %74 = vector.shape_cast %70 : vector<2x16x16x160xbf16> to vector<512x160xbf16>
    %cst_28 = arith.constant dense<0.000000e+00> : vector<512x128xf32>
    %75 = tpu.matmul %74, %71, %cst_28 {dimension_numbers = #tpu.dot_dimension_numbers<[1], [0], [0], [1], [0, 0, 1, 1], [], []>} : vector<512x160xbf16>, vector<160x128xbf16>, vector<512x128xf32> -> vector<512x128xf32>
    %76 = vector.shape_cast %75 : vector<512x128xf32> to vector<2x16x16x128xf32>
    %cst_29 = arith.constant 0.000000e+00 : f32
    %77 = vector.broadcast %cst_29 : f32 to vector<2x16x16x128xf32>
    %78 = arith.maximumf %76, %77 : vector<2x16x16x128xf32>
    %79 = arith.truncf %78 : vector<2x16x16x128xf32> to vector<2x16x16x128xbf16>
    %80 = vector.extract_strided_slice %79 {offsets = [0, 0, 0, 0], sizes = [2, 16, 16, 64], strides = [1, 1, 1, 1]} : vector<2x16x16x128xbf16> to vector<2x16x16x64xbf16>
    %81 = vector.extract_strided_slice %79 {offsets = [0, 0, 0, 64], sizes = [2, 16, 16, 64], strides = [1, 1, 1, 1]} : vector<2x16x16x128xbf16> to vector<2x16x16x64xbf16>
    %cst_30 = arith.constant 0.000000e+00 : bf16
    %82 = vector.broadcast %cst_30 : bf16 to vector<2x1x16x64xbf16>
    %83 = vector.extract_strided_slice %80 {offsets = [0, 0, 0, 0], sizes = [2, 15, 16, 64], strides = [1, 1, 1, 1]} : vector<2x16x16x64xbf16> to vector<2x15x16x64xbf16>
    %84 = tpu.concatenate %82, %83 in 1 : vector<2x1x16x64xbf16>, vector<2x15x16x64xbf16> -> vector<2x16x16x64xbf16>
    %cst_31 = arith.constant 0.000000e+00 : bf16
    %85 = vector.broadcast %cst_31 : bf16 to vector<2x1x16x64xbf16>
    %86 = vector.extract_strided_slice %80 {offsets = [0, 1, 0, 0], sizes = [2, 15, 16, 64], strides = [1, 1, 1, 1]} : vector<2x16x16x64xbf16> to vector<2x15x16x64xbf16>
    %87 = tpu.concatenate %86, %85 in 1 : vector<2x15x16x64xbf16>, vector<2x1x16x64xbf16> -> vector<2x16x16x64xbf16>
    %cst_32 = arith.constant 0.000000e+00 : bf16
    %88 = vector.broadcast %cst_32 : bf16 to vector<2x2x16x64xbf16>
    %89 = vector.extract_strided_slice %81 {offsets = [0, 0, 0, 0], sizes = [2, 14, 16, 64], strides = [1, 1, 1, 1]} : vector<2x16x16x64xbf16> to vector<2x14x16x64xbf16>
    %90 = tpu.concatenate %88, %89 in 1 : vector<2x2x16x64xbf16>, vector<2x14x16x64xbf16> -> vector<2x16x16x64xbf16>
    %cst_33 = arith.constant 0.000000e+00 : bf16
    %91 = vector.broadcast %cst_33 : bf16 to vector<2x1x16x64xbf16>
    %92 = vector.extract_strided_slice %81 {offsets = [0, 0, 0, 0], sizes = [2, 15, 16, 64], strides = [1, 1, 1, 1]} : vector<2x16x16x64xbf16> to vector<2x15x16x64xbf16>
    %93 = tpu.concatenate %91, %92 in 1 : vector<2x1x16x64xbf16>, vector<2x15x16x64xbf16> -> vector<2x16x16x64xbf16>
    %cst_34 = arith.constant 0.000000e+00 : bf16
    %94 = vector.broadcast %cst_34 : bf16 to vector<2x1x16x64xbf16>
    %95 = vector.extract_strided_slice %81 {offsets = [0, 1, 0, 0], sizes = [2, 15, 16, 64], strides = [1, 1, 1, 1]} : vector<2x16x16x64xbf16> to vector<2x15x16x64xbf16>
    %96 = tpu.concatenate %95, %94 in 1 : vector<2x15x16x64xbf16>, vector<2x1x16x64xbf16> -> vector<2x16x16x64xbf16>
    %cst_35 = arith.constant 0.000000e+00 : bf16
    %97 = vector.broadcast %cst_35 : bf16 to vector<2x2x16x64xbf16>
    %98 = vector.extract_strided_slice %81 {offsets = [0, 2, 0, 0], sizes = [2, 14, 16, 64], strides = [1, 1, 1, 1]} : vector<2x16x16x64xbf16> to vector<2x14x16x64xbf16>
    %99 = tpu.concatenate %98, %97 in 1 : vector<2x14x16x64xbf16>, vector<2x2x16x64xbf16> -> vector<2x16x16x64xbf16>
    %100 = tpu.concatenate %84, %80, %87, %90, %93, %81, %96, %99 in 3 : vector<2x16x16x64xbf16>, vector<2x16x16x64xbf16>, vector<2x16x16x64xbf16>, vector<2x16x16x64xbf16>, vector<2x16x16x64xbf16>, vector<2x16x16x64xbf16>, vector<2x16x16x64xbf16>, vector<2x16x16x64xbf16> -> vector<2x16x16x512xbf16>
    %101 = vector.shape_cast %100 : vector<2x16x16x512xbf16> to vector<512x512xbf16>
    %cst_36 = arith.constant dense<0.000000e+00> : vector<512x128xf32>
    %102 = tpu.matmul %101, %72, %cst_36 {dimension_numbers = #tpu.dot_dimension_numbers<[1], [0], [0], [1], [0, 0, 1, 1], [], []>} : vector<512x512xbf16>, vector<512x128xbf16>, vector<512x128xf32> -> vector<512x128xf32>
    %103 = vector.shape_cast %102 : vector<512x128xf32> to vector<2x16x16x128xf32>
    %cst_37 = arith.constant 0.000000e+00 : f32
    %104 = vector.broadcast %cst_37 : f32 to vector<2x16x16x128xf32>
    %105 = arith.maximumf %103, %104 : vector<2x16x16x128xf32>
    %106 = vector.extract_strided_slice %105 {offsets = [0, 0, 0, 0], sizes = [2, 16, 16, 64], strides = [1, 1, 1, 1]} : vector<2x16x16x128xf32> to vector<2x16x16x64xf32>
    %107 = vector.extract_strided_slice %105 {offsets = [0, 0, 0, 64], sizes = [2, 16, 16, 64], strides = [1, 1, 1, 1]} : vector<2x16x16x128xf32> to vector<2x16x16x64xf32>
    %108 = arith.addf %106, %107 : vector<2x16x16x64xf32>
    %109 = arith.truncf %108 : vector<2x16x16x64xf32> to vector<2x16x16x64xbf16>
    %110 = vector.shape_cast %109 : vector<2x16x16x64xbf16> to vector<512x64xbf16>
    %cst_38 = arith.constant dense<0.000000e+00> : vector<512x128xf32>
    %111 = tpu.matmul %110, %73, %cst_38 {dimension_numbers = #tpu.dot_dimension_numbers<[1], [0], [0], [1], [0, 0, 1, 1], [], []>} : vector<512x64xbf16>, vector<64x128xbf16>, vector<512x128xf32> -> vector<512x128xf32>
    %112 = vector.shape_cast %111 : vector<512x128xf32> to vector<2x16x16x128xf32>
    %cst_39 = arith.constant 0.000000e+00 : f32
    %113 = vector.broadcast %cst_39 : f32 to vector<2x16x16x128xf32>
    %114 = arith.maximumf %112, %113 : vector<2x16x16x128xf32>
    %115 = vector.extract_strided_slice %114 {offsets = [0, 0, 0, 0], sizes = [2, 16, 16, 64], strides = [1, 1, 1, 1]} : vector<2x16x16x128xf32> to vector<2x16x16x64xf32>
    %cst_40 = arith.constant 0.000000e+00 : f32
    %116 = vector.broadcast %cst_40 : f32 to vector<2x1x16x64xf32>
    %117 = vector.extract_strided_slice %115 {offsets = [0, 0, 0, 0], sizes = [2, 15, 16, 64], strides = [1, 1, 1, 1]} : vector<2x16x16x64xf32> to vector<2x15x16x64xf32>
    %118 = tpu.concatenate %116, %117 in 1 : vector<2x1x16x64xf32>, vector<2x15x16x64xf32> -> vector<2x16x16x64xf32>
    %119 = arith.maximumf %118, %115 : vector<2x16x16x64xf32>
    %cst_41 = arith.constant 0.000000e+00 : f32
    %120 = vector.broadcast %cst_41 : f32 to vector<2x1x16x64xf32>
    %121 = vector.extract_strided_slice %115 {offsets = [0, 1, 0, 0], sizes = [2, 15, 16, 64], strides = [1, 1, 1, 1]} : vector<2x16x16x64xf32> to vector<2x15x16x64xf32>
    %122 = tpu.concatenate %121, %120 in 1 : vector<2x15x16x64xf32>, vector<2x1x16x64xf32> -> vector<2x16x16x64xf32>
    %123 = arith.maximumf %119, %122 : vector<2x16x16x64xf32>
    %124 = vector.shape_cast %123 : vector<2x16x16x64xf32> to vector<2x8x2x16x64xf32>
    %125 = vector.extract_strided_slice %124 {offsets = [0, 0, 0, 0, 0], sizes = [2, 8, 1, 16, 64], strides = [1, 1, 1, 1, 1]} : vector<2x8x2x16x64xf32> to vector<2x8x1x16x64xf32>
    %126 = vector.shape_cast %125 : vector<2x8x1x16x64xf32> to vector<2x8x16x64xf32>
    %127 = arith.truncf %126 : vector<2x8x16x64xf32> to vector<2x8x16x64xbf16>
    %cst_42 = arith.constant 0.000000e+00 : bf16
    %128 = vector.broadcast %cst_42 : bf16 to vector<2x8x2x64xbf16>
    %129 = vector.extract_strided_slice %127 {offsets = [0, 0, 0, 0], sizes = [2, 8, 14, 64], strides = [1, 1, 1, 1]} : vector<2x8x16x64xbf16> to vector<2x8x14x64xbf16>
    %130 = tpu.concatenate %128, %129 in 2 : vector<2x8x2x64xbf16>, vector<2x8x14x64xbf16> -> vector<2x8x16x64xbf16>
    %cst_43 = arith.constant 0.000000e+00 : bf16
    %131 = vector.broadcast %cst_43 : bf16 to vector<2x8x1x64xbf16>
    %132 = vector.extract_strided_slice %127 {offsets = [0, 0, 0, 0], sizes = [2, 8, 15, 64], strides = [1, 1, 1, 1]} : vector<2x8x16x64xbf16> to vector<2x8x15x64xbf16>
    %133 = tpu.concatenate %131, %132 in 2 : vector<2x8x1x64xbf16>, vector<2x8x15x64xbf16> -> vector<2x8x16x64xbf16>
    %cst_44 = arith.constant 0.000000e+00 : bf16
    %134 = vector.broadcast %cst_44 : bf16 to vector<2x8x1x64xbf16>
    %135 = vector.extract_strided_slice %127 {offsets = [0, 0, 1, 0], sizes = [2, 8, 15, 64], strides = [1, 1, 1, 1]} : vector<2x8x16x64xbf16> to vector<2x8x15x64xbf16>
    %136 = tpu.concatenate %135, %134 in 2 : vector<2x8x15x64xbf16>, vector<2x8x1x64xbf16> -> vector<2x8x16x64xbf16>
    %cst_45 = arith.constant 0.000000e+00 : bf16
    %137 = vector.broadcast %cst_45 : bf16 to vector<2x8x2x64xbf16>
    %138 = vector.extract_strided_slice %127 {offsets = [0, 0, 2, 0], sizes = [2, 8, 14, 64], strides = [1, 1, 1, 1]} : vector<2x8x16x64xbf16> to vector<2x8x14x64xbf16>
    %139 = tpu.concatenate %138, %137 in 2 : vector<2x8x14x64xbf16>, vector<2x8x2x64xbf16> -> vector<2x8x16x64xbf16>
    %140 = tpu.concatenate %130, %133, %127, %136, %139 in 3 : vector<2x8x16x64xbf16>, vector<2x8x16x64xbf16>, vector<2x8x16x64xbf16>, vector<2x8x16x64xbf16>, vector<2x8x16x64xbf16> -> vector<2x8x16x320xbf16>
    %c0_46 = arith.constant 0 : index
    %c0_47 = arith.constant 0 : index
    %141 = vector.load %arg4[%c0_46, %c0_47] : memref<1472x256xbf16, #tpu.memory_space<vmem>>, vector<320x256xbf16>
    %c320 = arith.constant 320 : index
    %c0_48 = arith.constant 0 : index
    %142 = vector.load %arg4[%c320, %c0_48] : memref<1472x256xbf16, #tpu.memory_space<vmem>>, vector<1024x256xbf16>
    %c1344 = arith.constant 1344 : index
    %c0_49 = arith.constant 0 : index
    %143 = vector.load %arg4[%c1344, %c0_49] : memref<1472x256xbf16, #tpu.memory_space<vmem>>, vector<128x256xbf16>
    %144 = vector.shape_cast %140 : vector<2x8x16x320xbf16> to vector<256x320xbf16>
    %cst_50 = arith.constant dense<0.000000e+00> : vector<256x256xf32>
    %145 = tpu.matmul %144, %141, %cst_50 {dimension_numbers = #tpu.dot_dimension_numbers<[1], [0], [0], [1], [0, 0, 1, 1], [], []>} : vector<256x320xbf16>, vector<320x256xbf16>, vector<256x256xf32> -> vector<256x256xf32>
    %146 = vector.shape_cast %145 : vector<256x256xf32> to vector<2x8x16x256xf32>
    %cst_51 = arith.constant 0.000000e+00 : f32
    %147 = vector.broadcast %cst_51 : f32 to vector<2x8x16x256xf32>
    %148 = arith.maximumf %146, %147 : vector<2x8x16x256xf32>
    %149 = arith.truncf %148 : vector<2x8x16x256xf32> to vector<2x8x16x256xbf16>
    %150 = vector.extract_strided_slice %149 {offsets = [0, 0, 0, 0], sizes = [2, 8, 16, 128], strides = [1, 1, 1, 1]} : vector<2x8x16x256xbf16> to vector<2x8x16x128xbf16>
    %151 = vector.extract_strided_slice %149 {offsets = [0, 0, 0, 128], sizes = [2, 8, 16, 128], strides = [1, 1, 1, 1]} : vector<2x8x16x256xbf16> to vector<2x8x16x128xbf16>
    %cst_52 = arith.constant 0.000000e+00 : bf16
    %152 = vector.broadcast %cst_52 : bf16 to vector<2x1x16x128xbf16>
    %153 = vector.extract_strided_slice %150 {offsets = [0, 0, 0, 0], sizes = [2, 7, 16, 128], strides = [1, 1, 1, 1]} : vector<2x8x16x128xbf16> to vector<2x7x16x128xbf16>
    %154 = tpu.concatenate %152, %153 in 1 : vector<2x1x16x128xbf16>, vector<2x7x16x128xbf16> -> vector<2x8x16x128xbf16>
    %cst_53 = arith.constant 0.000000e+00 : bf16
    %155 = vector.broadcast %cst_53 : bf16 to vector<2x1x16x128xbf16>
    %156 = vector.extract_strided_slice %150 {offsets = [0, 1, 0, 0], sizes = [2, 7, 16, 128], strides = [1, 1, 1, 1]} : vector<2x8x16x128xbf16> to vector<2x7x16x128xbf16>
    %157 = tpu.concatenate %156, %155 in 1 : vector<2x7x16x128xbf16>, vector<2x1x16x128xbf16> -> vector<2x8x16x128xbf16>
    %cst_54 = arith.constant 0.000000e+00 : bf16
    %158 = vector.broadcast %cst_54 : bf16 to vector<2x2x16x128xbf16>
    %159 = vector.extract_strided_slice %151 {offsets = [0, 0, 0, 0], sizes = [2, 6, 16, 128], strides = [1, 1, 1, 1]} : vector<2x8x16x128xbf16> to vector<2x6x16x128xbf16>
    %160 = tpu.concatenate %158, %159 in 1 : vector<2x2x16x128xbf16>, vector<2x6x16x128xbf16> -> vector<2x8x16x128xbf16>
    %cst_55 = arith.constant 0.000000e+00 : bf16
    %161 = vector.broadcast %cst_55 : bf16 to vector<2x1x16x128xbf16>
    %162 = vector.extract_strided_slice %151 {offsets = [0, 0, 0, 0], sizes = [2, 7, 16, 128], strides = [1, 1, 1, 1]} : vector<2x8x16x128xbf16> to vector<2x7x16x128xbf16>
    %163 = tpu.concatenate %161, %162 in 1 : vector<2x1x16x128xbf16>, vector<2x7x16x128xbf16> -> vector<2x8x16x128xbf16>
    %cst_56 = arith.constant 0.000000e+00 : bf16
    %164 = vector.broadcast %cst_56 : bf16 to vector<2x1x16x128xbf16>
    %165 = vector.extract_strided_slice %151 {offsets = [0, 1, 0, 0], sizes = [2, 7, 16, 128], strides = [1, 1, 1, 1]} : vector<2x8x16x128xbf16> to vector<2x7x16x128xbf16>
    %166 = tpu.concatenate %165, %164 in 1 : vector<2x7x16x128xbf16>, vector<2x1x16x128xbf16> -> vector<2x8x16x128xbf16>
    %cst_57 = arith.constant 0.000000e+00 : bf16
    %167 = vector.broadcast %cst_57 : bf16 to vector<2x2x16x128xbf16>
    %168 = vector.extract_strided_slice %151 {offsets = [0, 2, 0, 0], sizes = [2, 6, 16, 128], strides = [1, 1, 1, 1]} : vector<2x8x16x128xbf16> to vector<2x6x16x128xbf16>
    %169 = tpu.concatenate %168, %167 in 1 : vector<2x6x16x128xbf16>, vector<2x2x16x128xbf16> -> vector<2x8x16x128xbf16>
    %170 = tpu.concatenate %154, %150, %157, %160, %163, %151, %166, %169 in 3 : vector<2x8x16x128xbf16>, vector<2x8x16x128xbf16>, vector<2x8x16x128xbf16>, vector<2x8x16x128xbf16>, vector<2x8x16x128xbf16>, vector<2x8x16x128xbf16>, vector<2x8x16x128xbf16>, vector<2x8x16x128xbf16> -> vector<2x8x16x1024xbf16>
    %171 = vector.shape_cast %170 : vector<2x8x16x1024xbf16> to vector<256x1024xbf16>
    %cst_58 = arith.constant dense<0.000000e+00> : vector<256x256xf32>
    %172 = tpu.matmul %171, %142, %cst_58 {dimension_numbers = #tpu.dot_dimension_numbers<[1], [0], [0], [1], [0, 0, 1, 1], [], []>} : vector<256x1024xbf16>, vector<1024x256xbf16>, vector<256x256xf32> -> vector<256x256xf32>
    %173 = vector.shape_cast %172 : vector<256x256xf32> to vector<2x8x16x256xf32>
    %cst_59 = arith.constant 0.000000e+00 : f32
    %174 = vector.broadcast %cst_59 : f32 to vector<2x8x16x256xf32>
    %175 = arith.maximumf %173, %174 : vector<2x8x16x256xf32>
    %176 = vector.extract_strided_slice %175 {offsets = [0, 0, 0, 0], sizes = [2, 8, 16, 128], strides = [1, 1, 1, 1]} : vector<2x8x16x256xf32> to vector<2x8x16x128xf32>
    %177 = vector.extract_strided_slice %175 {offsets = [0, 0, 0, 128], sizes = [2, 8, 16, 128], strides = [1, 1, 1, 1]} : vector<2x8x16x256xf32> to vector<2x8x16x128xf32>
    %178 = arith.addf %176, %177 : vector<2x8x16x128xf32>
    %179 = arith.truncf %178 : vector<2x8x16x128xf32> to vector<2x8x16x128xbf16>
    %180 = vector.shape_cast %179 : vector<2x8x16x128xbf16> to vector<256x128xbf16>
    %cst_60 = arith.constant dense<0.000000e+00> : vector<256x256xf32>
    %181 = tpu.matmul %180, %143, %cst_60 {dimension_numbers = #tpu.dot_dimension_numbers<[1], [0], [0], [1], [0, 0, 1, 1], [], []>} : vector<256x128xbf16>, vector<128x256xbf16>, vector<256x256xf32> -> vector<256x256xf32>
    %182 = vector.shape_cast %181 : vector<256x256xf32> to vector<2x8x16x256xf32>
    %cst_61 = arith.constant 0.000000e+00 : f32
    %183 = vector.broadcast %cst_61 : f32 to vector<2x8x16x256xf32>
    %184 = arith.maximumf %182, %183 : vector<2x8x16x256xf32>
    %185 = vector.extract_strided_slice %184 {offsets = [0, 0, 0, 0], sizes = [2, 8, 16, 128], strides = [1, 1, 1, 1]} : vector<2x8x16x256xf32> to vector<2x8x16x128xf32>
    %cst_62 = arith.constant dense<0.000000e+00> : vector<2x8x128xf32>
    %186 = vector.multi_reduction <add>, %185, %cst_62 [2] : vector<2x8x16x128xf32> to vector<2x8x128xf32>
    %cst_63 = arith.constant 1.600000e+01 : f32
    %187 = vector.broadcast %cst_63 : f32 to vector<2x8x128xf32>
    %188 = arith.divf %186, %187 : vector<2x8x128xf32>
    %c0_64 = arith.constant 0 : index
    %c0_65 = arith.constant 0 : index
    %c0_66 = arith.constant 0 : index
    %189 = vector.load %arg5[%c0_64, %c0_65, %c0_66] : memref<2x8x128xf32, #tpu.memory_space<vmem>>, vector<2x8x128xf32>
    tpu.vector_store %arg5[%c0_64, %c0_65, %c0_66], %188 {strides = array<i32>} : memref<2x8x128xf32, #tpu.memory_space<vmem>>, vector<2x8x128xf32>,
    return
  }
  func.func @transform_0(%arg0: i32) -> (i32, i32, i32, i32) {
    %c0_i32 = arith.constant 0 : i32
    %c0_i32_0 = arith.constant 0 : i32
    %c0_i32_1 = arith.constant 0 : i32
    %c0_i32_2 = arith.constant 0 : i32
    return %arg0, %c0_i32, %c0_i32_0, %c0_i32_1 : i32, i32, i32, i32
  }
  func.func @transform_1(%arg0: i32) -> (i32, i32) {
    %c0_i32 = arith.constant 0 : i32
    %c0_i32_0 = arith.constant 0 : i32
    %c0_i32_1 = arith.constant 0 : i32
    return %c0_i32, %c0_i32_0 : i32, i32
  }
  func.func @transform_2(%arg0: i32) -> (i32, i32) {
    %c0_i32 = arith.constant 0 : i32
    %c0_i32_0 = arith.constant 0 : i32
    %c0_i32_1 = arith.constant 0 : i32
    return %c0_i32, %c0_i32_0 : i32, i32
  }
  func.func @transform_3(%arg0: i32) -> (i32, i32) {
    %c0_i32 = arith.constant 0 : i32
    %c0_i32_0 = arith.constant 0 : i32
    %c0_i32_1 = arith.constant 0 : i32
    return %c0_i32, %c0_i32_0 : i32, i32
  }
  func.func @transform_4(%arg0: i32) -> (i32, i32, i32) {
    %c0_i32 = arith.constant 0 : i32
    %c0_i32_0 = arith.constant 0 : i32
    %c0_i32_1 = arith.constant 0 : i32
    return %arg0, %c0_i32, %c0_i32_0 : i32, i32, i32
  }
}

</mosaic_0001>

<llo_original>
// kernel: audio_encoder_forward.1
$region0: #{audio_encoder_forward.1}
  #allocation0 [shape = 'u32[]', space=smem, size = 0x4, offset = 0x4, fixed_abs, tag = 'smem constant byte address 0x4 - core index']
  #allocation1 [shape = 'u32[144,128]{1,0:T(1,128)}', space=vmem, size = 0x12000, scoped, tag = 'internal scratch']
  %s0 = inlined_call_operand.vmem [shape: bf16[2,32,16,8], index: 0, kind: input, shape index: {}]
  %s1 = inlined_call_operand.vmem [shape: bf16[304,64], index: 1, kind: input, shape index: {}]
  %s2 = inlined_call_operand.vmem [shape: bf16[736,128], index: 2, kind: input, shape index: {}]
  %s3 = inlined_call_operand.vmem [shape: bf16[1472,256], index: 3, kind: input, shape index: {}]
  %s4 = inlined_call_operand.hbm [shape: f32[2,8,128], index: 4, kind: output, shape index: {}]
  %s5 = sld [smem:[#allocation0]]
  $region26: #{audio_encoder_forward.1} parent=0
    _
  %s7 = ssub.s32 1, %s5
  %s8 = scalar_select 0, %s7, %s5
  $region1: #{audio_encoder_forward.1} parent=0
    #allocation2 [shape = 'u8[8192]{0}', space=vmem, size = 0x2000, scoped, tag = 'output window, operand 0, single buffered']
    #allocation3 [shape = 's32[1]{0}', space=sflag, size = 0x4, scoped, tag = 'scoped memory for audio_encoder_forward.1']
    %9 = vsyncpa [#allocation3], 0
    // Predicated region
    $region2: #{audio_encoder_forward.1} parent=1 // pred_check
      _
    $region3: #{audio_encoder_forward.1} parent=1 // pred_check_branch
      %11 = sbr.rel (0) target = $region5
    $region4: #{audio_encoder_forward.1} parent=1 // pred_region
      _
    $region5: #{audio_encoder_forward.1} parent=1 // pred_fallthru
      _
    // Predicated region
    $region6: #{audio_encoder_forward.1} parent=1 // pred_check
      _
    $region7: #{audio_encoder_forward.1} parent=1 // pred_check_branch
      %13 = sbr.rel (0) target = $region9
    $region8: #{audio_encoder_forward.1} parent=1 // pred_region
      _
    $region9: #{audio_encoder_forward.1} parent=1 // pred_fallthru
      _
    // Predicated region
    $region10: #{audio_encoder_forward.1} parent=1 // pred_check
      _
    $region11: #{audio_encoder_forward.1} parent=1 // pred_check_branch
      %15 = sbr.rel (0) target = $region13
    $region12: #{audio_encoder_forward.1} parent=1 // pred_region
      _
    $region13: #{audio_encoder_forward.1} parent=1 // pred_fallthru
      _
    // Predicated region
    $region14: #{audio_encoder_forward.1} parent=1 // pred_check
      _
    $region15: #{audio_encoder_forward.1} parent=1 // pred_check_branch
      %17 = sbr.rel (0) target = $region17
    $region16: #{audio_encoder_forward.1} parent=1 // pred_region
      _
    $region17: #{audio_encoder_forward.1} parent=1 // pred_fallthru
      _
    %v19 = vld [vmem:[%s0] sm:$0xf]
    %v20 = vld [vmem:[%s0 + $0x4] sm:$0xf]
    %v21 = vld [vmem:[%s0 + $0x8] sm:$0xf]
    %v22 = vld [vmem:[%s0 + $0xc] sm:$0xf]
    %v23 = vld [vmem:[%s0 + $0x10] sm:$0xf]
    %v24 = vld [vmem:[%s0 + $0x14] sm:$0xf]
    %v25 = vld [vmem:[%s0 + $0x18] sm:$0xf]
    %v26 = vld [vmem:[%s0 + $0x1c] sm:$0xf]
    %v27 = vld [vmem:[%s0 + $0x20] sm:$0xf]
    %v28 = vld [vmem:[%s0 + $0x24] sm:$0xf]
    %v29 = vld [vmem:[%s0 + $0x28] sm:$0xf]
    %v30 = vld [vmem:[%s0 + $0x2c] sm:$0xf]
    %v31 = vld [vmem:[%s0 + $0x30] sm:$0xf]
    %v32 = vld [vmem:[%s0 + $0x34] sm:$0xf]
    %v33 = vld [vmem:[%s0 + $0x38] sm:$0xf]
    %v34 = vld [vmem:[%s0 + $0x3c] sm:$0xf]
    %v35 = vld [vmem:[%s0 + $0x40] sm:$0xf]
    %v36 = vld [vmem:[%s0 + $0x44] sm:$0xf]
    %v37 = vld [vmem:[%s0 + $0x48] sm:$0xf]
    %v38 = vld [vmem:[%s0 + $0x4c] sm:$0xf]
    %v39 = vld [vmem:[%s0 + $0x50] sm:$0xf]
    %v40 = vld [vmem:[%s0 + $0x54] sm:$0xf]
    %v41 = vld [vmem:[%s0 + $0x58] sm:$0xf]
    %v42 = vld [vmem:[%s0 + $0x5c] sm:$0xf]
    %v43 = vld [vmem:[%s0 + $0x60] sm:$0xf]
    %v44 = vld [vmem:[%s0 + $0x64] sm:$0xf]
    %v45 = vld [vmem:[%s0 + $0x68] sm:$0xf]
    %v46 = vld [vmem:[%s0 + $0x6c] sm:$0xf]
    %v47 = vld [vmem:[%s0 + $0x70] sm:$0xf]
    %v48 = vld [vmem:[%s0 + $0x74] sm:$0xf]
    %v49 = vld [vmem:[%s0 + $0x78] sm:$0xf]
    %v50 = vld [vmem:[%s0 + $0x7c] sm:$0xf]
    %v51 = vld [vmem:[%s0 + $0x80] sm:$0xf]
    %v52 = vld [vmem:[%s0 + $0x84] sm:$0xf]
    %v53 = vld [vmem:[%s0 + $0x88] sm:$0xf]
    %v54 = vld [vmem:[%s0 + $0x8c] sm:$0xf]
    %v55 = vld [vmem:[%s0 + $0x90] sm:$0xf]
    %v56 = vld [vmem:[%s0 + $0x94] sm:$0xf]
    %v57 = vld [vmem:[%s0 + $0x98] sm:$0xf]
    %v58 = vld [vmem:[%s0 + $0x9c] sm:$0xf]
    %v59 = vld [vmem:[%s0 + $0xa0] sm:$0xf]
    %v60 = vld [vmem:[%s0 + $0xa4] sm:$0xf]
    %v61 = vld [vmem:[%s0 + $0xa8] sm:$0xf]
    %v62 = vld [vmem:[%s0 + $0xac] sm:$0xf]
    %v63 = vld [vmem:[%s0 + $0xb0] sm:$0xf]
    %v64 = vld [vmem:[%s0 + $0xb4] sm:$0xf]
    %v65 = vld [vmem:[%s0 + $0xb8] sm:$0xf]
    %v66 = vld [vmem:[%s0 + $0xbc] sm:$0xf]
    %v67 = vld [vmem:[%s0 + $0xc0] sm:$0xf]
    %v68 = vld [vmem:[%s0 + $0xc4] sm:$0xf]
    %v69 = vld [vmem:[%s0 + $0xc8] sm:$0xf]
    %v70 = vld [vmem:[%s0 + $0xcc] sm:$0xf]
    %v71 = vld [vmem:[%s0 + $0xd0] sm:$0xf]
    %v72 = vld [vmem:[%s0 + $0xd4] sm:$0xf]
    %v73 = vld [vmem:[%s0 + $0xd8] sm:$0xf]
    %v74 = vld [vmem:[%s0 + $0xdc] sm:$0xf]
    %v75 = vld [vmem:[%s0 + $0xe0] sm:$0xf]
    %v76 = vld [vmem:[%s0 + $0xe4] sm:$0xf]
    %v77 = vld [vmem:[%s0 + $0xe8] sm:$0xf]
    %v78 = vld [vmem:[%s0 + $0xec] sm:$0xf]
    %v79 = vld [vmem:[%s0 + $0xf0] sm:$0xf]
    %v80 = vld [vmem:[%s0 + $0xf4] sm:$0xf]
    %v81 = vld [vmem:[%s0 + $0xf8] sm:$0xf]
    %v82 = vld [vmem:[%s0 + $0xfc] sm:$0xf]
    %v83 = vld [vmem:[%s0 + $0x100] sm:$0xf]
    %v84 = vld [vmem:[%s0 + $0x104] sm:$0xf]
    %v85 = vld [vmem:[%s0 + $0x108] sm:$0xf]
    %v86 = vld [vmem:[%s0 + $0x10c] sm:$0xf]
    %v87 = vld [vmem:[%s0 + $0x110] sm:$0xf]
    %v88 = vld [vmem:[%s0 + $0x114] sm:$0xf]
    %v89 = vld [vmem:[%s0 + $0x118] sm:$0xf]
    %v90 = vld [vmem:[%s0 + $0x11c] sm:$0xf]
    %v91 = vld [vmem:[%s0 + $0x120] sm:$0xf]
    %v92 = vld [vmem:[%s0 + $0x124] sm:$0xf]
    %v93 = vld [vmem:[%s0 + $0x128] sm:$0xf]
    %v94 = vld [vmem:[%s0 + $0x12c] sm:$0xf]
    %v95 = vld [vmem:[%s0 + $0x130] sm:$0xf]
    %v96 = vld [vmem:[%s0 + $0x134] sm:$0xf]
    %v97 = vld [vmem:[%s0 + $0x138] sm:$0xf]
    %v98 = vld [vmem:[%s0 + $0x13c] sm:$0xf]
    %v99 = vld [vmem:[%s0 + $0x140] sm:$0xf]
    %v100 = vld [vmem:[%s0 + $0x144] sm:$0xf]
    %v101 = vld [vmem:[%s0 + $0x148] sm:$0xf]
    %v102 = vld [vmem:[%s0 + $0x14c] sm:$0xf]
    %v103 = vld [vmem:[%s0 + $0x150] sm:$0xf]
    %v104 = vld [vmem:[%s0 + $0x154] sm:$0xf]
    %v105 = vld [vmem:[%s0 + $0x158] sm:$0xf]
    %v106 = vld [vmem:[%s0 + $0x15c] sm:$0xf]
    %v107 = vld [vmem:[%s0 + $0x160] sm:$0xf]
    %v108 = vld [vmem:[%s0 + $0x164] sm:$0xf]
    %v109 = vld [vmem:[%s0 + $0x168] sm:$0xf]
    %v110 = vld [vmem:[%s0 + $0x16c] sm:$0xf]
    %v111 = vld [vmem:[%s0 + $0x170] sm:$0xf]
    %v112 = vld [vmem:[%s0 + $0x174] sm:$0xf]
    %v113 = vld [vmem:[%s0 + $0x178] sm:$0xf]
    %v114 = vld [vmem:[%s0 + $0x17c] sm:$0xf]
    %v115 = vld [vmem:[%s0 + $0x180] sm:$0xf]
    %v116 = vld [vmem:[%s0 + $0x184] sm:$0xf]
    %v117 = vld [vmem:[%s0 + $0x188] sm:$0xf]
    %v118 = vld [vmem:[%s0 + $0x18c] sm:$0xf]
    %v119 = vld [vmem:[%s0 + $0x190] sm:$0xf]
    %v120 = vld [vmem:[%s0 + $0x194] sm:$0xf]
    %v121 = vld [vmem:[%s0 + $0x198] sm:$0xf]
    %v122 = vld [vmem:[%s0 + $0x19c] sm:$0xf]
    %v123 = vld [vmem:[%s0 + $0x1a0] sm:$0xf]
    %v124 = vld [vmem:[%s0 + $0x1a4] sm:$0xf]
    %v125 = vld [vmem:[%s0 + $0x1a8] sm:$0xf]
    %v126 = vld [vmem:[%s0 + $0x1ac] sm:$0xf]
    %v127 = vld [vmem:[%s0 + $0x1b0] sm:$0xf]
    %v128 = vld [vmem:[%s0 + $0x1b4] sm:$0xf]
    %v129 = vld [vmem:[%s0 + $0x1b8] sm:$0xf]
    %v130 = vld [vmem:[%s0 + $0x1bc] sm:$0xf]
    %v131 = vld [vmem:[%s0 + $0x1c0] sm:$0xf]
    %v132 = vld [vmem:[%s0 + $0x1c4] sm:$0xf]
    %v133 = vld [vmem:[%s0 + $0x1c8] sm:$0xf]
    %v134 = vld [vmem:[%s0 + $0x1cc] sm:$0xf]
    %v135 = vld [vmem:[%s0 + $0x1d0] sm:$0xf]
    %v136 = vld [vmem:[%s0 + $0x1d4] sm:$0xf]
    %v137 = vld [vmem:[%s0 + $0x1d8] sm:$0xf]
    %v138 = vld [vmem:[%s0 + $0x1dc] sm:$0xf]
    %v139 = vld [vmem:[%s0 + $0x1e0] sm:$0xf]
    %v140 = vld [vmem:[%s0 + $0x1e4] sm:$0xf]
    %v141 = vld [vmem:[%s0 + $0x1e8] sm:$0xf]
    %v142 = vld [vmem:[%s0 + $0x1ec] sm:$0xf]
    %v143 = vld [vmem:[%s0 + $0x1f0] sm:$0xf]
    %v144 = vld [vmem:[%s0 + $0x1f4] sm:$0xf]
    %v145 = vld [vmem:[%s0 + $0x1f8] sm:$0xf]
    %v146 = vld [vmem:[%s0 + $0x1fc] sm:$0xf]
    %v147 = vld [vmem:[%s1] sm:$0xf]
    %v148 = vld [vmem:[%s1 + $0x8] sm:$0xf]
    %v149 = vld [vmem:[%s1 + $0xc] sm:$0xf]
    %v150 = vld [vmem:[%s1 + $0x10] sm:$0xf]
    %v151 = vld [vmem:[%s1 + $0x14] sm:$0xf]
    %v152 = vld [vmem:[%s1 + $0x18] sm:$0xf]
    %v153 = vld [vmem:[%s1 + $0x1c] sm:$0xf]
    %v154 = vld [vmem:[%s1 + $0x20] sm:$0xf]
    %v155 = vld [vmem:[%s1 + $0x24] sm:$0xf]
    %v156 = vld [vmem:[%s1 + $0x28] sm:$0xf]
    %v157 = vld [vmem:[%s1 + $0x2c] sm:$0xf]
    %v158 = vld [vmem:[%s1 + $0x30] sm:$0xf]
    %v159 = vld [vmem:[%s1 + $0x34] sm:$0xf]
    %v160 = vld [vmem:[%s1 + $0x38] sm:$0xf]
    %v161 = vld [vmem:[%s1 + $0x3c] sm:$0xf]
    %v162 = vld [vmem:[%s1 + $0x40] sm:$0xf]
    %v163 = vld [vmem:[%s1 + $0x44] sm:$0xf]
    %v164 = vld [vmem:[%s1 + $0x48] sm:$0xf]
    %v165 = vld [vmem:[%s1 + $0x4c] sm:$0xf]
    %v166 = vld [vmem:[%s1 + $0x50] sm:$0xf]
    %v167 = vld [vmem:[%s1 + $0x54] sm:$0xf]
    %v168 = vld [vmem:[%s1 + $0x58] sm:$0xf]
    %v169 = vld [vmem:[%s1 + $0x5c] sm:$0xf]
    %v170 = vld [vmem:[%s1 + $0x60] sm:$0xf]
    %v171 = vld [vmem:[%s1 + $0x64] sm:$0xf]
    %v172 = vld [vmem:[%s1 + $0x68] sm:$0xf]
    %v173 = vld [vmem:[%s1 + $0x6c] sm:$0xf]
    %v174 = vld [vmem:[%s1 + $0x70] sm:$0xf]
    %v175 = vld [vmem:[%s1 + $0x74] sm:$0xf]
    %v176 = vld [vmem:[%s1 + $0x78] sm:$0xf]
    %v177 = vld [vmem:[%s1 + $0x7c] sm:$0xf]
    %v178 = vld [vmem:[%s1 + $0x80] sm:$0xf]
    %v179 = vld [vmem:[%s1 + $0x84] sm:$0xf]
    %v180 = vld [vmem:[%s1 + $0x88] sm:$0xf]
    %v181 = vld [vmem:[%s1 + $0x8c] sm:$0xf]
    %v182 = vld [vmem:[%s1 + $0x90] sm:$0xf]
    %v183 = vld [vmem:[%s1 + $0x94] sm:$0xf]
    %v312 = vunpack.c.l.b16 %v19
    %v313 = vunpack.c.l.b16 %v20
    %v314 = vunpack.c.l.b16 %v21
    %v315 = vunpack.c.l.b16 %v22
    %v316 = vunpack.c.l.b16 %v23
    %v317 = vunpack.c.l.b16 %v24
    %v318 = vunpack.c.l.b16 %v25
    %v319 = vunpack.c.l.b16 %v26
    %v320 = vunpack.c.l.b16 %v27
    %v321 = vunpack.c.l.b16 %v28
    %v322 = vunpack.c.l.b16 %v29
    %v323 = vunpack.c.l.b16 %v30
    %v324 = vunpack.c.l.b16 %v31
    %v325 = vunpack.c.l.b16 %v32
    %v326 = vunpack.c.l.b16 %v33
    %v327 = vunpack.c.l.b16 %v34
    %v328 = vunpack.c.l.b16 %v35
    %v329 = vunpack.c.l.b16 %v36
    %v330 = vunpack.c.l.b16 %v37
    %v331 = vunpack.c.l.b16 %v38
    %v332 = vunpack.c.l.b16 %v39
    %v333 = vunpack.c.l.b16 %v40
    %v334 = vunpack.c.l.b16 %v41
    %v335 = vunpack.c.l.b16 %v42
    %v336 = vunpack.c.l.b16 %v43
    %v337 = vunpack.c.l.b16 %v44
    %v338 = vunpack.c.l.b16 %v45
    %v339 = vunpack.c.l.b16 %v46
    %v340 = vunpack.c.l.b16 %v47
    %v341 = vunpack.c.l.b16 %v48
    %v342 = vunpack.c.l.b16 %v49
    %v343 = vunpack.c.l.b16 %v50
    %v344 = vunpack.c.l.b16 %v51
    %v345 = vunpack.c.l.b16 %v52
    %v346 = vunpack.c.l.b16 %v53
    %v347 = vunpack.c.l.b16 %v54
    %v348 = vunpack.c.l.b16 %v55
    %v349 = vunpack.c.l.b16 %v56
    %v350 = vunpack.c.l.b16 %v57
    %v351 = vunpack.c.l.b16 %v58
    %v352 = vunpack.c.l.b16 %v59
    %v353 = vunpack.c.l.b16 %v60
    %v354 = vunpack.c.l.b16 %v61
    %v355 = vunpack.c.l.b16 %v62
    %v356 = vunpack.c.l.b16 %v63
    %v357 = vunpack.c.l.b16 %v64
    %v358 = vunpack.c.l.b16 %v65
    %v359 = vunpack.c.l.b16 %v66
    %v360 = vunpack.c.l.b16 %v67
    %v361 = vunpack.c.l.b16 %v68
    %v362 = vunpack.c.l.b16 %v69
    %v363 = vunpack.c.l.b16 %v70
    %v364 = vunpack.c.l.b16 %v71
    %v365 = vunpack.c.l.b16 %v72
    %v366 = vunpack.c.l.b16 %v73
    %v367 = vunpack.c.l.b16 %v74
    %v368 = vunpack.c.l.b16 %v75
    %v369 = vunpack.c.l.b16 %v76
    %v370 = vunpack.c.l.b16 %v77
    %v371 = vunpack.c.l.b16 %v78
    %v372 = vunpack.c.l.b16 %v79
    %v373 = vunpack.c.l.b16 %v80
    %v374 = vunpack.c.l.b16 %v81
    %v375 = vunpack.c.l.b16 %v82
    %v376 = vunpack.c.l.b16 %v83
    %v377 = vunpack.c.l.b16 %v84
    %v378 = vunpack.c.l.b16 %v85
    %v379 = vunpack.c.l.b16 %v86
    %v380 = vunpack.c.l.b16 %v87
    %v381 = vunpack.c.l.b16 %v88
    %v382 = vunpack.c.l.b16 %v89
    %v383 = vunpack.c.l.b16 %v90
    %v384 = vunpack.c.l.b16 %v91
    %v385 = vunpack.c.l.b16 %v92
    %v386 = vunpack.c.l.b16 %v93
    %v387 = vunpack.c.l.b16 %v94
    %v388 = vunpack.c.l.b16 %v95
    %v389 = vunpack.c.l.b16 %v96
    %v390 = vunpack.c.l.b16 %v97
    %v391 = vunpack.c.l.b16 %v98
    %v392 = vunpack.c.l.b16 %v99
    %v393 = vunpack.c.l.b16 %v100
    %v394 = vunpack.c.l.b16 %v101
    %v395 = vunpack.c.l.b16 %v102
    %v396 = vunpack.c.l.b16 %v103
    %v397 = vunpack.c.l.b16 %v104
    %v398 = vunpack.c.l.b16 %v105
    %v399 = vunpack.c.l.b16 %v106
    %v400 = vunpack.c.l.b16 %v107
    %v401 = vunpack.c.l.b16 %v108
    %v402 = vunpack.c.l.b16 %v109
    %v403 = vunpack.c.l.b16 %v110
    %v404 = vunpack.c.l.b16 %v111
    %v405 = vunpack.c.l.b16 %v112
    %v406 = vunpack.c.l.b16 %v113
    %v407 = vunpack.c.l.b16 %v114
    %v408 = vunpack.c.l.b16 %v115
    %v409 = vunpack.c.l.b16 %v116
    %v410 = vunpack.c.l.b16 %v117
    %v411 = vunpack.c.l.b16 %v118
    %v412 = vunpack.c.l.b16 %v119
    %v413 = vunpack.c.l.b16 %v120
    %v414 = vunpack.c.l.b16 %v121
    %v415 = vunpack.c.l.b16 %v122
    %v416 = vunpack.c.l.b16 %v123
    %v417 = vunpack.c.l.b16 %v124
    %v418 = vunpack.c.l.b16 %v125
    %v419 = vunpack.c.l.b16 %v126
    %v420 = vunpack.c.l.b16 %v127
    %v421 = vunpack.c.l.b16 %v128
    %v422 = vunpack.c.l.b16 %v129
    %v423 = vunpack.c.l.b16 %v130
    %v424 = vunpack.c.l.b16 %v131
    %v425 = vunpack.c.l.b16 %v132
    %v426 = vunpack.c.l.b16 %v133
    %v427 = vunpack.c.l.b16 %v134
    %v428 = vunpack.c.l.b16 %v135
    %v429 = vunpack.c.l.b16 %v136
    %v430 = vunpack.c.l.b16 %v137
    %v431 = vunpack.c.l.b16 %v138
    %v432 = vunpack.c.l.b16 %v139
    %v433 = vunpack.c.l.b16 %v140
    %v434 = vunpack.c.l.b16 %v141
    %v435 = vunpack.c.l.b16 %v142
    %v436 = vunpack.c.l.b16 %v143
    %v437 = vunpack.c.l.b16 %v144
    %v438 = vunpack.c.l.b16 %v145
    %v439 = vunpack.c.l.b16 %v146
    %v440 = vpack.c.b16 %v313, %v312
    %v441 = vpack.c.b16 %v315, %v314
    %v442 = vpack.c.b16 %v317, %v316
    %v443 = vpack.c.b16 %v319, %v318
    %v444 = vpack.c.b16 %v321, %v320
    %v445 = vpack.c.b16 %v323, %v322
    %v446 = vpack.c.b16 %v325, %v324
    %v447 = vpack.c.b16 %v327, %v326
    %v448 = vpack.c.b16 %v329, %v328
    %v449 = vpack.c.b16 %v331, %v330
    %v450 = vpack.c.b16 %v333, %v332
    %v451 = vpack.c.b16 %v335, %v334
    %v452 = vpack.c.b16 %v337, %v336
    %v453 = vpack.c.b16 %v339, %v338
    %v454 = vpack.c.b16 %v341, %v340
    %v455 = vpack.c.b16 %v343, %v342
    %v456 = vpack.c.b16 %v345, %v344
    %v457 = vpack.c.b16 %v347, %v346
    %v458 = vpack.c.b16 %v349, %v348
    %v459 = vpack.c.b16 %v351, %v350
    %v460 = vpack.c.b16 %v353, %v352
    %v461 = vpack.c.b16 %v355, %v354
    %v462 = vpack.c.b16 %v357, %v356
    %v463 = vpack.c.b16 %v359, %v358
    %v464 = vpack.c.b16 %v361, %v360
    %v465 = vpack.c.b16 %v363, %v362
    %v466 = vpack.c.b16 %v365, %v364
    %v467 = vpack.c.b16 %v367, %v366
    %v468 = vpack.c.b16 %v369, %v368
    %v469 = vpack.c.b16 %v371, %v370
    %v470 = vpack.c.b16 %v373, %v372
    %v471 = vpack.c.b16 %v375, %v374
    %v472 = vpack.c.b16 %v377, %v376
    %v473 = vpack.c.b16 %v379, %v378
    %v474 = vpack.c.b16 %v381, %v380
    %v475 = vpack.c.b16 %v383, %v382
    %v476 = vpack.c.b16 %v385, %v384
    %v477 = vpack.c.b16 %v387, %v386
    %v478 = vpack.c.b16 %v389, %v388
    %v479 = vpack.c.b16 %v391, %v390
    %v480 = vpack.c.b16 %v393, %v392
    %v481 = vpack.c.b16 %v395, %v394
    %v482 = vpack.c.b16 %v397, %v396
    %v483 = vpack.c.b16 %v399, %v398
    %v484 = vpack.c.b16 %v401, %v400
    %v485 = vpack.c.b16 %v403, %v402
    %v486 = vpack.c.b16 %v405, %v404
    %v487 = vpack.c.b16 %v407, %v406
    %v488 = vpack.c.b16 %v409, %v408
    %v489 = vpack.c.b16 %v411, %v410
    %v490 = vpack.c.b16 %v413, %v412
    %v491 = vpack.c.b16 %v415, %v414
    %v492 = vpack.c.b16 %v417, %v416
    %v493 = vpack.c.b16 %v419, %v418
    %v494 = vpack.c.b16 %v421, %v420
    %v495 = vpack.c.b16 %v423, %v422
    %v496 = vpack.c.b16 %v425, %v424
    %v497 = vpack.c.b16 %v427, %v426
    %v498 = vpack.c.b16 %v429, %v428
    %v499 = vpack.c.b16 %v431, %v430
    %v500 = vpack.c.b16 %v433, %v432
    %v501 = vpack.c.b16 %v435, %v434
    %v502 = vpack.c.b16 %v437, %v436
    %v503 = vpack.c.b16 %v439, %v438
    %vm504 = vcmask 64512
    %v506 = vsel %vm504, %v440, 0
    %v509 = vsel %vm504, %v441, 0
    %v512 = vsel %vm504, %v442, 0
    %v515 = vsel %vm504, %v443, 0
    %v518 = vsel %vm504, %v444, 0
    %v521 = vsel %vm504, %v445, 0
    %v524 = vsel %vm504, %v446, 0
    %v527 = vsel %vm504, %v447, 0
    %v530 = vsel %vm504, %v448, 0
    %v533 = vsel %vm504, %v449, 0
    %v536 = vsel %vm504, %v450, 0
    %v539 = vsel %vm504, %v451, 0
    %v542 = vsel %vm504, %v452, 0
    %v545 = vsel %vm504, %v453, 0
    %v548 = vsel %vm504, %v454, 0
    %v551 = vsel %vm504, %v455, 0
    %v554 = vsel %vm504, %v456, 0
    %v557 = vsel %vm504, %v457, 0
    %v560 = vsel %vm504, %v458, 0
    %v563 = vsel %vm504, %v459, 0
    %v566 = vsel %vm504, %v460, 0
    %v569 = vsel %vm504, %v461, 0
    %v572 = vsel %vm504, %v462, 0
    %v575 = vsel %vm504, %v463, 0
    %v578 = vsel %vm504, %v464, 0
    %v581 = vsel %vm504, %v465, 0
    %v584 = vsel %vm504, %v466, 0
    %v587 = vsel %vm504, %v467, 0
    %v590 = vsel %vm504, %v468, 0
    %v593 = vsel %vm504, %v469, 0
    %v596 = vsel %vm504, %v470, 0
    %v599 = vsel %vm504, %v471, 0
    %v602 = vsel %vm504, %v472, 0
    %v605 = vsel %vm504, %v473, 0
    %v608 = vsel %vm504, %v474, 0
    %v611 = vsel %vm504, %v475, 0
    %v614 = vsel %vm504, %v476, 0
    %v617 = vsel %vm504, %v477, 0
    %v620 = vsel %vm504, %v478, 0
    %v623 = vsel %vm504, %v479, 0
    %v626 = vsel %vm504, %v480, 0
    %v629 = vsel %vm504, %v481, 0
    %v632 = vsel %vm504, %v482, 0
    %v635 = vsel %vm504, %v483, 0
    %v638 = vsel %vm504, %v484, 0
    %v641 = vsel %vm504, %v485, 0
    %v644 = vsel %vm504, %v486, 0
    %v647 = vsel %vm504, %v487, 0
    %v650 = vsel %vm504, %v488, 0
    %v653 = vsel %vm504, %v489, 0
    %v656 = vsel %vm504, %v490, 0
    %v659 = vsel %vm504, %v491, 0
    %v662 = vsel %vm504, %v492, 0
    %v665 = vsel %vm504, %v493, 0
    %v668 = vsel %vm504, %v494, 0
    %v671 = vsel %vm504, %v495, 0
    %v674 = vsel %vm504, %v496, 0
    %v677 = vsel %vm504, %v497, 0
    %v680 = vsel %vm504, %v498, 0
    %v683 = vsel %vm504, %v499, 0
    %v686 = vsel %vm504, %v500, 0
    %v689 = vsel %vm504, %v501, 0
    %v692 = vsel %vm504, %v502, 0
    %v695 = vsel %vm504, %v503, 0
    %vm697 = vcmask 1043456
    %v699 = vsel %vm697, %v147, 0
    %701 = vmatprep.subr.bf16.mxu0 0
    %702 = vmatpush1.bf16.msra.mxu0 %v699
    %703 = vmatprep.subr.bf16.mxu0 0
    %704 = vmatpush1.bf16.msra.mxu0 0
    %705 = vmatprep.subr.bf16.mxu0 0
    %706 = vmatpush1.bf16.msra.mxu0 0
    %707 = vmatprep.subr.bf16.mxu0 0
    %708 = vmatpush1.bf16.msra.mxu0 0
    %709 = vmatprep.subr.bf16.mxu0 0
    %710 = vmatpush1.bf16.msra.mxu0 0
    %711 = vmatprep.subr.bf16.mxu0 0
    %712 = vmatpush1.bf16.msra.mxu0 0
    %713 = vmatprep.subr.bf16.mxu0 0
    %714 = vmatpush1.bf16.msra.mxu0 0
    %715 = vmatprep.subr.bf16.mxu0 0
    %716 = vmatpush1.bf16.msra.mxu0 0
    %717 = vmatprep.subr.bf16.mxu0 0
    %718 = vmatpush1.bf16.msra.mxu0 0
    %719 = vmatprep.subr.bf16.mxu0 0
    %720 = vmatpush1.bf16.msra.mxu0 0
    %721 = vmatprep.subr.bf16.mxu0 0
    %722 = vmatpush1.bf16.msra.mxu0 0
    %723 = vmatprep.subr.bf16.mxu0 0
    %724 = vmatpush1.bf16.msra.mxu0 0
    %725 = vmatprep.subr.bf16.mxu0 0
    %726 = vmatpush1.bf16.msra.mxu0 0
    %727 = vmatprep.subr.bf16.mxu0 0
    %728 = vmatpush1.bf16.msra.mxu0 0
    %729 = vmatprep.subr.bf16.mxu0 0
    %730 = vmatpush1.bf16.msra.mxu0 0
    %731 = vmatprep.subr.bf16.mxu0 0
    %732 = vmatpush1.bf16.msra.mxu0 0
    %733 = vmatprep.mubr.bf16.mxu0 0
    %734 = vmatmul.mubr.bf16.gmra.mrb[0].mxu0 %v506
    %v735 = vpop.f32.mrb[0].mxu0
    %v736 = vadd.f32 0.0, %v735
    %v737 = vpop.f32.mrb[0].mxu0
    %v738 = vpop.f32.mrb[0].mxu0
    %v739 = vadd.f32 0.0, %v738
    %v740 = vpop.f32.mrb[0].mxu0
    %741 = vmatprep.mubr.bf16.mxu0 0
    %742 = vmatmul.mubr.bf16.gmra.mrb[0].mxu0 %v509
    %v743 = vpop.f32.mrb[0].mxu0
    %v744 = vadd.f32 0.0, %v743
    %v745 = vpop.f32.mrb[0].mxu0
    %v746 = vpop.f32.mrb[0].mxu0
    %v747 = vadd.f32 0.0, %v746
    %v748 = vpop.f32.mrb[0].mxu0
    %749 = vmatprep.mubr.bf16.mxu0 0
    %750 = vmatmul.mubr.bf16.gmra.mrb[0].mxu0 %v512
    %v751 = vpop.f32.mrb[0].mxu0
    %v752 = vadd.f32 0.0, %v751
    %v753 = vpop.f32.mrb[0].mxu0
    %v754 = vpop.f32.mrb[0].mxu0
    %v755 = vadd.f32 0.0, %v754
    %v756 = vpop.f32.mrb[0].mxu0
    %757 = vmatprep.mubr.bf16.mxu0 0
    %758 = vmatmul.mubr.bf16.gmra.mrb[0].mxu0 %v515
    %v759 = vpop.f32.mrb[0].mxu0
    %v760 = vadd.f32 0.0, %v759
    %v761 = vpop.f32.mrb[0].mxu0
    %v762 = vpop.f32.mrb[0].mxu0
    %v763 = vadd.f32 0.0, %v762
    %v764 = vpop.f32.mrb[0].mxu0
    %765 = vmatprep.mubr.bf16.mxu0 0
    %766 = vmatmul.mubr.bf16.gmra.mrb[0].mxu0 %v518
    %v767 = vpop.f32.mrb[0].mxu0
    %v768 = vadd.f32 0.0, %v767
    %v769 = vpop.f32.mrb[0].mxu0
    %v770 = vpop.f32.mrb[0].mxu0
    %v771 = vadd.f32 0.0, %v770
    %v772 = vpop.f32.mrb[0].mxu0
    %773 = vmatprep.mubr.bf16.mxu0 0
    %774 = vmatmul.mubr.bf16.gmra.mrb[0].mxu0 %v521
    %v775 = vpop.f32.mrb[0].mxu0
    %v776 = vadd.f32 0.0, %v775
    %v777 = vpop.f32.mrb[0].mxu0
    %v778 = vpop.f32.mrb[0].mxu0
    %v779 = vadd.f32 0.0, %v778
    %v780 = vpop.f32.mrb[0].mxu0
    %781 = vmatprep.mubr.bf16.mxu0 0
    %782 = vmatmul.mubr.bf16.gmra.mrb[0].mxu0 %v524
    %v783 = vpop.f32.mrb[0].mxu0
    %v784 = vadd.f32 0.0, %v783
    %v785 = vpop.f32.mrb[0].mxu0
    %v786 = vpop.f32.mrb[0].mxu0
    %v787 = vadd.f32 0.0, %v786
    %v788 = vpop.f32.mrb[0].mxu0
    %789 = vmatprep.mubr.bf16.mxu0 0
    %790 = vmatmul.mubr.bf16.gmra.mrb[0].mxu0 %v527
    %v791 = vpop.f32.mrb[0].mxu0
    %v792 = vadd.f32 0.0, %v791
    %v793 = vpop.f32.mrb[0].mxu0
    %v794 = vpop.f32.mrb[0].mxu0
    %v795 = vadd.f32 0.0, %v794
    %v796 = vpop.f32.mrb[0].mxu0
    %797 = vmatprep.mubr.bf16.mxu0 0
    %798 = vmatmul.mubr.bf16.gmra.mrb[0].mxu0 %v530
    %v799 = vpop.f32.mrb[0].mxu0
    %v800 = vadd.f32 0.0, %v799
    %v801 = vpop.f32.mrb[0].mxu0
    %v802 = vpop.f32.mrb[0].mxu0
    %v803 = vadd.f32 0.0, %v802
    %v804 = vpop.f32.mrb[0].mxu0
    %805 = vmatprep.mubr.bf16.mxu0 0
    %806 = vmatmul.mubr.bf16.gmra.mrb[0].mxu0 %v533
    %v807 = vpop.f32.mrb[0].mxu0
    %v808 = vadd.f32 0.0, %v807
    %v809 = vpop.f32.mrb[0].mxu0
    %v810 = vpop.f32.mrb[0].mxu0
    %v811 = vadd.f32 0.0, %v810
    %v812 = vpop.f32.mrb[0].mxu0
    %813 = vmatprep.mubr.bf16.mxu0 0
    %814 = vmatmul.mubr.bf16.gmra.mrb[0].mxu0 %v536
    %v815 = vpop.f32.mrb[0].mxu0
    %v816 = vadd.f32 0.0, %v815
    %v817 = vpop.f32.mrb[0].mxu0
    %v818 = vpop.f32.mrb[0].mxu0
    %v819 = vadd.f32 0.0, %v818
    %v820 = vpop.f32.mrb[0].mxu0
    %821 = vmatprep.mubr.bf16.mxu0 0
    %822 = vmatmul.mubr.bf16.gmra.mrb[0].mxu0 %v539
    %v823 = vpop.f32.mrb[0].mxu0
    %v824 = vadd.f32 0.0, %v823
    %v825 = vpop.f32.mrb[0].mxu0
    %v826 = vpop.f32.mrb[0].mxu0
    %v827 = vadd.f32 0.0, %v826
    %v828 = vpop.f32.mrb[0].mxu0
    %829 = vmatprep.mubr.bf16.mxu0 0
    %830 = vmatmul.mubr.bf16.gmra.mrb[0].mxu0 %v542
    %v831 = vpop.f32.mrb[0].mxu0
    %v832 = vadd.f32 0.0, %v831
    %v833 = vpop.f32.mrb[0].mxu0
    %v834 = vpop.f32.mrb[0].mxu0
    %v835 = vadd.f32 0.0, %v834
    %v836 = vpop.f32.mrb[0].mxu0
    %837 = vmatprep.mubr.bf16.mxu0 0
    %838 = vmatmul.mubr.bf16.gmra.mrb[0].mxu0 %v545
    %v839 = vpop.f32.mrb[0].mxu0
    %v840 = vadd.f32 0.0, %v839
    %v841 = vpop.f32.mrb[0].mxu0
    %v842 = vpop.f32.mrb[0].mxu0
    %v843 = vadd.f32 0.0, %v842
    %v844 = vpop.f32.mrb[0].mxu0
    %845 = vmatprep.mubr.bf16.mxu0 0
    %846 = vmatmul.mubr.bf16.gmra.mrb[0].mxu0 %v548
    %v847 = vpop.f32.mrb[0].mxu0
    %v848 = vadd.f32 0.0, %v847
    %v849 = vpop.f32.mrb[0].mxu0
    %v850 = vpop.f32.mrb[0].mxu0
    %v851 = vadd.f32 0.0, %v850
    %v852 = vpop.f32.mrb[0].mxu0
    %853 = vmatprep.mubr.bf16.mxu0 0
    %854 = vmatmul.mubr.bf16.gmra.mrb[0].mxu0 %v551
    %v855 = vpop.f32.mrb[0].mxu0
    %v856 = vadd.f32 0.0, %v855
    %v857 = vpop.f32.mrb[0].mxu0
    %v858 = vpop.f32.mrb[0].mxu0
    %v859 = vadd.f32 0.0, %v858
    %v860 = vpop.f32.mrb[0].mxu0
    %861 = vmatprep.mubr.bf16.mxu0 0
    %862 = vmatmul.mubr.bf16.gmra.mrb[0].mxu0 %v554
    %v863 = vpop.f32.mrb[0].mxu0
    %v864 = vadd.f32 0.0, %v863
    %v865 = vpop.f32.mrb[0].mxu0
    %v866 = vpop.f32.mrb[0].mxu0
    %v867 = vadd.f32 0.0, %v866
    %v868 = vpop.f32.mrb[0].mxu0
    %869 = vmatprep.mubr.bf16.mxu0 0
    %870 = vmatmul.mubr.bf16.gmra.mrb[0].mxu0 %v557
    %v871 = vpop.f32.mrb[0].mxu0
    %v872 = vadd.f32 0.0, %v871
    %v873 = vpop.f32.mrb[0].mxu0
    %v874 = vpop.f32.mrb[0].mxu0
    %v875 = vadd.f32 0.0, %v874
    %v876 = vpop.f32.mrb[0].mxu0
    %877 = vmatprep.mubr.bf16.mxu0 0
    %878 = vmatmul.mubr.bf16.gmra.mrb[0].mxu0 %v560
    %v879 = vpop.f32.mrb[0].mxu0
    %v880 = vadd.f32 0.0, %v879
    %v881 = vpop.f32.mrb[0].mxu0
    %v882 = vpop.f32.mrb[0].mxu0
    %v883 = vadd.f32 0.0, %v882
    %v884 = vpop.f32.mrb[0].mxu0
    %885 = vmatprep.mubr.bf16.mxu0 0
    %886 = vmatmul.mubr.bf16.gmra.mrb[0].mxu0 %v563
    %v887 = vpop.f32.mrb[0].mxu0
    %v888 = vadd.f32 0.0, %v887
    %v889 = vpop.f32.mrb[0].mxu0
    %v890 = vpop.f32.mrb[0].mxu0
    %v891 = vadd.f32 0.0, %v890
    %v892 = vpop.f32.mrb[0].mxu0
    %893 = vmatprep.mubr.bf16.mxu0 0
    %894 = vmatmul.mubr.bf16.gmra.mrb[0].mxu0 %v566
    %v895 = vpop.f32.mrb[0].mxu0
    %v896 = vadd.f32 0.0, %v895
    %v897 = vpop.f32.mrb[0].mxu0
    %v898 = vpop.f32.mrb[0].mxu0
    %v899 = vadd.f32 0.0, %v898
    %v900 = vpop.f32.mrb[0].mxu0
    %901 = vmatprep.mubr.bf16.mxu0 0
    %902 = vmatmul.mubr.bf16.gmra.mrb[0].mxu0 %v569
    %v903 = vpop.f32.mrb[0].mxu0
    %v904 = vadd.f32 0.0, %v903
    %v905 = vpop.f32.mrb[0].mxu0
    %v906 = vpop.f32.mrb[0].mxu0
    %v907 = vadd.f32 0.0, %v906
    %v908 = vpop.f32.mrb[0].mxu0
    %909 = vmatprep.mubr.bf16.mxu0 0
    %910 = vmatmul.mubr.bf16.gmra.mrb[0].mxu0 %v572
    %v911 = vpop.f32.mrb[0].mxu0
    %v912 = vadd.f32 0.0, %v911
    %v913 = vpop.f32.mrb[0].mxu0
    %v914 = vpop.f32.mrb[0].mxu0
    %v915 = vadd.f32 0.0, %v914
    %v916 = vpop.f32.mrb[0].mxu0
    %917 = vmatprep.mubr.bf16.mxu0 0
    %918 = vmatmul.mubr.bf16.gmra.mrb[0].mxu0 %v575
    %v919 = vpop.f32.mrb[0].mxu0
    %v920 = vadd.f32 0.0, %v919
    %v921 = vpop.f32.mrb[0].mxu0
    %v922 = vpop.f32.mrb[0].mxu0
    %v923 = vadd.f32 0.0, %v922
    %v924 = vpop.f32.mrb[0].mxu0
    %925 = vmatprep.mubr.bf16.mxu0 0
    %926 = vmatmul.mubr.bf16.gmra.mrb[0].mxu0 %v578
    %v927 = vpop.f32.mrb[0].mxu0
    %v928 = vadd.f32 0.0, %v927
    %v929 = vpop.f32.mrb[0].mxu0
    %v930 = vpop.f32.mrb[0].mxu0
    %v931 = vadd.f32 0.0, %v930
    %v932 = vpop.f32.mrb[0].mxu0
    %933 = vmatprep.mubr.bf16.mxu0 0
    %934 = vmatmul.mubr.bf16.gmra.mrb[0].mxu0 %v581
    %v935 = vpop.f32.mrb[0].mxu0
    %v936 = vadd.f32 0.0, %v935
    %v937 = vpop.f32.mrb[0].mxu0
    %v938 = vpop.f32.mrb[0].mxu0
    %v939 = vadd.f32 0.0, %v938
    %v940 = vpop.f32.mrb[0].mxu0
    %941 = vmatprep.mubr.bf16.mxu0 0
    %942 = vmatmul.mubr.bf16.gmra.mrb[0].mxu0 %v584
    %v943 = vpop.f32.mrb[0].mxu0
    %v944 = vadd.f32 0.0, %v943
    %v945 = vpop.f32.mrb[0].mxu0
    %v946 = vpop.f32.mrb[0].mxu0
    %v947 = vadd.f32 0.0, %v946
    %v948 = vpop.f32.mrb[0].mxu0
    %949 = vmatprep.mubr.bf16.mxu0 0
    %950 = vmatmul.mubr.bf16.gmra.mrb[0].mxu0 %v587
    %v951 = vpop.f32.mrb[0].mxu0
    %v952 = vadd.f32 0.0, %v951
    %v953 = vpop.f32.mrb[0].mxu0
    %v954 = vpop.f32.mrb[0].mxu0
    %v955 = vadd.f32 0.0, %v954
    %v956 = vpop.f32.mrb[0].mxu0
    %957 = vmatprep.mubr.bf16.mxu0 0
    %958 = vmatmul.mubr.bf16.gmra.mrb[0].mxu0 %v590
    %v959 = vpop.f32.mrb[0].mxu0
    %v960 = vadd.f32 0.0, %v959
    %v961 = vpop.f32.mrb[0].mxu0
    %v962 = vpop.f32.mrb[0].mxu0
    %v963 = vadd.f32 0.0, %v962
    %v964 = vpop.f32.mrb[0].mxu0
    %965 = vmatprep.mubr.bf16.mxu0 0
    %966 = vmatmul.mubr.bf16.gmra.mrb[0].mxu0 %v593
    %v967 = vpop.f32.mrb[0].mxu0
    %v968 = vadd.f32 0.0, %v967
    %v969 = vpop.f32.mrb[0].mxu0
    %v970 = vpop.f32.mrb[0].mxu0
    %v971 = vadd.f32 0.0, %v970
    %v972 = vpop.f32.mrb[0].mxu0
    %973 = vmatprep.mubr.bf16.mxu0 0
    %974 = vmatmul.mubr.bf16.gmra.mrb[0].mxu0 %v596
    %v975 = vpop.f32.mrb[0].mxu0
    %v976 = vadd.f32 0.0, %v975
    %v977 = vpop.f32.mrb[0].mxu0
    %v978 = vpop.f32.mrb[0].mxu0
    %v979 = vadd.f32 0.0, %v978
    %v980 = vpop.f32.mrb[0].mxu0
    %981 = vmatprep.mubr.bf16.mxu0 0
    %982 = vmatmul.mubr.bf16.gmra.mrb[0].mxu0 %v599
    %v983 = vpop.f32.mrb[0].mxu0
    %v984 = vadd.f32 0.0, %v983
    %v985 = vpop.f32.mrb[0].mxu0
    %v986 = vpop.f32.mrb[0].mxu0
    %v987 = vadd.f32 0.0, %v986
    %v988 = vpop.f32.mrb[0].mxu0
    %989 = vmatprep.mubr.bf16.mxu0 0
    %990 = vmatmul.mubr.bf16.gmra.mrb[0].mxu0 %v602
    %v991 = vpop.f32.mrb[0].mxu0
    %v992 = vadd.f32 0.0, %v991
    %v993 = vpop.f32.mrb[0].mxu0
    %v994 = vpop.f32.mrb[0].mxu0
    %v995 = vadd.f32 0.0, %v994
    %v996 = vpop.f32.mrb[0].mxu0
    %997 = vmatprep.mubr.bf16.mxu0 0
    %998 = vmatmul.mubr.bf16.gmra.mrb[0].mxu0 %v605
    %v999 = vpop.f32.mrb[0].mxu0
    %v1000 = vadd.f32 0.0, %v999
    %v1001 = vpop.f32.mrb[0].mxu0
    %v1002 = vpop.f32.mrb[0].mxu0
    %v1003 = vadd.f32 0.0, %v1002
    %v1004 = vpop.f32.mrb[0].mxu0
    %1005 = vmatprep.mubr.bf16.mxu0 0
    %1006 = vmatmul.mubr.bf16.gmra.mrb[0].mxu0 %v608
    %v1007 = vpop.f32.mrb[0].mxu0
    %v1008 = vadd.f32 0.0, %v1007
    %v1009 = vpop.f32.mrb[0].mxu0
    %v1010 = vpop.f32.mrb[0].mxu0
    %v1011 = vadd.f32 0.0, %v1010
    %v1012 = vpop.f32.mrb[0].mxu0
    %1013 = vmatprep.mubr.bf16.mxu0 0
    %1014 = vmatmul.mubr.bf16.gmra.mrb[0].mxu0 %v611
    %v1015 = vpop.f32.mrb[0].mxu0
    %v1016 = vadd.f32 0.0, %v1015
    %v1017 = vpop.f32.mrb[0].mxu0
    %v1018 = vpop.f32.mrb[0].mxu0
    %v1019 = vadd.f32 0.0, %v1018
    %v1020 = vpop.f32.mrb[0].mxu0
    %1021 = vmatprep.mubr.bf16.mxu0 0
    %1022 = vmatmul.mubr.bf16.gmra.mrb[0].mxu0 %v614
    %v1023 = vpop.f32.mrb[0].mxu0
    %v1024 = vadd.f32 0.0, %v1023
    %v1025 = vpop.f32.mrb[0].mxu0
    %v1026 = vpop.f32.mrb[0].mxu0
    %v1027 = vadd.f32 0.0, %v1026
    %v1028 = vpop.f32.mrb[0].mxu0
    %1029 = vmatprep.mubr.bf16.mxu0 0
    %1030 = vmatmul.mubr.bf16.gmra.mrb[0].mxu0 %v617
    %v1031 = vpop.f32.mrb[0].mxu0
    %v1032 = vadd.f32 0.0, %v1031
    %v1033 = vpop.f32.mrb[0].mxu0
    %v1034 = vpop.f32.mrb[0].mxu0
    %v1035 = vadd.f32 0.0, %v1034
    %v1036 = vpop.f32.mrb[0].mxu0
    %1037 = vmatprep.mubr.bf16.mxu0 0
    %1038 = vmatmul.mubr.bf16.gmra.mrb[0].mxu0 %v620
    %v1039 = vpop.f32.mrb[0].mxu0
    %v1040 = vadd.f32 0.0, %v1039
    %v1041 = vpop.f32.mrb[0].mxu0
    %v1042 = vpop.f32.mrb[0].mxu0
    %v1043 = vadd.f32 0.0, %v1042
    %v1044 = vpop.f32.mrb[0].mxu0
    %1045 = vmatprep.mubr.bf16.mxu0 0
    %1046 = vmatmul.mubr.bf16.gmra.mrb[0].mxu0 %v623
    %v1047 = vpop.f32.mrb[0].mxu0
    %v1048 = vadd.f32 0.0, %v1047
    %v1049 = vpop.f32.mrb[0].mxu0
    %v1050 = vpop.f32.mrb[0].mxu0
    %v1051 = vadd.f32 0.0, %v1050
    %v1052 = vpop.f32.mrb[0].mxu0
    %1053 = vmatprep.mubr.bf16.mxu0 0
    %1054 = vmatmul.mubr.bf16.gmra.mrb[0].mxu0 %v626
    %v1055 = vpop.f32.mrb[0].mxu0
    %v1056 = vadd.f32 0.0, %v1055
    %v1057 = vpop.f32.mrb[0].mxu0
    %v1058 = vpop.f32.mrb[0].mxu0
    %v1059 = vadd.f32 0.0, %v1058
    %v1060 = vpop.f32.mrb[0].mxu0
    %1061 = vmatprep.mubr.bf16.mxu0 0
    %1062 = vmatmul.mubr.bf16.gmra.mrb[0].mxu0 %v629
    %v1063 = vpop.f32.mrb[0].mxu0
    %v1064 = vadd.f32 0.0, %v1063
    %v1065 = vpop.f32.mrb[0].mxu0
    %v1066 = vpop.f32.mrb[0].mxu0
    %v1067 = vadd.f32 0.0, %v1066
    %v1068 = vpop.f32.mrb[0].mxu0
    %1069 = vmatprep.mubr.bf16.mxu0 0
    %1070 = vmatmul.mubr.bf16.gmra.mrb[0].mxu0 %v632
    %v1071 = vpop.f32.mrb[0].mxu0
    %v1072 = vadd.f32 0.0, %v1071
    %v1073 = vpop.f32.mrb[0].mxu0
    %v1074 = vpop.f32.mrb[0].mxu0
    %v1075 = vadd.f32 0.0, %v1074
    %v1076 = vpop.f32.mrb[0].mxu0
    %1077 = vmatprep.mubr.bf16.mxu0 0
    %1078 = vmatmul.mubr.bf16.gmra.mrb[0].mxu0 %v635
    %v1079 = vpop.f32.mrb[0].mxu0
    %v1080 = vadd.f32 0.0, %v1079
    %v1081 = vpop.f32.mrb[0].mxu0
    %v1082 = vpop.f32.mrb[0].mxu0
    %v1083 = vadd.f32 0.0, %v1082
    %v1084 = vpop.f32.mrb[0].mxu0
    %1085 = vmatprep.mubr.bf16.mxu0 0
    %1086 = vmatmul.mubr.bf16.gmra.mrb[0].mxu0 %v638
    %v1087 = vpop.f32.mrb[0].mxu0
    %v1088 = vadd.f32 0.0, %v1087
    %v1089 = vpop.f32.mrb[0].mxu0
    %v1090 = vpop.f32.mrb[0].mxu0
    %v1091 = vadd.f32 0.0, %v1090
    %v1092 = vpop.f32.mrb[0].mxu0
    %1093 = vmatprep.mubr.bf16.mxu0 0
    %1094 = vmatmul.mubr.bf16.gmra.mrb[0].mxu0 %v641
    %v1095 = vpop.f32.mrb[0].mxu0
    %v1096 = vadd.f32 0.0, %v1095
    %v1097 = vpop.f32.mrb[0].mxu0
    %v1098 = vpop.f32.mrb[0].mxu0
    %v1099 = vadd.f32 0.0, %v1098
    %v1100 = vpop.f32.mrb[0].mxu0
    %1101 = vmatprep.mubr.bf16.mxu0 0
    %1102 = vmatmul.mubr.bf16.gmra.mrb[0].mxu0 %v644
    %v1103 = vpop.f32.mrb[0].mxu0
    %v1104 = vadd.f32 0.0, %v1103
    %v1105 = vpop.f32.mrb[0].mxu0
    %v1106 = vpop.f32.mrb[0].mxu0
    %v1107 = vadd.f32 0.0, %v1106
    %v1108 = vpop.f32.mrb[0].mxu0
    %1109 = vmatprep.mubr.bf16.mxu0 0
    %1110 = vmatmul.mubr.bf16.gmra.mrb[0].mxu0 %v647
    %v1111 = vpop.f32.mrb[0].mxu0
    %v1112 = vadd.f32 0.0, %v1111
    %v1113 = vpop.f32.mrb[0].mxu0
    %v1114 = vpop.f32.mrb[0].mxu0
    %v1115 = vadd.f32 0.0, %v1114
    %v1116 = vpop.f32.mrb[0].mxu0
    %1117 = vmatprep.mubr.bf16.mxu0 0
    %1118 = vmatmul.mubr.bf16.gmra.mrb[0].mxu0 %v650
    %v1119 = vpop.f32.mrb[0].mxu0
    %v1120 = vadd.f32 0.0, %v1119
    %v1121 = vpop.f32.mrb[0].mxu0
    %v1122 = vpop.f32.mrb[0].mxu0
    %v1123 = vadd.f32 0.0, %v1122
    %v1124 = vpop.f32.mrb[0].mxu0
    %1125 = vmatprep.mubr.bf16.mxu0 0
    %1126 = vmatmul.mubr.bf16.gmra.mrb[0].mxu0 %v653
    %v1127 = vpop.f32.mrb[0].mxu0
    %v1128 = vadd.f32 0.0, %v1127
    %v1129 = vpop.f32.mrb[0].mxu0
    %v1130 = vpop.f32.mrb[0].mxu0
    %v1131 = vadd.f32 0.0, %v1130
    %v1132 = vpop.f32.mrb[0].mxu0
    %1133 = vmatprep.mubr.bf16.mxu0 0
    %1134 = vmatmul.mubr.bf16.gmra.mrb[0].mxu0 %v656
    %v1135 = vpop.f32.mrb[0].mxu0
    %v1136 = vadd.f32 0.0, %v1135
    %v1137 = vpop.f32.mrb[0].mxu0
    %v1138 = vpop.f32.mrb[0].mxu0
    %v1139 = vadd.f32 0.0, %v1138
    %v1140 = vpop.f32.mrb[0].mxu0
    %1141 = vmatprep.mubr.bf16.mxu0 0
    %1142 = vmatmul.mubr.bf16.gmra.mrb[0].mxu0 %v659
    %v1143 = vpop.f32.mrb[0].mxu0
    %v1144 = vadd.f32 0.0, %v1143
    %v1145 = vpop.f32.mrb[0].mxu0
    %v1146 = vpop.f32.mrb[0].mxu0
    %v1147 = vadd.f32 0.0, %v1146
    %v1148 = vpop.f32.mrb[0].mxu0
    %1149 = vmatprep.mubr.bf16.mxu0 0
    %1150 = vmatmul.mubr.bf16.gmra.mrb[0].mxu0 %v662
    %v1151 = vpop.f32.mrb[0].mxu0
    %v1152 = vadd.f32 0.0, %v1151
    %v1153 = vpop.f32.mrb[0].mxu0
    %v1154 = vpop.f32.mrb[0].mxu0
    %v1155 = vadd.f32 0.0, %v1154
    %v1156 = vpop.f32.mrb[0].mxu0
    %1157 = vmatprep.mubr.bf16.mxu0 0
    %1158 = vmatmul.mubr.bf16.gmra.mrb[0].mxu0 %v665
    %v1159 = vpop.f32.mrb[0].mxu0
    %v1160 = vadd.f32 0.0, %v1159
    %v1161 = vpop.f32.mrb[0].mxu0
    %v1162 = vpop.f32.mrb[0].mxu0
    %v1163 = vadd.f32 0.0, %v1162
    %v1164 = vpop.f32.mrb[0].mxu0
    %1165 = vmatprep.mubr.bf16.mxu0 0
    %1166 = vmatmul.mubr.bf16.gmra.mrb[0].mxu0 %v668
    %v1167 = vpop.f32.mrb[0].mxu0
    %v1168 = vadd.f32 0.0, %v1167
    %v1169 = vpop.f32.mrb[0].mxu0
    %v1170 = vpop.f32.mrb[0].mxu0
    %v1171 = vadd.f32 0.0, %v1170
    %v1172 = vpop.f32.mrb[0].mxu0
    %1173 = vmatprep.mubr.bf16.mxu0 0
    %1174 = vmatmul.mubr.bf16.gmra.mrb[0].mxu0 %v671
    %v1175 = vpop.f32.mrb[0].mxu0
    %v1176 = vadd.f32 0.0, %v1175
    %v1177 = vpop.f32.mrb[0].mxu0
    %v1178 = vpop.f32.mrb[0].mxu0
    %v1179 = vadd.f32 0.0, %v1178
    %v1180 = vpop.f32.mrb[0].mxu0
    %1181 = vmatprep.mubr.bf16.mxu0 0
    %1182 = vmatmul.mubr.bf16.gmra.mrb[0].mxu0 %v674
    %v1183 = vpop.f32.mrb[0].mxu0
    %v1184 = vadd.f32 0.0, %v1183
    %v1185 = vpop.f32.mrb[0].mxu0
    %v1186 = vpop.f32.mrb[0].mxu0
    %v1187 = vadd.f32 0.0, %v1186
    %v1188 = vpop.f32.mrb[0].mxu0
    %1189 = vmatprep.mubr.bf16.mxu0 0
    %1190 = vmatmul.mubr.bf16.gmra.mrb[0].mxu0 %v677
    %v1191 = vpop.f32.mrb[0].mxu0
    %v1192 = vadd.f32 0.0, %v1191
    %v1193 = vpop.f32.mrb[0].mxu0
    %v1194 = vpop.f32.mrb[0].mxu0
    %v1195 = vadd.f32 0.0, %v1194
    %v1196 = vpop.f32.mrb[0].mxu0
    %1197 = vmatprep.mubr.bf16.mxu0 0
    %1198 = vmatmul.mubr.bf16.gmra.mrb[0].mxu0 %v680
    %v1199 = vpop.f32.mrb[0].mxu0
    %v1200 = vadd.f32 0.0, %v1199
    %v1201 = vpop.f32.mrb[0].mxu0
    %v1202 = vpop.f32.mrb[0].mxu0
    %v1203 = vadd.f32 0.0, %v1202
    %v1204 = vpop.f32.mrb[0].mxu0
    %1205 = vmatprep.mubr.bf16.mxu0 0
    %1206 = vmatmul.mubr.bf16.gmra.mrb[0].mxu0 %v683
    %v1207 = vpop.f32.mrb[0].mxu0
    %v1208 = vadd.f32 0.0, %v1207
    %v1209 = vpop.f32.mrb[0].mxu0
    %v1210 = vpop.f32.mrb[0].mxu0
    %v1211 = vadd.f32 0.0, %v1210
    %v1212 = vpop.f32.mrb[0].mxu0
    %1213 = vmatprep.mubr.bf16.mxu0 0
    %1214 = vmatmul.mubr.bf16.gmra.mrb[0].mxu0 %v686
    %v1215 = vpop.f32.mrb[0].mxu0
    %v1216 = vadd.f32 0.0, %v1215
    %v1217 = vpop.f32.mrb[0].mxu0
    %v1218 = vpop.f32.mrb[0].mxu0
    %v1219 = vadd.f32 0.0, %v1218
    %v1220 = vpop.f32.mrb[0].mxu0
    %1221 = vmatprep.mubr.bf16.mxu0 0
    %1222 = vmatmul.mubr.bf16.gmra.mrb[0].mxu0 %v689
    %v1223 = vpop.f32.mrb[0].mxu0
    %v1224 = vadd.f32 0.0, %v1223
    %v1225 = vpop.f32.mrb[0].mxu0
    %v1226 = vpop.f32.mrb[0].mxu0
    %v1227 = vadd.f32 0.0, %v1226
    %v1228 = vpop.f32.mrb[0].mxu0
    %1229 = vmatprep.mubr.bf16.mxu0 0
    %1230 = vmatmul.mubr.bf16.gmra.mrb[0].mxu0 %v692
    %v1231 = vpop.f32.mrb[0].mxu0
    %v1232 = vadd.f32 0.0, %v1231
    %v1233 = vpop.f32.mrb[0].mxu0
    %v1234 = vpop.f32.mrb[0].mxu0
    %v1235 = vadd.f32 0.0, %v1234
    %v1236 = vpop.f32.mrb[0].mxu0
    %1237 = vmatprep.mubr.bf16.mxu0 0
    %1238 = vmatmul.mubr.bf16.gmra.mrb[0].mxu0 %v695
    %v1239 = vpop.f32.mrb[0].mxu0
    %v1240 = vadd.f32 0.0, %v1239
    %v1241 = vpop.f32.mrb[0].mxu0
    %v1242 = vpop.f32.mrb[0].mxu0
    %v1243 = vadd.f32 0.0, %v1242
    %v1244 = vpop.f32.mrb[0].mxu0
    %1245 = vdwg.mxu0
    %v1246 = vmax.f32 %v736, 0.0
    %v1247 = vmax.f32 %v739, 0.0
    %v1248 = vmax.f32 %v744, 0.0
    %v1249 = vmax.f32 %v747, 0.0
    %v1250 = vmax.f32 %v752, 0.0
    %v1251 = vmax.f32 %v755, 0.0
    %v1252 = vmax.f32 %v760, 0.0
    %v1253 = vmax.f32 %v763, 0.0
    %v1254 = vmax.f32 %v768, 0.0
    %v1255 = vmax.f32 %v771, 0.0
    %v1256 = vmax.f32 %v776, 0.0
    %v1257 = vmax.f32 %v779, 0.0
    %v1258 = vmax.f32 %v784, 0.0
    %v1259 = vmax.f32 %v787, 0.0
    %v1260 = vmax.f32 %v792, 0.0
    %v1261 = vmax.f32 %v795, 0.0
    %v1262 = vmax.f32 %v800, 0.0
    %v1263 = vmax.f32 %v803, 0.0
    %v1264 = vmax.f32 %v808, 0.0
    %v1265 = vmax.f32 %v811, 0.0
    %v1266 = vmax.f32 %v816, 0.0
    %v1267 = vmax.f32 %v819, 0.0
    %v1268 = vmax.f32 %v824, 0.0
    %v1269 = vmax.f32 %v827, 0.0
    %v1270 = vmax.f32 %v832, 0.0
    %v1271 = vmax.f32 %v835, 0.0
    %v1272 = vmax.f32 %v840, 0.0
    %v1273 = vmax.f32 %v843, 0.0
    %v1274 = vmax.f32 %v848, 0.0
    %v1275 = vmax.f32 %v851, 0.0
    %v1276 = vmax.f32 %v856, 0.0
    %v1277 = vmax.f32 %v859, 0.0
    %v1278 = vmax.f32 %v864, 0.0
    %v1279 = vmax.f32 %v867, 0.0
    %v1280 = vmax.f32 %v872, 0.0
    %v1281 = vmax.f32 %v875, 0.0
    %v1282 = vmax.f32 %v880, 0.0
    %v1283 = vmax.f32 %v883, 0.0
    %v1284 = vmax.f32 %v888, 0.0
    %v1285 = vmax.f32 %v891, 0.0
    %v1286 = vmax.f32 %v896, 0.0
    %v1287 = vmax.f32 %v899, 0.0
    %v1288 = vmax.f32 %v904, 0.0
    %v1289 = vmax.f32 %v907, 0.0
    %v1290 = vmax.f32 %v912, 0.0
    %v1291 = vmax.f32 %v915, 0.0
    %v1292 = vmax.f32 %v920, 0.0
    %v1293 = vmax.f32 %v923, 0.0
    %v1294 = vmax.f32 %v928, 0.0
    %v1295 = vmax.f32 %v931, 0.0
    %v1296 = vmax.f32 %v936, 0.0
    %v1297 = vmax.f32 %v939, 0.0
    %v1298 = vmax.f32 %v944, 0.0
    %v1299 = vmax.f32 %v947, 0.0
    %v1300 = vmax.f32 %v952, 0.0
    %v1301 = vmax.f32 %v955, 0.0
    %v1302 = vmax.f32 %v960, 0.0
    %v1303 = vmax.f32 %v963, 0.0
    %v1304 = vmax.f32 %v968, 0.0
    %v1305 = vmax.f32 %v971, 0.0
    %v1306 = vmax.f32 %v976, 0.0
    %v1307 = vmax.f32 %v979, 0.0
    %v1308 = vmax.f32 %v984, 0.0
    %v1309 = vmax.f32 %v987, 0.0
    %v1310 = vmax.f32 %v992, 0.0
    %v1311 = vmax.f32 %v995, 0.0
    %v1312 = vmax.f32 %v1000, 0.0
    %v1313 = vmax.f32 %v1003, 0.0
    %v1314 = vmax.f32 %v1008, 0.0
    %v1315 = vmax.f32 %v1011, 0.0
    %v1316 = vmax.f32 %v1016, 0.0
    %v1317 = vmax.f32 %v1019, 0.0
    %v1318 = vmax.f32 %v1024, 0.0
    %v1319 = vmax.f32 %v1027, 0.0
    %v1320 = vmax.f32 %v1032, 0.0
    %v1321 = vmax.f32 %v1035, 0.0
    %v1322 = vmax.f32 %v1040, 0.0
    %v1323 = vmax.f32 %v1043, 0.0
    %v1324 = vmax.f32 %v1048, 0.0
    %v1325 = vmax.f32 %v1051, 0.0
    %v1326 = vmax.f32 %v1056, 0.0
    %v1327 = vmax.f32 %v1059, 0.0
    %v1328 = vmax.f32 %v1064, 0.0
    %v1329 = vmax.f32 %v1067, 0.0
    %v1330 = vmax.f32 %v1072, 0.0
    %v1331 = vmax.f32 %v1075, 0.0
    %v1332 = vmax.f32 %v1080, 0.0
    %v1333 = vmax.f32 %v1083, 0.0
    %v1334 = vmax.f32 %v1088, 0.0
    %v1335 = vmax.f32 %v1091, 0.0
    %v1336 = vmax.f32 %v1096, 0.0
    %v1337 = vmax.f32 %v1099, 0.0
    %v1338 = vmax.f32 %v1104, 0.0
    %v1339 = vmax.f32 %v1107, 0.0
    %v1340 = vmax.f32 %v1112, 0.0
    %v1341 = vmax.f32 %v1115, 0.0
    %v1342 = vmax.f32 %v1120, 0.0
    %v1343 = vmax.f32 %v1123, 0.0
    %v1344 = vmax.f32 %v1128, 0.0
    %v1345 = vmax.f32 %v1131, 0.0
    %v1346 = vmax.f32 %v1136, 0.0
    %v1347 = vmax.f32 %v1139, 0.0
    %v1348 = vmax.f32 %v1144, 0.0
    %v1349 = vmax.f32 %v1147, 0.0
    %v1350 = vmax.f32 %v1152, 0.0
    %v1351 = vmax.f32 %v1155, 0.0
    %v1352 = vmax.f32 %v1160, 0.0
    %v1353 = vmax.f32 %v1163, 0.0
    %v1354 = vmax.f32 %v1168, 0.0
    %v1355 = vmax.f32 %v1171, 0.0
    %v1356 = vmax.f32 %v1176, 0.0
    %v1357 = vmax.f32 %v1179, 0.0
    %v1358 = vmax.f32 %v1184, 0.0
    %v1359 = vmax.f32 %v1187, 0.0
    %v1360 = vmax.f32 %v1192, 0.0
    %v1361 = vmax.f32 %v1195, 0.0
    %v1362 = vmax.f32 %v1200, 0.0
    %v1363 = vmax.f32 %v1203, 0.0
    %v1364 = vmax.f32 %v1208, 0.0
    %v1365 = vmax.f32 %v1211, 0.0
    %v1366 = vmax.f32 %v1216, 0.0
    %v1367 = vmax.f32 %v1219, 0.0
    %v1368 = vmax.f32 %v1224, 0.0
    %v1369 = vmax.f32 %v1227, 0.0
    %v1370 = vmax.f32 %v1232, 0.0
    %v1371 = vmax.f32 %v1235, 0.0
    %v1372 = vmax.f32 %v1240, 0.0
    %v1373 = vmax.f32 %v1243, 0.0
    %v1374 = vpack.c.bf16 %v1247, %v1246
    %v1375 = vpack.c.bf16 %v1249, %v1248
    %v1376 = vpack.c.bf16 %v1251, %v1250
    %v1377 = vpack.c.bf16 %v1253, %v1252
    %v1378 = vpack.c.bf16 %v1255, %v1254
    %v1379 = vpack.c.bf16 %v1257, %v1256
    %v1380 = vpack.c.bf16 %v1259, %v1258
    %v1381 = vpack.c.bf16 %v1261, %v1260
    %v1382 = vpack.c.bf16 %v1263, %v1262
    %v1383 = vpack.c.bf16 %v1265, %v1264
    %v1384 = vpack.c.bf16 %v1267, %v1266
    %v1385 = vpack.c.bf16 %v1269, %v1268
    %v1386 = vpack.c.bf16 %v1271, %v1270
    %v1387 = vpack.c.bf16 %v1273, %v1272
    %v1388 = vpack.c.bf16 %v1275, %v1274
    %v1389 = vpack.c.bf16 %v1277, %v1276
    %v1390 = vpack.c.bf16 %v1279, %v1278
    %v1391 = vpack.c.bf16 %v1281, %v1280
    %v1392 = vpack.c.bf16 %v1283, %v1282
    %v1393 = vpack.c.bf16 %v1285, %v1284
    %v1394 = vpack.c.bf16 %v1287, %v1286
    %v1395 = vpack.c.bf16 %v1289, %v1288
    %v1396 = vpack.c.bf16 %v1291, %v1290
    %v1397 = vpack.c.bf16 %v1293, %v1292
    %v1398 = vpack.c.bf16 %v1295, %v1294
    %v1399 = vpack.c.bf16 %v1297, %v1296
    %v1400 = vpack.c.bf16 %v1299, %v1298
    %v1401 = vpack.c.bf16 %v1301, %v1300
    %v1402 = vpack.c.bf16 %v1303, %v1302
    %v1403 = vpack.c.bf16 %v1305, %v1304
    %v1404 = vpack.c.bf16 %v1307, %v1306
    %v1405 = vpack.c.bf16 %v1309, %v1308
    %v1406 = vpack.c.bf16 %v1311, %v1310
    %v1407 = vpack.c.bf16 %v1313, %v1312
    %v1408 = vpack.c.bf16 %v1315, %v1314
    %v1409 = vpack.c.bf16 %v1317, %v1316
    %v1410 = vpack.c.bf16 %v1319, %v1318
    %v1411 = vpack.c.bf16 %v1321, %v1320
    %v1412 = vpack.c.bf16 %v1323, %v1322
    %v1413 = vpack.c.bf16 %v1325, %v1324
    %v1414 = vpack.c.bf16 %v1327, %v1326
    %v1415 = vpack.c.bf16 %v1329, %v1328
    %v1416 = vpack.c.bf16 %v1331, %v1330
    %v1417 = vpack.c.bf16 %v1333, %v1332
    %v1418 = vpack.c.bf16 %v1335, %v1334
    %v1419 = vpack.c.bf16 %v1337, %v1336
    %v1420 = vpack.c.bf16 %v1339, %v1338
    %v1421 = vpack.c.bf16 %v1341, %v1340
    %v1422 = vpack.c.bf16 %v1343, %v1342
    %v1423 = vpack.c.bf16 %v1345, %v1344
    %v1424 = vpack.c.bf16 %v1347, %v1346
    %v1425 = vpack.c.bf16 %v1349, %v1348
    %v1426 = vpack.c.bf16 %v1351, %v1350
    %v1427 = vpack.c.bf16 %v1353, %v1352
    %v1428 = vpack.c.bf16 %v1355, %v1354
    %v1429 = vpack.c.bf16 %v1357, %v1356
    %v1430 = vpack.c.bf16 %v1359, %v1358
    %v1431 = vpack.c.bf16 %v1361, %v1360
    %v1432 = vpack.c.bf16 %v1363, %v1362
    %v1433 = vpack.c.bf16 %v1365, %v1364
    %v1434 = vpack.c.bf16 %v1367, %v1366
    %v1435 = vpack.c.bf16 %v1369, %v1368
    %v1436 = vpack.c.bf16 %v1371, %v1370
    %v1437 = vpack.c.bf16 %v1373, %v1372
    %1498 = vrot.lane.b32.xlu0 %v1374, 96
    %v1499 = vpop.permute.xlu0 %1498
    %1500 = vrot.lane.b32.xlu0 %v1375, 96
    %v1501 = vpop.permute.xlu0 %1500
    %1502 = vrot.lane.b32.xlu0 %v1376, 96
    %v1503 = vpop.permute.xlu0 %1502
    %1504 = vrot.lane.b32.xlu0 %v1377, 96
    %v1505 = vpop.permute.xlu0 %1504
    %1506 = vrot.lane.b32.xlu0 %v1378, 96
    %v1507 = vpop.permute.xlu0 %1506
    %1508 = vrot.lane.b32.xlu0 %v1379, 96
    %v1509 = vpop.permute.xlu0 %1508
    %1510 = vrot.lane.b32.xlu0 %v1380, 96
    %v1511 = vpop.permute.xlu0 %1510
    %1512 = vrot.lane.b32.xlu0 %v1381, 96
    %v1513 = vpop.permute.xlu0 %1512
    %1514 = vrot.lane.b32.xlu0 %v1382, 96
    %v1515 = vpop.permute.xlu0 %1514
    %1516 = vrot.lane.b32.xlu0 %v1383, 96
    %v1517 = vpop.permute.xlu0 %1516
    %1518 = vrot.lane.b32.xlu0 %v1384, 96
    %v1519 = vpop.permute.xlu0 %1518
    %1520 = vrot.lane.b32.xlu0 %v1385, 96
    %v1521 = vpop.permute.xlu0 %1520
    %1522 = vrot.lane.b32.xlu0 %v1386, 96
    %v1523 = vpop.permute.xlu0 %1522
    %1524 = vrot.lane.b32.xlu0 %v1387, 96
    %v1525 = vpop.permute.xlu0 %1524
    %1526 = vrot.lane.b32.xlu0 %v1388, 96
    %v1527 = vpop.permute.xlu0 %1526
    %1528 = vrot.lane.b32.xlu0 %v1389, 96
    %v1529 = vpop.permute.xlu0 %1528
    %1530 = vrot.lane.b32.xlu0 %v1390, 96
    %v1531 = vpop.permute.xlu0 %1530
    %1532 = vrot.lane.b32.xlu0 %v1391, 96
    %v1533 = vpop.permute.xlu0 %1532
    %1534 = vrot.lane.b32.xlu0 %v1392, 96
    %v1535 = vpop.permute.xlu0 %1534
    %1536 = vrot.lane.b32.xlu0 %v1393, 96
    %v1537 = vpop.permute.xlu0 %1536
    %1538 = vrot.lane.b32.xlu0 %v1394, 96
    %v1539 = vpop.permute.xlu0 %1538
    %1540 = vrot.lane.b32.xlu0 %v1395, 96
    %v1541 = vpop.permute.xlu0 %1540
    %1542 = vrot.lane.b32.xlu0 %v1396, 96
    %v1543 = vpop.permute.xlu0 %1542
    %1544 = vrot.lane.b32.xlu0 %v1397, 96
    %v1545 = vpop.permute.xlu0 %1544
    %1546 = vrot.lane.b32.xlu0 %v1398, 96
    %v1547 = vpop.permute.xlu0 %1546
    %1548 = vrot.lane.b32.xlu0 %v1399, 96
    %v1549 = vpop.permute.xlu0 %1548
    %1550 = vrot.lane.b32.xlu0 %v1400, 96
    %v1551 = vpop.permute.xlu0 %1550
    %1552 = vrot.lane.b32.xlu0 %v1401, 96
    %v1553 = vpop.permute.xlu0 %1552
    %1554 = vrot.lane.b32.xlu0 %v1402, 96
    %v1555 = vpop.permute.xlu0 %1554
    %1556 = vrot.lane.b32.xlu0 %v1403, 96
    %v1557 = vpop.permute.xlu0 %1556
    %1558 = vrot.lane.b32.xlu0 %v1406, 96
    %v1559 = vpop.permute.xlu0 %1558
    %1560 = vrot.lane.b32.xlu0 %v1407, 96
    %v1561 = vpop.permute.xlu0 %1560
    %1562 = vrot.lane.b32.xlu0 %v1408, 96
    %v1563 = vpop.permute.xlu0 %1562
    %1564 = vrot.lane.b32.xlu0 %v1409, 96
    %v1565 = vpop.permute.xlu0 %1564
    %1566 = vrot.lane.b32.xlu0 %v1410, 96
    %v1567 = vpop.permute.xlu0 %1566
    %1568 = vrot.lane.b32.xlu0 %v1411, 96
    %v1569 = vpop.permute.xlu0 %1568
    %1570 = vrot.lane.b32.xlu0 %v1412, 96
    %v1571 = vpop.permute.xlu0 %1570
    %1572 = vrot.lane.b32.xlu0 %v1413, 96
    %v1573 = vpop.permute.xlu0 %1572
    %1574 = vrot.lane.b32.xlu0 %v1414, 96
    %v1575 = vpop.permute.xlu0 %1574
    %1576 = vrot.lane.b32.xlu0 %v1415, 96
    %v1577 = vpop.permute.xlu0 %1576
    %1578 = vrot.lane.b32.xlu0 %v1416, 96
    %v1579 = vpop.permute.xlu0 %1578
    %1580 = vrot.lane.b32.xlu0 %v1417, 96
    %v1581 = vpop.permute.xlu0 %1580
    %1582 = vrot.lane.b32.xlu0 %v1418, 96
    %v1583 = vpop.permute.xlu0 %1582
    %1584 = vrot.lane.b32.xlu0 %v1419, 96
    %v1585 = vpop.permute.xlu0 %1584
    %1586 = vrot.lane.b32.xlu0 %v1420, 96
    %v1587 = vpop.permute.xlu0 %1586
    %1588 = vrot.lane.b32.xlu0 %v1421, 96
    %v1589 = vpop.permute.xlu0 %1588
    %1590 = vrot.lane.b32.xlu0 %v1422, 96
    %v1591 = vpop.permute.xlu0 %1590
    %1592 = vrot.lane.b32.xlu0 %v1423, 96
    %v1593 = vpop.permute.xlu0 %1592
    %1594 = vrot.lane.b32.xlu0 %v1424, 96
    %v1595 = vpop.permute.xlu0 %1594
    %1596 = vrot.lane.b32.xlu0 %v1425, 96
    %v1597 = vpop.permute.xlu0 %1596
    %1598 = vrot.lane.b32.xlu0 %v1426, 96
    %v1599 = vpop.permute.xlu0 %1598
    %1600 = vrot.lane.b32.xlu0 %v1427, 96
    %v1601 = vpop.permute.xlu0 %1600
    %1602 = vrot.lane.b32.xlu0 %v1428, 96
    %v1603 = vpop.permute.xlu0 %1602
    %1604 = vrot.lane.b32.xlu0 %v1429, 96
    %v1605 = vpop.permute.xlu0 %1604
    %1606 = vrot.lane.b32.xlu0 %v1430, 96
    %v1607 = vpop.permute.xlu0 %1606
    %1608 = vrot.lane.b32.xlu0 %v1431, 96
    %v1609 = vpop.permute.xlu0 %1608
    %1610 = vrot.lane.b32.xlu0 %v1432, 96
    %v1611 = vpop.permute.xlu0 %1610
    %1612 = vrot.lane.b32.xlu0 %v1433, 96
    %v1613 = vpop.permute.xlu0 %1612
    %1614 = vrot.lane.b32.xlu0 %v1434, 96
    %v1615 = vpop.permute.xlu0 %1614
    %1616 = vrot.lane.b32.xlu0 %v1435, 96
    %v1617 = vpop.permute.xlu0 %1616
    %1620 = vrot.lane.b32.xlu0 %v1404, 96
    %v1621 = vpop.permute.xlu0 %1620
    %1622 = vrot.lane.b32.xlu0 %v1436, 96
    %v1623 = vpop.permute.xlu0 %1622
    %1626 = vrot.lane.b32.xlu0 %v1374, 32
    %v1627 = vpop.permute.xlu0 %1626
    %1628 = vrot.lane.b32.xlu0 %v1375, 32
    %v1629 = vpop.permute.xlu0 %1628
    %1630 = vrot.lane.b32.xlu0 %v1376, 32
    %v1631 = vpop.permute.xlu0 %1630
    %1632 = vrot.lane.b32.xlu0 %v1377, 32
    %v1633 = vpop.permute.xlu0 %1632
    %1634 = vrot.lane.b32.xlu0 %v1378, 32
    %v1635 = vpop.permute.xlu0 %1634
    %1636 = vrot.lane.b32.xlu0 %v1379, 32
    %v1637 = vpop.permute.xlu0 %1636
    %1638 = vrot.lane.b32.xlu0 %v1380, 32
    %v1639 = vpop.permute.xlu0 %1638
    %1640 = vrot.lane.b32.xlu0 %v1381, 32
    %v1641 = vpop.permute.xlu0 %1640
    %1642 = vrot.lane.b32.xlu0 %v1382, 32
    %v1643 = vpop.permute.xlu0 %1642
    %1644 = vrot.lane.b32.xlu0 %v1383, 32
    %v1645 = vpop.permute.xlu0 %1644
    %1646 = vrot.lane.b32.xlu0 %v1384, 32
    %v1647 = vpop.permute.xlu0 %1646
    %1648 = vrot.lane.b32.xlu0 %v1385, 32
    %v1649 = vpop.permute.xlu0 %1648
    %1650 = vrot.lane.b32.xlu0 %v1386, 32
    %v1651 = vpop.permute.xlu0 %1650
    %1652 = vrot.lane.b32.xlu0 %v1387, 32
    %v1653 = vpop.permute.xlu0 %1652
    %1654 = vrot.lane.b32.xlu0 %v1388, 32
    %v1655 = vpop.permute.xlu0 %1654
    %1656 = vrot.lane.b32.xlu0 %v1389, 32
    %v1657 = vpop.permute.xlu0 %1656
    %1658 = vrot.lane.b32.xlu0 %v1390, 32
    %v1659 = vpop.permute.xlu0 %1658
    %1660 = vrot.lane.b32.xlu0 %v1391, 32
    %v1661 = vpop.permute.xlu0 %1660
    %1662 = vrot.lane.b32.xlu0 %v1392, 32
    %v1663 = vpop.permute.xlu0 %1662
    %1664 = vrot.lane.b32.xlu0 %v1393, 32
    %v1665 = vpop.permute.xlu0 %1664
    %1666 = vrot.lane.b32.xlu0 %v1394, 32
    %v1667 = vpop.permute.xlu0 %1666
    %1668 = vrot.lane.b32.xlu0 %v1395, 32
    %v1669 = vpop.permute.xlu0 %1668
    %1670 = vrot.lane.b32.xlu0 %v1396, 32
    %v1671 = vpop.permute.xlu0 %1670
    %1672 = vrot.lane.b32.xlu0 %v1397, 32
    %v1673 = vpop.permute.xlu0 %1672
    %1674 = vrot.lane.b32.xlu0 %v1398, 32
    %v1675 = vpop.permute.xlu0 %1674
    %1676 = vrot.lane.b32.xlu0 %v1399, 32
    %v1677 = vpop.permute.xlu0 %1676
    %1678 = vrot.lane.b32.xlu0 %v1400, 32
    %v1679 = vpop.permute.xlu0 %1678
    %1680 = vrot.lane.b32.xlu0 %v1401, 32
    %v1681 = vpop.permute.xlu0 %1680
    %1682 = vrot.lane.b32.xlu0 %v1402, 32
    %v1683 = vpop.permute.xlu0 %1682
    %1684 = vrot.lane.b32.xlu0 %v1403, 32
    %v1685 = vpop.permute.xlu0 %1684
    %1686 = vrot.lane.b32.xlu0 %v1404, 32
    %v1687 = vpop.permute.xlu0 %1686
    %1688 = vrot.lane.b32.xlu0 %v1405, 32
    %v1689 = vpop.permute.xlu0 %1688
    %1690 = vrot.lane.b32.xlu0 %v1406, 32
    %v1691 = vpop.permute.xlu0 %1690
    %1692 = vrot.lane.b32.xlu0 %v1407, 32
    %v1693 = vpop.permute.xlu0 %1692
    %1694 = vrot.lane.b32.xlu0 %v1408, 32
    %v1695 = vpop.permute.xlu0 %1694
    %1696 = vrot.lane.b32.xlu0 %v1409, 32
    %v1697 = vpop.permute.xlu0 %1696
    %1698 = vrot.lane.b32.xlu0 %v1410, 32
    %v1699 = vpop.permute.xlu0 %1698
    %1700 = vrot.lane.b32.xlu0 %v1411, 32
    %v1701 = vpop.permute.xlu0 %1700
    %1702 = vrot.lane.b32.xlu0 %v1412, 32
    %v1703 = vpop.permute.xlu0 %1702
    %1704 = vrot.lane.b32.xlu0 %v1413, 32
    %v1705 = vpop.permute.xlu0 %1704
    %1706 = vrot.lane.b32.xlu0 %v1414, 32
    %v1707 = vpop.permute.xlu0 %1706
    %1708 = vrot.lane.b32.xlu0 %v1415, 32
    %v1709 = vpop.permute.xlu0 %1708
    %1710 = vrot.lane.b32.xlu0 %v1416, 32
    %v1711 = vpop.permute.xlu0 %1710
    %1712 = vrot.lane.b32.xlu0 %v1417, 32
    %v1713 = vpop.permute.xlu0 %1712
    %1714 = vrot.lane.b32.xlu0 %v1418, 32
    %v1715 = vpop.permute.xlu0 %1714
    %1716 = vrot.lane.b32.xlu0 %v1419, 32
    %v1717 = vpop.permute.xlu0 %1716
    %1718 = vrot.lane.b32.xlu0 %v1420, 32
    %v1719 = vpop.permute.xlu0 %1718
    %1720 = vrot.lane.b32.xlu0 %v1421, 32
    %v1721 = vpop.permute.xlu0 %1720
    %1722 = vrot.lane.b32.xlu0 %v1422, 32
    %v1723 = vpop.permute.xlu0 %1722
    %1724 = vrot.lane.b32.xlu0 %v1423, 32
    %v1725 = vpop.permute.xlu0 %1724
    %1726 = vrot.lane.b32.xlu0 %v1424, 32
    %v1727 = vpop.permute.xlu0 %1726
    %1728 = vrot.lane.b32.xlu0 %v1425, 32
    %v1729 = vpop.permute.xlu0 %1728
    %1730 = vrot.lane.b32.xlu0 %v1426, 32
    %v1731 = vpop.permute.xlu0 %1730
    %1732 = vrot.lane.b32.xlu0 %v1427, 32
    %v1733 = vpop.permute.xlu0 %1732
    %1734 = vrot.lane.b32.xlu0 %v1428, 32
    %v1735 = vpop.permute.xlu0 %1734
    %1736 = vrot.lane.b32.xlu0 %v1429, 32
    %v1737 = vpop.permute.xlu0 %1736
    %1738 = vrot.lane.b32.xlu0 %v1430, 32
    %v1739 = vpop.permute.xlu0 %1738
    %1740 = vrot.lane.b32.xlu0 %v1431, 32
    %v1741 = vpop.permute.xlu0 %1740
    %1742 = vrot.lane.b32.xlu0 %v1432, 32
    %v1743 = vpop.permute.xlu0 %1742
    %1744 = vrot.lane.b32.xlu0 %v1433, 32
    %v1745 = vpop.permute.xlu0 %1744
    %1746 = vrot.lane.b32.xlu0 %v1434, 32
    %v1747 = vpop.permute.xlu0 %1746
    %1748 = vrot.lane.b32.xlu0 %v1435, 32
    %v1749 = vpop.permute.xlu0 %1748
    %1750 = vrot.lane.b32.xlu0 %v1436, 32
    %v1751 = vpop.permute.xlu0 %1750
    %1752 = vrot.lane.b32.xlu0 %v1437, 32
    %v1753 = vpop.permute.xlu0 %1752
    %1755 = vrot.lane.b32.xlu0 %v1375, 64
    %v1756 = vpop.permute.xlu0 %1755
    %1757 = vrot.lane.b32.xlu0 %v1376, 64
    %v1758 = vpop.permute.xlu0 %1757
    %1759 = vrot.lane.b32.xlu0 %v1377, 64
    %v1760 = vpop.permute.xlu0 %1759
    %1761 = vrot.lane.b32.xlu0 %v1378, 64
    %v1762 = vpop.permute.xlu0 %1761
    %1763 = vrot.lane.b32.xlu0 %v1379, 64
    %v1764 = vpop.permute.xlu0 %1763
    %1765 = vrot.lane.b32.xlu0 %v1380, 64
    %v1766 = vpop.permute.xlu0 %1765
    %1767 = vrot.lane.b32.xlu0 %v1381, 64
    %v1768 = vpop.permute.xlu0 %1767
    %1769 = vrot.lane.b32.xlu0 %v1382, 64
    %v1770 = vpop.permute.xlu0 %1769
    %1771 = vrot.lane.b32.xlu0 %v1383, 64
    %v1772 = vpop.permute.xlu0 %1771
    %1773 = vrot.lane.b32.xlu0 %v1384, 64
    %v1774 = vpop.permute.xlu0 %1773
    %1775 = vrot.lane.b32.xlu0 %v1385, 64
    %v1776 = vpop.permute.xlu0 %1775
    %1777 = vrot.lane.b32.xlu0 %v1386, 64
    %v1778 = vpop.permute.xlu0 %1777
    %1779 = vrot.lane.b32.xlu0 %v1387, 64
    %v1780 = vpop.permute.xlu0 %1779
    %1781 = vrot.lane.b32.xlu0 %v1388, 64
    %v1782 = vpop.permute.xlu0 %1781
    %1783 = vrot.lane.b32.xlu0 %v1389, 64
    %v1784 = vpop.permute.xlu0 %1783
    %1785 = vrot.lane.b32.xlu0 %v1390, 64
    %v1786 = vpop.permute.xlu0 %1785
    %1787 = vrot.lane.b32.xlu0 %v1391, 64
    %v1788 = vpop.permute.xlu0 %1787
    %1789 = vrot.lane.b32.xlu0 %v1392, 64
    %v1790 = vpop.permute.xlu0 %1789
    %1791 = vrot.lane.b32.xlu0 %v1393, 64
    %v1792 = vpop.permute.xlu0 %1791
    %1793 = vrot.lane.b32.xlu0 %v1394, 64
    %v1794 = vpop.permute.xlu0 %1793
    %1795 = vrot.lane.b32.xlu0 %v1395, 64
    %v1796 = vpop.permute.xlu0 %1795
    %1797 = vrot.lane.b32.xlu0 %v1396, 64
    %v1798 = vpop.permute.xlu0 %1797
    %1799 = vrot.lane.b32.xlu0 %v1397, 64
    %v1800 = vpop.permute.xlu0 %1799
    %1801 = vrot.lane.b32.xlu0 %v1398, 64
    %v1802 = vpop.permute.xlu0 %1801
    %1803 = vrot.lane.b32.xlu0 %v1399, 64
    %v1804 = vpop.permute.xlu0 %1803
    %1805 = vrot.lane.b32.xlu0 %v1400, 64
    %v1806 = vpop.permute.xlu0 %1805
    %1807 = vrot.lane.b32.xlu0 %v1401, 64
    %v1808 = vpop.permute.xlu0 %1807
    %1809 = vrot.lane.b32.xlu0 %v1402, 64
    %v1810 = vpop.permute.xlu0 %1809
    %1811 = vrot.lane.b32.xlu0 %v1403, 64
    %v1812 = vpop.permute.xlu0 %1811
    %1813 = vrot.lane.b32.xlu0 %v1404, 64
    %v1814 = vpop.permute.xlu0 %1813
    %1815 = vrot.lane.b32.xlu0 %v1405, 64
    %v1816 = vpop.permute.xlu0 %1815
    %1817 = vrot.lane.b32.xlu0 0, 64
    %v1818 = vpop.permute.xlu0 %1817
    %1819 = vrot.lane.b32.xlu0 %v1407, 64
    %v1820 = vpop.permute.xlu0 %1819
    %1821 = vrot.lane.b32.xlu0 %v1408, 64
    %v1822 = vpop.permute.xlu0 %1821
    %1823 = vrot.lane.b32.xlu0 %v1409, 64
    %v1824 = vpop.permute.xlu0 %1823
    %1825 = vrot.lane.b32.xlu0 %v1410, 64
    %v1826 = vpop.permute.xlu0 %1825
    %1827 = vrot.lane.b32.xlu0 %v1411, 64
    %v1828 = vpop.permute.xlu0 %1827
    %1829 = vrot.lane.b32.xlu0 %v1412, 64
    %v1830 = vpop.permute.xlu0 %1829
    %1831 = vrot.lane.b32.xlu0 %v1413, 64
    %v1832 = vpop.permute.xlu0 %1831
    %1833 = vrot.lane.b32.xlu0 %v1414, 64
    %v1834 = vpop.permute.xlu0 %1833
    %1835 = vrot.lane.b32.xlu0 %v1415, 64
    %v1836 = vpop.permute.xlu0 %1835
    %1837 = vrot.lane.b32.xlu0 %v1416, 64
    %v1838 = vpop.permute.xlu0 %1837
    %1839 = vrot.lane.b32.xlu0 %v1417, 64
    %v1840 = vpop.permute.xlu0 %1839
    %1841 = vrot.lane.b32.xlu0 %v1418, 64
    %v1842 = vpop.permute.xlu0 %1841
    %1843 = vrot.lane.b32.xlu0 %v1419, 64
    %v1844 = vpop.permute.xlu0 %1843
    %1845 = vrot.lane.b32.xlu0 %v1420, 64
    %v1846 = vpop.permute.xlu0 %1845
    %1847 = vrot.lane.b32.xlu0 %v1421, 64
    %v1848 = vpop.permute.xlu0 %1847
    %1849 = vrot.lane.b32.xlu0 %v1422, 64
    %v1850 = vpop.permute.xlu0 %1849
    %1851 = vrot.lane.b32.xlu0 %v1423, 64
    %v1852 = vpop.permute.xlu0 %1851
    %1853 = vrot.lane.b32.xlu0 %v1424, 64
    %v1854 = vpop.permute.xlu0 %1853
    %1855 = vrot.lane.b32.xlu0 %v1425, 64
    %v1856 = vpop.permute.xlu0 %1855
    %1857 = vrot.lane.b32.xlu0 %v1426, 64
    %v1858 = vpop.permute.xlu0 %1857
    %1859 = vrot.lane.b32.xlu0 %v1427, 64
    %v1860 = vpop.permute.xlu0 %1859
    %1861 = vrot.lane.b32.xlu0 %v1428, 64
    %v1862 = vpop.permute.xlu0 %1861
    %1863 = vrot.lane.b32.xlu0 %v1429, 64
    %v1864 = vpop.permute.xlu0 %1863
    %1865 = vrot.lane.b32.xlu0 %v1430, 64
    %v1866 = vpop.permute.xlu0 %1865
    %1867 = vrot.lane.b32.xlu0 %v1431, 64
    %v1868 = vpop.permute.xlu0 %1867
    %1869 = vrot.lane.b32.xlu0 %v1432, 64
    %v1870 = vpop.permute.xlu0 %1869
    %1871 = vrot.lane.b32.xlu0 %v1433, 64
    %v1872 = vpop.permute.xlu0 %1871
    %1873 = vrot.lane.b32.xlu0 %v1434, 64
    %v1874 = vpop.permute.xlu0 %1873
    %1875 = vrot.lane.b32.xlu0 %v1435, 64
    %v1876 = vpop.permute.xlu0 %1875
    %1877 = vrot.lane.b32.xlu0 %v1436, 64
    %v1878 = vpop.permute.xlu0 %1877
    %1879 = vrot.lane.b32.xlu0 %v1437, 64
    %v1880 = vpop.permute.xlu0 %1879
    %1881 = vrot.lane.b32.xlu0 0, 96
    %v1882 = vpop.permute.xlu0 %1881
    %1883 = vrot.lane.b32.xlu0 %v1499, 96
    %v1884 = vpop.permute.xlu0 %1883
    %1885 = vrot.lane.b32.xlu0 %v1501, 96
    %v1886 = vpop.permute.xlu0 %1885
    %1887 = vrot.lane.b32.xlu0 %v1503, 96
    %v1888 = vpop.permute.xlu0 %1887
    %1889 = vrot.lane.b32.xlu0 %v1505, 96
    %v1890 = vpop.permute.xlu0 %1889
    %1891 = vrot.lane.b32.xlu0 %v1507, 96
    %v1892 = vpop.permute.xlu0 %1891
    %1893 = vrot.lane.b32.xlu0 %v1509, 96
    %v1894 = vpop.permute.xlu0 %1893
    %1895 = vrot.lane.b32.xlu0 %v1511, 96
    %v1896 = vpop.permute.xlu0 %1895
    %1897 = vrot.lane.b32.xlu0 %v1513, 96
    %v1898 = vpop.permute.xlu0 %1897
    %1899 = vrot.lane.b32.xlu0 %v1515, 96
    %v1900 = vpop.permute.xlu0 %1899
    %1901 = vrot.lane.b32.xlu0 %v1517, 96
    %v1902 = vpop.permute.xlu0 %1901
    %1903 = vrot.lane.b32.xlu0 %v1519, 96
    %v1904 = vpop.permute.xlu0 %1903
    %1905 = vrot.lane.b32.xlu0 %v1521, 96
    %v1906 = vpop.permute.xlu0 %1905
    %1907 = vrot.lane.b32.xlu0 %v1523, 96
    %v1908 = vpop.permute.xlu0 %1907
    %1909 = vrot.lane.b32.xlu0 %v1525, 96
    %v1910 = vpop.permute.xlu0 %1909
    %1911 = vrot.lane.b32.xlu0 %v1527, 96
    %v1912 = vpop.permute.xlu0 %1911
    %1913 = vrot.lane.b32.xlu0 %v1529, 96
    %v1914 = vpop.permute.xlu0 %1913
    %1915 = vrot.lane.b32.xlu0 %v1531, 96
    %v1916 = vpop.permute.xlu0 %1915
    %1917 = vrot.lane.b32.xlu0 %v1533, 96
    %v1918 = vpop.permute.xlu0 %1917
    %1919 = vrot.lane.b32.xlu0 %v1535, 96
    %v1920 = vpop.permute.xlu0 %1919
    %1921 = vrot.lane.b32.xlu0 %v1537, 96
    %v1922 = vpop.permute.xlu0 %1921
    %1923 = vrot.lane.b32.xlu0 %v1539, 96
    %v1924 = vpop.permute.xlu0 %1923
    %1925 = vrot.lane.b32.xlu0 %v1541, 96
    %v1926 = vpop.permute.xlu0 %1925
    %1927 = vrot.lane.b32.xlu0 %v1543, 96
    %v1928 = vpop.permute.xlu0 %1927
    %1929 = vrot.lane.b32.xlu0 %v1545, 96
    %v1930 = vpop.permute.xlu0 %1929
    %1931 = vrot.lane.b32.xlu0 %v1547, 96
    %v1932 = vpop.permute.xlu0 %1931
    %1933 = vrot.lane.b32.xlu0 %v1549, 96
    %v1934 = vpop.permute.xlu0 %1933
    %1935 = vrot.lane.b32.xlu0 %v1551, 96
    %v1936 = vpop.permute.xlu0 %1935
    %1937 = vrot.lane.b32.xlu0 %v1553, 96
    %v1938 = vpop.permute.xlu0 %1937
    %1939 = vrot.lane.b32.xlu0 %v1555, 96
    %v1940 = vpop.permute.xlu0 %1939
    %1941 = vrot.lane.b32.xlu0 %v1557, 96
    %v1942 = vpop.permute.xlu0 %1941
    %1943 = vrot.lane.b32.xlu0 %v1559, 96
    %v1944 = vpop.permute.xlu0 %1943
    %1945 = vrot.lane.b32.xlu0 %v1561, 96
    %v1946 = vpop.permute.xlu0 %1945
    %1947 = vrot.lane.b32.xlu0 %v1563, 96
    %v1948 = vpop.permute.xlu0 %1947
    %1949 = vrot.lane.b32.xlu0 %v1565, 96
    %v1950 = vpop.permute.xlu0 %1949
    %1951 = vrot.lane.b32.xlu0 %v1567, 96
    %v1952 = vpop.permute.xlu0 %1951
    %1953 = vrot.lane.b32.xlu0 %v1569, 96
    %v1954 = vpop.permute.xlu0 %1953
    %1955 = vrot.lane.b32.xlu0 %v1571, 96
    %v1956 = vpop.permute.xlu0 %1955
    %1957 = vrot.lane.b32.xlu0 %v1573, 96
    %v1958 = vpop.permute.xlu0 %1957
    %1959 = vrot.lane.b32.xlu0 %v1575, 96
    %v1960 = vpop.permute.xlu0 %1959
    %1961 = vrot.lane.b32.xlu0 %v1577, 96
    %v1962 = vpop.permute.xlu0 %1961
    %1963 = vrot.lane.b32.xlu0 %v1579, 96
    %v1964 = vpop.permute.xlu0 %1963
    %1965 = vrot.lane.b32.xlu0 %v1581, 96
    %v1966 = vpop.permute.xlu0 %1965
    %1967 = vrot.lane.b32.xlu0 %v1583, 96
    %v1968 = vpop.permute.xlu0 %1967
    %1969 = vrot.lane.b32.xlu0 %v1585, 96
    %v1970 = vpop.permute.xlu0 %1969
    %1971 = vrot.lane.b32.xlu0 %v1587, 96
    %v1972 = vpop.permute.xlu0 %1971
    %1973 = vrot.lane.b32.xlu0 %v1589, 96
    %v1974 = vpop.permute.xlu0 %1973
    %1975 = vrot.lane.b32.xlu0 %v1591, 96
    %v1976 = vpop.permute.xlu0 %1975
    %1977 = vrot.lane.b32.xlu0 %v1593, 96
    %v1978 = vpop.permute.xlu0 %1977
    %1979 = vrot.lane.b32.xlu0 %v1595, 96
    %v1980 = vpop.permute.xlu0 %1979
    %1981 = vrot.lane.b32.xlu0 %v1597, 96
    %v1982 = vpop.permute.xlu0 %1981
    %1983 = vrot.lane.b32.xlu0 %v1599, 96
    %v1984 = vpop.permute.xlu0 %1983
    %1985 = vrot.lane.b32.xlu0 %v1601, 96
    %v1986 = vpop.permute.xlu0 %1985
    %1987 = vrot.lane.b32.xlu0 %v1603, 96
    %v1988 = vpop.permute.xlu0 %1987
    %1989 = vrot.lane.b32.xlu0 %v1605, 96
    %v1990 = vpop.permute.xlu0 %1989
    %1991 = vrot.lane.b32.xlu0 %v1607, 96
    %v1992 = vpop.permute.xlu0 %1991
    %1993 = vrot.lane.b32.xlu0 %v1609, 96
    %v1994 = vpop.permute.xlu0 %1993
    %1995 = vrot.lane.b32.xlu0 %v1611, 96
    %v1996 = vpop.permute.xlu0 %1995
    %1997 = vrot.lane.b32.xlu0 %v1613, 96
    %v1998 = vpop.permute.xlu0 %1997
    %1999 = vrot.lane.b32.xlu0 %v1615, 96
    %v2000 = vpop.permute.xlu0 %1999
    %2001 = vrot.lane.b32.xlu0 %v1617, 96
    %v2002 = vpop.permute.xlu0 %2001
    %2003 = vrot.lane.b32.xlu0 0, 32
    %v2004 = vpop.permute.xlu0 %2003
    %vm2005 = vcmask 261120
    %v2008 = vsel %vm2005, 0, %v1627
    %v2011 = vsel %vm2005, %v1374, %v1629
    %v2014 = vsel %vm2005, %v1375, %v1631
    %v2017 = vsel %vm2005, %v1376, %v1633
    %v2020 = vsel %vm2005, %v1377, %v1635
    %v2023 = vsel %vm2005, %v1378, %v1637
    %v2026 = vsel %vm2005, %v1379, %v1639
    %v2029 = vsel %vm2005, %v1380, %v1641
    %v2032 = vsel %vm2005, %v1381, %v1643
    %v2035 = vsel %vm2005, %v1382, %v1645
    %v2038 = vsel %vm2005, %v1383, %v1647
    %v2041 = vsel %vm2005, %v1384, %v1649
    %v2044 = vsel %vm2005, %v1385, %v1651
    %v2047 = vsel %vm2005, %v1386, %v1653
    %v2050 = vsel %vm2005, %v1387, %v1655
    %v2053 = vsel %vm2005, %v1388, %v1657
    %v2056 = vsel %vm2005, %v1389, %v1659
    %v2059 = vsel %vm2005, %v1390, %v1661
    %v2062 = vsel %vm2005, %v1391, %v1663
    %v2065 = vsel %vm2005, %v1392, %v1665
    %v2068 = vsel %vm2005, %v1393, %v1667
    %v2071 = vsel %vm2005, %v1394, %v1669
    %v2074 = vsel %vm2005, %v1395, %v1671
    %v2077 = vsel %vm2005, %v1396, %v1673
    %v2080 = vsel %vm2005, %v1397, %v1675
    %v2083 = vsel %vm2005, %v1398, %v1677
    %v2086 = vsel %vm2005, %v1399, %v1679
    %v2089 = vsel %vm2005, %v1400, %v1681
    %v2092 = vsel %vm2005, %v1401, %v1683
    %v2095 = vsel %vm2005, %v1402, %v1685
    %v2098 = vsel %vm2005, %v1403, %v1687
    %v2101 = vsel %vm2005, %v1404, %v1689
    %v2103 = vsel %vm2005, 0, %v1691
    %v2106 = vsel %vm2005, %v1406, %v1693
    %v2109 = vsel %vm2005, %v1407, %v1695
    %v2112 = vsel %vm2005, %v1408, %v1697
    %v2115 = vsel %vm2005, %v1409, %v1699
    %v2118 = vsel %vm2005, %v1410, %v1701
    %v2121 = vsel %vm2005, %v1411, %v1703
    %v2124 = vsel %vm2005, %v1412, %v1705
    %v2127 = vsel %vm2005, %v1413, %v1707
    %v2130 = vsel %vm2005, %v1414, %v1709
    %v2133 = vsel %vm2005, %v1415, %v1711
    %v2136 = vsel %vm2005, %v1416, %v1713
    %v2139 = vsel %vm2005, %v1417, %v1715
    %v2142 = vsel %vm2005, %v1418, %v1717
    %v2145 = vsel %vm2005, %v1419, %v1719
    %v2148 = vsel %vm2005, %v1420, %v1721
    %v2151 = vsel %vm2005, %v1421, %v1723
    %v2154 = vsel %vm2005, %v1422, %v1725
    %v2157 = vsel %vm2005, %v1423, %v1727
    %v2160 = vsel %vm2005, %v1424, %v1729
    %v2163 = vsel %vm2005, %v1425, %v1731
    %v2166 = vsel %vm2005, %v1426, %v1733
    %v2169 = vsel %vm2005, %v1427, %v1735
    %v2172 = vsel %vm2005, %v1428, %v1737
    %v2175 = vsel %vm2005, %v1429, %v1739
    %v2178 = vsel %vm2005, %v1430, %v1741
    %v2181 = vsel %vm2005, %v1431, %v1743
    %v2184 = vsel %vm2005, %v1432, %v1745
    %v2187 = vsel %vm2005, %v1433, %v1747
    %v2190 = vsel %vm2005, %v1434, %v1749
    %v2193 = vsel %vm2005, %v1435, %v1751
    %v2196 = vsel %vm2005, %v1436, %v1753
    %vm2197 = vcmask 523264
    %v2199 = vsel %vm2197, %v2008, %v1756
    %v2201 = vsel %vm2197, %v2011, %v1758
    %v2203 = vsel %vm2197, %v2014, %v1760
    %v2205 = vsel %vm2197, %v2017, %v1762
    %v2207 = vsel %vm2197, %v2020, %v1764
    %v2209 = vsel %vm2197, %v2023, %v1766
    %v2211 = vsel %vm2197, %v2026, %v1768
    %v2213 = vsel %vm2197, %v2029, %v1770
    %v2215 = vsel %vm2197, %v2032, %v1772
    %v2217 = vsel %vm2197, %v2035, %v1774
    %v2219 = vsel %vm2197, %v2038, %v1776
    %v2221 = vsel %vm2197, %v2041, %v1778
    %v2223 = vsel %vm2197, %v2044, %v1780
    %v2225 = vsel %vm2197, %v2047, %v1782
    %v2227 = vsel %vm2197, %v2050, %v1784
    %v2229 = vsel %vm2197, %v2053, %v1786
    %v2231 = vsel %vm2197, %v2056, %v1788
    %v2233 = vsel %vm2197, %v2059, %v1790
    %v2235 = vsel %vm2197, %v2062, %v1792
    %v2237 = vsel %vm2197, %v2065, %v1794
    %v2239 = vsel %vm2197, %v2068, %v1796
    %v2241 = vsel %vm2197, %v2071, %v1798
    %v2243 = vsel %vm2197, %v2074, %v1800
    %v2245 = vsel %vm2197, %v2077, %v1802
    %v2247 = vsel %vm2197, %v2080, %v1804
    %v2249 = vsel %vm2197, %v2083, %v1806
    %v2251 = vsel %vm2197, %v2086, %v1808
    %v2253 = vsel %vm2197, %v2089, %v1810
    %v2255 = vsel %vm2197, %v2092, %v1812
    %v2257 = vsel %vm2197, %v2095, %v1814
    %v2259 = vsel %vm2197, %v2098, %v1816
    %v2261 = vsel %vm2197, %v2101, %v1818
    %v2263 = vsel %vm2197, %v2103, %v1820
    %v2265 = vsel %vm2197, %v2106, %v1822
    %v2267 = vsel %vm2197, %v2109, %v1824
    %v2269 = vsel %vm2197, %v2112, %v1826
    %v2271 = vsel %vm2197, %v2115, %v1828
    %v2273 = vsel %vm2197, %v2118, %v1830
    %v2275 = vsel %vm2197, %v2121, %v1832
    %v2277 = vsel %vm2197, %v2124, %v1834
    %v2279 = vsel %vm2197, %v2127, %v1836
    %v2281 = vsel %vm2197, %v2130, %v1838
    %v2283 = vsel %vm2197, %v2133, %v1840
    %v2285 = vsel %vm2197, %v2136, %v1842
    %v2287 = vsel %vm2197, %v2139, %v1844
    %v2289 = vsel %vm2197, %v2142, %v1846
    %v2291 = vsel %vm2197, %v2145, %v1848
    %v2293 = vsel %vm2197, %v2148, %v1850
    %v2295 = vsel %vm2197, %v2151, %v1852
    %v2297 = vsel %vm2197, %v2154, %v1854
    %v2299 = vsel %vm2197, %v2157, %v1856
    %v2301 = vsel %vm2197, %v2160, %v1858
    %v2303 = vsel %vm2197, %v2163, %v1860
    %v2305 = vsel %vm2197, %v2166, %v1862
    %v2307 = vsel %vm2197, %v2169, %v1864
    %v2309 = vsel %vm2197, %v2172, %v1866
    %v2311 = vsel %vm2197, %v2175, %v1868
    %v2313 = vsel %vm2197, %v2178, %v1870
    %v2315 = vsel %vm2197, %v2181, %v1872
    %v2317 = vsel %vm2197, %v2184, %v1874
    %v2319 = vsel %vm2197, %v2187, %v1876
    %v2321 = vsel %vm2197, %v2190, %v1878
    %v2323 = vsel %vm2197, %v2193, %v1880
    %v2324 = vsel %vm2197, %v2196, %v1818
    %vm2325 = vcmask 785408
    %v2327 = vsel %vm2325, %v2199, %v1882
    %v2329 = vsel %vm2325, %v2201, %v1882
    %v2332 = vsel %vm2325, %v2203, %v1884
    %v2335 = vsel %vm2325, %v2205, %v1886
    %v2338 = vsel %vm2325, %v2207, %v1888
    %v2341 = vsel %vm2325, %v2209, %v1890
    %v2344 = vsel %vm2325, %v2211, %v1892
    %v2347 = vsel %vm2325, %v2213, %v1894
    %v2350 = vsel %vm2325, %v2215, %v1896
    %v2353 = vsel %vm2325, %v2217, %v1898
    %v2356 = vsel %vm2325, %v2219, %v1900
    %v2359 = vsel %vm2325, %v2221, %v1902
    %v2362 = vsel %vm2325, %v2223, %v1904
    %v2365 = vsel %vm2325, %v2225, %v1906
    %v2368 = vsel %vm2325, %v2227, %v1908
    %v2371 = vsel %vm2325, %v2229, %v1910
    %v2374 = vsel %vm2325, %v2231, %v1912
    %v2377 = vsel %vm2325, %v2233, %v1914
    %v2380 = vsel %vm2325, %v2235, %v1916
    %v2383 = vsel %vm2325, %v2237, %v1918
    %v2386 = vsel %vm2325, %v2239, %v1920
    %v2389 = vsel %vm2325, %v2241, %v1922
    %v2392 = vsel %vm2325, %v2243, %v1924
    %v2395 = vsel %vm2325, %v2245, %v1926
    %v2398 = vsel %vm2325, %v2247, %v1928
    %v2401 = vsel %vm2325, %v2249, %v1930
    %v2404 = vsel %vm2325, %v2251, %v1932
    %v2407 = vsel %vm2325, %v2253, %v1934
    %v2410 = vsel %vm2325, %v2255, %v1936
    %v2413 = vsel %vm2325, %v2257, %v1938
    %v2416 = vsel %vm2325, %v2259, %v1940
    %v2419 = vsel %vm2325, %v2261, %v1942
    %v2421 = vsel %vm2325, %v2263, %v1882
    %v2423 = vsel %vm2325, %v2265, %v1882
    %v2426 = vsel %vm2325, %v2267, %v1944
    %v2429 = vsel %vm2325, %v2269, %v1946
    %v2432 = vsel %vm2325, %v2271, %v1948
    %v2435 = vsel %vm2325, %v2273, %v1950
    %v2438 = vsel %vm2325, %v2275, %v1952
    %v2441 = vsel %vm2325, %v2277, %v1954
    %v2444 = vsel %vm2325, %v2279, %v1956
    %v2447 = vsel %vm2325, %v2281, %v1958
    %v2450 = vsel %vm2325, %v2283, %v1960
    %v2453 = vsel %vm2325, %v2285, %v1962
    %v2456 = vsel %vm2325, %v2287, %v1964
    %v2459 = vsel %vm2325, %v2289, %v1966
    %v2462 = vsel %vm2325, %v2291, %v1968
    %v2465 = vsel %vm2325, %v2293, %v1970
    %v2468 = vsel %vm2325, %v2295, %v1972
    %v2471 = vsel %vm2325, %v2297, %v1974
    %v2474 = vsel %vm2325, %v2299, %v1976
    %v2477 = vsel %vm2325, %v2301, %v1978
    %v2480 = vsel %vm2325, %v2303, %v1980
    %v2483 = vsel %vm2325, %v2305, %v1982
    %v2486 = vsel %vm2325, %v2307, %v1984
    %v2489 = vsel %vm2325, %v2309, %v1986
    %v2492 = vsel %vm2325, %v2311, %v1988
    %v2495 = vsel %vm2325, %v2313, %v1990
    %v2498 = vsel %vm2325, %v2315, %v1992
    %v2501 = vsel %vm2325, %v2317, %v1994
    %v2504 = vsel %vm2325, %v2319, %v1996
    %v2507 = vsel %vm2325, %v2321, %v1998
    %v2510 = vsel %vm2325, %v2323, %v2000
    %v2513 = vsel %vm2325, %v2324, %v2002
    %v2515 = vsel %vm2005, 0, %v1374
    %v2517 = vsel %vm2005, %v1499, %v1375
    %v2519 = vsel %vm2005, %v1501, %v1376
    %v2521 = vsel %vm2005, %v1503, %v1377
    %v2523 = vsel %vm2005, %v1505, %v1378
    %v2525 = vsel %vm2005, %v1507, %v1379
    %v2527 = vsel %vm2005, %v1509, %v1380
    %v2529 = vsel %vm2005, %v1511, %v1381
    %v2531 = vsel %vm2005, %v1513, %v1382
    %v2533 = vsel %vm2005, %v1515, %v1383
    %v2535 = vsel %vm2005, %v1517, %v1384
    %v2537 = vsel %vm2005, %v1519, %v1385
    %v2539 = vsel %vm2005, %v1521, %v1386
    %v2541 = vsel %vm2005, %v1523, %v1387
    %v2543 = vsel %vm2005, %v1525, %v1388
    %v2545 = vsel %vm2005, %v1527, %v1389
    %v2547 = vsel %vm2005, %v1529, %v1390
    %v2549 = vsel %vm2005, %v1531, %v1391
    %v2551 = vsel %vm2005, %v1533, %v1392
    %v2553 = vsel %vm2005, %v1535, %v1393
    %v2555 = vsel %vm2005, %v1537, %v1394
    %v2557 = vsel %vm2005, %v1539, %v1395
    %v2559 = vsel %vm2005, %v1541, %v1396
    %v2561 = vsel %vm2005, %v1543, %v1397
    %v2563 = vsel %vm2005, %v1545, %v1398
    %v2565 = vsel %vm2005, %v1547, %v1399
    %v2567 = vsel %vm2005, %v1549, %v1400
    %v2569 = vsel %vm2005, %v1551, %v1401
    %v2571 = vsel %vm2005, %v1553, %v1402
    %v2573 = vsel %vm2005, %v1555, %v1403
    %v2575 = vsel %vm2005, %v1557, %v1404
    %v2578 = vsel %vm2005, %v1621, %v1405
    %v2579 = vsel %vm2005, 0, %v1406
    %v2581 = vsel %vm2005, %v1559, %v1407
    %v2583 = vsel %vm2005, %v1561, %v1408
    %v2585 = vsel %vm2005, %v1563, %v1409
    %v2587 = vsel %vm2005, %v1565, %v1410
    %v2589 = vsel %vm2005, %v1567, %v1411
    %v2591 = vsel %vm2005, %v1569, %v1412
    %v2593 = vsel %vm2005, %v1571, %v1413
    %v2595 = vsel %vm2005, %v1573, %v1414
    %v2597 = vsel %vm2005, %v1575, %v1415
    %v2599 = vsel %vm2005, %v1577, %v1416
    %v2601 = vsel %vm2005, %v1579, %v1417
    %v2603 = vsel %vm2005, %v1581, %v1418
    %v2605 = vsel %vm2005, %v1583, %v1419
    %v2607 = vsel %vm2005, %v1585, %v1420
    %v2609 = vsel %vm2005, %v1587, %v1421
    %v2611 = vsel %vm2005, %v1589, %v1422
    %v2613 = vsel %vm2005, %v1591, %v1423
    %v2615 = vsel %vm2005, %v1593, %v1424
    %v2617 = vsel %vm2005, %v1595, %v1425
    %v2619 = vsel %vm2005, %v1597, %v1426
    %v2621 = vsel %vm2005, %v1599, %v1427
    %v2623 = vsel %vm2005, %v1601, %v1428
    %v2625 = vsel %vm2005, %v1603, %v1429
    %v2627 = vsel %vm2005, %v1605, %v1430
    %v2629 = vsel %vm2005, %v1607, %v1431
    %v2631 = vsel %vm2005, %v1609, %v1432
    %v2633 = vsel %vm2005, %v1611, %v1433
    %v2635 = vsel %vm2005, %v1613, %v1434
    %v2637 = vsel %vm2005, %v1615, %v1435
    %v2639 = vsel %vm2005, %v1617, %v1436
    %v2642 = vsel %vm2005, %v1623, %v1437
    %v2643 = vsel %vm2197, %v2515, %v1629
    %v2644 = vsel %vm2197, %v2517, %v1631
    %v2645 = vsel %vm2197, %v2519, %v1633
    %v2646 = vsel %vm2197, %v2521, %v1635
    %v2647 = vsel %vm2197, %v2523, %v1637
    %v2648 = vsel %vm2197, %v2525, %v1639
    %v2649 = vsel %vm2197, %v2527, %v1641
    %v2650 = vsel %vm2197, %v2529, %v1643
    %v2651 = vsel %vm2197, %v2531, %v1645
    %v2652 = vsel %vm2197, %v2533, %v1647
    %v2653 = vsel %vm2197, %v2535, %v1649
    %v2654 = vsel %vm2197, %v2537, %v1651
    %v2655 = vsel %vm2197, %v2539, %v1653
    %v2656 = vsel %vm2197, %v2541, %v1655
    %v2657 = vsel %vm2197, %v2543, %v1657
    %v2658 = vsel %vm2197, %v2545, %v1659
    %v2659 = vsel %vm2197, %v2547, %v1661
    %v2660 = vsel %vm2197, %v2549, %v1663
    %v2661 = vsel %vm2197, %v2551, %v1665
    %v2662 = vsel %vm2197, %v2553, %v1667
    %v2663 = vsel %vm2197, %v2555, %v1669
    %v2664 = vsel %vm2197, %v2557, %v1671
    %v2665 = vsel %vm2197, %v2559, %v1673
    %v2666 = vsel %vm2197, %v2561, %v1675
    %v2667 = vsel %vm2197, %v2563, %v1677
    %v2668 = vsel %vm2197, %v2565, %v1679
    %v2669 = vsel %vm2197, %v2567, %v1681
    %v2670 = vsel %vm2197, %v2569, %v1683
    %v2671 = vsel %vm2197, %v2571, %v1685
    %v2672 = vsel %vm2197, %v2573, %v1687
    %v2673 = vsel %vm2197, %v2575, %v1689
    %v2675 = vsel %vm2197, %v2578, %v2004
    %v2676 = vsel %vm2197, %v2579, %v1693
    %v2677 = vsel %vm2197, %v2581, %v1695
    %v2678 = vsel %vm2197, %v2583, %v1697
    %v2679 = vsel %vm2197, %v2585, %v1699
    %v2680 = vsel %vm2197, %v2587, %v1701
    %v2681 = vsel %vm2197, %v2589, %v1703
    %v2682 = vsel %vm2197, %v2591, %v1705
    %v2683 = vsel %vm2197, %v2593, %v1707
    %v2684 = vsel %vm2197, %v2595, %v1709
    %v2685 = vsel %vm2197, %v2597, %v1711
    %v2686 = vsel %vm2197, %v2599, %v1713
    %v2687 = vsel %vm2197, %v2601, %v1715
    %v2688 = vsel %vm2197, %v2603, %v1717
    %v2689 = vsel %vm2197, %v2605, %v1719
    %v2690 = vsel %vm2197, %v2607, %v1721
    %v2691 = vsel %vm2197, %v2609, %v1723
    %v2692 = vsel %vm2197, %v2611, %v1725
    %v2693 = vsel %vm2197, %v2613, %v1727
    %v2694 = vsel %vm2197, %v2615, %v1729
    %v2695 = vsel %vm2197, %v2617, %v1731
    %v2696 = vsel %vm2197, %v2619, %v1733
    %v2697 = vsel %vm2197, %v2621, %v1735
    %v2698 = vsel %vm2197, %v2623, %v1737
    %v2699 = vsel %vm2197, %v2625, %v1739
    %v2700 = vsel %vm2197, %v2627, %v1741
    %v2701 = vsel %vm2197, %v2629, %v1743
    %v2702 = vsel %vm2197, %v2631, %v1745
    %v2703 = vsel %vm2197, %v2633, %v1747
    %v2704 = vsel %vm2197, %v2635, %v1749
    %v2705 = vsel %vm2197, %v2637, %v1751
    %v2706 = vsel %vm2197, %v2639, %v1753
    %v2707 = vsel %vm2197, %v2642, %v2004
    %v2708 = vsel %vm2325, %v2643, %v1758
    %v2710 = vsel %vm2325, %v2644, %v1760
    %v2712 = vsel %vm2325, %v2645, %v1762
    %v2714 = vsel %vm2325, %v2646, %v1764
    %v2716 = vsel %vm2325, %v2647, %v1766
    %v2718 = vsel %vm2325, %v2648, %v1768
    %v2720 = vsel %vm2325, %v2649, %v1770
    %v2722 = vsel %vm2325, %v2650, %v1772
    %v2724 = vsel %vm2325, %v2651, %v1774
    %v2726 = vsel %vm2325, %v2652, %v1776
    %v2728 = vsel %vm2325, %v2653, %v1778
    %v2730 = vsel %vm2325, %v2654, %v1780
    %v2732 = vsel %vm2325, %v2655, %v1782
    %v2734 = vsel %vm2325, %v2656, %v1784
    %v2736 = vsel %vm2325, %v2657, %v1786
    %v2738 = vsel %vm2325, %v2658, %v1788
    %v2740 = vsel %vm2325, %v2659, %v1790
    %v2742 = vsel %vm2325, %v2660, %v1792
    %v2744 = vsel %vm2325, %v2661, %v1794
    %v2746 = vsel %vm2325, %v2662, %v1796
    %v2748 = vsel %vm2325, %v2663, %v1798
    %v2750 = vsel %vm2325, %v2664, %v1800
    %v2752 = vsel %vm2325, %v2665, %v1802
    %v2754 = vsel %vm2325, %v2666, %v1804
    %v2756 = vsel %vm2325, %v2667, %v1806
    %v2758 = vsel %vm2325, %v2668, %v1808
    %v2760 = vsel %vm2325, %v2669, %v1810
    %v2762 = vsel %vm2325, %v2670, %v1812
    %v2764 = vsel %vm2325, %v2671, %v1814
    %v2766 = vsel %vm2325, %v2672, %v1816
    %v2768 = vsel %vm2325, %v2673, %v1818
    %v2770 = vsel %vm2325, %v2675, %v1818
    %v2772 = vsel %vm2325, %v2676, %v1822
    %v2774 = vsel %vm2325, %v2677, %v1824
    %v2776 = vsel %vm2325, %v2678, %v1826
    %v2778 = vsel %vm2325, %v2679, %v1828
    %v2780 = vsel %vm2325, %v2680, %v1830
    %v2782 = vsel %vm2325, %v2681, %v1832
    %v2784 = vsel %vm2325, %v2682, %v1834
    %v2786 = vsel %vm2325, %v2683, %v1836
    %v2788 = vsel %vm2325, %v2684, %v1838
    %v2790 = vsel %vm2325, %v2685, %v1840
    %v2792 = vsel %vm2325, %v2686, %v1842
    %v2794 = vsel %vm2325, %v2687, %v1844
    %v2796 = vsel %vm2325, %v2688, %v1846
    %v2798 = vsel %vm2325, %v2689, %v1848
    %v2800 = vsel %vm2325, %v2690, %v1850
    %v2802 = vsel %vm2325, %v2691, %v1852
    %v2804 = vsel %vm2325, %v2692, %v1854
    %v2806 = vsel %vm2325, %v2693, %v1856
    %v2808 = vsel %vm2325, %v2694, %v1858
    %v2810 = vsel %vm2325, %v2695, %v1860
    %v2812 = vsel %vm2325, %v2696, %v1862
    %v2814 = vsel %vm2325, %v2697, %v1864
    %v2816 = vsel %vm2325, %v2698, %v1866
    %v2818 = vsel %vm2325, %v2699, %v1868
    %v2820 = vsel %vm2325, %v2700, %v1870
    %v2822 = vsel %vm2325, %v2701, %v1872
    %v2824 = vsel %vm2325, %v2702, %v1874
    %v2826 = vsel %vm2325, %v2703, %v1876
    %v2828 = vsel %vm2325, %v2704, %v1878
    %v2830 = vsel %vm2325, %v2705, %v1880
    %v2832 = vsel %vm2325, %v2706, %v1818
    %v2834 = vsel %vm2325, %v2707, %v1818
    %v2868 = vunpack.c.l.b16 %v148
    %v2869 = vunpack.c.l.b16 %v149
    %v2870 = vunpack.c.l.b16 %v150
    %v2871 = vunpack.c.l.b16 %v151
    %v2872 = vunpack.c.l.b16 %v152
    %v2873 = vunpack.c.l.b16 %v153
    %v2874 = vunpack.c.l.b16 %v154
    %v2875 = vunpack.c.l.b16 %v155
    %v2876 = vunpack.c.l.b16 %v156
    %v2877 = vunpack.c.l.b16 %v157
    %v2878 = vunpack.c.l.b16 %v158
    %v2879 = vunpack.c.l.b16 %v159
    %v2880 = vunpack.c.l.b16 %v160
    %v2881 = vunpack.c.l.b16 %v161
    %v2882 = vunpack.c.l.b16 %v162
    %v2883 = vunpack.c.l.b16 %v163
    %v2884 = vunpack.c.l.b16 %v164
    %v2885 = vunpack.c.l.b16 %v165
    %v2886 = vunpack.c.l.b16 %v166
    %v2887 = vunpack.c.l.b16 %v167
    %v2888 = vunpack.c.l.b16 %v168
    %v2889 = vunpack.c.l.b16 %v169
    %v2890 = vunpack.c.l.b16 %v170
    %v2891 = vunpack.c.l.b16 %v171
    %v2892 = vunpack.c.l.b16 %v172
    %v2893 = vunpack.c.l.b16 %v173
    %v2894 = vunpack.c.l.b16 %v174
    %v2895 = vunpack.c.l.b16 %v175
    %v2896 = vunpack.c.l.b16 %v176
    %v2897 = vunpack.c.l.b16 %v177
    %v2898 = vunpack.c.l.b16 %v178
    %v2899 = vunpack.c.l.b16 %v179
    %v2900 = vpack.c.b16 %v2869, %v2868
    %v2901 = vpack.c.b16 %v2871, %v2870
    %v2902 = vpack.c.b16 %v2873, %v2872
    %v2903 = vpack.c.b16 %v2875, %v2874
    %v2904 = vpack.c.b16 %v2877, %v2876
    %v2905 = vpack.c.b16 %v2879, %v2878
    %v2906 = vpack.c.b16 %v2881, %v2880
    %v2907 = vpack.c.b16 %v2883, %v2882
    %v2908 = vpack.c.b16 %v2885, %v2884
    %v2909 = vpack.c.b16 %v2887, %v2886
    %v2910 = vpack.c.b16 %v2889, %v2888
    %v2911 = vpack.c.b16 %v2891, %v2890
    %v2912 = vpack.c.b16 %v2893, %v2892
    %v2913 = vpack.c.b16 %v2895, %v2894
    %v2914 = vpack.c.b16 %v2897, %v2896
    %v2915 = vpack.c.b16 %v2899, %v2898
    %2932 = vmatprep.subr.bf16.mxu0 0
    %2933 = vmatpush1.bf16.msra.mxu0 %v2900
    %2934 = vmatprep.subr.bf16.mxu0 0
    %2935 = vmatpush1.bf16.msra.mxu0 %v2901
    %2936 = vmatprep.subr.bf16.mxu0 0
    %2937 = vmatpush1.bf16.msra.mxu0 %v2902
    %2938 = vmatprep.subr.bf16.mxu0 0
    %2939 = vmatpush1.bf16.msra.mxu0 %v2903
    %2940 = vmatprep.subr.bf16.mxu0 0
    %2941 = vmatpush1.bf16.msra.mxu0 %v2904
    %2942 = vmatprep.subr.bf16.mxu0 0
    %2943 = vmatpush1.bf16.msra.mxu0 %v2905
    %2944 = vmatprep.subr.bf16.mxu0 0
    %2945 = vmatpush1.bf16.msra.mxu0 %v2906
    %2946 = vmatprep.subr.bf16.mxu0 0
    %2947 = vmatpush1.bf16.msra.mxu0 %v2907
    %2948 = vmatprep.subr.bf16.mxu0 0
    %2949 = vmatpush1.bf16.msra.mxu0 %v2908
    %2950 = vmatprep.subr.bf16.mxu0 0
    %2951 = vmatpush1.bf16.msra.mxu0 %v2909
    %2952 = vmatprep.subr.bf16.mxu0 0
    %2953 = vmatpush1.bf16.msra.mxu0 %v2910
    %2954 = vmatprep.subr.bf16.mxu0 0
    %2955 = vmatpush1.bf16.msra.mxu0 %v2911
    %2956 = vmatprep.subr.bf16.mxu0 0
    %2957 = vmatpush1.bf16.msra.mxu0 %v2912
    %2958 = vmatprep.subr.bf16.mxu0 0
    %2959 = vmatpush1.bf16.msra.mxu0 %v2913
    %2960 = vmatprep.subr.bf16.mxu0 0
    %2961 = vmatpush1.bf16.msra.mxu0 %v2914
    %2962 = vmatprep.subr.bf16.mxu0 0
    %2963 = vmatpush1.bf16.msra.mxu0 %v2915
    %2964 = vmatprep.mubr.bf16.mxu0 %v2708
    %2965 = vmatmul.mubr.bf16.gmra.mrb[0].mxu0 %v2327
    %v2966 = vpop.f32.mrb[0].mxu0
    %v2967 = vadd.f32 0.0, %v2966
    %v2968 = vpop.f32.mrb[0].mxu0
    %v2969 = vpop.f32.mrb[0].mxu0
    %v2970 = vadd.f32 0.0, %v2969
    %v2971 = vpop.f32.mrb[0].mxu0
    %2972 = vmatprep.mubr.bf16.mxu0 %v2710
    %2973 = vmatmul.mubr.bf16.gmra.mrb[0].mxu0 %v2329
    %v2974 = vpop.f32.mrb[0].mxu0
    %v2975 = vadd.f32 0.0, %v2974
    %v2976 = vpop.f32.mrb[0].mxu0
    %v2977 = vpop.f32.mrb[0].mxu0
    %v2978 = vadd.f32 0.0, %v2977
    %v2979 = vpop.f32.mrb[0].mxu0
    %2980 = vmatprep.mubr.bf16.mxu0 %v2712
    %2981 = vmatmul.mubr.bf16.gmra.mrb[0].mxu0 %v2332
    %v2982 = vpop.f32.mrb[0].mxu0
    %v2983 = vadd.f32 0.0, %v2982
    %v2984 = vpop.f32.mrb[0].mxu0
    %v2985 = vpop.f32.mrb[0].mxu0
    %v2986 = vadd.f32 0.0, %v2985
    %v2987 = vpop.f32.mrb[0].mxu0
    %2988 = vmatprep.mubr.bf16.mxu0 %v2714
    %2989 = vmatmul.mubr.bf16.gmra.mrb[0].mxu0 %v2335
    %v2990 = vpop.f32.mrb[0].mxu0
    %v2991 = vadd.f32 0.0, %v2990
    %v2992 = vpop.f32.mrb[0].mxu0
    %v2993 = vpop.f32.mrb[0].mxu0
    %v2994 = vadd.f32 0.0, %v2993
    %v2995 = vpop.f32.mrb[0].mxu0
    %2996 = vmatprep.mubr.bf16.mxu0 %v2716
    %2997 = vmatmul.mubr.bf16.gmra.mrb[0].mxu0 %v2338
    %v2998 = vpop.f32.mrb[0].mxu0
    %v2999 = vadd.f32 0.0, %v2998
    %v3000 = vpop.f32.mrb[0].mxu0
    %v3001 = vpop.f32.mrb[0].mxu0
    %v3002 = vadd.f32 0.0, %v3001
    %v3003 = vpop.f32.mrb[0].mxu0
    %3004 = vmatprep.mubr.bf16.mxu0 %v2718
    %3005 = vmatmul.mubr.bf16.gmra.mrb[0].mxu0 %v2341
    %v3006 = vpop.f32.mrb[0].mxu0
    %v3007 = vadd.f32 0.0, %v3006
    %v3008 = vpop.f32.mrb[0].mxu0
    %v3009 = vpop.f32.mrb[0].mxu0
    %v3010 = vadd.f32 0.0, %v3009
    %v3011 = vpop.f32.mrb[0].mxu0
    %3012 = vmatprep.mubr.bf16.mxu0 %v2720
    %3013 = vmatmul.mubr.bf16.gmra.mrb[0].mxu0 %v2344
    %v3014 = vpop.f32.mrb[0].mxu0
    %v3015 = vadd.f32 0.0, %v3014
    %v3016 = vpop.f32.mrb[0].mxu0
    %v3017 = vpop.f32.mrb[0].mxu0
    %v3018 = vadd.f32 0.0, %v3017
    %v3019 = vpop.f32.mrb[0].mxu0
    %3020 = vmatprep.mubr.bf16.mxu0 %v2722
    %3021 = vmatmul.mubr.bf16.gmra.mrb[0].mxu0 %v2347
    %v3022 = vpop.f32.mrb[0].mxu0
    %v3023 = vadd.f32 0.0, %v3022
    %v3024 = vpop.f32.mrb[0].mxu0
    %v3025 = vpop.f32.mrb[0].mxu0
    %v3026 = vadd.f32 0.0, %v3025
    %v3027 = vpop.f32.mrb[0].mxu0
    %3028 = vmatprep.mubr.bf16.mxu0 %v2724
    %3029 = vmatmul.mubr.bf16.gmra.mrb[0].mxu0 %v2350
    %v3030 = vpop.f32.mrb[0].mxu0
    %v3031 = vadd.f32 0.0, %v3030
    %v3032 = vpop.f32.mrb[0].mxu0
    %v3033 = vpop.f32.mrb[0].mxu0
    %v3034 = vadd.f32 0.0, %v3033
    %v3035 = vpop.f32.mrb[0].mxu0
    %3036 = vmatprep.mubr.bf16.mxu0 %v2726
    %3037 = vmatmul.mubr.bf16.gmra.mrb[0].mxu0 %v2353
    %v3038 = vpop.f32.mrb[0].mxu0
    %v3039 = vadd.f32 0.0, %v3038
    %v3040 = vpop.f32.mrb[0].mxu0
    %v3041 = vpop.f32.mrb[0].mxu0
    %v3042 = vadd.f32 0.0, %v3041
    %v3043 = vpop.f32.mrb[0].mxu0
    %3044 = vmatprep.mubr.bf16.mxu0 %v2728
    %3045 = vmatmul.mubr.bf16.gmra.mrb[0].mxu0 %v2356
    %v3046 = vpop.f32.mrb[0].mxu0
    %v3047 = vadd.f32 0.0, %v3046
    %v3048 = vpop.f32.mrb[0].mxu0
    %v3049 = vpop.f32.mrb[0].mxu0
    %v3050 = vadd.f32 0.0, %v3049
    %v3051 = vpop.f32.mrb[0].mxu0
    %3052 = vmatprep.mubr.bf16.mxu0 %v2730
    %3053 = vmatmul.mubr.bf16.gmra.mrb[0].mxu0 %v2359
    %v3054 = vpop.f32.mrb[0].mxu0
    %v3055 = vadd.f32 0.0, %v3054
    %v3056 = vpop.f32.mrb[0].mxu0
    %v3057 = vpop.f32.mrb[0].mxu0
    %v3058 = vadd.f32 0.0, %v3057
    %v3059 = vpop.f32.mrb[0].mxu0
    %3060 = vmatprep.mubr.bf16.mxu0 %v2732
    %3061 = vmatmul.mubr.bf16.gmra.mrb[0].mxu0 %v2362
    %v3062 = vpop.f32.mrb[0].mxu0
    %v3063 = vadd.f32 0.0, %v3062
    %v3064 = vpop.f32.mrb[0].mxu0
    %v3065 = vpop.f32.mrb[0].mxu0
    %v3066 = vadd.f32 0.0, %v3065
    %v3067 = vpop.f32.mrb[0].mxu0
    %3068 = vmatprep.mubr.bf16.mxu0 %v2734
    %3069 = vmatmul.mubr.bf16.gmra.mrb[0].mxu0 %v2365
    %v3070 = vpop.f32.mrb[0].mxu0
    %v3071 = vadd.f32 0.0, %v3070
    %v3072 = vpop.f32.mrb[0].mxu0
    %v3073 = vpop.f32.mrb[0].mxu0
    %v3074 = vadd.f32 0.0, %v3073
    %v3075 = vpop.f32.mrb[0].mxu0
    %3076 = vmatprep.mubr.bf16.mxu0 %v2736
    %3077 = vmatmul.mubr.bf16.gmra.mrb[0].mxu0 %v2368
    %v3078 = vpop.f32.mrb[0].mxu0
    %v3079 = vadd.f32 0.0, %v3078
    %v3080 = vpop.f32.mrb[0].mxu0
    %v3081 = vpop.f32.mrb[0].mxu0
    %v3082 = vadd.f32 0.0, %v3081
    %v3083 = vpop.f32.mrb[0].mxu0
    %3084 = vmatprep.mubr.bf16.mxu0 %v2738
    %3085 = vmatmul.mubr.bf16.gmra.mrb[0].mxu0 %v2371
    %v3086 = vpop.f32.mrb[0].mxu0
    %v3087 = vadd.f32 0.0, %v3086
    %v3088 = vpop.f32.mrb[0].mxu0
    %v3089 = vpop.f32.mrb[0].mxu0
    %v3090 = vadd.f32 0.0, %v3089
    %v3091 = vpop.f32.mrb[0].mxu0
    %3092 = vmatprep.mubr.bf16.mxu0 %v2740
    %3093 = vmatmul.mubr.bf16.gmra.mrb[0].mxu0 %v2374
    %v3094 = vpop.f32.mrb[0].mxu0
    %v3095 = vadd.f32 0.0, %v3094
    %v3096 = vpop.f32.mrb[0].mxu0
    %v3097 = vpop.f32.mrb[0].mxu0
    %v3098 = vadd.f32 0.0, %v3097
    %v3099 = vpop.f32.mrb[0].mxu0
    %3100 = vmatprep.mubr.bf16.mxu0 %v2742
    %3101 = vmatmul.mubr.bf16.gmra.mrb[0].mxu0 %v2377
    %v3102 = vpop.f32.mrb[0].mxu0
    %v3103 = vadd.f32 0.0, %v3102
    %v3104 = vpop.f32.mrb[0].mxu0
    %v3105 = vpop.f32.mrb[0].mxu0
    %v3106 = vadd.f32 0.0, %v3105
    %v3107 = vpop.f32.mrb[0].mxu0
    %3108 = vmatprep.mubr.bf16.mxu0 %v2744
    %3109 = vmatmul.mubr.bf16.gmra.mrb[0].mxu0 %v2380
    %v3110 = vpop.f32.mrb[0].mxu0
    %v3111 = vadd.f32 0.0, %v3110
    %v3112 = vpop.f32.mrb[0].mxu0
    %v3113 = vpop.f32.mrb[0].mxu0
    %v3114 = vadd.f32 0.0, %v3113
    %v3115 = vpop.f32.mrb[0].mxu0
    %3116 = vmatprep.mubr.bf16.mxu0 %v2746
    %3117 = vmatmul.mubr.bf16.gmra.mrb[0].mxu0 %v2383
    %v3118 = vpop.f32.mrb[0].mxu0
    %v3119 = vadd.f32 0.0, %v3118
    %v3120 = vpop.f32.mrb[0].mxu0
    %v3121 = vpop.f32.mrb[0].mxu0
    %v3122 = vadd.f32 0.0, %v3121
    %v3123 = vpop.f32.mrb[0].mxu0
    %3124 = vmatprep.mubr.bf16.mxu0 %v2748
    %3125 = vmatmul.mubr.bf16.gmra.mrb[0].mxu0 %v2386
    %v3126 = vpop.f32.mrb[0].mxu0
    %v3127 = vadd.f32 0.0, %v3126
    %v3128 = vpop.f32.mrb[0].mxu0
    %v3129 = vpop.f32.mrb[0].mxu0
    %v3130 = vadd.f32 0.0, %v3129
    %v3131 = vpop.f32.mrb[0].mxu0
    %3132 = vmatprep.mubr.bf16.mxu0 %v2750
    %3133 = vmatmul.mubr.bf16.gmra.mrb[0].mxu0 %v2389
    %v3134 = vpop.f32.mrb[0].mxu0
    %v3135 = vadd.f32 0.0, %v3134
    %v3136 = vpop.f32.mrb[0].mxu0
    %v3137 = vpop.f32.mrb[0].mxu0
    %v3138 = vadd.f32 0.0, %v3137
    %v3139 = vpop.f32.mrb[0].mxu0
    %3140 = vmatprep.mubr.bf16.mxu0 %v2752
    %3141 = vmatmul.mubr.bf16.gmra.mrb[0].mxu0 %v2392
    %v3142 = vpop.f32.mrb[0].mxu0
    %v3143 = vadd.f32 0.0, %v3142
    %v3144 = vpop.f32.mrb[0].mxu0
    %v3145 = vpop.f32.mrb[0].mxu0
    %v3146 = vadd.f32 0.0, %v3145
    %v3147 = vpop.f32.mrb[0].mxu0
    %3148 = vmatprep.mubr.bf16.mxu0 %v2754
    %3149 = vmatmul.mubr.bf16.gmra.mrb[0].mxu0 %v2395
    %v3150 = vpop.f32.mrb[0].mxu0
    %v3151 = vadd.f32 0.0, %v3150
    %v3152 = vpop.f32.mrb[0].mxu0
    %v3153 = vpop.f32.mrb[0].mxu0
    %v3154 = vadd.f32 0.0, %v3153
    %v3155 = vpop.f32.mrb[0].mxu0
    %3156 = vmatprep.mubr.bf16.mxu0 %v2756
    %3157 = vmatmul.mubr.bf16.gmra.mrb[0].mxu0 %v2398
    %v3158 = vpop.f32.mrb[0].mxu0
    %v3159 = vadd.f32 0.0, %v3158
    %v3160 = vpop.f32.mrb[0].mxu0
    %v3161 = vpop.f32.mrb[0].mxu0
    %v3162 = vadd.f32 0.0, %v3161
    %v3163 = vpop.f32.mrb[0].mxu0
    %3164 = vmatprep.mubr.bf16.mxu0 %v2758
    %3165 = vmatmul.mubr.bf16.gmra.mrb[0].mxu0 %v2401
    %v3166 = vpop.f32.mrb[0].mxu0
    %v3167 = vadd.f32 0.0, %v3166
    %v3168 = vpop.f32.mrb[0].mxu0
    %v3169 = vpop.f32.mrb[0].mxu0
    %v3170 = vadd.f32 0.0, %v3169
    %v3171 = vpop.f32.mrb[0].mxu0
    %3172 = vmatprep.mubr.bf16.mxu0 %v2760
    %3173 = vmatmul.mubr.bf16.gmra.mrb[0].mxu0 %v2404
    %v3174 = vpop.f32.mrb[0].mxu0
    %v3175 = vadd.f32 0.0, %v3174
    %v3176 = vpop.f32.mrb[0].mxu0
    %v3177 = vpop.f32.mrb[0].mxu0
    %v3178 = vadd.f32 0.0, %v3177
    %v3179 = vpop.f32.mrb[0].mxu0
    %3180 = vmatprep.mubr.bf16.mxu0 %v2762
    %3181 = vmatmul.mubr.bf16.gmra.mrb[0].mxu0 %v2407
    %v3182 = vpop.f32.mrb[0].mxu0
    %v3183 = vadd.f32 0.0, %v3182
    %v3184 = vpop.f32.mrb[0].mxu0
    %v3185 = vpop.f32.mrb[0].mxu0
    %v3186 = vadd.f32 0.0, %v3185
    %v3187 = vpop.f32.mrb[0].mxu0
    %3188 = vmatprep.mubr.bf16.mxu0 %v2764
    %3189 = vmatmul.mubr.bf16.gmra.mrb[0].mxu0 %v2410
    %v3190 = vpop.f32.mrb[0].mxu0
    %v3191 = vadd.f32 0.0, %v3190
    %v3192 = vpop.f32.mrb[0].mxu0
    %v3193 = vpop.f32.mrb[0].mxu0
    %v3194 = vadd.f32 0.0, %v3193
    %v3195 = vpop.f32.mrb[0].mxu0
    %3196 = vmatprep.mubr.bf16.mxu0 %v2766
    %3197 = vmatmul.mubr.bf16.gmra.mrb[0].mxu0 %v2413
    %v3198 = vpop.f32.mrb[0].mxu0
    %v3199 = vadd.f32 0.0, %v3198
    %v3200 = vpop.f32.mrb[0].mxu0
    %v3201 = vpop.f32.mrb[0].mxu0
    %v3202 = vadd.f32 0.0, %v3201
    %v3203 = vpop.f32.mrb[0].mxu0
    %3204 = vmatprep.mubr.bf16.mxu0 %v2768
    %3205 = vmatmul.mubr.bf16.gmra.mrb[0].mxu0 %v2416
    %v3206 = vpop.f32.mrb[0].mxu0
    %v3207 = vadd.f32 0.0, %v3206
    %v3208 = vpop.f32.mrb[0].mxu0
    %v3209 = vpop.f32.mrb[0].mxu0
    %v3210 = vadd.f32 0.0, %v3209
    %v3211 = vpop.f32.mrb[0].mxu0
    %3212 = vmatprep.mubr.bf16.mxu0 %v2770
    %3213 = vmatmul.mubr.bf16.gmra.mrb[0].mxu0 %v2419
    %v3214 = vpop.f32.mrb[0].mxu0
    %v3215 = vadd.f32 0.0, %v3214
    %v3216 = vpop.f32.mrb[0].mxu0
    %v3217 = vpop.f32.mrb[0].mxu0
    %v3218 = vadd.f32 0.0, %v3217
    %v3219 = vpop.f32.mrb[0].mxu0
    %3220 = vmatprep.mubr.bf16.mxu0 %v2772
    %3221 = vmatmul.mubr.bf16.gmra.mrb[0].mxu0 %v2421
    %v3222 = vpop.f32.mrb[0].mxu0
    %v3223 = vadd.f32 0.0, %v3222
    %v3224 = vpop.f32.mrb[0].mxu0
    %v3225 = vpop.f32.mrb[0].mxu0
    %v3226 = vadd.f32 0.0, %v3225
    %v3227 = vpop.f32.mrb[0].mxu0
    %3228 = vmatprep.mubr.bf16.mxu0 %v2774
    %3229 = vmatmul.mubr.bf16.gmra.mrb[0].mxu0 %v2423
    %v3230 = vpop.f32.mrb[0].mxu0
    %v3231 = vadd.f32 0.0, %v3230
    %v3232 = vpop.f32.mrb[0].mxu0
    %v3233 = vpop.f32.mrb[0].mxu0
    %v3234 = vadd.f32 0.0, %v3233
    %v3235 = vpop.f32.mrb[0].mxu0
    %3236 = vmatprep.mubr.bf16.mxu0 %v2776
    %3237 = vmatmul.mubr.bf16.gmra.mrb[0].mxu0 %v2426
    %v3238 = vpop.f32.mrb[0].mxu0
    %v3239 = vadd.f32 0.0, %v3238
    %v3240 = vpop.f32.mrb[0].mxu0
    %v3241 = vpop.f32.mrb[0].mxu0
    %v3242 = vadd.f32 0.0, %v3241
    %v3243 = vpop.f32.mrb[0].mxu0
    %3244 = vmatprep.mubr.bf16.mxu0 %v2778
    %3245 = vmatmul.mubr.bf16.gmra.mrb[0].mxu0 %v2429
    %v3246 = vpop.f32.mrb[0].mxu0
    %v3247 = vadd.f32 0.0, %v3246
    %v3248 = vpop.f32.mrb[0].mxu0
    %v3249 = vpop.f32.mrb[0].mxu0
    %v3250 = vadd.f32 0.0, %v3249
    %v3251 = vpop.f32.mrb[0].mxu0
    %3252 = vmatprep.mubr.bf16.mxu0 %v2780
    %3253 = vmatmul.mubr.bf16.gmra.mrb[0].mxu0 %v2432
    %v3254 = vpop.f32.mrb[0].mxu0
    %v3255 = vadd.f32 0.0, %v3254
    %v3256 = vpop.f32.mrb[0].mxu0
    %v3257 = vpop.f32.mrb[0].mxu0
    %v3258 = vadd.f32 0.0, %v3257
    %v3259 = vpop.f32.mrb[0].mxu0
    %3260 = vmatprep.mubr.bf16.mxu0 %v2782
    %3261 = vmatmul.mubr.bf16.gmra.mrb[0].mxu0 %v2435
    %v3262 = vpop.f32.mrb[0].mxu0
    %v3263 = vadd.f32 0.0, %v3262
    %v3264 = vpop.f32.mrb[0].mxu0
    %v3265 = vpop.f32.mrb[0].mxu0
    %v3266 = vadd.f32 0.0, %v3265
    %v3267 = vpop.f32.mrb[0].mxu0
    %3268 = vmatprep.mubr.bf16.mxu0 %v2784
    %3269 = vmatmul.mubr.bf16.gmra.mrb[0].mxu0 %v2438
    %v3270 = vpop.f32.mrb[0].mxu0
    %v3271 = vadd.f32 0.0, %v3270
    %v3272 = vpop.f32.mrb[0].mxu0
    %v3273 = vpop.f32.mrb[0].mxu0
    %v3274 = vadd.f32 0.0, %v3273
    %v3275 = vpop.f32.mrb[0].mxu0
    %3276 = vmatprep.mubr.bf16.mxu0 %v2786
    %3277 = vmatmul.mubr.bf16.gmra.mrb[0].mxu0 %v2441
    %v3278 = vpop.f32.mrb[0].mxu0
    %v3279 = vadd.f32 0.0, %v3278
    %v3280 = vpop.f32.mrb[0].mxu0
    %v3281 = vpop.f32.mrb[0].mxu0
    %v3282 = vadd.f32 0.0, %v3281
    %v3283 = vpop.f32.mrb[0].mxu0
    %3284 = vmatprep.mubr.bf16.mxu0 %v2788
    %3285 = vmatmul.mubr.bf16.gmra.mrb[0].mxu0 %v2444
    %v3286 = vpop.f32.mrb[0].mxu0
    %v3287 = vadd.f32 0.0, %v3286
    %v3288 = vpop.f32.mrb[0].mxu0
    %v3289 = vpop.f32.mrb[0].mxu0
    %v3290 = vadd.f32 0.0, %v3289
    %v3291 = vpop.f32.mrb[0].mxu0
    %3292 = vmatprep.mubr.bf16.mxu0 %v2790
    %3293 = vmatmul.mubr.bf16.gmra.mrb[0].mxu0 %v2447
    %v3294 = vpop.f32.mrb[0].mxu0
    %v3295 = vadd.f32 0.0, %v3294
    %v3296 = vpop.f32.mrb[0].mxu0
    %v3297 = vpop.f32.mrb[0].mxu0
    %v3298 = vadd.f32 0.0, %v3297
    %v3299 = vpop.f32.mrb[0].mxu0
    %3300 = vmatprep.mubr.bf16.mxu0 %v2792
    %3301 = vmatmul.mubr.bf16.gmra.mrb[0].mxu0 %v2450
    %v3302 = vpop.f32.mrb[0].mxu0
    %v3303 = vadd.f32 0.0, %v3302
    %v3304 = vpop.f32.mrb[0].mxu0
    %v3305 = vpop.f32.mrb[0].mxu0
    %v3306 = vadd.f32 0.0, %v3305
    %v3307 = vpop.f32.mrb[0].mxu0
    %3308 = vmatprep.mubr.bf16.mxu0 %v2794
    %3309 = vmatmul.mubr.bf16.gmra.mrb[0].mxu0 %v2453
    %v3310 = vpop.f32.mrb[0].mxu0
    %v3311 = vadd.f32 0.0, %v3310
    %v3312 = vpop.f32.mrb[0].mxu0
    %v3313 = vpop.f32.mrb[0].mxu0
    %v3314 = vadd.f32 0.0, %v3313
    %v3315 = vpop.f32.mrb[0].mxu0
    %3316 = vmatprep.mubr.bf16.mxu0 %v2796
    %3317 = vmatmul.mubr.bf16.gmra.mrb[0].mxu0 %v2456
    %v3318 = vpop.f32.mrb[0].mxu0
    %v3319 = vadd.f32 0.0, %v3318
    %v3320 = vpop.f32.mrb[0].mxu0
    %v3321 = vpop.f32.mrb[0].mxu0
    %v3322 = vadd.f32 0.0, %v3321
    %v3323 = vpop.f32.mrb[0].mxu0
    %3324 = vmatprep.mubr.bf16.mxu0 %v2798
    %3325 = vmatmul.mubr.bf16.gmra.mrb[0].mxu0 %v2459
    %v3326 = vpop.f32.mrb[0].mxu0
    %v3327 = vadd.f32 0.0, %v3326
    %v3328 = vpop.f32.mrb[0].mxu0
    %v3329 = vpop.f32.mrb[0].mxu0
    %v3330 = vadd.f32 0.0, %v3329
    %v3331 = vpop.f32.mrb[0].mxu0
    %3332 = vmatprep.mubr.bf16.mxu0 %v2800
    %3333 = vmatmul.mubr.bf16.gmra.mrb[0].mxu0 %v2462
    %v3334 = vpop.f32.mrb[0].mxu0
    %v3335 = vadd.f32 0.0, %v3334
    %v3336 = vpop.f32.mrb[0].mxu0
    %v3337 = vpop.f32.mrb[0].mxu0
    %v3338 = vadd.f32 0.0, %v3337
    %v3339 = vpop.f32.mrb[0].mxu0
    %3340 = vmatprep.mubr.bf16.mxu0 %v2802
    %3341 = vmatmul.mubr.bf16.gmra.mrb[0].mxu0 %v2465
    %v3342 = vpop.f32.mrb[0].mxu0
    %v3343 = vadd.f32 0.0, %v3342
    %v3344 = vpop.f32.mrb[0].mxu0
    %v3345 = vpop.f32.mrb[0].mxu0
    %v3346 = vadd.f32 0.0, %v3345
    %v3347 = vpop.f32.mrb[0].mxu0
    %3348 = vmatprep.mubr.bf16.mxu0 %v2804
    %3349 = vmatmul.mubr.bf16.gmra.mrb[0].mxu0 %v2468
    %v3350 = vpop.f32.mrb[0].mxu0
    %v3351 = vadd.f32 0.0, %v3350
    %v3352 = vpop.f32.mrb[0].mxu0
    %v3353 = vpop.f32.mrb[0].mxu0
    %v3354 = vadd.f32 0.0, %v3353
    %v3355 = vpop.f32.mrb[0].mxu0
    %3356 = vmatprep.mubr.bf16.mxu0 %v2806
    %3357 = vmatmul.mubr.bf16.gmra.mrb[0].mxu0 %v2471
    %v3358 = vpop.f32.mrb[0].mxu0
    %v3359 = vadd.f32 0.0, %v3358
    %v3360 = vpop.f32.mrb[0].mxu0
    %v3361 = vpop.f32.mrb[0].mxu0
    %v3362 = vadd.f32 0.0, %v3361
    %v3363 = vpop.f32.mrb[0].mxu0
    %3364 = vmatprep.mubr.bf16.mxu0 %v2808
    %3365 = vmatmul.mubr.bf16.gmra.mrb[0].mxu0 %v2474
    %v3366 = vpop.f32.mrb[0].mxu0
    %v3367 = vadd.f32 0.0, %v3366
    %v3368 = vpop.f32.mrb[0].mxu0
    %v3369 = vpop.f32.mrb[0].mxu0
    %v3370 = vadd.f32 0.0, %v3369
    %v3371 = vpop.f32.mrb[0].mxu0
    %3372 = vmatprep.mubr.bf16.mxu0 %v2810
    %3373 = vmatmul.mubr.bf16.gmra.mrb[0].mxu0 %v2477
    %v3374 = vpop.f32.mrb[0].mxu0
    %v3375 = vadd.f32 0.0, %v3374
    %v3376 = vpop.f32.mrb[0].mxu0
    %v3377 = vpop.f32.mrb[0].mxu0
    %v3378 = vadd.f32 0.0, %v3377
    %v3379 = vpop.f32.mrb[0].mxu0
    %3380 = vmatprep.mubr.bf16.mxu0 %v2812
    %3381 = vmatmul.mubr.bf16.gmra.mrb[0].mxu0 %v2480
    %v3382 = vpop.f32.mrb[0].mxu0
    %v3383 = vadd.f32 0.0, %v3382
    %v3384 = vpop.f32.mrb[0].mxu0
    %v3385 = vpop.f32.mrb[0].mxu0
    %v3386 = vadd.f32 0.0, %v3385
    %v3387 = vpop.f32.mrb[0].mxu0
    %3388 = vmatprep.mubr.bf16.mxu0 %v2814
    %3389 = vmatmul.mubr.bf16.gmra.mrb[0].mxu0 %v2483
    %v3390 = vpop.f32.mrb[0].mxu0
    %v3391 = vadd.f32 0.0, %v3390
    %v3392 = vpop.f32.mrb[0].mxu0
    %v3393 = vpop.f32.mrb[0].mxu0
    %v3394 = vadd.f32 0.0, %v3393
    %v3395 = vpop.f32.mrb[0].mxu0
    %3396 = vmatprep.mubr.bf16.mxu0 %v2816
    %3397 = vmatmul.mubr.bf16.gmra.mrb[0].mxu0 %v2486
    %v3398 = vpop.f32.mrb[0].mxu0
    %v3399 = vadd.f32 0.0, %v3398
    %v3400 = vpop.f32.mrb[0].mxu0
    %v3401 = vpop.f32.mrb[0].mxu0
    %v3402 = vadd.f32 0.0, %v3401
    %v3403 = vpop.f32.mrb[0].mxu0
    %3404 = vmatprep.mubr.bf16.mxu0 %v2818
    %3405 = vmatmul.mubr.bf16.gmra.mrb[0].mxu0 %v2489
    %v3406 = vpop.f32.mrb[0].mxu0
    %v3407 = vadd.f32 0.0, %v3406
    %v3408 = vpop.f32.mrb[0].mxu0
    %v3409 = vpop.f32.mrb[0].mxu0
    %v3410 = vadd.f32 0.0, %v3409
    %v3411 = vpop.f32.mrb[0].mxu0
    %3412 = vmatprep.mubr.bf16.mxu0 %v2820
    %3413 = vmatmul.mubr.bf16.gmra.mrb[0].mxu0 %v2492
    %v3414 = vpop.f32.mrb[0].mxu0
    %v3415 = vadd.f32 0.0, %v3414
    %v3416 = vpop.f32.mrb[0].mxu0
    %v3417 = vpop.f32.mrb[0].mxu0
    %v3418 = vadd.f32 0.0, %v3417
    %v3419 = vpop.f32.mrb[0].mxu0
    %3420 = vmatprep.mubr.bf16.mxu0 %v2822
    %3421 = vmatmul.mubr.bf16.gmra.mrb[0].mxu0 %v2495
    %v3422 = vpop.f32.mrb[0].mxu0
    %v3423 = vadd.f32 0.0, %v3422
    %v3424 = vpop.f32.mrb[0].mxu0
    %v3425 = vpop.f32.mrb[0].mxu0
    %v3426 = vadd.f32 0.0, %v3425
    %v3427 = vpop.f32.mrb[0].mxu0
    %3428 = vmatprep.mubr.bf16.mxu0 %v2824
    %3429 = vmatmul.mubr.bf16.gmra.mrb[0].mxu0 %v2498
    %v3430 = vpop.f32.mrb[0].mxu0
    %v3431 = vadd.f32 0.0, %v3430
    %v3432 = vpop.f32.mrb[0].mxu0
    %v3433 = vpop.f32.mrb[0].mxu0
    %v3434 = vadd.f32 0.0, %v3433
    %v3435 = vpop.f32.mrb[0].mxu0
    %3436 = vmatprep.mubr.bf16.mxu0 %v2826
    %3437 = vmatmul.mubr.bf16.gmra.mrb[0].mxu0 %v2501
    %v3438 = vpop.f32.mrb[0].mxu0
    %v3439 = vadd.f32 0.0, %v3438
    %v3440 = vpop.f32.mrb[0].mxu0
    %v3441 = vpop.f32.mrb[0].mxu0
    %v3442 = vadd.f32 0.0, %v3441
    %v3443 = vpop.f32.mrb[0].mxu0
    %3444 = vmatprep.mubr.bf16.mxu0 %v2828
    %3445 = vmatmul.mubr.bf16.gmra.mrb[0].mxu0 %v2504
    %v3446 = vpop.f32.mrb[0].mxu0
    %v3447 = vadd.f32 0.0, %v3446
    %v3448 = vpop.f32.mrb[0].mxu0
    %v3449 = vpop.f32.mrb[0].mxu0
    %v3450 = vadd.f32 0.0, %v3449
    %v3451 = vpop.f32.mrb[0].mxu0
    %3452 = vmatprep.mubr.bf16.mxu0 %v2830
    %3453 = vmatmul.mubr.bf16.gmra.mrb[0].mxu0 %v2507
    %v3454 = vpop.f32.mrb[0].mxu0
    %v3455 = vadd.f32 0.0, %v3454
    %v3456 = vpop.f32.mrb[0].mxu0
    %v3457 = vpop.f32.mrb[0].mxu0
    %v3458 = vadd.f32 0.0, %v3457
    %v3459 = vpop.f32.mrb[0].mxu0
    %3460 = vmatprep.mubr.bf16.mxu0 %v2832
    %3461 = vmatmul.mubr.bf16.gmra.mrb[0].mxu0 %v2510
    %v3462 = vpop.f32.mrb[0].mxu0
    %v3463 = vadd.f32 0.0, %v3462
    %v3464 = vpop.f32.mrb[0].mxu0
    %v3465 = vpop.f32.mrb[0].mxu0
    %v3466 = vadd.f32 0.0, %v3465
    %v3467 = vpop.f32.mrb[0].mxu0
    %3468 = vmatprep.mubr.bf16.mxu0 %v2834
    %3469 = vmatmul.mubr.bf16.gmra.mrb[0].mxu0 %v2513
    %v3470 = vpop.f32.mrb[0].mxu0
    %v3471 = vadd.f32 0.0, %v3470
    %v3472 = vpop.f32.mrb[0].mxu0
    %v3473 = vpop.f32.mrb[0].mxu0
    %v3474 = vadd.f32 0.0, %v3473
    %v3475 = vpop.f32.mrb[0].mxu0
    %3476 = vdwg.mxu0
    %v3477 = vmax.f32 %v2967, 0.0
    %v3478 = vmax.f32 %v2970, 0.0
    %v3479 = vmax.f32 %v2975, 0.0
    %v3480 = vmax.f32 %v2978, 0.0
    %v3481 = vmax.f32 %v2983, 0.0
    %v3482 = vmax.f32 %v2986, 0.0
    %v3483 = vmax.f32 %v2991, 0.0
    %v3484 = vmax.f32 %v2994, 0.0
    %v3485 = vmax.f32 %v2999, 0.0
    %v3486 = vmax.f32 %v3002, 0.0
    %v3487 = vmax.f32 %v3007, 0.0
    %v3488 = vmax.f32 %v3010, 0.0
    %v3489 = vmax.f32 %v3015, 0.0
    %v3490 = vmax.f32 %v3018, 0.0
    %v3491 = vmax.f32 %v3023, 0.0
    %v3492 = vmax.f32 %v3026, 0.0
    %v3493 = vmax.f32 %v3031, 0.0
    %v3494 = vmax.f32 %v3034, 0.0
    %v3495 = vmax.f32 %v3039, 0.0
    %v3496 = vmax.f32 %v3042, 0.0
    %v3497 = vmax.f32 %v3047, 0.0
    %v3498 = vmax.f32 %v3050, 0.0
    %v3499 = vmax.f32 %v3055, 0.0
    %v3500 = vmax.f32 %v3058, 0.0
    %v3501 = vmax.f32 %v3063, 0.0
    %v3502 = vmax.f32 %v3066, 0.0
    %v3503 = vmax.f32 %v3071, 0.0
    %v3504 = vmax.f32 %v3074, 0.0
    %v3505 = vmax.f32 %v3079, 0.0
    %v3506 = vmax.f32 %v3082, 0.0
    %v3507 = vmax.f32 %v3087, 0.0
    %v3508 = vmax.f32 %v3090, 0.0
    %v3509 = vmax.f32 %v3095, 0.0
    %v3510 = vmax.f32 %v3098, 0.0
    %v3511 = vmax.f32 %v3103, 0.0
    %v3512 = vmax.f32 %v3106, 0.0
    %v3513 = vmax.f32 %v3111, 0.0
    %v3514 = vmax.f32 %v3114, 0.0
    %v3515 = vmax.f32 %v3119, 0.0
    %v3516 = vmax.f32 %v3122, 0.0
    %v3517 = vmax.f32 %v3127, 0.0
    %v3518 = vmax.f32 %v3130, 0.0
    %v3519 = vmax.f32 %v3135, 0.0
    %v3520 = vmax.f32 %v3138, 0.0
    %v3521 = vmax.f32 %v3143, 0.0
    %v3522 = vmax.f32 %v3146, 0.0
    %v3523 = vmax.f32 %v3151, 0.0
    %v3524 = vmax.f32 %v3154, 0.0
    %v3525 = vmax.f32 %v3159, 0.0
    %v3526 = vmax.f32 %v3162, 0.0
    %v3527 = vmax.f32 %v3167, 0.0
    %v3528 = vmax.f32 %v3170, 0.0
    %v3529 = vmax.f32 %v3175, 0.0
    %v3530 = vmax.f32 %v3178, 0.0
    %v3531 = vmax.f32 %v3183, 0.0
    %v3532 = vmax.f32 %v3186, 0.0
    %v3533 = vmax.f32 %v3191, 0.0
    %v3534 = vmax.f32 %v3194, 0.0
    %v3535 = vmax.f32 %v3199, 0.0
    %v3536 = vmax.f32 %v3202, 0.0
    %v3537 = vmax.f32 %v3207, 0.0
    %v3538 = vmax.f32 %v3210, 0.0
    %v3539 = vmax.f32 %v3215, 0.0
    %v3540 = vmax.f32 %v3218, 0.0
    %v3541 = vmax.f32 %v3223, 0.0
    %v3542 = vmax.f32 %v3226, 0.0
    %v3543 = vmax.f32 %v3231, 0.0
    %v3544 = vmax.f32 %v3234, 0.0
    %v3545 = vmax.f32 %v3239, 0.0
    %v3546 = vmax.f32 %v3242, 0.0
    %v3547 = vmax.f32 %v3247, 0.0
    %v3548 = vmax.f32 %v3250, 0.0
    %v3549 = vmax.f32 %v3255, 0.0
    %v3550 = vmax.f32 %v3258, 0.0
    %v3551 = vmax.f32 %v3263, 0.0
    %v3552 = vmax.f32 %v3266, 0.0
    %v3553 = vmax.f32 %v3271, 0.0
    %v3554 = vmax.f32 %v3274, 0.0
    %v3555 = vmax.f32 %v3279, 0.0
    %v3556 = vmax.f32 %v3282, 0.0
    %v3557 = vmax.f32 %v3287, 0.0
    %v3558 = vmax.f32 %v3290, 0.0
    %v3559 = vmax.f32 %v3295, 0.0
    %v3560 = vmax.f32 %v3298, 0.0
    %v3561 = vmax.f32 %v3303, 0.0
    %v3562 = vmax.f32 %v3306, 0.0
    %v3563 = vmax.f32 %v3311, 0.0
    %v3564 = vmax.f32 %v3314, 0.0
    %v3565 = vmax.f32 %v3319, 0.0
    %v3566 = vmax.f32 %v3322, 0.0
    %v3567 = vmax.f32 %v3327, 0.0
    %v3568 = vmax.f32 %v3330, 0.0
    %v3569 = vmax.f32 %v3335, 0.0
    %v3570 = vmax.f32 %v3338, 0.0
    %v3571 = vmax.f32 %v3343, 0.0
    %v3572 = vmax.f32 %v3346, 0.0
    %v3573 = vmax.f32 %v3351, 0.0
    %v3574 = vmax.f32 %v3354, 0.0
    %v3575 = vmax.f32 %v3359, 0.0
    %v3576 = vmax.f32 %v3362, 0.0
    %v3577 = vmax.f32 %v3367, 0.0
    %v3578 = vmax.f32 %v3370, 0.0
    %v3579 = vmax.f32 %v3375, 0.0
    %v3580 = vmax.f32 %v3378, 0.0
    %v3581 = vmax.f32 %v3383, 0.0
    %v3582 = vmax.f32 %v3386, 0.0
    %v3583 = vmax.f32 %v3391, 0.0
    %v3584 = vmax.f32 %v3394, 0.0
    %v3585 = vmax.f32 %v3399, 0.0
    %v3586 = vmax.f32 %v3402, 0.0
    %v3587 = vmax.f32 %v3407, 0.0
    %v3588 = vmax.f32 %v3410, 0.0
    %v3589 = vmax.f32 %v3415, 0.0
    %v3590 = vmax.f32 %v3418, 0.0
    %v3591 = vmax.f32 %v3423, 0.0
    %v3592 = vmax.f32 %v3426, 0.0
    %v3593 = vmax.f32 %v3431, 0.0
    %v3594 = vmax.f32 %v3434, 0.0
    %v3595 = vmax.f32 %v3439, 0.0
    %v3596 = vmax.f32 %v3442, 0.0
    %v3597 = vmax.f32 %v3447, 0.0
    %v3598 = vmax.f32 %v3450, 0.0
    %v3599 = vmax.f32 %v3455, 0.0
    %v3600 = vmax.f32 %v3458, 0.0
    %v3601 = vmax.f32 %v3463, 0.0
    %v3602 = vmax.f32 %v3466, 0.0
    %v3603 = vmax.f32 %v3471, 0.0
    %v3604 = vmax.f32 %v3474, 0.0
    %3733 = vrot.lane.b32.xlu0 %v3477, 96
    %v3734 = vpop.permute.xlu0 %3733
    %3735 = vrot.lane.b32.xlu0 %v3478, 96
    %v3736 = vpop.permute.xlu0 %3735
    %3737 = vrot.lane.b32.xlu0 %v3479, 96
    %v3738 = vpop.permute.xlu0 %3737
    %3739 = vrot.lane.b32.xlu0 %v3480, 96
    %v3740 = vpop.permute.xlu0 %3739
    %3741 = vrot.lane.b32.xlu0 %v3481, 96
    %v3742 = vpop.permute.xlu0 %3741
    %3743 = vrot.lane.b32.xlu0 %v3482, 96
    %v3744 = vpop.permute.xlu0 %3743
    %3745 = vrot.lane.b32.xlu0 %v3483, 96
    %v3746 = vpop.permute.xlu0 %3745
    %3747 = vrot.lane.b32.xlu0 %v3484, 96
    %v3748 = vpop.permute.xlu0 %3747
    %3749 = vrot.lane.b32.xlu0 %v3485, 96
    %v3750 = vpop.permute.xlu0 %3749
    %3751 = vrot.lane.b32.xlu0 %v3486, 96
    %v3752 = vpop.permute.xlu0 %3751
    %3753 = vrot.lane.b32.xlu0 %v3487, 96
    %v3754 = vpop.permute.xlu0 %3753
    %3755 = vrot.lane.b32.xlu0 %v3488, 96
    %v3756 = vpop.permute.xlu0 %3755
    %3757 = vrot.lane.b32.xlu0 %v3489, 96
    %v3758 = vpop.permute.xlu0 %3757
    %3759 = vrot.lane.b32.xlu0 %v3490, 96
    %v3760 = vpop.permute.xlu0 %3759
    %3761 = vrot.lane.b32.xlu0 %v3491, 96
    %v3762 = vpop.permute.xlu0 %3761
    %3763 = vrot.lane.b32.xlu0 %v3492, 96
    %v3764 = vpop.permute.xlu0 %3763
    %3765 = vrot.lane.b32.xlu0 %v3493, 96
    %v3766 = vpop.permute.xlu0 %3765
    %3767 = vrot.lane.b32.xlu0 %v3494, 96
    %v3768 = vpop.permute.xlu0 %3767
    %3769 = vrot.lane.b32.xlu0 %v3495, 96
    %v3770 = vpop.permute.xlu0 %3769
    %3771 = vrot.lane.b32.xlu0 %v3496, 96
    %v3772 = vpop.permute.xlu0 %3771
    %3773 = vrot.lane.b32.xlu0 %v3497, 96
    %v3774 = vpop.permute.xlu0 %3773
    %3775 = vrot.lane.b32.xlu0 %v3498, 96
    %v3776 = vpop.permute.xlu0 %3775
    %3777 = vrot.lane.b32.xlu0 %v3499, 96
    %v3778 = vpop.permute.xlu0 %3777
    %3779 = vrot.lane.b32.xlu0 %v3500, 96
    %v3780 = vpop.permute.xlu0 %3779
    %3781 = vrot.lane.b32.xlu0 %v3501, 96
    %v3782 = vpop.permute.xlu0 %3781
    %3783 = vrot.lane.b32.xlu0 %v3502, 96
    %v3784 = vpop.permute.xlu0 %3783
    %3785 = vrot.lane.b32.xlu0 %v3503, 96
    %v3786 = vpop.permute.xlu0 %3785
    %3787 = vrot.lane.b32.xlu0 %v3504, 96
    %v3788 = vpop.permute.xlu0 %3787
    %3789 = vrot.lane.b32.xlu0 %v3505, 96
    %v3790 = vpop.permute.xlu0 %3789
    %3791 = vrot.lane.b32.xlu0 %v3506, 96
    %v3792 = vpop.permute.xlu0 %3791
    %3793 = vrot.lane.b32.xlu0 %v3507, 96
    %v3794 = vpop.permute.xlu0 %3793
    %3795 = vrot.lane.b32.xlu0 %v3508, 96
    %v3796 = vpop.permute.xlu0 %3795
    %3797 = vrot.lane.b32.xlu0 %v3509, 96
    %v3798 = vpop.permute.xlu0 %3797
    %3799 = vrot.lane.b32.xlu0 %v3510, 96
    %v3800 = vpop.permute.xlu0 %3799
    %3801 = vrot.lane.b32.xlu0 %v3511, 96
    %v3802 = vpop.permute.xlu0 %3801
    %3803 = vrot.lane.b32.xlu0 %v3512, 96
    %v3804 = vpop.permute.xlu0 %3803
    %3805 = vrot.lane.b32.xlu0 %v3513, 96
    %v3806 = vpop.permute.xlu0 %3805
    %3807 = vrot.lane.b32.xlu0 %v3514, 96
    %v3808 = vpop.permute.xlu0 %3807
    %3809 = vrot.lane.b32.xlu0 %v3515, 96
    %v3810 = vpop.permute.xlu0 %3809
    %3811 = vrot.lane.b32.xlu0 %v3516, 96
    %v3812 = vpop.permute.xlu0 %3811
    %3813 = vrot.lane.b32.xlu0 %v3517, 96
    %v3814 = vpop.permute.xlu0 %3813
    %3815 = vrot.lane.b32.xlu0 %v3518, 96
    %v3816 = vpop.permute.xlu0 %3815
    %3817 = vrot.lane.b32.xlu0 %v3519, 96
    %v3818 = vpop.permute.xlu0 %3817
    %3819 = vrot.lane.b32.xlu0 %v3520, 96
    %v3820 = vpop.permute.xlu0 %3819
    %3821 = vrot.lane.b32.xlu0 %v3521, 96
    %v3822 = vpop.permute.xlu0 %3821
    %3823 = vrot.lane.b32.xlu0 %v3522, 96
    %v3824 = vpop.permute.xlu0 %3823
    %3825 = vrot.lane.b32.xlu0 %v3523, 96
    %v3826 = vpop.permute.xlu0 %3825
    %3827 = vrot.lane.b32.xlu0 %v3524, 96
    %v3828 = vpop.permute.xlu0 %3827
    %3829 = vrot.lane.b32.xlu0 %v3525, 96
    %v3830 = vpop.permute.xlu0 %3829
    %3831 = vrot.lane.b32.xlu0 %v3526, 96
    %v3832 = vpop.permute.xlu0 %3831
    %3833 = vrot.lane.b32.xlu0 %v3527, 96
    %v3834 = vpop.permute.xlu0 %3833
    %3835 = vrot.lane.b32.xlu0 %v3528, 96
    %v3836 = vpop.permute.xlu0 %3835
    %3837 = vrot.lane.b32.xlu0 %v3529, 96
    %v3838 = vpop.permute.xlu0 %3837
    %3839 = vrot.lane.b32.xlu0 %v3530, 96
    %v3840 = vpop.permute.xlu0 %3839
    %3841 = vrot.lane.b32.xlu0 %v3531, 96
    %v3842 = vpop.permute.xlu0 %3841
    %3843 = vrot.lane.b32.xlu0 %v3532, 96
    %v3844 = vpop.permute.xlu0 %3843
    %3845 = vrot.lane.b32.xlu0 %v3533, 96
    %v3846 = vpop.permute.xlu0 %3845
    %3847 = vrot.lane.b32.xlu0 %v3534, 96
    %v3848 = vpop.permute.xlu0 %3847
    %3849 = vrot.lane.b32.xlu0 %v3535, 96
    %v3850 = vpop.permute.xlu0 %3849
    %3851 = vrot.lane.b32.xlu0 %v3536, 96
    %v3852 = vpop.permute.xlu0 %3851
    %3853 = vrot.lane.b32.xlu0 %v3537, 96
    %v3854 = vpop.permute.xlu0 %3853
    %3855 = vrot.lane.b32.xlu0 %v3538, 96
    %v3856 = vpop.permute.xlu0 %3855
    %3857 = vrot.lane.b32.xlu0 %v3539, 96
    %v3858 = vpop.permute.xlu0 %3857
    %3859 = vrot.lane.b32.xlu0 %v3540, 96
    %v3860 = vpop.permute.xlu0 %3859
    %3861 = vrot.lane.b32.xlu0 %v3541, 96
    %v3862 = vpop.permute.xlu0 %3861
    %3863 = vrot.lane.b32.xlu0 %v3542, 96
    %v3864 = vpop.permute.xlu0 %3863
    %3865 = vrot.lane.b32.xlu0 %v3543, 96
    %v3866 = vpop.permute.xlu0 %3865
    %3867 = vrot.lane.b32.xlu0 %v3544, 96
    %v3868 = vpop.permute.xlu0 %3867
    %3869 = vrot.lane.b32.xlu0 %v3545, 96
    %v3870 = vpop.permute.xlu0 %3869
    %3871 = vrot.lane.b32.xlu0 %v3546, 96
    %v3872 = vpop.permute.xlu0 %3871
    %3873 = vrot.lane.b32.xlu0 %v3547, 96
    %v3874 = vpop.permute.xlu0 %3873
    %3875 = vrot.lane.b32.xlu0 %v3548, 96
    %v3876 = vpop.permute.xlu0 %3875
    %3877 = vrot.lane.b32.xlu0 %v3549, 96
    %v3878 = vpop.permute.xlu0 %3877
    %3879 = vrot.lane.b32.xlu0 %v3550, 96
    %v3880 = vpop.permute.xlu0 %3879
    %3881 = vrot.lane.b32.xlu0 %v3551, 96
    %v3882 = vpop.permute.xlu0 %3881
    %3883 = vrot.lane.b32.xlu0 %v3552, 96
    %v3884 = vpop.permute.xlu0 %3883
    %3885 = vrot.lane.b32.xlu0 %v3553, 96
    %v3886 = vpop.permute.xlu0 %3885
    %3887 = vrot.lane.b32.xlu0 %v3554, 96
    %v3888 = vpop.permute.xlu0 %3887
    %3889 = vrot.lane.b32.xlu0 %v3555, 96
    %v3890 = vpop.permute.xlu0 %3889
    %3891 = vrot.lane.b32.xlu0 %v3556, 96
    %v3892 = vpop.permute.xlu0 %3891
    %3893 = vrot.lane.b32.xlu0 %v3557, 96
    %v3894 = vpop.permute.xlu0 %3893
    %3895 = vrot.lane.b32.xlu0 %v3558, 96
    %v3896 = vpop.permute.xlu0 %3895
    %3897 = vrot.lane.b32.xlu0 %v3559, 96
    %v3898 = vpop.permute.xlu0 %3897
    %3899 = vrot.lane.b32.xlu0 %v3560, 96
    %v3900 = vpop.permute.xlu0 %3899
    %3901 = vrot.lane.b32.xlu0 %v3561, 96
    %v3902 = vpop.permute.xlu0 %3901
    %3903 = vrot.lane.b32.xlu0 %v3562, 96
    %v3904 = vpop.permute.xlu0 %3903
    %3905 = vrot.lane.b32.xlu0 %v3563, 96
    %v3906 = vpop.permute.xlu0 %3905
    %3907 = vrot.lane.b32.xlu0 %v3564, 96
    %v3908 = vpop.permute.xlu0 %3907
    %3909 = vrot.lane.b32.xlu0 %v3565, 96
    %v3910 = vpop.permute.xlu0 %3909
    %3911 = vrot.lane.b32.xlu0 %v3566, 96
    %v3912 = vpop.permute.xlu0 %3911
    %3913 = vrot.lane.b32.xlu0 %v3567, 96
    %v3914 = vpop.permute.xlu0 %3913
    %3915 = vrot.lane.b32.xlu0 %v3568, 96
    %v3916 = vpop.permute.xlu0 %3915
    %3917 = vrot.lane.b32.xlu0 %v3569, 96
    %v3918 = vpop.permute.xlu0 %3917
    %3919 = vrot.lane.b32.xlu0 %v3570, 96
    %v3920 = vpop.permute.xlu0 %3919
    %3921 = vrot.lane.b32.xlu0 %v3571, 96
    %v3922 = vpop.permute.xlu0 %3921
    %3923 = vrot.lane.b32.xlu0 %v3572, 96
    %v3924 = vpop.permute.xlu0 %3923
    %3925 = vrot.lane.b32.xlu0 %v3573, 96
    %v3926 = vpop.permute.xlu0 %3925
    %3927 = vrot.lane.b32.xlu0 %v3574, 96
    %v3928 = vpop.permute.xlu0 %3927
    %3929 = vrot.lane.b32.xlu0 %v3575, 96
    %v3930 = vpop.permute.xlu0 %3929
    %3931 = vrot.lane.b32.xlu0 %v3576, 96
    %v3932 = vpop.permute.xlu0 %3931
    %3933 = vrot.lane.b32.xlu0 %v3577, 96
    %v3934 = vpop.permute.xlu0 %3933
    %3935 = vrot.lane.b32.xlu0 %v3578, 96
    %v3936 = vpop.permute.xlu0 %3935
    %3937 = vrot.lane.b32.xlu0 %v3579, 96
    %v3938 = vpop.permute.xlu0 %3937
    %3939 = vrot.lane.b32.xlu0 %v3580, 96
    %v3940 = vpop.permute.xlu0 %3939
    %3941 = vrot.lane.b32.xlu0 %v3581, 96
    %v3942 = vpop.permute.xlu0 %3941
    %3943 = vrot.lane.b32.xlu0 %v3582, 96
    %v3944 = vpop.permute.xlu0 %3943
    %3945 = vrot.lane.b32.xlu0 %v3583, 96
    %v3946 = vpop.permute.xlu0 %3945
    %3947 = vrot.lane.b32.xlu0 %v3584, 96
    %v3948 = vpop.permute.xlu0 %3947
    %3949 = vrot.lane.b32.xlu0 %v3585, 96
    %v3950 = vpop.permute.xlu0 %3949
    %3951 = vrot.lane.b32.xlu0 %v3586, 96
    %v3952 = vpop.permute.xlu0 %3951
    %3953 = vrot.lane.b32.xlu0 %v3587, 96
    %v3954 = vpop.permute.xlu0 %3953
    %3955 = vrot.lane.b32.xlu0 %v3588, 96
    %v3956 = vpop.permute.xlu0 %3955
    %3957 = vrot.lane.b32.xlu0 %v3589, 96
    %v3958 = vpop.permute.xlu0 %3957
    %3959 = vrot.lane.b32.xlu0 %v3590, 96
    %v3960 = vpop.permute.xlu0 %3959
    %3961 = vrot.lane.b32.xlu0 %v3591, 96
    %v3962 = vpop.permute.xlu0 %3961
    %3963 = vrot.lane.b32.xlu0 %v3592, 96
    %v3964 = vpop.permute.xlu0 %3963
    %3965 = vrot.lane.b32.xlu0 %v3593, 96
    %v3966 = vpop.permute.xlu0 %3965
    %3967 = vrot.lane.b32.xlu0 %v3594, 96
    %v3968 = vpop.permute.xlu0 %3967
    %3969 = vrot.lane.b32.xlu0 %v3595, 96
    %v3970 = vpop.permute.xlu0 %3969
    %3971 = vrot.lane.b32.xlu0 %v3596, 96
    %v3972 = vpop.permute.xlu0 %3971
    %3973 = vrot.lane.b32.xlu0 %v3597, 96
    %v3974 = vpop.permute.xlu0 %3973
    %3975 = vrot.lane.b32.xlu0 %v3598, 96
    %v3976 = vpop.permute.xlu0 %3975
    %3977 = vrot.lane.b32.xlu0 %v3599, 96
    %v3978 = vpop.permute.xlu0 %3977
    %3979 = vrot.lane.b32.xlu0 %v3600, 96
    %v3980 = vpop.permute.xlu0 %3979
    %3981 = vrot.lane.b32.xlu0 %v3601, 96
    %v3982 = vpop.permute.xlu0 %3981
    %3983 = vrot.lane.b32.xlu0 %v3602, 96
    %v3984 = vpop.permute.xlu0 %3983
    %3985 = vrot.lane.b32.xlu0 %v3603, 96
    %v3986 = vpop.permute.xlu0 %3985
    %3987 = vrot.lane.b32.xlu0 %v3604, 96
    %v3988 = vpop.permute.xlu0 %3987
    %v4117 = vadd.f32 %v3477, %v3734
    %v4118 = vadd.f32 %v3478, %v3736
    %v4119 = vadd.f32 %v3479, %v3738
    %v4120 = vadd.f32 %v3480, %v3740
    %v4121 = vadd.f32 %v3481, %v3742
    %v4122 = vadd.f32 %v3482, %v3744
    %v4123 = vadd.f32 %v3483, %v3746
    %v4124 = vadd.f32 %v3484, %v3748
    %v4125 = vadd.f32 %v3485, %v3750
    %v4126 = vadd.f32 %v3486, %v3752
    %v4127 = vadd.f32 %v3487, %v3754
    %v4128 = vadd.f32 %v3488, %v3756
    %v4129 = vadd.f32 %v3489, %v3758
    %v4130 = vadd.f32 %v3490, %v3760
    %v4131 = vadd.f32 %v3491, %v3762
    %v4132 = vadd.f32 %v3492, %v3764
    %v4133 = vadd.f32 %v3493, %v3766
    %v4134 = vadd.f32 %v3494, %v3768
    %v4135 = vadd.f32 %v3495, %v3770
    %v4136 = vadd.f32 %v3496, %v3772
    %v4137 = vadd.f32 %v3497, %v3774
    %v4138 = vadd.f32 %v3498, %v3776
    %v4139 = vadd.f32 %v3499, %v3778
    %v4140 = vadd.f32 %v3500, %v3780
    %v4141 = vadd.f32 %v3501, %v3782
    %v4142 = vadd.f32 %v3502, %v3784
    %v4143 = vadd.f32 %v3503, %v3786
    %v4144 = vadd.f32 %v3504, %v3788
    %v4145 = vadd.f32 %v3505, %v3790
    %v4146 = vadd.f32 %v3506, %v3792
    %v4147 = vadd.f32 %v3507, %v3794
    %v4148 = vadd.f32 %v3508, %v3796
    %v4149 = vadd.f32 %v3509, %v3798
    %v4150 = vadd.f32 %v3510, %v3800
    %v4151 = vadd.f32 %v3511, %v3802
    %v4152 = vadd.f32 %v3512, %v3804
    %v4153 = vadd.f32 %v3513, %v3806
    %v4154 = vadd.f32 %v3514, %v3808
    %v4155 = vadd.f32 %v3515, %v3810
    %v4156 = vadd.f32 %v3516, %v3812
    %v4157 = vadd.f32 %v3517, %v3814
    %v4158 = vadd.f32 %v3518, %v3816
    %v4159 = vadd.f32 %v3519, %v3818
    %v4160 = vadd.f32 %v3520, %v3820
    %v4161 = vadd.f32 %v3521, %v3822
    %v4162 = vadd.f32 %v3522, %v3824
    %v4163 = vadd.f32 %v3523, %v3826
    %v4164 = vadd.f32 %v3524, %v3828
    %v4165 = vadd.f32 %v3525, %v3830
    %v4166 = vadd.f32 %v3526, %v3832
    %v4167 = vadd.f32 %v3527, %v3834
    %v4168 = vadd.f32 %v3528, %v3836
    %v4169 = vadd.f32 %v3529, %v3838
    %v4170 = vadd.f32 %v3530, %v3840
    %v4171 = vadd.f32 %v3531, %v3842
    %v4172 = vadd.f32 %v3532, %v3844
    %v4173 = vadd.f32 %v3533, %v3846
    %v4174 = vadd.f32 %v3534, %v3848
    %v4175 = vadd.f32 %v3535, %v3850
    %v4176 = vadd.f32 %v3536, %v3852
    %v4177 = vadd.f32 %v3537, %v3854
    %v4178 = vadd.f32 %v3538, %v3856
    %v4179 = vadd.f32 %v3539, %v3858
    %v4180 = vadd.f32 %v3540, %v3860
    %v4181 = vadd.f32 %v3541, %v3862
    %v4182 = vadd.f32 %v3542, %v3864
    %v4183 = vadd.f32 %v3543, %v3866
    %v4184 = vadd.f32 %v3544, %v3868
    %v4185 = vadd.f32 %v3545, %v3870
    %v4186 = vadd.f32 %v3546, %v3872
    %v4187 = vadd.f32 %v3547, %v3874
    %v4188 = vadd.f32 %v3548, %v3876
    %v4189 = vadd.f32 %v3549, %v3878
    %v4190 = vadd.f32 %v3550, %v3880
    %v4191 = vadd.f32 %v3551, %v3882
    %v4192 = vadd.f32 %v3552, %v3884
    %v4193 = vadd.f32 %v3553, %v3886
    %v4194 = vadd.f32 %v3554, %v3888
    %v4195 = vadd.f32 %v3555, %v3890
    %v4196 = vadd.f32 %v3556, %v3892
    %v4197 = vadd.f32 %v3557, %v3894
    %v4198 = vadd.f32 %v3558, %v3896
    %v4199 = vadd.f32 %v3559, %v3898
    %v4200 = vadd.f32 %v3560, %v3900
    %v4201 = vadd.f32 %v3561, %v3902
    %v4202 = vadd.f32 %v3562, %v3904
    %v4203 = vadd.f32 %v3563, %v3906
    %v4204 = vadd.f32 %v3564, %v3908
    %v4205 = vadd.f32 %v3565, %v3910
    %v4206 = vadd.f32 %v3566, %v3912
    %v4207 = vadd.f32 %v3567, %v3914
    %v4208 = vadd.f32 %v3568, %v3916
    %v4209 = vadd.f32 %v3569, %v3918
    %v4210 = vadd.f32 %v3570, %v3920
    %v4211 = vadd.f32 %v3571, %v3922
    %v4212 = vadd.f32 %v3572, %v3924
    %v4213 = vadd.f32 %v3573, %v3926
    %v4214 = vadd.f32 %v3574, %v3928
    %v4215 = vadd.f32 %v3575, %v3930
    %v4216 = vadd.f32 %v3576, %v3932
    %v4217 = vadd.f32 %v3577, %v3934
    %v4218 = vadd.f32 %v3578, %v3936
    %v4219 = vadd.f32 %v3579, %v3938
    %v4220 = vadd.f32 %v3580, %v3940
    %v4221 = vadd.f32 %v3581, %v3942
    %v4222 = vadd.f32 %v3582, %v3944
    %v4223 = vadd.f32 %v3583, %v3946
    %v4224 = vadd.f32 %v3584, %v3948
    %v4225 = vadd.f32 %v3585, %v3950
    %v4226 = vadd.f32 %v3586, %v3952
    %v4227 = vadd.f32 %v3587, %v3954
    %v4228 = vadd.f32 %v3588, %v3956
    %v4229 = vadd.f32 %v3589, %v3958
    %v4230 = vadd.f32 %v3590, %v3960
    %v4231 = vadd.f32 %v3591, %v3962
    %v4232 = vadd.f32 %v3592, %v3964
    %v4233 = vadd.f32 %v3593, %v3966
    %v4234 = vadd.f32 %v3594, %v3968
    %v4235 = vadd.f32 %v3595, %v3970
    %v4236 = vadd.f32 %v3596, %v3972
    %v4237 = vadd.f32 %v3597, %v3974
    %v4238 = vadd.f32 %v3598, %v3976
    %v4239 = vadd.f32 %v3599, %v3978
    %v4240 = vadd.f32 %v3600, %v3980
    %v4241 = vadd.f32 %v3601, %v3982
    %v4242 = vadd.f32 %v3602, %v3984
    %v4243 = vadd.f32 %v3603, %v3986
    %v4244 = vadd.f32 %v3604, %v3988
    %v4245 = vpack.c.bf16 %v4118, %v4117
    %v4246 = vpack.c.bf16 %v4120, %v4119
    %v4247 = vpack.c.bf16 %v4122, %v4121
    %v4248 = vpack.c.bf16 %v4124, %v4123
    %v4249 = vpack.c.bf16 %v4126, %v4125
    %v4250 = vpack.c.bf16 %v4128, %v4127
    %v4251 = vpack.c.bf16 %v4130, %v4129
    %v4252 = vpack.c.bf16 %v4132, %v4131
    %v4253 = vpack.c.bf16 %v4134, %v4133
    %v4254 = vpack.c.bf16 %v4136, %v4135
    %v4255 = vpack.c.bf16 %v4138, %v4137
    %v4256 = vpack.c.bf16 %v4140, %v4139
    %v4257 = vpack.c.bf16 %v4142, %v4141
    %v4258 = vpack.c.bf16 %v4144, %v4143
    %v4259 = vpack.c.bf16 %v4146, %v4145
    %v4260 = vpack.c.bf16 %v4148, %v4147
    %v4261 = vpack.c.bf16 %v4150, %v4149
    %v4262 = vpack.c.bf16 %v4152, %v4151
    %v4263 = vpack.c.bf16 %v4154, %v4153
    %v4264 = vpack.c.bf16 %v4156, %v4155
    %v4265 = vpack.c.bf16 %v4158, %v4157
    %v4266 = vpack.c.bf16 %v4160, %v4159
    %v4267 = vpack.c.bf16 %v4162, %v4161
    %v4268 = vpack.c.bf16 %v4164, %v4163
    %v4269 = vpack.c.bf16 %v4166, %v4165
    %v4270 = vpack.c.bf16 %v4168, %v4167
    %v4271 = vpack.c.bf16 %v4170, %v4169
    %v4272 = vpack.c.bf16 %v4172, %v4171
    %v4273 = vpack.c.bf16 %v4174, %v4173
    %v4274 = vpack.c.bf16 %v4176, %v4175
    %v4275 = vpack.c.bf16 %v4178, %v4177
    %v4276 = vpack.c.bf16 %v4180, %v4179
    %v4277 = vpack.c.bf16 %v4182, %v4181
    %v4278 = vpack.c.bf16 %v4184, %v4183
    %v4279 = vpack.c.bf16 %v4186, %v4185
    %v4280 = vpack.c.bf16 %v4188, %v4187
    %v4281 = vpack.c.bf16 %v4190, %v4189
    %v4282 = vpack.c.bf16 %v4192, %v4191
    %v4283 = vpack.c.bf16 %v4194, %v4193
    %v4284 = vpack.c.bf16 %v4196, %v4195
    %v4285 = vpack.c.bf16 %v4198, %v4197
    %v4286 = vpack.c.bf16 %v4200, %v4199
    %v4287 = vpack.c.bf16 %v4202, %v4201
    %v4288 = vpack.c.bf16 %v4204, %v4203
    %v4289 = vpack.c.bf16 %v4206, %v4205
    %v4290 = vpack.c.bf16 %v4208, %v4207
    %v4291 = vpack.c.bf16 %v4210, %v4209
    %v4292 = vpack.c.bf16 %v4212, %v4211
    %v4293 = vpack.c.bf16 %v4214, %v4213
    %v4294 = vpack.c.bf16 %v4216, %v4215
    %v4295 = vpack.c.bf16 %v4218, %v4217
    %v4296 = vpack.c.bf16 %v4220, %v4219
    %v4297 = vpack.c.bf16 %v4222, %v4221
    %v4298 = vpack.c.bf16 %v4224, %v4223
    %v4299 = vpack.c.bf16 %v4226, %v4225
    %v4300 = vpack.c.bf16 %v4228, %v4227
    %v4301 = vpack.c.bf16 %v4230, %v4229
    %v4302 = vpack.c.bf16 %v4232, %v4231
    %v4303 = vpack.c.bf16 %v4234, %v4233
    %v4304 = vpack.c.bf16 %v4236, %v4235
    %v4305 = vpack.c.bf16 %v4238, %v4237
    %v4306 = vpack.c.bf16 %v4240, %v4239
    %v4307 = vpack.c.bf16 %v4242, %v4241
    %v4308 = vpack.c.bf16 %v4244, %v4243
    %v4313 = vunpack.c.l.b16 %v180
    %v4314 = vunpack.c.l.b16 %v181
    %v4315 = vunpack.c.l.b16 %v182
    %v4316 = vunpack.c.l.b16 %v183
    %v4317 = vpack.c.b16 %v4314, %v4313
    %v4318 = vpack.c.b16 %v4316, %v4315
    %v4322 = vsel %vm2005, %v4245, 0
    %v4325 = vsel %vm2005, %v4246, 0
    %v4328 = vsel %vm2005, %v4247, 0
    %v4331 = vsel %vm2005, %v4248, 0
    %v4334 = vsel %vm2005, %v4249, 0
    %v4337 = vsel %vm2005, %v4250, 0
    %v4340 = vsel %vm2005, %v4251, 0
    %v4343 = vsel %vm2005, %v4252, 0
    %v4346 = vsel %vm2005, %v4253, 0
    %v4349 = vsel %vm2005, %v4254, 0
    %v4352 = vsel %vm2005, %v4255, 0
    %v4355 = vsel %vm2005, %v4256, 0
    %v4358 = vsel %vm2005, %v4257, 0
    %v4361 = vsel %vm2005, %v4258, 0
    %v4364 = vsel %vm2005, %v4259, 0
    %v4367 = vsel %vm2005, %v4260, 0
    %v4370 = vsel %vm2005, %v4261, 0
    %v4373 = vsel %vm2005, %v4262, 0
    %v4376 = vsel %vm2005, %v4263, 0
    %v4379 = vsel %vm2005, %v4264, 0
    %v4382 = vsel %vm2005, %v4265, 0
    %v4385 = vsel %vm2005, %v4266, 0
    %v4388 = vsel %vm2005, %v4267, 0
    %v4391 = vsel %vm2005, %v4268, 0
    %v4394 = vsel %vm2005, %v4269, 0
    %v4397 = vsel %vm2005, %v4270, 0
    %v4400 = vsel %vm2005, %v4271, 0
    %v4403 = vsel %vm2005, %v4272, 0
    %v4406 = vsel %vm2005, %v4273, 0
    %v4409 = vsel %vm2005, %v4274, 0
    %v4412 = vsel %vm2005, %v4275, 0
    %v4415 = vsel %vm2005, %v4276, 0
    %v4418 = vsel %vm2005, %v4277, 0
    %v4421 = vsel %vm2005, %v4278, 0
    %v4424 = vsel %vm2005, %v4279, 0
    %v4427 = vsel %vm2005, %v4280, 0
    %v4430 = vsel %vm2005, %v4281, 0
    %v4433 = vsel %vm2005, %v4282, 0
    %v4436 = vsel %vm2005, %v4283, 0
    %v4439 = vsel %vm2005, %v4284, 0
    %v4442 = vsel %vm2005, %v4285, 0
    %v4445 = vsel %vm2005, %v4286, 0
    %v4448 = vsel %vm2005, %v4287, 0
    %v4451 = vsel %vm2005, %v4288, 0
    %v4454 = vsel %vm2005, %v4289, 0
    %v4457 = vsel %vm2005, %v4290, 0
    %v4460 = vsel %vm2005, %v4291, 0
    %v4463 = vsel %vm2005, %v4292, 0
    %v4466 = vsel %vm2005, %v4293, 0
    %v4469 = vsel %vm2005, %v4294, 0
    %v4472 = vsel %vm2005, %v4295, 0
    %v4475 = vsel %vm2005, %v4296, 0
    %v4478 = vsel %vm2005, %v4297, 0
    %v4481 = vsel %vm2005, %v4298, 0
    %v4484 = vsel %vm2005, %v4299, 0
    %v4487 = vsel %vm2005, %v4300, 0
    %v4490 = vsel %vm2005, %v4301, 0
    %v4493 = vsel %vm2005, %v4302, 0
    %v4496 = vsel %vm2005, %v4303, 0
    %v4499 = vsel %vm2005, %v4304, 0
    %v4502 = vsel %vm2005, %v4305, 0
    %v4505 = vsel %vm2005, %v4306, 0
    %v4508 = vsel %vm2005, %v4307, 0
    %v4511 = vsel %vm2005, %v4308, 0
    %4513 = vmatprep.subr.bf16.mxu0 0
    %4514 = vmatpush1.bf16.msra.mxu0 %v4317
    %4515 = vmatprep.subr.bf16.mxu0 0
    %4516 = vmatpush1.bf16.msra.mxu0 %v4318
    %4517 = vmatprep.subr.bf16.mxu0 0
    %4518 = vmatpush1.bf16.msra.mxu0 0
    %4519 = vmatprep.subr.bf16.mxu0 0
    %4520 = vmatpush1.bf16.msra.mxu0 0
    %4521 = vmatprep.subr.bf16.mxu0 0
    %4522 = vmatpush1.bf16.msra.mxu0 0
    %4523 = vmatprep.subr.bf16.mxu0 0
    %4524 = vmatpush1.bf16.msra.mxu0 0
    %4525 = vmatprep.subr.bf16.mxu0 0
    %4526 = vmatpush1.bf16.msra.mxu0 0
    %4527 = vmatprep.subr.bf16.mxu0 0
    %4528 = vmatpush1.bf16.msra.mxu0 0
    %4529 = vmatprep.subr.bf16.mxu0 0
    %4530 = vmatpush1.bf16.msra.mxu0 0
    %4531 = vmatprep.subr.bf16.mxu0 0
    %4532 = vmatpush1.bf16.msra.mxu0 0
    %4533 = vmatprep.subr.bf16.mxu0 0
    %4534 = vmatpush1.bf16.msra.mxu0 0
    %4535 = vmatprep.subr.bf16.mxu0 0
    %4536 = vmatpush1.bf16.msra.mxu0 0
    %4537 = vmatprep.subr.bf16.mxu0 0
    %4538 = vmatpush1.bf16.msra.mxu0 0
    %4539 = vmatprep.subr.bf16.mxu0 0
    %4540 = vmatpush1.bf16.msra.mxu0 0
    %4541 = vmatprep.subr.bf16.mxu0 0
    %4542 = vmatpush1.bf16.msra.mxu0 0
    %4543 = vmatprep.subr.bf16.mxu0 0
    %4544 = vmatpush1.bf16.msra.mxu0 0
    %4545 = vmatprep.mubr.bf16.mxu0 0
    %4546 = vmatmul.mubr.bf16.gmra.mrb[0].mxu0 %v4322
    %v4547 = vpop.f32.mrb[0].mxu0
    %v4548 = vadd.f32 0.0, %v4547
    %v4549 = vpop.f32.mrb[0].mxu0
    %v4550 = vpop.f32.mrb[0].mxu0
    %v4551 = vadd.f32 0.0, %v4550
    %v4552 = vpop.f32.mrb[0].mxu0
    %4553 = vmatprep.mubr.bf16.mxu0 0
    %4554 = vmatmul.mubr.bf16.gmra.mrb[0].mxu0 %v4325
    %v4555 = vpop.f32.mrb[0].mxu0
    %v4556 = vadd.f32 0.0, %v4555
    %v4557 = vpop.f32.mrb[0].mxu0
    %v4558 = vpop.f32.mrb[0].mxu0
    %v4559 = vadd.f32 0.0, %v4558
    %v4560 = vpop.f32.mrb[0].mxu0
    %4561 = vmatprep.mubr.bf16.mxu0 0
    %4562 = vmatmul.mubr.bf16.gmra.mrb[0].mxu0 %v4328
    %v4563 = vpop.f32.mrb[0].mxu0
    %v4564 = vadd.f32 0.0, %v4563
    %v4565 = vpop.f32.mrb[0].mxu0
    %v4566 = vpop.f32.mrb[0].mxu0
    %v4567 = vadd.f32 0.0, %v4566
    %v4568 = vpop.f32.mrb[0].mxu0
    %4569 = vmatprep.mubr.bf16.mxu0 0
    %4570 = vmatmul.mubr.bf16.gmra.mrb[0].mxu0 %v4331
    %v4571 = vpop.f32.mrb[0].mxu0
    %v4572 = vadd.f32 0.0, %v4571
    %v4573 = vpop.f32.mrb[0].mxu0
    %v4574 = vpop.f32.mrb[0].mxu0
    %v4575 = vadd.f32 0.0, %v4574
    %v4576 = vpop.f32.mrb[0].mxu0
    %4577 = vmatprep.mubr.bf16.mxu0 0
    %4578 = vmatmul.mubr.bf16.gmra.mrb[0].mxu0 %v4334
    %v4579 = vpop.f32.mrb[0].mxu0
    %v4580 = vadd.f32 0.0, %v4579
    %v4581 = vpop.f32.mrb[0].mxu0
    %v4582 = vpop.f32.mrb[0].mxu0
    %v4583 = vadd.f32 0.0, %v4582
    %v4584 = vpop.f32.mrb[0].mxu0
    %4585 = vmatprep.mubr.bf16.mxu0 0
    %4586 = vmatmul.mubr.bf16.gmra.mrb[0].mxu0 %v4337
    %v4587 = vpop.f32.mrb[0].mxu0
    %v4588 = vadd.f32 0.0, %v4587
    %v4589 = vpop.f32.mrb[0].mxu0
    %v4590 = vpop.f32.mrb[0].mxu0
    %v4591 = vadd.f32 0.0, %v4590
    %v4592 = vpop.f32.mrb[0].mxu0
    %4593 = vmatprep.mubr.bf16.mxu0 0
    %4594 = vmatmul.mubr.bf16.gmra.mrb[0].mxu0 %v4340
    %v4595 = vpop.f32.mrb[0].mxu0
    %v4596 = vadd.f32 0.0, %v4595
    %v4597 = vpop.f32.mrb[0].mxu0
    %v4598 = vpop.f32.mrb[0].mxu0
    %v4599 = vadd.f32 0.0, %v4598
    %v4600 = vpop.f32.mrb[0].mxu0
    %4601 = vmatprep.mubr.bf16.mxu0 0
    %4602 = vmatmul.mubr.bf16.gmra.mrb[0].mxu0 %v4343
    %v4603 = vpop.f32.mrb[0].mxu0
    %v4604 = vadd.f32 0.0, %v4603
    %v4605 = vpop.f32.mrb[0].mxu0
    %v4606 = vpop.f32.mrb[0].mxu0
    %v4607 = vadd.f32 0.0, %v4606
    %v4608 = vpop.f32.mrb[0].mxu0
    %4609 = vmatprep.mubr.bf16.mxu0 0
    %4610 = vmatmul.mubr.bf16.gmra.mrb[0].mxu0 %v4346
    %v4611 = vpop.f32.mrb[0].mxu0
    %v4612 = vadd.f32 0.0, %v4611
    %v4613 = vpop.f32.mrb[0].mxu0
    %v4614 = vpop.f32.mrb[0].mxu0
    %v4615 = vadd.f32 0.0, %v4614
    %v4616 = vpop.f32.mrb[0].mxu0
    %4617 = vmatprep.mubr.bf16.mxu0 0
    %4618 = vmatmul.mubr.bf16.gmra.mrb[0].mxu0 %v4349
    %v4619 = vpop.f32.mrb[0].mxu0
    %v4620 = vadd.f32 0.0, %v4619
    %v4621 = vpop.f32.mrb[0].mxu0
    %v4622 = vpop.f32.mrb[0].mxu0
    %v4623 = vadd.f32 0.0, %v4622
    %v4624 = vpop.f32.mrb[0].mxu0
    %4625 = vmatprep.mubr.bf16.mxu0 0
    %4626 = vmatmul.mubr.bf16.gmra.mrb[0].mxu0 %v4352
    %v4627 = vpop.f32.mrb[0].mxu0
    %v4628 = vadd.f32 0.0, %v4627
    %v4629 = vpop.f32.mrb[0].mxu0
    %v4630 = vpop.f32.mrb[0].mxu0
    %v4631 = vadd.f32 0.0, %v4630
    %v4632 = vpop.f32.mrb[0].mxu0
    %4633 = vmatprep.mubr.bf16.mxu0 0
    %4634 = vmatmul.mubr.bf16.gmra.mrb[0].mxu0 %v4355
    %v4635 = vpop.f32.mrb[0].mxu0
    %v4636 = vadd.f32 0.0, %v4635
    %v4637 = vpop.f32.mrb[0].mxu0
    %v4638 = vpop.f32.mrb[0].mxu0
    %v4639 = vadd.f32 0.0, %v4638
    %v4640 = vpop.f32.mrb[0].mxu0
    %4641 = vmatprep.mubr.bf16.mxu0 0
    %4642 = vmatmul.mubr.bf16.gmra.mrb[0].mxu0 %v4358
    %v4643 = vpop.f32.mrb[0].mxu0
    %v4644 = vadd.f32 0.0, %v4643
    %v4645 = vpop.f32.mrb[0].mxu0
    %v4646 = vpop.f32.mrb[0].mxu0
    %v4647 = vadd.f32 0.0, %v4646
    %v4648 = vpop.f32.mrb[0].mxu0
    %4649 = vmatprep.mubr.bf16.mxu0 0
    %4650 = vmatmul.mubr.bf16.gmra.mrb[0].mxu0 %v4361
    %v4651 = vpop.f32.mrb[0].mxu0
    %v4652 = vadd.f32 0.0, %v4651
    %v4653 = vpop.f32.mrb[0].mxu0
    %v4654 = vpop.f32.mrb[0].mxu0
    %v4655 = vadd.f32 0.0, %v4654
    %v4656 = vpop.f32.mrb[0].mxu0
    %4657 = vmatprep.mubr.bf16.mxu0 0
    %4658 = vmatmul.mubr.bf16.gmra.mrb[0].mxu0 %v4364
    %v4659 = vpop.f32.mrb[0].mxu0
    %v4660 = vadd.f32 0.0, %v4659
    %v4661 = vpop.f32.mrb[0].mxu0
    %v4662 = vpop.f32.mrb[0].mxu0
    %v4663 = vadd.f32 0.0, %v4662
    %v4664 = vpop.f32.mrb[0].mxu0
    %4665 = vmatprep.mubr.bf16.mxu0 0
    %4666 = vmatmul.mubr.bf16.gmra.mrb[0].mxu0 %v4367
    %v4667 = vpop.f32.mrb[0].mxu0
    %v4668 = vadd.f32 0.0, %v4667
    %v4669 = vpop.f32.mrb[0].mxu0
    %v4670 = vpop.f32.mrb[0].mxu0
    %v4671 = vadd.f32 0.0, %v4670
    %v4672 = vpop.f32.mrb[0].mxu0
    %4673 = vmatprep.mubr.bf16.mxu0 0
    %4674 = vmatmul.mubr.bf16.gmra.mrb[0].mxu0 %v4370
    %v4675 = vpop.f32.mrb[0].mxu0
    %v4676 = vadd.f32 0.0, %v4675
    %v4677 = vpop.f32.mrb[0].mxu0
    %v4678 = vpop.f32.mrb[0].mxu0
    %v4679 = vadd.f32 0.0, %v4678
    %v4680 = vpop.f32.mrb[0].mxu0
    %4681 = vmatprep.mubr.bf16.mxu0 0
    %4682 = vmatmul.mubr.bf16.gmra.mrb[0].mxu0 %v4373
    %v4683 = vpop.f32.mrb[0].mxu0
    %v4684 = vadd.f32 0.0, %v4683
    %v4685 = vpop.f32.mrb[0].mxu0
    %v4686 = vpop.f32.mrb[0].mxu0
    %v4687 = vadd.f32 0.0, %v4686
    %v4688 = vpop.f32.mrb[0].mxu0
    %4689 = vmatprep.mubr.bf16.mxu0 0
    %4690 = vmatmul.mubr.bf16.gmra.mrb[0].mxu0 %v4376
    %v4691 = vpop.f32.mrb[0].mxu0
    %v4692 = vadd.f32 0.0, %v4691
    %v4693 = vpop.f32.mrb[0].mxu0
    %v4694 = vpop.f32.mrb[0].mxu0
    %v4695 = vadd.f32 0.0, %v4694
    %v4696 = vpop.f32.mrb[0].mxu0
    %4697 = vmatprep.mubr.bf16.mxu0 0
    %4698 = vmatmul.mubr.bf16.gmra.mrb[0].mxu0 %v4379
    %v4699 = vpop.f32.mrb[0].mxu0
    %v4700 = vadd.f32 0.0, %v4699
    %v4701 = vpop.f32.mrb[0].mxu0
    %v4702 = vpop.f32.mrb[0].mxu0
    %v4703 = vadd.f32 0.0, %v4702
    %v4704 = vpop.f32.mrb[0].mxu0
    %4705 = vmatprep.mubr.bf16.mxu0 0
    %4706 = vmatmul.mubr.bf16.gmra.mrb[0].mxu0 %v4382
    %v4707 = vpop.f32.mrb[0].mxu0
    %v4708 = vadd.f32 0.0, %v4707
    %v4709 = vpop.f32.mrb[0].mxu0
    %v4710 = vpop.f32.mrb[0].mxu0
    %v4711 = vadd.f32 0.0, %v4710
    %v4712 = vpop.f32.mrb[0].mxu0
    %4713 = vmatprep.mubr.bf16.mxu0 0
    %4714 = vmatmul.mubr.bf16.gmra.mrb[0].mxu0 %v4385
    %v4715 = vpop.f32.mrb[0].mxu0
    %v4716 = vadd.f32 0.0, %v4715
    %v4717 = vpop.f32.mrb[0].mxu0
    %v4718 = vpop.f32.mrb[0].mxu0
    %v4719 = vadd.f32 0.0, %v4718
    %v4720 = vpop.f32.mrb[0].mxu0
    %4721 = vmatprep.mubr.bf16.mxu0 0
    %4722 = vmatmul.mubr.bf16.gmra.mrb[0].mxu0 %v4388
    %v4723 = vpop.f32.mrb[0].mxu0
    %v4724 = vadd.f32 0.0, %v4723
    %v4725 = vpop.f32.mrb[0].mxu0
    %v4726 = vpop.f32.mrb[0].mxu0
    %v4727 = vadd.f32 0.0, %v4726
    %v4728 = vpop.f32.mrb[0].mxu0
    %4729 = vmatprep.mubr.bf16.mxu0 0
    %4730 = vmatmul.mubr.bf16.gmra.mrb[0].mxu0 %v4391
    %v4731 = vpop.f32.mrb[0].mxu0
    %v4732 = vadd.f32 0.0, %v4731
    %v4733 = vpop.f32.mrb[0].mxu0
    %v4734 = vpop.f32.mrb[0].mxu0
    %v4735 = vadd.f32 0.0, %v4734
    %v4736 = vpop.f32.mrb[0].mxu0
    %4737 = vmatprep.mubr.bf16.mxu0 0
    %4738 = vmatmul.mubr.bf16.gmra.mrb[0].mxu0 %v4394
    %v4739 = vpop.f32.mrb[0].mxu0
    %v4740 = vadd.f32 0.0, %v4739
    %v4741 = vpop.f32.mrb[0].mxu0
    %v4742 = vpop.f32.mrb[0].mxu0
    %v4743 = vadd.f32 0.0, %v4742
    %v4744 = vpop.f32.mrb[0].mxu0
    %4745 = vmatprep.mubr.bf16.mxu0 0
    %4746 = vmatmul.mubr.bf16.gmra.mrb[0].mxu0 %v4397
    %v4747 = vpop.f32.mrb[0].mxu0
    %v4748 = vadd.f32 0.0, %v4747
    %v4749 = vpop.f32.mrb[0].mxu0
    %v4750 = vpop.f32.mrb[0].mxu0
    %v4751 = vadd.f32 0.0, %v4750
    %v4752 = vpop.f32.mrb[0].mxu0
    %4753 = vmatprep.mubr.bf16.mxu0 0
    %4754 = vmatmul.mubr.bf16.gmra.mrb[0].mxu0 %v4400
    %v4755 = vpop.f32.mrb[0].mxu0
    %v4756 = vadd.f32 0.0, %v4755
    %v4757 = vpop.f32.mrb[0].mxu0
    %v4758 = vpop.f32.mrb[0].mxu0
    %v4759 = vadd.f32 0.0, %v4758
    %v4760 = vpop.f32.mrb[0].mxu0
    %4761 = vmatprep.mubr.bf16.mxu0 0
    %4762 = vmatmul.mubr.bf16.gmra.mrb[0].mxu0 %v4403
    %v4763 = vpop.f32.mrb[0].mxu0
    %v4764 = vadd.f32 0.0, %v4763
    %v4765 = vpop.f32.mrb[0].mxu0
    %v4766 = vpop.f32.mrb[0].mxu0
    %v4767 = vadd.f32 0.0, %v4766
    %v4768 = vpop.f32.mrb[0].mxu0
    %4769 = vmatprep.mubr.bf16.mxu0 0
    %4770 = vmatmul.mubr.bf16.gmra.mrb[0].mxu0 %v4406
    %v4771 = vpop.f32.mrb[0].mxu0
    %v4772 = vadd.f32 0.0, %v4771
    %v4773 = vpop.f32.mrb[0].mxu0
    %v4774 = vpop.f32.mrb[0].mxu0
    %v4775 = vadd.f32 0.0, %v4774
    %v4776 = vpop.f32.mrb[0].mxu0
    %4777 = vmatprep.mubr.bf16.mxu0 0
    %4778 = vmatmul.mubr.bf16.gmra.mrb[0].mxu0 %v4409
    %v4779 = vpop.f32.mrb[0].mxu0
    %v4780 = vadd.f32 0.0, %v4779
    %v4781 = vpop.f32.mrb[0].mxu0
    %v4782 = vpop.f32.mrb[0].mxu0
    %v4783 = vadd.f32 0.0, %v4782
    %v4784 = vpop.f32.mrb[0].mxu0
    %4785 = vmatprep.mubr.bf16.mxu0 0
    %4786 = vmatmul.mubr.bf16.gmra.mrb[0].mxu0 %v4412
    %v4787 = vpop.f32.mrb[0].mxu0
    %v4788 = vadd.f32 0.0, %v4787
    %v4789 = vpop.f32.mrb[0].mxu0
    %v4790 = vpop.f32.mrb[0].mxu0
    %v4791 = vadd.f32 0.0, %v4790
    %v4792 = vpop.f32.mrb[0].mxu0
    %4793 = vmatprep.mubr.bf16.mxu0 0
    %4794 = vmatmul.mubr.bf16.gmra.mrb[0].mxu0 %v4415
    %v4795 = vpop.f32.mrb[0].mxu0
    %v4796 = vadd.f32 0.0, %v4795
    %v4797 = vpop.f32.mrb[0].mxu0
    %v4798 = vpop.f32.mrb[0].mxu0
    %v4799 = vadd.f32 0.0, %v4798
    %v4800 = vpop.f32.mrb[0].mxu0
    %4801 = vmatprep.mubr.bf16.mxu0 0
    %4802 = vmatmul.mubr.bf16.gmra.mrb[0].mxu0 %v4418
    %v4803 = vpop.f32.mrb[0].mxu0
    %v4804 = vadd.f32 0.0, %v4803
    %v4805 = vpop.f32.mrb[0].mxu0
    %v4806 = vpop.f32.mrb[0].mxu0
    %v4807 = vadd.f32 0.0, %v4806
    %v4808 = vpop.f32.mrb[0].mxu0
    %4809 = vmatprep.mubr.bf16.mxu0 0
    %4810 = vmatmul.mubr.bf16.gmra.mrb[0].mxu0 %v4421
    %v4811 = vpop.f32.mrb[0].mxu0
    %v4812 = vadd.f32 0.0, %v4811
    %v4813 = vpop.f32.mrb[0].mxu0
    %v4814 = vpop.f32.mrb[0].mxu0
    %v4815 = vadd.f32 0.0, %v4814
    %v4816 = vpop.f32.mrb[0].mxu0
    %4817 = vmatprep.mubr.bf16.mxu0 0
    %4818 = vmatmul.mubr.bf16.gmra.mrb[0].mxu0 %v4424
    %v4819 = vpop.f32.mrb[0].mxu0
    %v4820 = vadd.f32 0.0, %v4819
    %v4821 = vpop.f32.mrb[0].mxu0
    %v4822 = vpop.f32.mrb[0].mxu0
    %v4823 = vadd.f32 0.0, %v4822
    %v4824 = vpop.f32.mrb[0].mxu0
    %4825 = vmatprep.mubr.bf16.mxu0 0
    %4826 = vmatmul.mubr.bf16.gmra.mrb[0].mxu0 %v4427
    %v4827 = vpop.f32.mrb[0].mxu0
    %v4828 = vadd.f32 0.0, %v4827
    %v4829 = vpop.f32.mrb[0].mxu0
    %v4830 = vpop.f32.mrb[0].mxu0
    %v4831 = vadd.f32 0.0, %v4830
    %v4832 = vpop.f32.mrb[0].mxu0
    %4833 = vmatprep.mubr.bf16.mxu0 0
    %4834 = vmatmul.mubr.bf16.gmra.mrb[0].mxu0 %v4430
    %v4835 = vpop.f32.mrb[0].mxu0
    %v4836 = vadd.f32 0.0, %v4835
    %v4837 = vpop.f32.mrb[0].mxu0
    %v4838 = vpop.f32.mrb[0].mxu0
    %v4839 = vadd.f32 0.0, %v4838
    %v4840 = vpop.f32.mrb[0].mxu0
    %4841 = vmatprep.mubr.bf16.mxu0 0
    %4842 = vmatmul.mubr.bf16.gmra.mrb[0].mxu0 %v4433
    %v4843 = vpop.f32.mrb[0].mxu0
    %v4844 = vadd.f32 0.0, %v4843
    %v4845 = vpop.f32.mrb[0].mxu0
    %v4846 = vpop.f32.mrb[0].mxu0
    %v4847 = vadd.f32 0.0, %v4846
    %v4848 = vpop.f32.mrb[0].mxu0
    %4849 = vmatprep.mubr.bf16.mxu0 0
    %4850 = vmatmul.mubr.bf16.gmra.mrb[0].mxu0 %v4436
    %v4851 = vpop.f32.mrb[0].mxu0
    %v4852 = vadd.f32 0.0, %v4851
    %v4853 = vpop.f32.mrb[0].mxu0
    %v4854 = vpop.f32.mrb[0].mxu0
    %v4855 = vadd.f32 0.0, %v4854
    %v4856 = vpop.f32.mrb[0].mxu0
    %4857 = vmatprep.mubr.bf16.mxu0 0
    %4858 = vmatmul.mubr.bf16.gmra.mrb[0].mxu0 %v4439
    %v4859 = vpop.f32.mrb[0].mxu0
    %v4860 = vadd.f32 0.0, %v4859
    %v4861 = vpop.f32.mrb[0].mxu0
    %v4862 = vpop.f32.mrb[0].mxu0
    %v4863 = vadd.f32 0.0, %v4862
    %v4864 = vpop.f32.mrb[0].mxu0
    %4865 = vmatprep.mubr.bf16.mxu0 0
    %4866 = vmatmul.mubr.bf16.gmra.mrb[0].mxu0 %v4442
    %v4867 = vpop.f32.mrb[0].mxu0
    %v4868 = vadd.f32 0.0, %v4867
    %v4869 = vpop.f32.mrb[0].mxu0
    %v4870 = vpop.f32.mrb[0].mxu0
    %v4871 = vadd.f32 0.0, %v4870
    %v4872 = vpop.f32.mrb[0].mxu0
    %4873 = vmatprep.mubr.bf16.mxu0 0
    %4874 = vmatmul.mubr.bf16.gmra.mrb[0].mxu0 %v4445
    %v4875 = vpop.f32.mrb[0].mxu0
    %v4876 = vadd.f32 0.0, %v4875
    %v4877 = vpop.f32.mrb[0].mxu0
    %v4878 = vpop.f32.mrb[0].mxu0
    %v4879 = vadd.f32 0.0, %v4878
    %v4880 = vpop.f32.mrb[0].mxu0
    %4881 = vmatprep.mubr.bf16.mxu0 0
    %4882 = vmatmul.mubr.bf16.gmra.mrb[0].mxu0 %v4448
    %v4883 = vpop.f32.mrb[0].mxu0
    %v4884 = vadd.f32 0.0, %v4883
    %v4885 = vpop.f32.mrb[0].mxu0
    %v4886 = vpop.f32.mrb[0].mxu0
    %v4887 = vadd.f32 0.0, %v4886
    %v4888 = vpop.f32.mrb[0].mxu0
    %4889 = vmatprep.mubr.bf16.mxu0 0
    %4890 = vmatmul.mubr.bf16.gmra.mrb[0].mxu0 %v4451
    %v4891 = vpop.f32.mrb[0].mxu0
    %v4892 = vadd.f32 0.0, %v4891
    %v4893 = vpop.f32.mrb[0].mxu0
    %v4894 = vpop.f32.mrb[0].mxu0
    %v4895 = vadd.f32 0.0, %v4894
    %v4896 = vpop.f32.mrb[0].mxu0
    %4897 = vmatprep.mubr.bf16.mxu0 0
    %4898 = vmatmul.mubr.bf16.gmra.mrb[0].mxu0 %v4454
    %v4899 = vpop.f32.mrb[0].mxu0
    %v4900 = vadd.f32 0.0, %v4899
    %v4901 = vpop.f32.mrb[0].mxu0
    %v4902 = vpop.f32.mrb[0].mxu0
    %v4903 = vadd.f32 0.0, %v4902
    %v4904 = vpop.f32.mrb[0].mxu0
    %4905 = vmatprep.mubr.bf16.mxu0 0
    %4906 = vmatmul.mubr.bf16.gmra.mrb[0].mxu0 %v4457
    %v4907 = vpop.f32.mrb[0].mxu0
    %v4908 = vadd.f32 0.0, %v4907
    %v4909 = vpop.f32.mrb[0].mxu0
    %v4910 = vpop.f32.mrb[0].mxu0
    %v4911 = vadd.f32 0.0, %v4910
    %v4912 = vpop.f32.mrb[0].mxu0
    %4913 = vmatprep.mubr.bf16.mxu0 0
    %4914 = vmatmul.mubr.bf16.gmra.mrb[0].mxu0 %v4460
    %v4915 = vpop.f32.mrb[0].mxu0
    %v4916 = vadd.f32 0.0, %v4915
    %v4917 = vpop.f32.mrb[0].mxu0
    %v4918 = vpop.f32.mrb[0].mxu0
    %v4919 = vadd.f32 0.0, %v4918
    %v4920 = vpop.f32.mrb[0].mxu0
    %4921 = vmatprep.mubr.bf16.mxu0 0
    %4922 = vmatmul.mubr.bf16.gmra.mrb[0].mxu0 %v4463
    %v4923 = vpop.f32.mrb[0].mxu0
    %v4924 = vadd.f32 0.0, %v4923
    %v4925 = vpop.f32.mrb[0].mxu0
    %v4926 = vpop.f32.mrb[0].mxu0
    %v4927 = vadd.f32 0.0, %v4926
    %v4928 = vpop.f32.mrb[0].mxu0
    %4929 = vmatprep.mubr.bf16.mxu0 0
    %4930 = vmatmul.mubr.bf16.gmra.mrb[0].mxu0 %v4466
    %v4931 = vpop.f32.mrb[0].mxu0
    %v4932 = vadd.f32 0.0, %v4931
    %v4933 = vpop.f32.mrb[0].mxu0
    %v4934 = vpop.f32.mrb[0].mxu0
    %v4935 = vadd.f32 0.0, %v4934
    %v4936 = vpop.f32.mrb[0].mxu0
    %4937 = vmatprep.mubr.bf16.mxu0 0
    %4938 = vmatmul.mubr.bf16.gmra.mrb[0].mxu0 %v4469
    %v4939 = vpop.f32.mrb[0].mxu0
    %v4940 = vadd.f32 0.0, %v4939
    %v4941 = vpop.f32.mrb[0].mxu0
    %v4942 = vpop.f32.mrb[0].mxu0
    %v4943 = vadd.f32 0.0, %v4942
    %v4944 = vpop.f32.mrb[0].mxu0
    %4945 = vmatprep.mubr.bf16.mxu0 0
    %4946 = vmatmul.mubr.bf16.gmra.mrb[0].mxu0 %v4472
    %v4947 = vpop.f32.mrb[0].mxu0
    %v4948 = vadd.f32 0.0, %v4947
    %v4949 = vpop.f32.mrb[0].mxu0
    %v4950 = vpop.f32.mrb[0].mxu0
    %v4951 = vadd.f32 0.0, %v4950
    %v4952 = vpop.f32.mrb[0].mxu0
    %4953 = vmatprep.mubr.bf16.mxu0 0
    %4954 = vmatmul.mubr.bf16.gmra.mrb[0].mxu0 %v4475
    %v4955 = vpop.f32.mrb[0].mxu0
    %v4956 = vadd.f32 0.0, %v4955
    %v4957 = vpop.f32.mrb[0].mxu0
    %v4958 = vpop.f32.mrb[0].mxu0
    %v4959 = vadd.f32 0.0, %v4958
    %v4960 = vpop.f32.mrb[0].mxu0
    %4961 = vmatprep.mubr.bf16.mxu0 0
    %4962 = vmatmul.mubr.bf16.gmra.mrb[0].mxu0 %v4478
    %v4963 = vpop.f32.mrb[0].mxu0
    %v4964 = vadd.f32 0.0, %v4963
    %v4965 = vpop.f32.mrb[0].mxu0
    %v4966 = vpop.f32.mrb[0].mxu0
    %v4967 = vadd.f32 0.0, %v4966
    %v4968 = vpop.f32.mrb[0].mxu0
    %4969 = vmatprep.mubr.bf16.mxu0 0
    %4970 = vmatmul.mubr.bf16.gmra.mrb[0].mxu0 %v4481
    %v4971 = vpop.f32.mrb[0].mxu0
    %v4972 = vadd.f32 0.0, %v4971
    %v4973 = vpop.f32.mrb[0].mxu0
    %v4974 = vpop.f32.mrb[0].mxu0
    %v4975 = vadd.f32 0.0, %v4974
    %v4976 = vpop.f32.mrb[0].mxu0
    %4977 = vmatprep.mubr.bf16.mxu0 0
    %4978 = vmatmul.mubr.bf16.gmra.mrb[0].mxu0 %v4484
    %v4979 = vpop.f32.mrb[0].mxu0
    %v4980 = vadd.f32 0.0, %v4979
    %v4981 = vpop.f32.mrb[0].mxu0
    %v4982 = vpop.f32.mrb[0].mxu0
    %v4983 = vadd.f32 0.0, %v4982
    %v4984 = vpop.f32.mrb[0].mxu0
    %4985 = vmatprep.mubr.bf16.mxu0 0
    %4986 = vmatmul.mubr.bf16.gmra.mrb[0].mxu0 %v4487
    %v4987 = vpop.f32.mrb[0].mxu0
    %v4988 = vadd.f32 0.0, %v4987
    %v4989 = vpop.f32.mrb[0].mxu0
    %v4990 = vpop.f32.mrb[0].mxu0
    %v4991 = vadd.f32 0.0, %v4990
    %v4992 = vpop.f32.mrb[0].mxu0
    %4993 = vmatprep.mubr.bf16.mxu0 0
    %4994 = vmatmul.mubr.bf16.gmra.mrb[0].mxu0 %v4490
    %v4995 = vpop.f32.mrb[0].mxu0
    %v4996 = vadd.f32 0.0, %v4995
    %v4997 = vpop.f32.mrb[0].mxu0
    %v4998 = vpop.f32.mrb[0].mxu0
    %v4999 = vadd.f32 0.0, %v4998
    %v5000 = vpop.f32.mrb[0].mxu0
    %5001 = vmatprep.mubr.bf16.mxu0 0
    %5002 = vmatmul.mubr.bf16.gmra.mrb[0].mxu0 %v4493
    %v5003 = vpop.f32.mrb[0].mxu0
    %v5004 = vadd.f32 0.0, %v5003
    %v5005 = vpop.f32.mrb[0].mxu0
    %v5006 = vpop.f32.mrb[0].mxu0
    %v5007 = vadd.f32 0.0, %v5006
    %v5008 = vpop.f32.mrb[0].mxu0
    %5009 = vmatprep.mubr.bf16.mxu0 0
    %5010 = vmatmul.mubr.bf16.gmra.mrb[0].mxu0 %v4496
    %v5011 = vpop.f32.mrb[0].mxu0
    %v5012 = vadd.f32 0.0, %v5011
    %v5013 = vpop.f32.mrb[0].mxu0
    %v5014 = vpop.f32.mrb[0].mxu0
    %v5015 = vadd.f32 0.0, %v5014
    %v5016 = vpop.f32.mrb[0].mxu0
    %5017 = vmatprep.mubr.bf16.mxu0 0
    %5018 = vmatmul.mubr.bf16.gmra.mrb[0].mxu0 %v4499
    %v5019 = vpop.f32.mrb[0].mxu0
    %v5020 = vadd.f32 0.0, %v5019
    %v5021 = vpop.f32.mrb[0].mxu0
    %v5022 = vpop.f32.mrb[0].mxu0
    %v5023 = vadd.f32 0.0, %v5022
    %v5024 = vpop.f32.mrb[0].mxu0
    %5025 = vmatprep.mubr.bf16.mxu0 0
    %5026 = vmatmul.mubr.bf16.gmra.mrb[0].mxu0 %v4502
    %v5027 = vpop.f32.mrb[0].mxu0
    %v5028 = vadd.f32 0.0, %v5027
    %v5029 = vpop.f32.mrb[0].mxu0
    %v5030 = vpop.f32.mrb[0].mxu0
    %v5031 = vadd.f32 0.0, %v5030
    %v5032 = vpop.f32.mrb[0].mxu0
    %5033 = vmatprep.mubr.bf16.mxu0 0
    %5034 = vmatmul.mubr.bf16.gmra.mrb[0].mxu0 %v4505
    %v5035 = vpop.f32.mrb[0].mxu0
    %v5036 = vadd.f32 0.0, %v5035
    %v5037 = vpop.f32.mrb[0].mxu0
    %v5038 = vpop.f32.mrb[0].mxu0
    %v5039 = vadd.f32 0.0, %v5038
    %v5040 = vpop.f32.mrb[0].mxu0
    %5041 = vmatprep.mubr.bf16.mxu0 0
    %5042 = vmatmul.mubr.bf16.gmra.mrb[0].mxu0 %v4508
    %v5043 = vpop.f32.mrb[0].mxu0
    %v5044 = vadd.f32 0.0, %v5043
    %v5045 = vpop.f32.mrb[0].mxu0
    %v5046 = vpop.f32.mrb[0].mxu0
    %v5047 = vadd.f32 0.0, %v5046
    %v5048 = vpop.f32.mrb[0].mxu0
    %5049 = vmatprep.mubr.bf16.mxu0 0
    %5050 = vmatmul.mubr.bf16.gmra.mrb[0].mxu0 %v4511
    %v5051 = vpop.f32.mrb[0].mxu0
    %v5052 = vadd.f32 0.0, %v5051
    %v5053 = vpop.f32.mrb[0].mxu0
    %v5054 = vpop.f32.mrb[0].mxu0
    %v5055 = vadd.f32 0.0, %v5054
    %v5056 = vpop.f32.mrb[0].mxu0
    %5057 = vdwg.mxu0
    %v5058 = vmax.f32 %v4548, 0.0
    %v5059 = vmax.f32 %v4551, 0.0
    %v5060 = vmax.f32 %v4556, 0.0
    %v5061 = vmax.f32 %v4559, 0.0
    %v5062 = vmax.f32 %v4564, 0.0
    %v5063 = vmax.f32 %v4567, 0.0
    %v5064 = vmax.f32 %v4572, 0.0
    %v5065 = vmax.f32 %v4575, 0.0
    %v5066 = vmax.f32 %v4580, 0.0
    %v5067 = vmax.f32 %v4583, 0.0
    %v5068 = vmax.f32 %v4588, 0.0
    %v5069 = vmax.f32 %v4591, 0.0
    %v5070 = vmax.f32 %v4596, 0.0
    %v5071 = vmax.f32 %v4599, 0.0
    %v5072 = vmax.f32 %v4604, 0.0
    %v5073 = vmax.f32 %v4607, 0.0
    %v5074 = vmax.f32 %v4612, 0.0
    %v5075 = vmax.f32 %v4615, 0.0
    %v5076 = vmax.f32 %v4620, 0.0
    %v5077 = vmax.f32 %v4623, 0.0
    %v5078 = vmax.f32 %v4628, 0.0
    %v5079 = vmax.f32 %v4631, 0.0
    %v5080 = vmax.f32 %v4636, 0.0
    %v5081 = vmax.f32 %v4639, 0.0
    %v5082 = vmax.f32 %v4644, 0.0
    %v5083 = vmax.f32 %v4647, 0.0
    %v5084 = vmax.f32 %v4652, 0.0
    %v5085 = vmax.f32 %v4655, 0.0
    %v5086 = vmax.f32 %v4660, 0.0
    %v5087 = vmax.f32 %v4663, 0.0
    %v5088 = vmax.f32 %v4668, 0.0
    %v5089 = vmax.f32 %v4671, 0.0
    %v5090 = vmax.f32 %v4676, 0.0
    %v5091 = vmax.f32 %v4679, 0.0
    %v5092 = vmax.f32 %v4684, 0.0
    %v5093 = vmax.f32 %v4687, 0.0
    %v5094 = vmax.f32 %v4692, 0.0
    %v5095 = vmax.f32 %v4695, 0.0
    %v5096 = vmax.f32 %v4700, 0.0
    %v5097 = vmax.f32 %v4703, 0.0
    %v5098 = vmax.f32 %v4708, 0.0
    %v5099 = vmax.f32 %v4711, 0.0
    %v5100 = vmax.f32 %v4716, 0.0
    %v5101 = vmax.f32 %v4719, 0.0
    %v5102 = vmax.f32 %v4724, 0.0
    %v5103 = vmax.f32 %v4727, 0.0
    %v5104 = vmax.f32 %v4732, 0.0
    %v5105 = vmax.f32 %v4735, 0.0
    %v5106 = vmax.f32 %v4740, 0.0
    %v5107 = vmax.f32 %v4743, 0.0
    %v5108 = vmax.f32 %v4748, 0.0
    %v5109 = vmax.f32 %v4751, 0.0
    %v5110 = vmax.f32 %v4756, 0.0
    %v5111 = vmax.f32 %v4759, 0.0
    %v5112 = vmax.f32 %v4764, 0.0
    %v5113 = vmax.f32 %v4767, 0.0
    %v5114 = vmax.f32 %v4772, 0.0
    %v5115 = vmax.f32 %v4775, 0.0
    %v5116 = vmax.f32 %v4780, 0.0
    %v5117 = vmax.f32 %v4783, 0.0
    %v5118 = vmax.f32 %v4788, 0.0
    %v5119 = vmax.f32 %v4791, 0.0
    %v5120 = vmax.f32 %v4796, 0.0
    %v5121 = vmax.f32 %v4799, 0.0
    %v5122 = vmax.f32 %v4804, 0.0
    %v5123 = vmax.f32 %v4807, 0.0
    %v5124 = vmax.f32 %v4812, 0.0
    %v5125 = vmax.f32 %v4815, 0.0
    %v5126 = vmax.f32 %v4820, 0.0
    %v5127 = vmax.f32 %v4823, 0.0
    %v5128 = vmax.f32 %v4828, 0.0
    %v5129 = vmax.f32 %v4831, 0.0
    %v5130 = vmax.f32 %v4836, 0.0
    %v5131 = vmax.f32 %v4839, 0.0
    %v5132 = vmax.f32 %v4844, 0.0
    %v5133 = vmax.f32 %v4847, 0.0
    %v5134 = vmax.f32 %v4852, 0.0
    %v5135 = vmax.f32 %v4855, 0.0
    %v5136 = vmax.f32 %v4860, 0.0
    %v5137 = vmax.f32 %v4863, 0.0
    %v5138 = vmax.f32 %v4868, 0.0
    %v5139 = vmax.f32 %v4871, 0.0
    %v5140 = vmax.f32 %v4876, 0.0
    %v5141 = vmax.f32 %v4879, 0.0
    %v5142 = vmax.f32 %v4884, 0.0
    %v5143 = vmax.f32 %v4887, 0.0
    %v5144 = vmax.f32 %v4892, 0.0
    %v5145 = vmax.f32 %v4895, 0.0
    %v5146 = vmax.f32 %v4900, 0.0
    %v5147 = vmax.f32 %v4903, 0.0
    %v5148 = vmax.f32 %v4908, 0.0
    %v5149 = vmax.f32 %v4911, 0.0
    %v5150 = vmax.f32 %v4916, 0.0
    %v5151 = vmax.f32 %v4919, 0.0
    %v5152 = vmax.f32 %v4924, 0.0
    %v5153 = vmax.f32 %v4927, 0.0
    %v5154 = vmax.f32 %v4932, 0.0
    %v5155 = vmax.f32 %v4935, 0.0
    %v5156 = vmax.f32 %v4940, 0.0
    %v5157 = vmax.f32 %v4943, 0.0
    %v5158 = vmax.f32 %v4948, 0.0
    %v5159 = vmax.f32 %v4951, 0.0
    %v5160 = vmax.f32 %v4956, 0.0
    %v5161 = vmax.f32 %v4959, 0.0
    %v5162 = vmax.f32 %v4964, 0.0
    %v5163 = vmax.f32 %v4967, 0.0
    %v5164 = vmax.f32 %v4972, 0.0
    %v5165 = vmax.f32 %v4975, 0.0
    %v5166 = vmax.f32 %v4980, 0.0
    %v5167 = vmax.f32 %v4983, 0.0
    %v5168 = vmax.f32 %v4988, 0.0
    %v5169 = vmax.f32 %v4991, 0.0
    %v5170 = vmax.f32 %v4996, 0.0
    %v5171 = vmax.f32 %v4999, 0.0
    %v5172 = vmax.f32 %v5004, 0.0
    %v5173 = vmax.f32 %v5007, 0.0
    %v5174 = vmax.f32 %v5012, 0.0
    %v5175 = vmax.f32 %v5015, 0.0
    %v5176 = vmax.f32 %v5020, 0.0
    %v5177 = vmax.f32 %v5023, 0.0
    %v5178 = vmax.f32 %v5028, 0.0
    %v5179 = vmax.f32 %v5031, 0.0
    %v5180 = vmax.f32 %v5036, 0.0
    %v5181 = vmax.f32 %v5039, 0.0
    %v5182 = vmax.f32 %v5044, 0.0
    %v5183 = vmax.f32 %v5047, 0.0
    %v5184 = vmax.f32 %v5052, 0.0
    %v5185 = vmax.f32 %v5055, 0.0
    %v5186 = vmax.f32 %v5058, 0.0
    %v5187 = vmax.f32 %v5059, 0.0
    %v5188 = vmax.f32 %v5060, %v5062
    %v5189 = vmax.f32 %v5061, %v5063
    %v5190 = vmax.f32 %v5064, %v5066
    %v5191 = vmax.f32 %v5065, %v5067
    %v5192 = vmax.f32 %v5068, %v5070
    %v5193 = vmax.f32 %v5069, %v5071
    %v5194 = vmax.f32 %v5072, %v5074
    %v5195 = vmax.f32 %v5073, %v5075
    %v5196 = vmax.f32 %v5076, %v5078
    %v5197 = vmax.f32 %v5077, %v5079
    %v5198 = vmax.f32 %v5080, %v5082
    %v5199 = vmax.f32 %v5081, %v5083
    %v5200 = vmax.f32 %v5084, %v5086
    %v5201 = vmax.f32 %v5085, %v5087
    %v5202 = vmax.f32 %v5088, %v5090
    %v5203 = vmax.f32 %v5089, %v5091
    %v5204 = vmax.f32 %v5092, %v5094
    %v5205 = vmax.f32 %v5093, %v5095
    %v5206 = vmax.f32 %v5096, %v5098
    %v5207 = vmax.f32 %v5097, %v5099
    %v5208 = vmax.f32 %v5100, %v5102
    %v5209 = vmax.f32 %v5101, %v5103
    %v5210 = vmax.f32 %v5104, %v5106
    %v5211 = vmax.f32 %v5105, %v5107
    %v5212 = vmax.f32 %v5108, %v5110
    %v5213 = vmax.f32 %v5109, %v5111
    %v5214 = vmax.f32 %v5112, %v5114
    %v5215 = vmax.f32 %v5113, %v5115
    %v5216 = vmax.f32 %v5116, %v5118
    %v5217 = vmax.f32 %v5117, %v5119
    %v5218 = vmax.f32 %v5122, 0.0
    %v5219 = vmax.f32 %v5123, 0.0
    %v5220 = vmax.f32 %v5124, %v5126
    %v5221 = vmax.f32 %v5125, %v5127
    %v5222 = vmax.f32 %v5128, %v5130
    %v5223 = vmax.f32 %v5129, %v5131
    %v5224 = vmax.f32 %v5132, %v5134
    %v5225 = vmax.f32 %v5133, %v5135
    %v5226 = vmax.f32 %v5136, %v5138
    %v5227 = vmax.f32 %v5137, %v5139
    %v5228 = vmax.f32 %v5140, %v5142
    %v5229 = vmax.f32 %v5141, %v5143
    %v5230 = vmax.f32 %v5144, %v5146
    %v5231 = vmax.f32 %v5145, %v5147
    %v5232 = vmax.f32 %v5148, %v5150
    %v5233 = vmax.f32 %v5149, %v5151
    %v5234 = vmax.f32 %v5152, %v5154
    %v5235 = vmax.f32 %v5153, %v5155
    %v5236 = vmax.f32 %v5156, %v5158
    %v5237 = vmax.f32 %v5157, %v5159
    %v5238 = vmax.f32 %v5160, %v5162
    %v5239 = vmax.f32 %v5161, %v5163
    %v5240 = vmax.f32 %v5164, %v5166
    %v5241 = vmax.f32 %v5165, %v5167
    %v5242 = vmax.f32 %v5168, %v5170
    %v5243 = vmax.f32 %v5169, %v5171
    %v5244 = vmax.f32 %v5172, %v5174
    %v5245 = vmax.f32 %v5173, %v5175
    %v5246 = vmax.f32 %v5176, %v5178
    %v5247 = vmax.f32 %v5177, %v5179
    %v5248 = vmax.f32 %v5180, %v5182
    %v5249 = vmax.f32 %v5181, %v5183
    %v5250 = vmax.f32 %v5186, %v5060
    %v5251 = vmax.f32 %v5187, %v5061
    %v5252 = vmax.f32 %v5188, %v5064
    %v5253 = vmax.f32 %v5189, %v5065
    %v5254 = vmax.f32 %v5190, %v5068
    %v5255 = vmax.f32 %v5191, %v5069
    %v5256 = vmax.f32 %v5192, %v5072
    %v5257 = vmax.f32 %v5193, %v5073
    %v5258 = vmax.f32 %v5194, %v5076
    %v5259 = vmax.f32 %v5195, %v5077
    %v5260 = vmax.f32 %v5196, %v5080
    %v5261 = vmax.f32 %v5197, %v5081
    %v5262 = vmax.f32 %v5198, %v5084
    %v5263 = vmax.f32 %v5199, %v5085
    %v5264 = vmax.f32 %v5200, %v5088
    %v5265 = vmax.f32 %v5201, %v5089
    %v5266 = vmax.f32 %v5202, %v5092
    %v5267 = vmax.f32 %v5203, %v5093
    %v5268 = vmax.f32 %v5204, %v5096
    %v5269 = vmax.f32 %v5205, %v5097
    %v5270 = vmax.f32 %v5206, %v5100
    %v5271 = vmax.f32 %v5207, %v5101
    %v5272 = vmax.f32 %v5208, %v5104
    %v5273 = vmax.f32 %v5209, %v5105
    %v5274 = vmax.f32 %v5210, %v5108
    %v5275 = vmax.f32 %v5211, %v5109
    %v5276 = vmax.f32 %v5212, %v5112
    %v5277 = vmax.f32 %v5213, %v5113
    %v5278 = vmax.f32 %v5214, %v5116
    %v5279 = vmax.f32 %v5215, %v5117
    %v5280 = vmax.f32 %v5216, %v5120
    %v5281 = vmax.f32 %v5217, %v5121
    %v5282 = vmax.f32 %v5218, %v5124
    %v5283 = vmax.f32 %v5219, %v5125
    %v5284 = vmax.f32 %v5220, %v5128
    %v5285 = vmax.f32 %v5221, %v5129
    %v5286 = vmax.f32 %v5222, %v5132
    %v5287 = vmax.f32 %v5223, %v5133
    %v5288 = vmax.f32 %v5224, %v5136
    %v5289 = vmax.f32 %v5225, %v5137
    %v5290 = vmax.f32 %v5226, %v5140
    %v5291 = vmax.f32 %v5227, %v5141
    %v5292 = vmax.f32 %v5228, %v5144
    %v5293 = vmax.f32 %v5229, %v5145
    %v5294 = vmax.f32 %v5230, %v5148
    %v5295 = vmax.f32 %v5231, %v5149
    %v5296 = vmax.f32 %v5232, %v5152
    %v5297 = vmax.f32 %v5233, %v5153
    %v5298 = vmax.f32 %v5234, %v5156
    %v5299 = vmax.f32 %v5235, %v5157
    %v5300 = vmax.f32 %v5236, %v5160
    %v5301 = vmax.f32 %v5237, %v5161
    %v5302 = vmax.f32 %v5238, %v5164
    %v5303 = vmax.f32 %v5239, %v5165
    %v5304 = vmax.f32 %v5240, %v5168
    %v5305 = vmax.f32 %v5241, %v5169
    %v5306 = vmax.f32 %v5242, %v5172
    %v5307 = vmax.f32 %v5243, %v5173
    %v5308 = vmax.f32 %v5244, %v5176
    %v5309 = vmax.f32 %v5245, %v5177
    %v5310 = vmax.f32 %v5246, %v5180
    %v5311 = vmax.f32 %v5247, %v5181
    %v5312 = vmax.f32 %v5248, %v5184
    %v5313 = vmax.f32 %v5249, %v5185
    %v5314 = vpack.c.bf16 %v5251, %v5250
    %v5315 = vpack.c.bf16 %v5253, %v5252
    %v5316 = vpack.c.bf16 %v5255, %v5254
    %v5317 = vpack.c.bf16 %v5257, %v5256
    %v5318 = vpack.c.bf16 %v5259, %v5258
    %v5319 = vpack.c.bf16 %v5261, %v5260
    %v5320 = vpack.c.bf16 %v5263, %v5262
    %v5321 = vpack.c.bf16 %v5265, %v5264
    %v5322 = vpack.c.bf16 %v5267, %v5266
    %v5323 = vpack.c.bf16 %v5269, %v5268
    %v5324 = vpack.c.bf16 %v5271, %v5270
    %v5325 = vpack.c.bf16 %v5273, %v5272
    %v5326 = vpack.c.bf16 %v5275, %v5274
    %v5327 = vpack.c.bf16 %v5277, %v5276
    %v5328 = vpack.c.bf16 %v5279, %v5278
    %v5329 = vpack.c.bf16 %v5281, %v5280
    %v5330 = vpack.c.bf16 %v5283, %v5282
    %v5331 = vpack.c.bf16 %v5285, %v5284
    %v5332 = vpack.c.bf16 %v5287, %v5286
    %v5333 = vpack.c.bf16 %v5289, %v5288
    %v5334 = vpack.c.bf16 %v5291, %v5290
    %v5335 = vpack.c.bf16 %v5293, %v5292
    %v5336 = vpack.c.bf16 %v5295, %v5294
    %v5337 = vpack.c.bf16 %v5297, %v5296
    %v5338 = vpack.c.bf16 %v5299, %v5298
    %v5339 = vpack.c.bf16 %v5301, %v5300
    %v5340 = vpack.c.bf16 %v5303, %v5302
    %v5341 = vpack.c.bf16 %v5305, %v5304
    %v5342 = vpack.c.bf16 %v5307, %v5306
    %v5343 = vpack.c.bf16 %v5309, %v5308
    %v5344 = vpack.c.bf16 %v5311, %v5310
    %v5345 = vpack.c.bf16 %v5313, %v5312
    %v5378 = vrot.slane %v5314, 7
    %v5379 = vrot.slane %v5315, 7
    %v5380 = vrot.slane %v5316, 7
    %v5381 = vrot.slane %v5317, 7
    %v5382 = vrot.slane %v5318, 7
    %v5383 = vrot.slane %v5319, 7
    %v5384 = vrot.slane %v5320, 7
    %v5385 = vrot.slane %v5321, 7
    %v5386 = vrot.slane %v5322, 7
    %v5387 = vrot.slane %v5323, 7
    %v5388 = vrot.slane %v5324, 7
    %v5389 = vrot.slane %v5325, 7
    %v5390 = vrot.slane %v5326, 7
    %v5391 = vrot.slane %v5327, 7
    %v5392 = vrot.slane %v5328, 7
    %v5393 = vrot.slane %v5329, 7
    %v5394 = vrot.slane %v5330, 7
    %v5395 = vrot.slane %v5331, 7
    %v5396 = vrot.slane %v5332, 7
    %v5397 = vrot.slane %v5333, 7
    %v5398 = vrot.slane %v5334, 7
    %v5399 = vrot.slane %v5335, 7
    %v5400 = vrot.slane %v5336, 7
    %v5401 = vrot.slane %v5337, 7
    %v5402 = vrot.slane %v5338, 7
    %v5403 = vrot.slane %v5339, 7
    %v5404 = vrot.slane %v5340, 7
    %v5405 = vrot.slane %v5341, 7
    %v5406 = vrot.slane %v5342, 7
    %v5407 = vrot.slane %v5343, 7
    %v5408 = vrot.slane %v5344, 7
    %v5409 = vrot.slane %v5345, 7
    %vm5410 = vcmask 1040384
    %v5412 = vsel %vm5410, 0, %v5378
    %v5414 = vsel %vm5410, 0, %v5379
    %v5416 = vsel %vm5410, 0, %v5380
    %v5418 = vsel %vm5410, 0, %v5381
    %v5420 = vsel %vm5410, 0, %v5382
    %v5422 = vsel %vm5410, 0, %v5383
    %v5424 = vsel %vm5410, 0, %v5384
    %v5426 = vsel %vm5410, 0, %v5385
    %v5428 = vsel %vm5410, 0, %v5386
    %v5430 = vsel %vm5410, 0, %v5387
    %v5432 = vsel %vm5410, 0, %v5388
    %v5434 = vsel %vm5410, 0, %v5389
    %v5436 = vsel %vm5410, 0, %v5390
    %v5438 = vsel %vm5410, 0, %v5391
    %v5440 = vsel %vm5410, 0, %v5392
    %v5442 = vsel %vm5410, 0, %v5393
    %v5444 = vsel %vm5410, 0, %v5394
    %v5446 = vsel %vm5410, 0, %v5395
    %v5448 = vsel %vm5410, 0, %v5396
    %v5450 = vsel %vm5410, 0, %v5397
    %v5452 = vsel %vm5410, 0, %v5398
    %v5454 = vsel %vm5410, 0, %v5399
    %v5456 = vsel %vm5410, 0, %v5400
    %v5458 = vsel %vm5410, 0, %v5401
    %v5460 = vsel %vm5410, 0, %v5402
    %v5462 = vsel %vm5410, 0, %v5403
    %v5464 = vsel %vm5410, 0, %v5404
    %v5466 = vsel %vm5410, 0, %v5405
    %v5468 = vsel %vm5410, 0, %v5406
    %v5470 = vsel %vm5410, 0, %v5407
    %v5472 = vsel %vm5410, 0, %v5408
    %v5474 = vsel %vm5410, 0, %v5409
    %v5476 = vshrl.u32 %v5314, 16
    %v5478 = vrot.slane %v5476, 7
    %v5479 = vshll.u32 %v5314, 16
    %v5481 = vor.u32 %v5478, %v5479
    %v5483 = vshrl.u32 %v5315, 16
    %v5485 = vrot.slane %v5483, 7
    %v5486 = vshll.u32 %v5315, 16
    %v5488 = vor.u32 %v5485, %v5486
    %v5490 = vshrl.u32 %v5316, 16
    %v5492 = vrot.slane %v5490, 7
    %v5493 = vshll.u32 %v5316, 16
    %v5495 = vor.u32 %v5492, %v5493
    %v5497 = vshrl.u32 %v5317, 16
    %v5499 = vrot.slane %v5497, 7
    %v5500 = vshll.u32 %v5317, 16
    %v5502 = vor.u32 %v5499, %v5500
    %v5504 = vshrl.u32 %v5318, 16
    %v5506 = vrot.slane %v5504, 7
    %v5507 = vshll.u32 %v5318, 16
    %v5509 = vor.u32 %v5506, %v5507
    %v5511 = vshrl.u32 %v5319, 16
    %v5513 = vrot.slane %v5511, 7
    %v5514 = vshll.u32 %v5319, 16
    %v5516 = vor.u32 %v5513, %v5514
    %v5518 = vshrl.u32 %v5320, 16
    %v5520 = vrot.slane %v5518, 7
    %v5521 = vshll.u32 %v5320, 16
    %v5523 = vor.u32 %v5520, %v5521
    %v5525 = vshrl.u32 %v5321, 16
    %v5527 = vrot.slane %v5525, 7
    %v5528 = vshll.u32 %v5321, 16
    %v5530 = vor.u32 %v5527, %v5528
    %v5532 = vshrl.u32 %v5322, 16
    %v5534 = vrot.slane %v5532, 7
    %v5535 = vshll.u32 %v5322, 16
    %v5537 = vor.u32 %v5534, %v5535
    %v5539 = vshrl.u32 %v5323, 16
    %v5541 = vrot.slane %v5539, 7
    %v5542 = vshll.u32 %v5323, 16
    %v5544 = vor.u32 %v5541, %v5542
    %v5546 = vshrl.u32 %v5324, 16
    %v5548 = vrot.slane %v5546, 7
    %v5549 = vshll.u32 %v5324, 16
    %v5551 = vor.u32 %v5548, %v5549
    %v5553 = vshrl.u32 %v5325, 16
    %v5555 = vrot.slane %v5553, 7
    %v5556 = vshll.u32 %v5325, 16
    %v5558 = vor.u32 %v5555, %v5556
    %v5560 = vshrl.u32 %v5326, 16
    %v5562 = vrot.slane %v5560, 7
    %v5563 = vshll.u32 %v5326, 16
    %v5565 = vor.u32 %v5562, %v5563
    %v5567 = vshrl.u32 %v5327, 16
    %v5569 = vrot.slane %v5567, 7
    %v5570 = vshll.u32 %v5327, 16
    %v5572 = vor.u32 %v5569, %v5570
    %v5574 = vshrl.u32 %v5328, 16
    %v5576 = vrot.slane %v5574, 7
    %v5577 = vshll.u32 %v5328, 16
    %v5579 = vor.u32 %v5576, %v5577
    %v5581 = vshrl.u32 %v5329, 16
    %v5583 = vrot.slane %v5581, 7
    %v5584 = vshll.u32 %v5329, 16
    %v5586 = vor.u32 %v5583, %v5584
    %v5588 = vshrl.u32 %v5330, 16
    %v5590 = vrot.slane %v5588, 7
    %v5591 = vshll.u32 %v5330, 16
    %v5593 = vor.u32 %v5590, %v5591
    %v5595 = vshrl.u32 %v5331, 16
    %v5597 = vrot.slane %v5595, 7
    %v5598 = vshll.u32 %v5331, 16
    %v5600 = vor.u32 %v5597, %v5598
    %v5602 = vshrl.u32 %v5332, 16
    %v5604 = vrot.slane %v5602, 7
    %v5605 = vshll.u32 %v5332, 16
    %v5607 = vor.u32 %v5604, %v5605
    %v5609 = vshrl.u32 %v5333, 16
    %v5611 = vrot.slane %v5609, 7
    %v5612 = vshll.u32 %v5333, 16
    %v5614 = vor.u32 %v5611, %v5612
    %v5616 = vshrl.u32 %v5334, 16
    %v5618 = vrot.slane %v5616, 7
    %v5619 = vshll.u32 %v5334, 16
    %v5621 = vor.u32 %v5618, %v5619
    %v5623 = vshrl.u32 %v5335, 16
    %v5625 = vrot.slane %v5623, 7
    %v5626 = vshll.u32 %v5335, 16
    %v5628 = vor.u32 %v5625, %v5626
    %v5630 = vshrl.u32 %v5336, 16
    %v5632 = vrot.slane %v5630, 7
    %v5633 = vshll.u32 %v5336, 16
    %v5635 = vor.u32 %v5632, %v5633
    %v5637 = vshrl.u32 %v5337, 16
    %v5639 = vrot.slane %v5637, 7
    %v5640 = vshll.u32 %v5337, 16
    %v5642 = vor.u32 %v5639, %v5640
    %v5644 = vshrl.u32 %v5338, 16
    %v5646 = vrot.slane %v5644, 7
    %v5647 = vshll.u32 %v5338, 16
    %v5649 = vor.u32 %v5646, %v5647
    %v5651 = vshrl.u32 %v5339, 16
    %v5653 = vrot.slane %v5651, 7
    %v5654 = vshll.u32 %v5339, 16
    %v5656 = vor.u32 %v5653, %v5654
    %v5658 = vshrl.u32 %v5340, 16
    %v5660 = vrot.slane %v5658, 7
    %v5661 = vshll.u32 %v5340, 16
    %v5663 = vor.u32 %v5660, %v5661
    %v5665 = vshrl.u32 %v5341, 16
    %v5667 = vrot.slane %v5665, 7
    %v5668 = vshll.u32 %v5341, 16
    %v5670 = vor.u32 %v5667, %v5668
    %v5672 = vshrl.u32 %v5342, 16
    %v5674 = vrot.slane %v5672, 7
    %v5675 = vshll.u32 %v5342, 16
    %v5677 = vor.u32 %v5674, %v5675
    %v5679 = vshrl.u32 %v5343, 16
    %v5681 = vrot.slane %v5679, 7
    %v5682 = vshll.u32 %v5343, 16
    %v5684 = vor.u32 %v5681, %v5682
    %v5686 = vshrl.u32 %v5344, 16
    %v5688 = vrot.slane %v5686, 7
    %v5689 = vshll.u32 %v5344, 16
    %v5691 = vor.u32 %v5688, %v5689
    %v5693 = vshrl.u32 %v5345, 16
    %v5695 = vrot.slane %v5693, 7
    %v5696 = vshll.u32 %v5345, 16
    %v5698 = vor.u32 %v5695, %v5696
    %vm5731 = vcmask 1040384
    %vm5732 = vsmask.f32 256
    %vm5733 = vmand %vm5731, %vm5732
    %v5734 = vsel %vm5733, 0, %v5481
    %v5735 = vsel %vm5733, 0, %v5488
    %v5736 = vsel %vm5733, 0, %v5495
    %v5737 = vsel %vm5733, 0, %v5502
    %v5738 = vsel %vm5733, 0, %v5509
    %v5739 = vsel %vm5733, 0, %v5516
    %v5740 = vsel %vm5733, 0, %v5523
    %v5741 = vsel %vm5733, 0, %v5530
    %v5742 = vsel %vm5733, 0, %v5537
    %v5743 = vsel %vm5733, 0, %v5544
    %v5744 = vsel %vm5733, 0, %v5551
    %v5745 = vsel %vm5733, 0, %v5558
    %v5746 = vsel %vm5733, 0, %v5565
    %v5747 = vsel %vm5733, 0, %v5572
    %v5748 = vsel %vm5733, 0, %v5579
    %v5749 = vsel %vm5733, 0, %v5586
    %v5750 = vsel %vm5733, 0, %v5593
    %v5751 = vsel %vm5733, 0, %v5600
    %v5752 = vsel %vm5733, 0, %v5607
    %v5753 = vsel %vm5733, 0, %v5614
    %v5754 = vsel %vm5733, 0, %v5621
    %v5755 = vsel %vm5733, 0, %v5628
    %v5756 = vsel %vm5733, 0, %v5635
    %v5757 = vsel %vm5733, 0, %v5642
    %v5758 = vsel %vm5733, 0, %v5649
    %v5759 = vsel %vm5733, 0, %v5656
    %v5760 = vsel %vm5733, 0, %v5663
    %v5761 = vsel %vm5733, 0, %v5670
    %v5762 = vsel %vm5733, 0, %v5677
    %v5763 = vsel %vm5733, 0, %v5684
    %v5764 = vsel %vm5733, 0, %v5691
    %v5765 = vsel %vm5733, 0, %v5698
    %v5766 = vrot.slane %v5479, 1
    %v5767 = vor.u32 %v5476, %v5766
    %v5768 = vrot.slane %v5486, 1
    %v5769 = vor.u32 %v5483, %v5768
    %v5770 = vrot.slane %v5493, 1
    %v5771 = vor.u32 %v5490, %v5770
    %v5772 = vrot.slane %v5500, 1
    %v5773 = vor.u32 %v5497, %v5772
    %v5774 = vrot.slane %v5507, 1
    %v5775 = vor.u32 %v5504, %v5774
    %v5776 = vrot.slane %v5514, 1
    %v5777 = vor.u32 %v5511, %v5776
    %v5778 = vrot.slane %v5521, 1
    %v5779 = vor.u32 %v5518, %v5778
    %v5780 = vrot.slane %v5528, 1
    %v5781 = vor.u32 %v5525, %v5780
    %v5782 = vrot.slane %v5535, 1
    %v5783 = vor.u32 %v5532, %v5782
    %v5784 = vrot.slane %v5542, 1
    %v5785 = vor.u32 %v5539, %v5784
    %v5786 = vrot.slane %v5549, 1
    %v5787 = vor.u32 %v5546, %v5786
    %v5788 = vrot.slane %v5556, 1
    %v5789 = vor.u32 %v5553, %v5788
    %v5790 = vrot.slane %v5563, 1
    %v5791 = vor.u32 %v5560, %v5790
    %v5792 = vrot.slane %v5570, 1
    %v5793 = vor.u32 %v5567, %v5792
    %v5794 = vrot.slane %v5577, 1
    %v5795 = vor.u32 %v5574, %v5794
    %v5796 = vrot.slane %v5584, 1
    %v5797 = vor.u32 %v5581, %v5796
    %v5798 = vrot.slane %v5591, 1
    %v5799 = vor.u32 %v5588, %v5798
    %v5800 = vrot.slane %v5598, 1
    %v5801 = vor.u32 %v5595, %v5800
    %v5802 = vrot.slane %v5605, 1
    %v5803 = vor.u32 %v5602, %v5802
    %v5804 = vrot.slane %v5612, 1
    %v5805 = vor.u32 %v5609, %v5804
    %v5806 = vrot.slane %v5619, 1
    %v5807 = vor.u32 %v5616, %v5806
    %v5808 = vrot.slane %v5626, 1
    %v5809 = vor.u32 %v5623, %v5808
    %v5810 = vrot.slane %v5633, 1
    %v5811 = vor.u32 %v5630, %v5810
    %v5812 = vrot.slane %v5640, 1
    %v5813 = vor.u32 %v5637, %v5812
    %v5814 = vrot.slane %v5647, 1
    %v5815 = vor.u32 %v5644, %v5814
    %v5816 = vrot.slane %v5654, 1
    %v5817 = vor.u32 %v5651, %v5816
    %v5818 = vrot.slane %v5661, 1
    %v5819 = vor.u32 %v5658, %v5818
    %v5820 = vrot.slane %v5668, 1
    %v5821 = vor.u32 %v5665, %v5820
    %v5822 = vrot.slane %v5675, 1
    %v5823 = vor.u32 %v5672, %v5822
    %v5824 = vrot.slane %v5682, 1
    %v5825 = vor.u32 %v5679, %v5824
    %v5826 = vrot.slane %v5689, 1
    %v5827 = vor.u32 %v5686, %v5826
    %v5828 = vrot.slane %v5696, 1
    %v5829 = vor.u32 %v5693, %v5828
    %vm5862 = vcmask 1047552
    %vm5863 = vsmask.f32 7424
    %vm5864 = vmand %vm5862, %vm5863
    %v5865 = vsel %vm5864, %v5767, 0
    %v5866 = vsel %vm5864, %v5769, 0
    %v5867 = vsel %vm5864, %v5771, 0
    %v5868 = vsel %vm5864, %v5773, 0
    %v5869 = vsel %vm5864, %v5775, 0
    %v5870 = vsel %vm5864, %v5777, 0
    %v5871 = vsel %vm5864, %v5779, 0
    %v5872 = vsel %vm5864, %v5781, 0
    %v5873 = vsel %vm5864, %v5783, 0
    %v5874 = vsel %vm5864, %v5785, 0
    %v5875 = vsel %vm5864, %v5787, 0
    %v5876 = vsel %vm5864, %v5789, 0
    %v5877 = vsel %vm5864, %v5791, 0
    %v5878 = vsel %vm5864, %v5793, 0
    %v5879 = vsel %vm5864, %v5795, 0
    %v5880 = vsel %vm5864, %v5797, 0
    %v5881 = vsel %vm5864, %v5799, 0
    %v5882 = vsel %vm5864, %v5801, 0
    %v5883 = vsel %vm5864, %v5803, 0
    %v5884 = vsel %vm5864, %v5805, 0
    %v5885 = vsel %vm5864, %v5807, 0
    %v5886 = vsel %vm5864, %v5809, 0
    %v5887 = vsel %vm5864, %v5811, 0
    %v5888 = vsel %vm5864, %v5813, 0
    %v5889 = vsel %vm5864, %v5815, 0
    %v5890 = vsel %vm5864, %v5817, 0
    %v5891 = vsel %vm5864, %v5819, 0
    %v5892 = vsel %vm5864, %v5821, 0
    %v5893 = vsel %vm5864, %v5823, 0
    %v5894 = vsel %vm5864, %v5825, 0
    %v5895 = vsel %vm5864, %v5827, 0
    %v5896 = vsel %vm5864, %v5829, 0
    %v5897 = vrot.slane %v5314, 1
    %v5898 = vrot.slane %v5315, 1
    %v5899 = vrot.slane %v5316, 1
    %v5900 = vrot.slane %v5317, 1
    %v5901 = vrot.slane %v5318, 1
    %v5902 = vrot.slane %v5319, 1
    %v5903 = vrot.slane %v5320, 1
    %v5904 = vrot.slane %v5321, 1
    %v5905 = vrot.slane %v5322, 1
    %v5906 = vrot.slane %v5323, 1
    %v5907 = vrot.slane %v5324, 1
    %v5908 = vrot.slane %v5325, 1
    %v5909 = vrot.slane %v5326, 1
    %v5910 = vrot.slane %v5327, 1
    %v5911 = vrot.slane %v5328, 1
    %v5912 = vrot.slane %v5329, 1
    %v5913 = vrot.slane %v5330, 1
    %v5914 = vrot.slane %v5331, 1
    %v5915 = vrot.slane %v5332, 1
    %v5916 = vrot.slane %v5333, 1
    %v5917 = vrot.slane %v5334, 1
    %v5918 = vrot.slane %v5335, 1
    %v5919 = vrot.slane %v5336, 1
    %v5920 = vrot.slane %v5337, 1
    %v5921 = vrot.slane %v5338, 1
    %v5922 = vrot.slane %v5339, 1
    %v5923 = vrot.slane %v5340, 1
    %v5924 = vrot.slane %v5341, 1
    %v5925 = vrot.slane %v5342, 1
    %v5926 = vrot.slane %v5343, 1
    %v5927 = vrot.slane %v5344, 1
    %v5928 = vrot.slane %v5345, 1
    %vm5929 = vcmask 1046528
    %v5931 = vsel %vm5929, %v5897, 0
    %v5933 = vsel %vm5929, %v5898, 0
    %v5935 = vsel %vm5929, %v5899, 0
    %v5937 = vsel %vm5929, %v5900, 0
    %v5939 = vsel %vm5929, %v5901, 0
    %v5941 = vsel %vm5929, %v5902, 0
    %v5943 = vsel %vm5929, %v5903, 0
    %v5945 = vsel %vm5929, %v5904, 0
    %v5947 = vsel %vm5929, %v5905, 0
    %v5949 = vsel %vm5929, %v5906, 0
    %v5951 = vsel %vm5929, %v5907, 0
    %v5953 = vsel %vm5929, %v5908, 0
    %v5955 = vsel %vm5929, %v5909, 0
    %v5957 = vsel %vm5929, %v5910, 0
    %v5959 = vsel %vm5929, %v5911, 0
    %v5961 = vsel %vm5929, %v5912, 0
    %v5963 = vsel %vm5929, %v5913, 0
    %v5965 = vsel %vm5929, %v5914, 0
    %v5967 = vsel %vm5929, %v5915, 0
    %v5969 = vsel %vm5929, %v5916, 0
    %v5971 = vsel %vm5929, %v5917, 0
    %v5973 = vsel %vm5929, %v5918, 0
    %v5975 = vsel %vm5929, %v5919, 0
    %v5977 = vsel %vm5929, %v5920, 0
    %v5979 = vsel %vm5929, %v5921, 0
    %v5981 = vsel %vm5929, %v5922, 0
    %v5983 = vsel %vm5929, %v5923, 0
    %v5985 = vsel %vm5929, %v5924, 0
    %v5987 = vsel %vm5929, %v5925, 0
    %v5989 = vsel %vm5929, %v5926, 0
    %v5991 = vsel %vm5929, %v5927, 0
    %v5993 = vsel %vm5929, %v5928, 0
    %6026 = vrot.lane.b32.xlu0 %v5734, 32
    %v6027 = vpop.permute.xlu0 %6026
    %6028 = vrot.lane.b32.xlu0 %v5735, 32
    %v6029 = vpop.permute.xlu0 %6028
    %6030 = vrot.lane.b32.xlu0 %v5736, 32
    %v6031 = vpop.permute.xlu0 %6030
    %6032 = vrot.lane.b32.xlu0 %v5737, 32
    %v6033 = vpop.permute.xlu0 %6032
    %6034 = vrot.lane.b32.xlu0 %v5738, 32
    %v6035 = vpop.permute.xlu0 %6034
    %6036 = vrot.lane.b32.xlu0 %v5739, 32
    %v6037 = vpop.permute.xlu0 %6036
    %6038 = vrot.lane.b32.xlu0 %v5740, 32
    %v6039 = vpop.permute.xlu0 %6038
    %6040 = vrot.lane.b32.xlu0 %v5741, 32
    %v6041 = vpop.permute.xlu0 %6040
    %6042 = vrot.lane.b32.xlu0 %v5742, 32
    %v6043 = vpop.permute.xlu0 %6042
    %6044 = vrot.lane.b32.xlu0 %v5743, 32
    %v6045 = vpop.permute.xlu0 %6044
    %6046 = vrot.lane.b32.xlu0 %v5744, 32
    %v6047 = vpop.permute.xlu0 %6046
    %6048 = vrot.lane.b32.xlu0 %v5745, 32
    %v6049 = vpop.permute.xlu0 %6048
    %6050 = vrot.lane.b32.xlu0 %v5746, 32
    %v6051 = vpop.permute.xlu0 %6050
    %6052 = vrot.lane.b32.xlu0 %v5747, 32
    %v6053 = vpop.permute.xlu0 %6052
    %6054 = vrot.lane.b32.xlu0 %v5748, 32
    %v6055 = vpop.permute.xlu0 %6054
    %6056 = vrot.lane.b32.xlu0 %v5749, 32
    %v6057 = vpop.permute.xlu0 %6056
    %6058 = vrot.lane.b32.xlu0 %v5750, 32
    %v6059 = vpop.permute.xlu0 %6058
    %6060 = vrot.lane.b32.xlu0 %v5751, 32
    %v6061 = vpop.permute.xlu0 %6060
    %6062 = vrot.lane.b32.xlu0 %v5752, 32
    %v6063 = vpop.permute.xlu0 %6062
    %6064 = vrot.lane.b32.xlu0 %v5753, 32
    %v6065 = vpop.permute.xlu0 %6064
    %6066 = vrot.lane.b32.xlu0 %v5754, 32
    %v6067 = vpop.permute.xlu0 %6066
    %6068 = vrot.lane.b32.xlu0 %v5755, 32
    %v6069 = vpop.permute.xlu0 %6068
    %6070 = vrot.lane.b32.xlu0 %v5756, 32
    %v6071 = vpop.permute.xlu0 %6070
    %6072 = vrot.lane.b32.xlu0 %v5757, 32
    %v6073 = vpop.permute.xlu0 %6072
    %6074 = vrot.lane.b32.xlu0 %v5758, 32
    %v6075 = vpop.permute.xlu0 %6074
    %6076 = vrot.lane.b32.xlu0 %v5759, 32
    %v6077 = vpop.permute.xlu0 %6076
    %6078 = vrot.lane.b32.xlu0 %v5760, 32
    %v6079 = vpop.permute.xlu0 %6078
    %6080 = vrot.lane.b32.xlu0 %v5761, 32
    %v6081 = vpop.permute.xlu0 %6080
    %6082 = vrot.lane.b32.xlu0 %v5762, 32
    %v6083 = vpop.permute.xlu0 %6082
    %6084 = vrot.lane.b32.xlu0 %v5763, 32
    %v6085 = vpop.permute.xlu0 %6084
    %6086 = vrot.lane.b32.xlu0 %v5764, 32
    %v6087 = vpop.permute.xlu0 %6086
    %6088 = vrot.lane.b32.xlu0 %v5765, 32
    %v6089 = vpop.permute.xlu0 %6088
    %6090 = vrot.lane.b32.xlu0 %v5314, 64
    %v6091 = vpop.permute.xlu0 %6090
    %6092 = vrot.lane.b32.xlu0 %v5315, 64
    %v6093 = vpop.permute.xlu0 %6092
    %6094 = vrot.lane.b32.xlu0 %v5316, 64
    %v6095 = vpop.permute.xlu0 %6094
    %6096 = vrot.lane.b32.xlu0 %v5317, 64
    %v6097 = vpop.permute.xlu0 %6096
    %6098 = vrot.lane.b32.xlu0 %v5318, 64
    %v6099 = vpop.permute.xlu0 %6098
    %6100 = vrot.lane.b32.xlu0 %v5319, 64
    %v6101 = vpop.permute.xlu0 %6100
    %6102 = vrot.lane.b32.xlu0 %v5320, 64
    %v6103 = vpop.permute.xlu0 %6102
    %6104 = vrot.lane.b32.xlu0 %v5321, 64
    %v6105 = vpop.permute.xlu0 %6104
    %6106 = vrot.lane.b32.xlu0 %v5322, 64
    %v6107 = vpop.permute.xlu0 %6106
    %6108 = vrot.lane.b32.xlu0 %v5323, 64
    %v6109 = vpop.permute.xlu0 %6108
    %6110 = vrot.lane.b32.xlu0 %v5324, 64
    %v6111 = vpop.permute.xlu0 %6110
    %6112 = vrot.lane.b32.xlu0 %v5325, 64
    %v6113 = vpop.permute.xlu0 %6112
    %6114 = vrot.lane.b32.xlu0 %v5326, 64
    %v6115 = vpop.permute.xlu0 %6114
    %6116 = vrot.lane.b32.xlu0 %v5327, 64
    %v6117 = vpop.permute.xlu0 %6116
    %6118 = vrot.lane.b32.xlu0 %v5328, 64
    %v6119 = vpop.permute.xlu0 %6118
    %6120 = vrot.lane.b32.xlu0 %v5329, 64
    %v6121 = vpop.permute.xlu0 %6120
    %6122 = vrot.lane.b32.xlu0 %v5330, 64
    %v6123 = vpop.permute.xlu0 %6122
    %6124 = vrot.lane.b32.xlu0 %v5331, 64
    %v6125 = vpop.permute.xlu0 %6124
    %6126 = vrot.lane.b32.xlu0 %v5332, 64
    %v6127 = vpop.permute.xlu0 %6126
    %6128 = vrot.lane.b32.xlu0 %v5333, 64
    %v6129 = vpop.permute.xlu0 %6128
    %6130 = vrot.lane.b32.xlu0 %v5334, 64
    %v6131 = vpop.permute.xlu0 %6130
    %6132 = vrot.lane.b32.xlu0 %v5335, 64
    %v6133 = vpop.permute.xlu0 %6132
    %6134 = vrot.lane.b32.xlu0 %v5336, 64
    %v6135 = vpop.permute.xlu0 %6134
    %6136 = vrot.lane.b32.xlu0 %v5337, 64
    %v6137 = vpop.permute.xlu0 %6136
    %6138 = vrot.lane.b32.xlu0 %v5338, 64
    %v6139 = vpop.permute.xlu0 %6138
    %6140 = vrot.lane.b32.xlu0 %v5339, 64
    %v6141 = vpop.permute.xlu0 %6140
    %6142 = vrot.lane.b32.xlu0 %v5340, 64
    %v6143 = vpop.permute.xlu0 %6142
    %6144 = vrot.lane.b32.xlu0 %v5341, 64
    %v6145 = vpop.permute.xlu0 %6144
    %6146 = vrot.lane.b32.xlu0 %v5342, 64
    %v6147 = vpop.permute.xlu0 %6146
    %6148 = vrot.lane.b32.xlu0 %v5343, 64
    %v6149 = vpop.permute.xlu0 %6148
    %6150 = vrot.lane.b32.xlu0 %v5344, 64
    %v6151 = vpop.permute.xlu0 %6150
    %6152 = vrot.lane.b32.xlu0 %v5345, 64
    %v6153 = vpop.permute.xlu0 %6152
    %6186 = vrot.lane.b32.xlu0 %v5865, 96
    %v6187 = vpop.permute.xlu0 %6186
    %6188 = vrot.lane.b32.xlu0 %v5866, 96
    %v6189 = vpop.permute.xlu0 %6188
    %6190 = vrot.lane.b32.xlu0 %v5867, 96
    %v6191 = vpop.permute.xlu0 %6190
    %6192 = vrot.lane.b32.xlu0 %v5868, 96
    %v6193 = vpop.permute.xlu0 %6192
    %6194 = vrot.lane.b32.xlu0 %v5869, 96
    %v6195 = vpop.permute.xlu0 %6194
    %6196 = vrot.lane.b32.xlu0 %v5870, 96
    %v6197 = vpop.permute.xlu0 %6196
    %6198 = vrot.lane.b32.xlu0 %v5871, 96
    %v6199 = vpop.permute.xlu0 %6198
    %6200 = vrot.lane.b32.xlu0 %v5872, 96
    %v6201 = vpop.permute.xlu0 %6200
    %6202 = vrot.lane.b32.xlu0 %v5873, 96
    %v6203 = vpop.permute.xlu0 %6202
    %6204 = vrot.lane.b32.xlu0 %v5874, 96
    %v6205 = vpop.permute.xlu0 %6204
    %6206 = vrot.lane.b32.xlu0 %v5875, 96
    %v6207 = vpop.permute.xlu0 %6206
    %6208 = vrot.lane.b32.xlu0 %v5876, 96
    %v6209 = vpop.permute.xlu0 %6208
    %6210 = vrot.lane.b32.xlu0 %v5877, 96
    %v6211 = vpop.permute.xlu0 %6210
    %6212 = vrot.lane.b32.xlu0 %v5878, 96
    %v6213 = vpop.permute.xlu0 %6212
    %6214 = vrot.lane.b32.xlu0 %v5879, 96
    %v6215 = vpop.permute.xlu0 %6214
    %6216 = vrot.lane.b32.xlu0 %v5880, 96
    %v6217 = vpop.permute.xlu0 %6216
    %6218 = vrot.lane.b32.xlu0 %v5881, 96
    %v6219 = vpop.permute.xlu0 %6218
    %6220 = vrot.lane.b32.xlu0 %v5882, 96
    %v6221 = vpop.permute.xlu0 %6220
    %6222 = vrot.lane.b32.xlu0 %v5883, 96
    %v6223 = vpop.permute.xlu0 %6222
    %6224 = vrot.lane.b32.xlu0 %v5884, 96
    %v6225 = vpop.permute.xlu0 %6224
    %6226 = vrot.lane.b32.xlu0 %v5885, 96
    %v6227 = vpop.permute.xlu0 %6226
    %6228 = vrot.lane.b32.xlu0 %v5886, 96
    %v6229 = vpop.permute.xlu0 %6228
    %6230 = vrot.lane.b32.xlu0 %v5887, 96
    %v6231 = vpop.permute.xlu0 %6230
    %6232 = vrot.lane.b32.xlu0 %v5888, 96
    %v6233 = vpop.permute.xlu0 %6232
    %6234 = vrot.lane.b32.xlu0 %v5889, 96
    %v6235 = vpop.permute.xlu0 %6234
    %6236 = vrot.lane.b32.xlu0 %v5890, 96
    %v6237 = vpop.permute.xlu0 %6236
    %6238 = vrot.lane.b32.xlu0 %v5891, 96
    %v6239 = vpop.permute.xlu0 %6238
    %6240 = vrot.lane.b32.xlu0 %v5892, 96
    %v6241 = vpop.permute.xlu0 %6240
    %6242 = vrot.lane.b32.xlu0 %v5893, 96
    %v6243 = vpop.permute.xlu0 %6242
    %6244 = vrot.lane.b32.xlu0 %v5894, 96
    %v6245 = vpop.permute.xlu0 %6244
    %6246 = vrot.lane.b32.xlu0 %v5895, 96
    %v6247 = vpop.permute.xlu0 %6246
    %6248 = vrot.lane.b32.xlu0 %v5896, 96
    %v6249 = vpop.permute.xlu0 %6248
    %v6251 = vsel %vm2005, %v5412, %v6027
    %v6253 = vsel %vm2005, %v5414, %v6029
    %v6255 = vsel %vm2005, %v5416, %v6031
    %v6257 = vsel %vm2005, %v5418, %v6033
    %v6259 = vsel %vm2005, %v5420, %v6035
    %v6261 = vsel %vm2005, %v5422, %v6037
    %v6263 = vsel %vm2005, %v5424, %v6039
    %v6265 = vsel %vm2005, %v5426, %v6041
    %v6267 = vsel %vm2005, %v5428, %v6043
    %v6269 = vsel %vm2005, %v5430, %v6045
    %v6271 = vsel %vm2005, %v5432, %v6047
    %v6273 = vsel %vm2005, %v5434, %v6049
    %v6275 = vsel %vm2005, %v5436, %v6051
    %v6277 = vsel %vm2005, %v5438, %v6053
    %v6279 = vsel %vm2005, %v5440, %v6055
    %v6281 = vsel %vm2005, %v5442, %v6057
    %v6283 = vsel %vm2005, %v5444, %v6059
    %v6285 = vsel %vm2005, %v5446, %v6061
    %v6287 = vsel %vm2005, %v5448, %v6063
    %v6289 = vsel %vm2005, %v5450, %v6065
    %v6291 = vsel %vm2005, %v5452, %v6067
    %v6293 = vsel %vm2005, %v5454, %v6069
    %v6295 = vsel %vm2005, %v5456, %v6071
    %v6297 = vsel %vm2005, %v5458, %v6073
    %v6299 = vsel %vm2005, %v5460, %v6075
    %v6301 = vsel %vm2005, %v5462, %v6077
    %v6303 = vsel %vm2005, %v5464, %v6079
    %v6305 = vsel %vm2005, %v5466, %v6081
    %v6307 = vsel %vm2005, %v5468, %v6083
    %v6309 = vsel %vm2005, %v5470, %v6085
    %v6311 = vsel %vm2005, %v5472, %v6087
    %v6313 = vsel %vm2005, %v5474, %v6089
    %v6315 = vsel %vm2197, %v6251, %v6091
    %v6317 = vsel %vm2197, %v6253, %v6093
    %v6319 = vsel %vm2197, %v6255, %v6095
    %v6321 = vsel %vm2197, %v6257, %v6097
    %v6323 = vsel %vm2197, %v6259, %v6099
    %v6325 = vsel %vm2197, %v6261, %v6101
    %v6327 = vsel %vm2197, %v6263, %v6103
    %v6329 = vsel %vm2197, %v6265, %v6105
    %v6331 = vsel %vm2197, %v6267, %v6107
    %v6333 = vsel %vm2197, %v6269, %v6109
    %v6335 = vsel %vm2197, %v6271, %v6111
    %v6337 = vsel %vm2197, %v6273, %v6113
    %v6339 = vsel %vm2197, %v6275, %v6115
    %v6341 = vsel %vm2197, %v6277, %v6117
    %v6343 = vsel %vm2197, %v6279, %v6119
    %v6345 = vsel %vm2197, %v6281, %v6121
    %v6347 = vsel %vm2197, %v6283, %v6123
    %v6349 = vsel %vm2197, %v6285, %v6125
    %v6351 = vsel %vm2197, %v6287, %v6127
    %v6353 = vsel %vm2197, %v6289, %v6129
    %v6355 = vsel %vm2197, %v6291, %v6131
    %v6357 = vsel %vm2197, %v6293, %v6133
    %v6359 = vsel %vm2197, %v6295, %v6135
    %v6361 = vsel %vm2197, %v6297, %v6137
    %v6363 = vsel %vm2197, %v6299, %v6139
    %v6365 = vsel %vm2197, %v6301, %v6141
    %v6367 = vsel %vm2197, %v6303, %v6143
    %v6369 = vsel %vm2197, %v6305, %v6145
    %v6371 = vsel %vm2197, %v6307, %v6147
    %v6373 = vsel %vm2197, %v6309, %v6149
    %v6375 = vsel %vm2197, %v6311, %v6151
    %v6377 = vsel %vm2197, %v6313, %v6153
    %v6379 = vsel %vm2325, %v6315, %v6187
    %v6382 = vsel %vm2325, %v6317, %v6189
    %v6385 = vsel %vm2325, %v6319, %v6191
    %v6388 = vsel %vm2325, %v6321, %v6193
    %v6391 = vsel %vm2325, %v6323, %v6195
    %v6394 = vsel %vm2325, %v6325, %v6197
    %v6397 = vsel %vm2325, %v6327, %v6199
    %v6400 = vsel %vm2325, %v6329, %v6201
    %v6403 = vsel %vm2325, %v6331, %v6203
    %v6406 = vsel %vm2325, %v6333, %v6205
    %v6409 = vsel %vm2325, %v6335, %v6207
    %v6412 = vsel %vm2325, %v6337, %v6209
    %v6415 = vsel %vm2325, %v6339, %v6211
    %v6418 = vsel %vm2325, %v6341, %v6213
    %v6421 = vsel %vm2325, %v6343, %v6215
    %v6424 = vsel %vm2325, %v6345, %v6217
    %v6427 = vsel %vm2325, %v6347, %v6219
    %v6430 = vsel %vm2325, %v6349, %v6221
    %v6433 = vsel %vm2325, %v6351, %v6223
    %v6436 = vsel %vm2325, %v6353, %v6225
    %v6439 = vsel %vm2325, %v6355, %v6227
    %v6442 = vsel %vm2325, %v6357, %v6229
    %v6445 = vsel %vm2325, %v6359, %v6231
    %v6448 = vsel %vm2325, %v6361, %v6233
    %v6451 = vsel %vm2325, %v6363, %v6235
    %v6454 = vsel %vm2325, %v6365, %v6237
    %v6457 = vsel %vm2325, %v6367, %v6239
    %v6460 = vsel %vm2325, %v6369, %v6241
    %v6463 = vsel %vm2325, %v6371, %v6243
    %v6466 = vsel %vm2325, %v6373, %v6245
    %v6469 = vsel %vm2325, %v6375, %v6247
    %v6472 = vsel %vm2325, %v6377, %v6249
    %v6474 = vld [vmem:[%s2] sm:$0xf]
    %v6475 = vld [vmem:[%s2 + $0x4] sm:$0xf]
    %v6476 = vld [vmem:[%s2 + $0x8] sm:$0xf]
    %v6477 = vld [vmem:[%s2 + $0xc] sm:$0xf]
    %v6478 = vld [vmem:[%s2 + $0x10] sm:$0xf]
    %v6479 = vld [vmem:[%s2 + $0x14] sm:$0xf]
    %v6480 = vld [vmem:[%s2 + $0x18] sm:$0xf]
    %v6481 = vld [vmem:[%s2 + $0x1c] sm:$0xf]
    %v6482 = vld [vmem:[%s2 + $0x20] sm:$0xf]
    %v6483 = vld [vmem:[%s2 + $0x24] sm:$0xf]
    %v6484 = vld [vmem:[%s2 + $0x28] sm:$0xf]
    %v6485 = vld [vmem:[%s2 + $0x2c] sm:$0xf]
    %v6486 = vld [vmem:[%s2 + $0x30] sm:$0xf]
    %v6487 = vld [vmem:[%s2 + $0x34] sm:$0xf]
    %v6488 = vld [vmem:[%s2 + $0x38] sm:$0xf]
    %v6489 = vld [vmem:[%s2 + $0x3c] sm:$0xf]
    %v6490 = vld [vmem:[%s2 + $0x40] sm:$0xf]
    %v6491 = vld [vmem:[%s2 + $0x44] sm:$0xf]
    %v6492 = vld [vmem:[%s2 + $0x48] sm:$0xf]
    %v6493 = vld [vmem:[%s2 + $0x4c] sm:$0xf]
    %v6494 = vld [vmem:[%s2 + $0x50] sm:$0xf]
    %v6495 = vld [vmem:[%s2 + $0x54] sm:$0xf]
    %v6496 = vld [vmem:[%s2 + $0x58] sm:$0xf]
    %v6497 = vld [vmem:[%s2 + $0x5c] sm:$0xf]
    %v6498 = vld [vmem:[%s2 + $0x60] sm:$0xf]
    %v6499 = vld [vmem:[%s2 + $0x64] sm:$0xf]
    %v6500 = vld [vmem:[%s2 + $0x68] sm:$0xf]
    %v6501 = vld [vmem:[%s2 + $0x6c] sm:$0xf]
    %v6502 = vld [vmem:[%s2 + $0x70] sm:$0xf]
    %v6503 = vld [vmem:[%s2 + $0x74] sm:$0xf]
    %v6504 = vld [vmem:[%s2 + $0x78] sm:$0xf]
    %v6505 = vld [vmem:[%s2 + $0x7c] sm:$0xf]
    %v6506 = vld [vmem:[%s2 + $0x80] sm:$0xf]
    %v6507 = vld [vmem:[%s2 + $0x84] sm:$0xf]
    %v6508 = vld [vmem:[%s2 + $0x88] sm:$0xf]
    %v6509 = vld [vmem:[%s2 + $0x8c] sm:$0xf]
    %v6510 = vld [vmem:[%s2 + $0x90] sm:$0xf]
    %v6511 = vld [vmem:[%s2 + $0x94] sm:$0xf]
    %v6512 = vld [vmem:[%s2 + $0x98] sm:$0xf]
    %v6513 = vld [vmem:[%s2 + $0x9c] sm:$0xf]
    %v6514 = vld [vmem:[%s2 + $0xa0] sm:$0xf]
    %v6515 = vld [vmem:[%s2 + $0xa4] sm:$0xf]
    %v6516 = vld [vmem:[%s2 + $0xa8] sm:$0xf]
    %v6517 = vld [vmem:[%s2 + $0xac] sm:$0xf]
    %v6518 = vld [vmem:[%s2 + $0xb0] sm:$0xf]
    %v6519 = vld [vmem:[%s2 + $0xb4] sm:$0xf]
    %v6520 = vld [vmem:[%s2 + $0xb8] sm:$0xf]
    %v6521 = vld [vmem:[%s2 + $0xbc] sm:$0xf]
    %v6522 = vld [vmem:[%s2 + $0xc0] sm:$0xf]
    %v6523 = vld [vmem:[%s2 + $0xc4] sm:$0xf]
    %v6524 = vld [vmem:[%s2 + $0xc8] sm:$0xf]
    %v6525 = vld [vmem:[%s2 + $0xcc] sm:$0xf]
    %v6526 = vld [vmem:[%s2 + $0xd0] sm:$0xf]
    %v6527 = vld [vmem:[%s2 + $0xd4] sm:$0xf]
    %v6528 = vld [vmem:[%s2 + $0xd8] sm:$0xf]
    %v6529 = vld [vmem:[%s2 + $0xdc] sm:$0xf]
    %v6530 = vld [vmem:[%s2 + $0xe0] sm:$0xf]
    %v6531 = vld [vmem:[%s2 + $0xe4] sm:$0xf]
    %v6532 = vld [vmem:[%s2 + $0xe8] sm:$0xf]
    %v6533 = vld [vmem:[%s2 + $0xec] sm:$0xf]
    %v6534 = vld [vmem:[%s2 + $0xf0] sm:$0xf]
    %v6535 = vld [vmem:[%s2 + $0xf4] sm:$0xf]
    %v6536 = vld [vmem:[%s2 + $0xf8] sm:$0xf]
    %v6537 = vld [vmem:[%s2 + $0xfc] sm:$0xf]
    %v6538 = vld [vmem:[%s2 + $0x100] sm:$0xf]
    %v6539 = vld [vmem:[%s2 + $0x104] sm:$0xf]
    %v6540 = vld [vmem:[%s2 + $0x108] sm:$0xf]
    %v6541 = vld [vmem:[%s2 + $0x10c] sm:$0xf]
    %v6542 = vld [vmem:[%s2 + $0x110] sm:$0xf]
    %v6543 = vld [vmem:[%s2 + $0x114] sm:$0xf]
    %v6544 = vld [vmem:[%s2 + $0x118] sm:$0xf]
    %v6545 = vld [vmem:[%s2 + $0x11c] sm:$0xf]
    %v6546 = vld [vmem:[%s2 + $0x120] sm:$0xf]
    %v6547 = vld [vmem:[%s2 + $0x124] sm:$0xf]
    %v6548 = vld [vmem:[%s2 + $0x128] sm:$0xf]
    %v6549 = vld [vmem:[%s2 + $0x12c] sm:$0xf]
    %v6550 = vld [vmem:[%s2 + $0x130] sm:$0xf]
    %v6551 = vld [vmem:[%s2 + $0x134] sm:$0xf]
    %v6552 = vld [vmem:[%s2 + $0x138] sm:$0xf]
    %v6553 = vld [vmem:[%s2 + $0x13c] sm:$0xf]
    %v6554 = vld [vmem:[%s2 + $0x140] sm:$0xf]
    %v6555 = vld [vmem:[%s2 + $0x144] sm:$0xf]
    %v6556 = vld [vmem:[%s2 + $0x148] sm:$0xf]
    %v6557 = vld [vmem:[%s2 + $0x14c] sm:$0xf]
    %v6558 = vld [vmem:[%s2 + $0x150] sm:$0xf]
    %v6559 = vld [vmem:[%s2 + $0x154] sm:$0xf]
    %v6560 = vld [vmem:[%s2 + $0x158] sm:$0xf]
    %v6561 = vld [vmem:[%s2 + $0x15c] sm:$0xf]
    %v6562 = vld [vmem:[%s2 + $0x160] sm:$0xf]
    %v6563 = vld [vmem:[%s2 + $0x164] sm:$0xf]
    %v6564 = vld [vmem:[%s2 + $0x168] sm:$0xf]
    %v6565 = vld [vmem:[%s2 + $0x16c] sm:$0xf]
    %v6586 = vunpack.c.l.b16 %v6474
    %v6587 = vunpack.c.l.b16 %v6475
    %v6588 = vunpack.c.l.b16 %v6476
    %v6589 = vunpack.c.l.b16 %v6477
    %v6590 = vunpack.c.l.b16 %v6478
    %v6591 = vunpack.c.l.b16 %v6479
    %v6592 = vunpack.c.l.b16 %v6480
    %v6593 = vunpack.c.l.b16 %v6481
    %v6594 = vunpack.c.l.b16 %v6482
    %v6595 = vunpack.c.l.b16 %v6483
    %v6596 = vunpack.c.l.b16 %v6484
    %v6597 = vunpack.c.l.b16 %v6485
    %v6598 = vunpack.c.l.b16 %v6486
    %v6599 = vunpack.c.l.b16 %v6487
    %v6600 = vunpack.c.l.b16 %v6488
    %v6601 = vunpack.c.l.b16 %v6489
    %v6602 = vunpack.c.l.b16 %v6490
    %v6603 = vunpack.c.l.b16 %v6491
    %v6604 = vunpack.c.l.b16 %v6492
    %v6605 = vunpack.c.l.b16 %v6493
    %v6606 = vpack.c.b16 %v6587, %v6586
    %v6607 = vpack.c.b16 %v6589, %v6588
    %v6608 = vpack.c.b16 %v6591, %v6590
    %v6609 = vpack.c.b16 %v6593, %v6592
    %v6610 = vpack.c.b16 %v6595, %v6594
    %v6611 = vpack.c.b16 %v6597, %v6596
    %v6612 = vpack.c.b16 %v6599, %v6598
    %v6613 = vpack.c.b16 %v6601, %v6600
    %v6614 = vpack.c.b16 %v6603, %v6602
    %v6615 = vpack.c.b16 %v6605, %v6604
    %v6626 = vsel %vm2005, %v5931, 0
    %v6628 = vsel %vm2005, %v5933, 0
    %v6630 = vsel %vm2005, %v5935, 0
    %v6632 = vsel %vm2005, %v5937, 0
    %v6634 = vsel %vm2005, %v5939, 0
    %v6636 = vsel %vm2005, %v5941, 0
    %v6638 = vsel %vm2005, %v5943, 0
    %v6640 = vsel %vm2005, %v5945, 0
    %v6642 = vsel %vm2005, %v5947, 0
    %v6644 = vsel %vm2005, %v5949, 0
    %v6646 = vsel %vm2005, %v5951, 0
    %v6648 = vsel %vm2005, %v5953, 0
    %v6650 = vsel %vm2005, %v5955, 0
    %v6652 = vsel %vm2005, %v5957, 0
    %v6654 = vsel %vm2005, %v5959, 0
    %v6656 = vsel %vm2005, %v5961, 0
    %v6658 = vsel %vm2005, %v5963, 0
    %v6660 = vsel %vm2005, %v5965, 0
    %v6662 = vsel %vm2005, %v5967, 0
    %v6664 = vsel %vm2005, %v5969, 0
    %v6666 = vsel %vm2005, %v5971, 0
    %v6668 = vsel %vm2005, %v5973, 0
    %v6670 = vsel %vm2005, %v5975, 0
    %v6672 = vsel %vm2005, %v5977, 0
    %v6674 = vsel %vm2005, %v5979, 0
    %v6676 = vsel %vm2005, %v5981, 0
    %v6678 = vsel %vm2005, %v5983, 0
    %v6680 = vsel %vm2005, %v5985, 0
    %v6682 = vsel %vm2005, %v5987, 0
    %v6684 = vsel %vm2005, %v5989, 0
    %v6686 = vsel %vm2005, %v5991, 0
    %v6688 = vsel %vm2005, %v5993, 0
    %6690 = vmatprep.subr.bf16.mxu0 0
    %6691 = vmatpush1.bf16.msra.mxu0 %v6606
    %6692 = vmatprep.subr.bf16.mxu0 0
    %6693 = vmatpush1.bf16.msra.mxu0 %v6607
    %6694 = vmatprep.subr.bf16.mxu0 0
    %6695 = vmatpush1.bf16.msra.mxu0 %v6608
    %6696 = vmatprep.subr.bf16.mxu0 0
    %6697 = vmatpush1.bf16.msra.mxu0 %v6609
    %6698 = vmatprep.subr.bf16.mxu0 0
    %6699 = vmatpush1.bf16.msra.mxu0 %v6610
    %6700 = vmatprep.subr.bf16.mxu0 0
    %6701 = vmatpush1.bf16.msra.mxu0 %v6611
    %6702 = vmatprep.subr.bf16.mxu0 0
    %6703 = vmatpush1.bf16.msra.mxu0 %v6612
    %6704 = vmatprep.subr.bf16.mxu0 0
    %6705 = vmatpush1.bf16.msra.mxu0 %v6613
    %6706 = vmatprep.subr.bf16.mxu0 0
    %6707 = vmatpush1.bf16.msra.mxu0 %v6614
    %6708 = vmatprep.subr.bf16.mxu0 0
    %6709 = vmatpush1.bf16.msra.mxu0 %v6615
    %6710 = vmatprep.subr.bf16.mxu0 0
    %6711 = vmatpush1.bf16.msra.mxu0 0
    %6712 = vmatprep.subr.bf16.mxu0 0
    %6713 = vmatpush1.bf16.msra.mxu0 0
    %6714 = vmatprep.subr.bf16.mxu0 0
    %6715 = vmatpush1.bf16.msra.mxu0 0
    %6716 = vmatprep.subr.bf16.mxu0 0
    %6717 = vmatpush1.bf16.msra.mxu0 0
    %6718 = vmatprep.subr.bf16.mxu0 0
    %6719 = vmatpush1.bf16.msra.mxu0 0
    %6720 = vmatprep.subr.bf16.mxu0 0
    %6721 = vmatpush1.bf16.msra.mxu0 0
    %6722 = vmatprep.mubr.bf16.mxu0 %v6626
    %6723 = vmatmul.mubr.bf16.gmra.mrb[0].mxu0 %v6379
    %v6724 = vpop.f32.mrb[0].mxu0
    %v6725 = vadd.f32 0.0, %v6724
    %v6726 = vpop.f32.mrb[0].mxu0
    %v6727 = vpop.f32.mrb[0].mxu0
    %v6728 = vadd.f32 0.0, %v6727
    %v6729 = vpop.f32.mrb[0].mxu0
    %6730 = vmatprep.mubr.bf16.mxu0 %v6628
    %6731 = vmatmul.mubr.bf16.gmra.mrb[0].mxu0 %v6382
    %v6732 = vpop.f32.mrb[0].mxu0
    %v6733 = vadd.f32 0.0, %v6732
    %v6734 = vpop.f32.mrb[0].mxu0
    %v6735 = vpop.f32.mrb[0].mxu0
    %v6736 = vadd.f32 0.0, %v6735
    %v6737 = vpop.f32.mrb[0].mxu0
    %6738 = vmatprep.mubr.bf16.mxu0 %v6630
    %6739 = vmatmul.mubr.bf16.gmra.mrb[0].mxu0 %v6385
    %v6740 = vpop.f32.mrb[0].mxu0
    %v6741 = vadd.f32 0.0, %v6740
    %v6742 = vpop.f32.mrb[0].mxu0
    %v6743 = vpop.f32.mrb[0].mxu0
    %v6744 = vadd.f32 0.0, %v6743
    %v6745 = vpop.f32.mrb[0].mxu0
    %6746 = vmatprep.mubr.bf16.mxu0 %v6632
    %6747 = vmatmul.mubr.bf16.gmra.mrb[0].mxu0 %v6388
    %v6748 = vpop.f32.mrb[0].mxu0
    %v6749 = vadd.f32 0.0, %v6748
    %v6750 = vpop.f32.mrb[0].mxu0
    %v6751 = vpop.f32.mrb[0].mxu0
    %v6752 = vadd.f32 0.0, %v6751
    %v6753 = vpop.f32.mrb[0].mxu0
    %6754 = vmatprep.mubr.bf16.mxu0 %v6634
    %6755 = vmatmul.mubr.bf16.gmra.mrb[0].mxu0 %v6391
    %v6756 = vpop.f32.mrb[0].mxu0
    %v6757 = vadd.f32 0.0, %v6756
    %v6758 = vpop.f32.mrb[0].mxu0
    %v6759 = vpop.f32.mrb[0].mxu0
    %v6760 = vadd.f32 0.0, %v6759
    %v6761 = vpop.f32.mrb[0].mxu0
    %6762 = vmatprep.mubr.bf16.mxu0 %v6636
    %6763 = vmatmul.mubr.bf16.gmra.mrb[0].mxu0 %v6394
    %v6764 = vpop.f32.mrb[0].mxu0
    %v6765 = vadd.f32 0.0, %v6764
    %v6766 = vpop.f32.mrb[0].mxu0
    %v6767 = vpop.f32.mrb[0].mxu0
    %v6768 = vadd.f32 0.0, %v6767
    %v6769 = vpop.f32.mrb[0].mxu0
    %6770 = vmatprep.mubr.bf16.mxu0 %v6638
    %6771 = vmatmul.mubr.bf16.gmra.mrb[0].mxu0 %v6397
    %v6772 = vpop.f32.mrb[0].mxu0
    %v6773 = vadd.f32 0.0, %v6772
    %v6774 = vpop.f32.mrb[0].mxu0
    %v6775 = vpop.f32.mrb[0].mxu0
    %v6776 = vadd.f32 0.0, %v6775
    %v6777 = vpop.f32.mrb[0].mxu0
    %6778 = vmatprep.mubr.bf16.mxu0 %v6640
    %6779 = vmatmul.mubr.bf16.gmra.mrb[0].mxu0 %v6400
    %v6780 = vpop.f32.mrb[0].mxu0
    %v6781 = vadd.f32 0.0, %v6780
    %v6782 = vpop.f32.mrb[0].mxu0
    %v6783 = vpop.f32.mrb[0].mxu0
    %v6784 = vadd.f32 0.0, %v6783
    %v6785 = vpop.f32.mrb[0].mxu0
    %6786 = vmatprep.mubr.bf16.mxu0 %v6642
    %6787 = vmatmul.mubr.bf16.gmra.mrb[0].mxu0 %v6403
    %v6788 = vpop.f32.mrb[0].mxu0
    %v6789 = vadd.f32 0.0, %v6788
    %v6790 = vpop.f32.mrb[0].mxu0
    %v6791 = vpop.f32.mrb[0].mxu0
    %v6792 = vadd.f32 0.0, %v6791
    %v6793 = vpop.f32.mrb[0].mxu0
    %6794 = vmatprep.mubr.bf16.mxu0 %v6644
    %6795 = vmatmul.mubr.bf16.gmra.mrb[0].mxu0 %v6406
    %v6796 = vpop.f32.mrb[0].mxu0
    %v6797 = vadd.f32 0.0, %v6796
    %v6798 = vpop.f32.mrb[0].mxu0
    %v6799 = vpop.f32.mrb[0].mxu0
    %v6800 = vadd.f32 0.0, %v6799
    %v6801 = vpop.f32.mrb[0].mxu0
    %6802 = vmatprep.mubr.bf16.mxu0 %v6646
    %6803 = vmatmul.mubr.bf16.gmra.mrb[0].mxu0 %v6409
    %v6804 = vpop.f32.mrb[0].mxu0
    %v6805 = vadd.f32 0.0, %v6804
    %v6806 = vpop.f32.mrb[0].mxu0
    %v6807 = vpop.f32.mrb[0].mxu0
    %v6808 = vadd.f32 0.0, %v6807
    %v6809 = vpop.f32.mrb[0].mxu0
    %6810 = vmatprep.mubr.bf16.mxu0 %v6648
    %6811 = vmatmul.mubr.bf16.gmra.mrb[0].mxu0 %v6412
    %v6812 = vpop.f32.mrb[0].mxu0
    %v6813 = vadd.f32 0.0, %v6812
    %v6814 = vpop.f32.mrb[0].mxu0
    %v6815 = vpop.f32.mrb[0].mxu0
    %v6816 = vadd.f32 0.0, %v6815
    %v6817 = vpop.f32.mrb[0].mxu0
    %6818 = vmatprep.mubr.bf16.mxu0 %v6650
    %6819 = vmatmul.mubr.bf16.gmra.mrb[0].mxu0 %v6415
    %v6820 = vpop.f32.mrb[0].mxu0
    %v6821 = vadd.f32 0.0, %v6820
    %v6822 = vpop.f32.mrb[0].mxu0
    %v6823 = vpop.f32.mrb[0].mxu0
    %v6824 = vadd.f32 0.0, %v6823
    %v6825 = vpop.f32.mrb[0].mxu0
    %6826 = vmatprep.mubr.bf16.mxu0 %v6652
    %6827 = vmatmul.mubr.bf16.gmra.mrb[0].mxu0 %v6418
    %v6828 = vpop.f32.mrb[0].mxu0
    %v6829 = vadd.f32 0.0, %v6828
    %v6830 = vpop.f32.mrb[0].mxu0
    %v6831 = vpop.f32.mrb[0].mxu0
    %v6832 = vadd.f32 0.0, %v6831
    %v6833 = vpop.f32.mrb[0].mxu0
    %6834 = vmatprep.mubr.bf16.mxu0 %v6654
    %6835 = vmatmul.mubr.bf16.gmra.mrb[0].mxu0 %v6421
    %v6836 = vpop.f32.mrb[0].mxu0
    %v6837 = vadd.f32 0.0, %v6836
    %v6838 = vpop.f32.mrb[0].mxu0
    %v6839 = vpop.f32.mrb[0].mxu0
    %v6840 = vadd.f32 0.0, %v6839
    %v6841 = vpop.f32.mrb[0].mxu0
    %6842 = vmatprep.mubr.bf16.mxu0 %v6656
    %6843 = vmatmul.mubr.bf16.gmra.mrb[0].mxu0 %v6424
    %v6844 = vpop.f32.mrb[0].mxu0
    %v6845 = vadd.f32 0.0, %v6844
    %v6846 = vpop.f32.mrb[0].mxu0
    %v6847 = vpop.f32.mrb[0].mxu0
    %v6848 = vadd.f32 0.0, %v6847
    %v6849 = vpop.f32.mrb[0].mxu0
    %6850 = vmatprep.mubr.bf16.mxu0 %v6658
    %6851 = vmatmul.mubr.bf16.gmra.mrb[0].mxu0 %v6427
    %v6852 = vpop.f32.mrb[0].mxu0
    %v6853 = vadd.f32 0.0, %v6852
    %v6854 = vpop.f32.mrb[0].mxu0
    %v6855 = vpop.f32.mrb[0].mxu0
    %v6856 = vadd.f32 0.0, %v6855
    %v6857 = vpop.f32.mrb[0].mxu0
    %6858 = vmatprep.mubr.bf16.mxu0 %v6660
    %6859 = vmatmul.mubr.bf16.gmra.mrb[0].mxu0 %v6430
    %v6860 = vpop.f32.mrb[0].mxu0
    %v6861 = vadd.f32 0.0, %v6860
    %v6862 = vpop.f32.mrb[0].mxu0
    %v6863 = vpop.f32.mrb[0].mxu0
    %v6864 = vadd.f32 0.0, %v6863
    %v6865 = vpop.f32.mrb[0].mxu0
    %6866 = vmatprep.mubr.bf16.mxu0 %v6662
    %6867 = vmatmul.mubr.bf16.gmra.mrb[0].mxu0 %v6433
    %v6868 = vpop.f32.mrb[0].mxu0
    %v6869 = vadd.f32 0.0, %v6868
    %v6870 = vpop.f32.mrb[0].mxu0
    %v6871 = vpop.f32.mrb[0].mxu0
    %v6872 = vadd.f32 0.0, %v6871
    %v6873 = vpop.f32.mrb[0].mxu0
    %6874 = vmatprep.mubr.bf16.mxu0 %v6664
    %6875 = vmatmul.mubr.bf16.gmra.mrb[0].mxu0 %v6436
    %v6876 = vpop.f32.mrb[0].mxu0
    %v6877 = vadd.f32 0.0, %v6876
    %v6878 = vpop.f32.mrb[0].mxu0
    %v6879 = vpop.f32.mrb[0].mxu0
    %v6880 = vadd.f32 0.0, %v6879
    %v6881 = vpop.f32.mrb[0].mxu0
    %6882 = vmatprep.mubr.bf16.mxu0 %v6666
    %6883 = vmatmul.mubr.bf16.gmra.mrb[0].mxu0 %v6439
    %v6884 = vpop.f32.mrb[0].mxu0
    %v6885 = vadd.f32 0.0, %v6884
    %v6886 = vpop.f32.mrb[0].mxu0
    %v6887 = vpop.f32.mrb[0].mxu0
    %v6888 = vadd.f32 0.0, %v6887
    %v6889 = vpop.f32.mrb[0].mxu0
    %6890 = vmatprep.mubr.bf16.mxu0 %v6668
    %6891 = vmatmul.mubr.bf16.gmra.mrb[0].mxu0 %v6442
    %v6892 = vpop.f32.mrb[0].mxu0
    %v6893 = vadd.f32 0.0, %v6892
    %v6894 = vpop.f32.mrb[0].mxu0
    %v6895 = vpop.f32.mrb[0].mxu0
    %v6896 = vadd.f32 0.0, %v6895
    %v6897 = vpop.f32.mrb[0].mxu0
    %6898 = vmatprep.mubr.bf16.mxu0 %v6670
    %6899 = vmatmul.mubr.bf16.gmra.mrb[0].mxu0 %v6445
    %v6900 = vpop.f32.mrb[0].mxu0
    %v6901 = vadd.f32 0.0, %v6900
    %v6902 = vpop.f32.mrb[0].mxu0
    %v6903 = vpop.f32.mrb[0].mxu0
    %v6904 = vadd.f32 0.0, %v6903
    %v6905 = vpop.f32.mrb[0].mxu0
    %6906 = vmatprep.mubr.bf16.mxu0 %v6672
    %6907 = vmatmul.mubr.bf16.gmra.mrb[0].mxu0 %v6448
    %v6908 = vpop.f32.mrb[0].mxu0
    %v6909 = vadd.f32 0.0, %v6908
    %v6910 = vpop.f32.mrb[0].mxu0
    %v6911 = vpop.f32.mrb[0].mxu0
    %v6912 = vadd.f32 0.0, %v6911
    %v6913 = vpop.f32.mrb[0].mxu0
    %6914 = vmatprep.mubr.bf16.mxu0 %v6674
    %6915 = vmatmul.mubr.bf16.gmra.mrb[0].mxu0 %v6451
    %v6916 = vpop.f32.mrb[0].mxu0
    %v6917 = vadd.f32 0.0, %v6916
    %v6918 = vpop.f32.mrb[0].mxu0
    %v6919 = vpop.f32.mrb[0].mxu0
    %v6920 = vadd.f32 0.0, %v6919
    %v6921 = vpop.f32.mrb[0].mxu0
    %6922 = vmatprep.mubr.bf16.mxu0 %v6676
    %6923 = vmatmul.mubr.bf16.gmra.mrb[0].mxu0 %v6454
    %v6924 = vpop.f32.mrb[0].mxu0
    %v6925 = vadd.f32 0.0, %v6924
    %v6926 = vpop.f32.mrb[0].mxu0
    %v6927 = vpop.f32.mrb[0].mxu0
    %v6928 = vadd.f32 0.0, %v6927
    %v6929 = vpop.f32.mrb[0].mxu0
    %6930 = vmatprep.mubr.bf16.mxu0 %v6678
    %6931 = vmatmul.mubr.bf16.gmra.mrb[0].mxu0 %v6457
    %v6932 = vpop.f32.mrb[0].mxu0
    %v6933 = vadd.f32 0.0, %v6932
    %v6934 = vpop.f32.mrb[0].mxu0
    %v6935 = vpop.f32.mrb[0].mxu0
    %v6936 = vadd.f32 0.0, %v6935
    %v6937 = vpop.f32.mrb[0].mxu0
    %6938 = vmatprep.mubr.bf16.mxu0 %v6680
    %6939 = vmatmul.mubr.bf16.gmra.mrb[0].mxu0 %v6460
    %v6940 = vpop.f32.mrb[0].mxu0
    %v6941 = vadd.f32 0.0, %v6940
    %v6942 = vpop.f32.mrb[0].mxu0
    %v6943 = vpop.f32.mrb[0].mxu0
    %v6944 = vadd.f32 0.0, %v6943
    %v6945 = vpop.f32.mrb[0].mxu0
    %6946 = vmatprep.mubr.bf16.mxu0 %v6682
    %6947 = vmatmul.mubr.bf16.gmra.mrb[0].mxu0 %v6463
    %v6948 = vpop.f32.mrb[0].mxu0
    %v6949 = vadd.f32 0.0, %v6948
    %v6950 = vpop.f32.mrb[0].mxu0
    %v6951 = vpop.f32.mrb[0].mxu0
    %v6952 = vadd.f32 0.0, %v6951
    %v6953 = vpop.f32.mrb[0].mxu0
    %6954 = vmatprep.mubr.bf16.mxu0 %v6684
    %6955 = vmatmul.mubr.bf16.gmra.mrb[0].mxu0 %v6466
    %v6956 = vpop.f32.mrb[0].mxu0
    %v6957 = vadd.f32 0.0, %v6956
    %v6958 = vpop.f32.mrb[0].mxu0
    %v6959 = vpop.f32.mrb[0].mxu0
    %v6960 = vadd.f32 0.0, %v6959
    %v6961 = vpop.f32.mrb[0].mxu0
    %6962 = vmatprep.mubr.bf16.mxu0 %v6686
    %6963 = vmatmul.mubr.bf16.gmra.mrb[0].mxu0 %v6469
    %v6964 = vpop.f32.mrb[0].mxu0
    %v6965 = vadd.f32 0.0, %v6964
    %v6966 = vpop.f32.mrb[0].mxu0
    %v6967 = vpop.f32.mrb[0].mxu0
    %v6968 = vadd.f32 0.0, %v6967
    %v6969 = vpop.f32.mrb[0].mxu0
    %6970 = vmatprep.mubr.bf16.mxu0 %v6688
    %6971 = vmatmul.mubr.bf16.gmra.mrb[0].mxu0 %v6472
    %v6972 = vpop.f32.mrb[0].mxu0
    %v6973 = vadd.f32 0.0, %v6972
    %v6974 = vpop.f32.mrb[0].mxu0
    %v6975 = vpop.f32.mrb[0].mxu0
    %v6976 = vadd.f32 0.0, %v6975
    %v6977 = vpop.f32.mrb[0].mxu0
    %6978 = vdwg.mxu0
    %v6979 = vmax.f32 %v6725, 0.0
    %v6980 = vmax.f32 %v6728, 0.0
    %v6981 = vmax.f32 %v6733, 0.0
    %v6982 = vmax.f32 %v6736, 0.0
    %v6983 = vmax.f32 %v6741, 0.0
    %v6984 = vmax.f32 %v6744, 0.0
    %v6985 = vmax.f32 %v6749, 0.0
    %v6986 = vmax.f32 %v6752, 0.0
    %v6987 = vmax.f32 %v6757, 0.0
    %v6988 = vmax.f32 %v6760, 0.0
    %v6989 = vmax.f32 %v6765, 0.0
    %v6990 = vmax.f32 %v6768, 0.0
    %v6991 = vmax.f32 %v6773, 0.0
    %v6992 = vmax.f32 %v6776, 0.0
    %v6993 = vmax.f32 %v6781, 0.0
    %v6994 = vmax.f32 %v6784, 0.0
    %v6995 = vmax.f32 %v6789, 0.0
    %v6996 = vmax.f32 %v6792, 0.0
    %v6997 = vmax.f32 %v6797, 0.0
    %v6998 = vmax.f32 %v6800, 0.0
    %v6999 = vmax.f32 %v6805, 0.0
    %v7000 = vmax.f32 %v6808, 0.0
    %v7001 = vmax.f32 %v6813, 0.0
    %v7002 = vmax.f32 %v6816, 0.0
    %v7003 = vmax.f32 %v6821, 0.0
    %v7004 = vmax.f32 %v6824, 0.0
    %v7005 = vmax.f32 %v6829, 0.0
    %v7006 = vmax.f32 %v6832, 0.0
    %v7007 = vmax.f32 %v6837, 0.0
    %v7008 = vmax.f32 %v6840, 0.0
    %v7009 = vmax.f32 %v6845, 0.0
    %v7010 = vmax.f32 %v6848, 0.0
    %v7011 = vmax.f32 %v6853, 0.0
    %v7012 = vmax.f32 %v6856, 0.0
    %v7013 = vmax.f32 %v6861, 0.0
    %v7014 = vmax.f32 %v6864, 0.0
    %v7015 = vmax.f32 %v6869, 0.0
    %v7016 = vmax.f32 %v6872, 0.0
    %v7017 = vmax.f32 %v6877, 0.0
    %v7018 = vmax.f32 %v6880, 0.0
    %v7019 = vmax.f32 %v6885, 0.0
    %v7020 = vmax.f32 %v6888, 0.0
    %v7021 = vmax.f32 %v6893, 0.0
    %v7022 = vmax.f32 %v6896, 0.0
    %v7023 = vmax.f32 %v6901, 0.0
    %v7024 = vmax.f32 %v6904, 0.0
    %v7025 = vmax.f32 %v6909, 0.0
    %v7026 = vmax.f32 %v6912, 0.0
    %v7027 = vmax.f32 %v6917, 0.0
    %v7028 = vmax.f32 %v6920, 0.0
    %v7029 = vmax.f32 %v6925, 0.0
    %v7030 = vmax.f32 %v6928, 0.0
    %v7031 = vmax.f32 %v6933, 0.0
    %v7032 = vmax.f32 %v6936, 0.0
    %v7033 = vmax.f32 %v6941, 0.0
    %v7034 = vmax.f32 %v6944, 0.0
    %v7035 = vmax.f32 %v6949, 0.0
    %v7036 = vmax.f32 %v6952, 0.0
    %v7037 = vmax.f32 %v6957, 0.0
    %v7038 = vmax.f32 %v6960, 0.0
    %v7039 = vmax.f32 %v6965, 0.0
    %v7040 = vmax.f32 %v6968, 0.0
    %v7041 = vmax.f32 %v6973, 0.0
    %v7042 = vmax.f32 %v6976, 0.0
    %v7043 = vpack.c.bf16 %v6980, %v6979
    %v7044 = vpack.c.bf16 %v6982, %v6981
    %v7045 = vpack.c.bf16 %v6984, %v6983
    %v7046 = vpack.c.bf16 %v6986, %v6985
    %v7047 = vpack.c.bf16 %v6988, %v6987
    %v7048 = vpack.c.bf16 %v6990, %v6989
    %v7049 = vpack.c.bf16 %v6992, %v6991
    %v7050 = vpack.c.bf16 %v6994, %v6993
    %v7051 = vpack.c.bf16 %v6996, %v6995
    %v7052 = vpack.c.bf16 %v6998, %v6997
    %v7053 = vpack.c.bf16 %v7000, %v6999
    %v7054 = vpack.c.bf16 %v7002, %v7001
    %v7055 = vpack.c.bf16 %v7004, %v7003
    %v7056 = vpack.c.bf16 %v7006, %v7005
    %v7057 = vpack.c.bf16 %v7008, %v7007
    %v7058 = vpack.c.bf16 %v7010, %v7009
    %v7059 = vpack.c.bf16 %v7012, %v7011
    %v7060 = vpack.c.bf16 %v7014, %v7013
    %v7061 = vpack.c.bf16 %v7016, %v7015
    %v7062 = vpack.c.bf16 %v7018, %v7017
    %v7063 = vpack.c.bf16 %v7020, %v7019
    %v7064 = vpack.c.bf16 %v7022, %v7021
    %v7065 = vpack.c.bf16 %v7024, %v7023
    %v7066 = vpack.c.bf16 %v7026, %v7025
    %v7067 = vpack.c.bf16 %v7028, %v7027
    %v7068 = vpack.c.bf16 %v7030, %v7029
    %v7069 = vpack.c.bf16 %v7032, %v7031
    %v7070 = vpack.c.bf16 %v7034, %v7033
    %v7071 = vpack.c.bf16 %v7036, %v7035
    %v7072 = vpack.c.bf16 %v7038, %v7037
    %v7073 = vpack.c.bf16 %v7040, %v7039
    %v7074 = vpack.c.bf16 %v7042, %v7041
    %7103 = vrot.lane.b32.xlu0 %v7043, 64
    %v7104 = vpop.permute.xlu0 %7103
    %7105 = vrot.lane.b32.xlu0 %v7044, 64
    %v7106 = vpop.permute.xlu0 %7105
    %7107 = vrot.lane.b32.xlu0 %v7045, 64
    %v7108 = vpop.permute.xlu0 %7107
    %7109 = vrot.lane.b32.xlu0 %v7046, 64
    %v7110 = vpop.permute.xlu0 %7109
    %7111 = vrot.lane.b32.xlu0 %v7047, 64
    %v7112 = vpop.permute.xlu0 %7111
    %7113 = vrot.lane.b32.xlu0 %v7048, 64
    %v7114 = vpop.permute.xlu0 %7113
    %7115 = vrot.lane.b32.xlu0 %v7049, 64
    %v7116 = vpop.permute.xlu0 %7115
    %7117 = vrot.lane.b32.xlu0 %v7050, 64
    %v7118 = vpop.permute.xlu0 %7117
    %7119 = vrot.lane.b32.xlu0 %v7051, 64
    %v7120 = vpop.permute.xlu0 %7119
    %7121 = vrot.lane.b32.xlu0 %v7052, 64
    %v7122 = vpop.permute.xlu0 %7121
    %7123 = vrot.lane.b32.xlu0 %v7053, 64
    %v7124 = vpop.permute.xlu0 %7123
    %7125 = vrot.lane.b32.xlu0 %v7054, 64
    %v7126 = vpop.permute.xlu0 %7125
    %7127 = vrot.lane.b32.xlu0 %v7055, 64
    %v7128 = vpop.permute.xlu0 %7127
    %7129 = vrot.lane.b32.xlu0 %v7056, 64
    %v7130 = vpop.permute.xlu0 %7129
    %7131 = vrot.lane.b32.xlu0 %v7059, 64
    %v7132 = vpop.permute.xlu0 %7131
    %7133 = vrot.lane.b32.xlu0 %v7060, 64
    %v7134 = vpop.permute.xlu0 %7133
    %7135 = vrot.lane.b32.xlu0 %v7061, 64
    %v7136 = vpop.permute.xlu0 %7135
    %7137 = vrot.lane.b32.xlu0 %v7062, 64
    %v7138 = vpop.permute.xlu0 %7137
    %7139 = vrot.lane.b32.xlu0 %v7063, 64
    %v7140 = vpop.permute.xlu0 %7139
    %7141 = vrot.lane.b32.xlu0 %v7064, 64
    %v7142 = vpop.permute.xlu0 %7141
    %7143 = vrot.lane.b32.xlu0 %v7065, 64
    %v7144 = vpop.permute.xlu0 %7143
    %7145 = vrot.lane.b32.xlu0 %v7066, 64
    %v7146 = vpop.permute.xlu0 %7145
    %7147 = vrot.lane.b32.xlu0 %v7067, 64
    %v7148 = vpop.permute.xlu0 %7147
    %7149 = vrot.lane.b32.xlu0 %v7068, 64
    %v7150 = vpop.permute.xlu0 %7149
    %7151 = vrot.lane.b32.xlu0 %v7069, 64
    %v7152 = vpop.permute.xlu0 %7151
    %7153 = vrot.lane.b32.xlu0 %v7070, 64
    %v7154 = vpop.permute.xlu0 %7153
    %7155 = vrot.lane.b32.xlu0 %v7071, 64
    %v7156 = vpop.permute.xlu0 %7155
    %7157 = vrot.lane.b32.xlu0 %v7072, 64
    %v7158 = vpop.permute.xlu0 %7157
    %7161 = vrot.lane.b32.xlu0 %v7057, 64
    %v7162 = vpop.permute.xlu0 %7161
    %7163 = vrot.lane.b32.xlu0 %v7073, 64
    %v7164 = vpop.permute.xlu0 %7163
    %7167 = vrot.lane.b32.xlu0 %v7058, 64
    %v7168 = vpop.permute.xlu0 %7167
    %7169 = vrot.lane.b32.xlu0 %v7074, 64
    %v7170 = vpop.permute.xlu0 %7169
    %7171 = vrot.lane.b32.xlu0 %v7104, 64
    %v7172 = vpop.permute.xlu0 %7171
    %7173 = vrot.lane.b32.xlu0 %v7106, 64
    %v7174 = vpop.permute.xlu0 %7173
    %7175 = vrot.lane.b32.xlu0 %v7108, 64
    %v7176 = vpop.permute.xlu0 %7175
    %7177 = vrot.lane.b32.xlu0 %v7110, 64
    %v7178 = vpop.permute.xlu0 %7177
    %7179 = vrot.lane.b32.xlu0 %v7112, 64
    %v7180 = vpop.permute.xlu0 %7179
    %7181 = vrot.lane.b32.xlu0 %v7114, 64
    %v7182 = vpop.permute.xlu0 %7181
    %7183 = vrot.lane.b32.xlu0 %v7116, 64
    %v7184 = vpop.permute.xlu0 %7183
    %7185 = vrot.lane.b32.xlu0 %v7118, 64
    %v7186 = vpop.permute.xlu0 %7185
    %7187 = vrot.lane.b32.xlu0 %v7120, 64
    %v7188 = vpop.permute.xlu0 %7187
    %7189 = vrot.lane.b32.xlu0 %v7122, 64
    %v7190 = vpop.permute.xlu0 %7189
    %7191 = vrot.lane.b32.xlu0 %v7124, 64
    %v7192 = vpop.permute.xlu0 %7191
    %7193 = vrot.lane.b32.xlu0 %v7126, 64
    %v7194 = vpop.permute.xlu0 %7193
    %7195 = vrot.lane.b32.xlu0 %v7128, 64
    %v7196 = vpop.permute.xlu0 %7195
    %7197 = vrot.lane.b32.xlu0 %v7130, 64
    %v7198 = vpop.permute.xlu0 %7197
    %7199 = vrot.lane.b32.xlu0 %v7132, 64
    %v7200 = vpop.permute.xlu0 %7199
    %7201 = vrot.lane.b32.xlu0 %v7134, 64
    %v7202 = vpop.permute.xlu0 %7201
    %7203 = vrot.lane.b32.xlu0 %v7136, 64
    %v7204 = vpop.permute.xlu0 %7203
    %7205 = vrot.lane.b32.xlu0 %v7138, 64
    %v7206 = vpop.permute.xlu0 %7205
    %7207 = vrot.lane.b32.xlu0 %v7140, 64
    %v7208 = vpop.permute.xlu0 %7207
    %7209 = vrot.lane.b32.xlu0 %v7142, 64
    %v7210 = vpop.permute.xlu0 %7209
    %7211 = vrot.lane.b32.xlu0 %v7144, 64
    %v7212 = vpop.permute.xlu0 %7211
    %7213 = vrot.lane.b32.xlu0 %v7146, 64
    %v7214 = vpop.permute.xlu0 %7213
    %7215 = vrot.lane.b32.xlu0 %v7148, 64
    %v7216 = vpop.permute.xlu0 %7215
    %7217 = vrot.lane.b32.xlu0 %v7150, 64
    %v7218 = vpop.permute.xlu0 %7217
    %7219 = vrot.lane.b32.xlu0 %v7152, 64
    %v7220 = vpop.permute.xlu0 %7219
    %7221 = vrot.lane.b32.xlu0 %v7154, 64
    %v7222 = vpop.permute.xlu0 %7221
    %7223 = vrot.lane.b32.xlu0 %v7156, 64
    %v7224 = vpop.permute.xlu0 %7223
    %7225 = vrot.lane.b32.xlu0 %v7158, 64
    %v7226 = vpop.permute.xlu0 %7225
    %v7228 = vsel %vm2197, 0, %v7104
    %v7232 = vsel %vm2197, %v7043, %v7106
    %v7236 = vsel %vm2197, %v7044, %v7108
    %v7240 = vsel %vm2197, %v7045, %v7110
    %v7244 = vsel %vm2197, %v7046, %v7112
    %v7248 = vsel %vm2197, %v7047, %v7114
    %v7252 = vsel %vm2197, %v7048, %v7116
    %v7256 = vsel %vm2197, %v7049, %v7118
    %v7260 = vsel %vm2197, %v7050, %v7120
    %v7264 = vsel %vm2197, %v7051, %v7122
    %v7268 = vsel %vm2197, %v7052, %v7124
    %v7272 = vsel %vm2197, %v7053, %v7126
    %v7276 = vsel %vm2197, %v7054, %v7128
    %v7280 = vsel %vm2197, %v7055, %v7130
    %v7284 = vsel %vm2197, %v7056, %v7162
    %v7288 = vsel %vm2197, %v7057, %v7168
    %v7291 = vsel %vm2197, 0, %v7132
    %v7295 = vsel %vm2197, %v7059, %v7134
    %v7299 = vsel %vm2197, %v7060, %v7136
    %v7303 = vsel %vm2197, %v7061, %v7138
    %v7307 = vsel %vm2197, %v7062, %v7140
    %v7311 = vsel %vm2197, %v7063, %v7142
    %v7315 = vsel %vm2197, %v7064, %v7144
    %v7319 = vsel %vm2197, %v7065, %v7146
    %v7323 = vsel %vm2197, %v7066, %v7148
    %v7327 = vsel %vm2197, %v7067, %v7150
    %v7331 = vsel %vm2197, %v7068, %v7152
    %v7335 = vsel %vm2197, %v7069, %v7154
    %v7339 = vsel %vm2197, %v7070, %v7156
    %v7343 = vsel %vm2197, %v7071, %v7158
    %v7347 = vsel %vm2197, %v7072, %v7164
    %v7351 = vsel %vm2197, %v7073, %v7170
    %v7353 = vsel %vm2197, %v7044, %v1818
    %v7355 = vsel %vm2197, %v7045, %v1818
    %v7358 = vsel %vm2197, %v7046, %v7172
    %v7361 = vsel %vm2197, %v7047, %v7174
    %v7364 = vsel %vm2197, %v7048, %v7176
    %v7367 = vsel %vm2197, %v7049, %v7178
    %v7370 = vsel %vm2197, %v7050, %v7180
    %v7373 = vsel %vm2197, %v7051, %v7182
    %v7376 = vsel %vm2197, %v7052, %v7184
    %v7379 = vsel %vm2197, %v7053, %v7186
    %v7382 = vsel %vm2197, %v7054, %v7188
    %v7385 = vsel %vm2197, %v7055, %v7190
    %v7388 = vsel %vm2197, %v7056, %v7192
    %v7391 = vsel %vm2197, %v7057, %v7194
    %v7395 = vsel %vm2197, %v7058, %v7196
    %v7398 = vsel %vm2197, 0, %v7198
    %v7400 = vsel %vm2197, %v7060, %v1818
    %v7402 = vsel %vm2197, %v7061, %v1818
    %v7405 = vsel %vm2197, %v7062, %v7200
    %v7408 = vsel %vm2197, %v7063, %v7202
    %v7411 = vsel %vm2197, %v7064, %v7204
    %v7414 = vsel %vm2197, %v7065, %v7206
    %v7417 = vsel %vm2197, %v7066, %v7208
    %v7420 = vsel %vm2197, %v7067, %v7210
    %v7423 = vsel %vm2197, %v7068, %v7212
    %v7426 = vsel %vm2197, %v7069, %v7214
    %v7429 = vsel %vm2197, %v7070, %v7216
    %v7432 = vsel %vm2197, %v7071, %v7218
    %v7435 = vsel %vm2197, %v7072, %v7220
    %v7438 = vsel %vm2197, %v7073, %v7222
    %v7442 = vsel %vm2197, %v7074, %v7224
    %v7445 = vsel %vm2197, 0, %v7226
    %v7447 = vsel %vm2197, 0, %v7043
    %v7449 = vsel %vm2197, %v7104, %v7044
    %v7451 = vsel %vm2197, %v7106, %v7045
    %v7453 = vsel %vm2197, %v7108, %v7046
    %v7455 = vsel %vm2197, %v7110, %v7047
    %v7457 = vsel %vm2197, %v7112, %v7048
    %v7459 = vsel %vm2197, %v7114, %v7049
    %v7461 = vsel %vm2197, %v7116, %v7050
    %v7463 = vsel %vm2197, %v7118, %v7051
    %v7465 = vsel %vm2197, %v7120, %v7052
    %v7467 = vsel %vm2197, %v7122, %v7053
    %v7469 = vsel %vm2197, %v7124, %v7054
    %v7471 = vsel %vm2197, %v7126, %v7055
    %v7473 = vsel %vm2197, %v7128, %v7056
    %v7475 = vsel %vm2197, %v7130, %v7057
    %v7477 = vsel %vm2197, %v7162, %v7058
    %v7479 = vsel %vm2197, 0, %v7059
    %v7481 = vsel %vm2197, %v7132, %v7060
    %v7483 = vsel %vm2197, %v7134, %v7061
    %v7485 = vsel %vm2197, %v7136, %v7062
    %v7487 = vsel %vm2197, %v7138, %v7063
    %v7489 = vsel %vm2197, %v7140, %v7064
    %v7491 = vsel %vm2197, %v7142, %v7065
    %v7493 = vsel %vm2197, %v7144, %v7066
    %v7495 = vsel %vm2197, %v7146, %v7067
    %v7497 = vsel %vm2197, %v7148, %v7068
    %v7499 = vsel %vm2197, %v7150, %v7069
    %v7501 = vsel %vm2197, %v7152, %v7070
    %v7503 = vsel %vm2197, %v7154, %v7071
    %v7505 = vsel %vm2197, %v7156, %v7072
    %v7507 = vsel %vm2197, %v7158, %v7073
    %v7509 = vsel %vm2197, %v7164, %v7074
    %v7511 = vsel %vm2197, %v7168, 0
    %v7513 = vsel %vm2197, %v1818, 0
    %v7515 = vsel %vm2197, %v7170, 0
    %v7581 = vunpack.c.l.b16 %v6494
    %v7582 = vunpack.c.l.b16 %v6495
    %v7583 = vunpack.c.l.b16 %v6496
    %v7584 = vunpack.c.l.b16 %v6497
    %v7585 = vunpack.c.l.b16 %v6498
    %v7586 = vunpack.c.l.b16 %v6499
    %v7587 = vunpack.c.l.b16 %v6500
    %v7588 = vunpack.c.l.b16 %v6501
    %v7589 = vunpack.c.l.b16 %v6502
    %v7590 = vunpack.c.l.b16 %v6503
    %v7591 = vunpack.c.l.b16 %v6504
    %v7592 = vunpack.c.l.b16 %v6505
    %v7593 = vunpack.c.l.b16 %v6506
    %v7594 = vunpack.c.l.b16 %v6507
    %v7595 = vunpack.c.l.b16 %v6508
    %v7596 = vunpack.c.l.b16 %v6509
    %v7597 = vunpack.c.l.b16 %v6510
    %v7598 = vunpack.c.l.b16 %v6511
    %v7599 = vunpack.c.l.b16 %v6512
    %v7600 = vunpack.c.l.b16 %v6513
    %v7601 = vunpack.c.l.b16 %v6514
    %v7602 = vunpack.c.l.b16 %v6515
    %v7603 = vunpack.c.l.b16 %v6516
    %v7604 = vunpack.c.l.b16 %v6517
    %v7605 = vunpack.c.l.b16 %v6518
    %v7606 = vunpack.c.l.b16 %v6519
    %v7607 = vunpack.c.l.b16 %v6520
    %v7608 = vunpack.c.l.b16 %v6521
    %v7609 = vunpack.c.l.b16 %v6522
    %v7610 = vunpack.c.l.b16 %v6523
    %v7611 = vunpack.c.l.b16 %v6524
    %v7612 = vunpack.c.l.b16 %v6525
    %v7613 = vunpack.c.l.b16 %v6526
    %v7614 = vunpack.c.l.b16 %v6527
    %v7615 = vunpack.c.l.b16 %v6528
    %v7616 = vunpack.c.l.b16 %v6529
    %v7617 = vunpack.c.l.b16 %v6530
    %v7618 = vunpack.c.l.b16 %v6531
    %v7619 = vunpack.c.l.b16 %v6532
    %v7620 = vunpack.c.l.b16 %v6533
    %v7621 = vunpack.c.l.b16 %v6534
    %v7622 = vunpack.c.l.b16 %v6535
    %v7623 = vunpack.c.l.b16 %v6536
    %v7624 = vunpack.c.l.b16 %v6537
    %v7625 = vunpack.c.l.b16 %v6538
    %v7626 = vunpack.c.l.b16 %v6539
    %v7627 = vunpack.c.l.b16 %v6540
    %v7628 = vunpack.c.l.b16 %v6541
    %v7629 = vunpack.c.l.b16 %v6542
    %v7630 = vunpack.c.l.b16 %v6543
    %v7631 = vunpack.c.l.b16 %v6544
    %v7632 = vunpack.c.l.b16 %v6545
    %v7633 = vunpack.c.l.b16 %v6546
    %v7634 = vunpack.c.l.b16 %v6547
    %v7635 = vunpack.c.l.b16 %v6548
    %v7636 = vunpack.c.l.b16 %v6549
    %v7637 = vunpack.c.l.b16 %v6550
    %v7638 = vunpack.c.l.b16 %v6551
    %v7639 = vunpack.c.l.b16 %v6552
    %v7640 = vunpack.c.l.b16 %v6553
    %v7641 = vunpack.c.l.b16 %v6554
    %v7642 = vunpack.c.l.b16 %v6555
    %v7643 = vunpack.c.l.b16 %v6556
    %v7644 = vunpack.c.l.b16 %v6557
    %v7645 = vpack.c.b16 %v7582, %v7581
    %v7646 = vpack.c.b16 %v7584, %v7583
    %v7647 = vpack.c.b16 %v7586, %v7585
    %v7648 = vpack.c.b16 %v7588, %v7587
    %v7649 = vpack.c.b16 %v7590, %v7589
    %v7650 = vpack.c.b16 %v7592, %v7591
    %v7651 = vpack.c.b16 %v7594, %v7593
    %v7652 = vpack.c.b16 %v7596, %v7595
    %v7653 = vpack.c.b16 %v7598, %v7597
    %v7654 = vpack.c.b16 %v7600, %v7599
    %v7655 = vpack.c.b16 %v7602, %v7601
    %v7656 = vpack.c.b16 %v7604, %v7603
    %v7657 = vpack.c.b16 %v7606, %v7605
    %v7658 = vpack.c.b16 %v7608, %v7607
    %v7659 = vpack.c.b16 %v7610, %v7609
    %v7660 = vpack.c.b16 %v7612, %v7611
    %v7661 = vpack.c.b16 %v7614, %v7613
    %v7662 = vpack.c.b16 %v7616, %v7615
    %v7663 = vpack.c.b16 %v7618, %v7617
    %v7664 = vpack.c.b16 %v7620, %v7619
    %v7665 = vpack.c.b16 %v7622, %v7621
    %v7666 = vpack.c.b16 %v7624, %v7623
    %v7667 = vpack.c.b16 %v7626, %v7625
    %v7668 = vpack.c.b16 %v7628, %v7627
    %v7669 = vpack.c.b16 %v7630, %v7629
    %v7670 = vpack.c.b16 %v7632, %v7631
    %v7671 = vpack.c.b16 %v7634, %v7633
    %v7672 = vpack.c.b16 %v7636, %v7635
    %v7673 = vpack.c.b16 %v7638, %v7637
    %v7674 = vpack.c.b16 %v7640, %v7639
    %v7675 = vpack.c.b16 %v7642, %v7641
    %v7676 = vpack.c.b16 %v7644, %v7643
    %7709 = vmatprep.subr.bf16.mxu0 0
    %7710 = vmatpush1.bf16.msra.mxu0 %v7645
    %7711 = vmatprep.subr.bf16.mxu0 0
    %7712 = vmatpush1.bf16.msra.mxu0 %v7646
    %7713 = vmatprep.subr.bf16.mxu0 0
    %7714 = vmatpush1.bf16.msra.mxu0 %v7647
    %7715 = vmatprep.subr.bf16.mxu0 0
    %7716 = vmatpush1.bf16.msra.mxu0 %v7648
    %7717 = vmatprep.subr.bf16.mxu0 0
    %7718 = vmatpush1.bf16.msra.mxu0 %v7649
    %7719 = vmatprep.subr.bf16.mxu0 0
    %7720 = vmatpush1.bf16.msra.mxu0 %v7650
    %7721 = vmatprep.subr.bf16.mxu0 0
    %7722 = vmatpush1.bf16.msra.mxu0 %v7651
    %7723 = vmatprep.subr.bf16.mxu0 0
    %7724 = vmatpush1.bf16.msra.mxu0 %v7652
    %7725 = vmatprep.subr.bf16.mxu0 0
    %7726 = vmatpush1.bf16.msra.mxu0 %v7653
    %7727 = vmatprep.subr.bf16.mxu0 0
    %7728 = vmatpush1.bf16.msra.mxu0 %v7654
    %7729 = vmatprep.subr.bf16.mxu0 0
    %7730 = vmatpush1.bf16.msra.mxu0 %v7655
    %7731 = vmatprep.subr.bf16.mxu0 0
    %7732 = vmatpush1.bf16.msra.mxu0 %v7656
    %7733 = vmatprep.subr.bf16.mxu0 0
    %7734 = vmatpush1.bf16.msra.mxu0 %v7657
    %7735 = vmatprep.subr.bf16.mxu0 0
    %7736 = vmatpush1.bf16.msra.mxu0 %v7658
    %7737 = vmatprep.subr.bf16.mxu0 0
    %7738 = vmatpush1.bf16.msra.mxu0 %v7659
    %7739 = vmatprep.subr.bf16.mxu0 0
    %7740 = vmatpush1.bf16.msra.mxu0 %v7660
    %7741 = vmatprep.mubr.bf16.mxu0 %v7353
    %7742 = vmatmul.mubr.bf16.gmra.mrb[0].mxu0 %v7228
    %v7743 = vpop.f32.mrb[0].mxu0
    %v7744 = vadd.f32 0.0, %v7743
    %v7745 = vpop.f32.mrb[0].mxu0
    %v7746 = vpop.f32.mrb[0].mxu0
    %v7747 = vadd.f32 0.0, %v7746
    %v7748 = vpop.f32.mrb[0].mxu0
    %7749 = vmatprep.mubr.bf16.mxu0 %v7355
    %7750 = vmatmul.mubr.bf16.gmra.mrb[0].mxu0 %v7232
    %v7751 = vpop.f32.mrb[0].mxu0
    %v7752 = vadd.f32 0.0, %v7751
    %v7753 = vpop.f32.mrb[0].mxu0
    %v7754 = vpop.f32.mrb[0].mxu0
    %v7755 = vadd.f32 0.0, %v7754
    %v7756 = vpop.f32.mrb[0].mxu0
    %7757 = vmatprep.mubr.bf16.mxu0 %v7358
    %7758 = vmatmul.mubr.bf16.gmra.mrb[0].mxu0 %v7236
    %v7759 = vpop.f32.mrb[0].mxu0
    %v7760 = vadd.f32 0.0, %v7759
    %v7761 = vpop.f32.mrb[0].mxu0
    %v7762 = vpop.f32.mrb[0].mxu0
    %v7763 = vadd.f32 0.0, %v7762
    %v7764 = vpop.f32.mrb[0].mxu0
    %7765 = vmatprep.mubr.bf16.mxu0 %v7361
    %7766 = vmatmul.mubr.bf16.gmra.mrb[0].mxu0 %v7240
    %v7767 = vpop.f32.mrb[0].mxu0
    %v7768 = vadd.f32 0.0, %v7767
    %v7769 = vpop.f32.mrb[0].mxu0
    %v7770 = vpop.f32.mrb[0].mxu0
    %v7771 = vadd.f32 0.0, %v7770
    %v7772 = vpop.f32.mrb[0].mxu0
    %7773 = vmatprep.mubr.bf16.mxu0 %v7364
    %7774 = vmatmul.mubr.bf16.gmra.mrb[0].mxu0 %v7244
    %v7775 = vpop.f32.mrb[0].mxu0
    %v7776 = vadd.f32 0.0, %v7775
    %v7777 = vpop.f32.mrb[0].mxu0
    %v7778 = vpop.f32.mrb[0].mxu0
    %v7779 = vadd.f32 0.0, %v7778
    %v7780 = vpop.f32.mrb[0].mxu0
    %7781 = vmatprep.mubr.bf16.mxu0 %v7367
    %7782 = vmatmul.mubr.bf16.gmra.mrb[0].mxu0 %v7248
    %v7783 = vpop.f32.mrb[0].mxu0
    %v7784 = vadd.f32 0.0, %v7783
    %v7785 = vpop.f32.mrb[0].mxu0
    %v7786 = vpop.f32.mrb[0].mxu0
    %v7787 = vadd.f32 0.0, %v7786
    %v7788 = vpop.f32.mrb[0].mxu0
    %7789 = vmatprep.mubr.bf16.mxu0 %v7370
    %7790 = vmatmul.mubr.bf16.gmra.mrb[0].mxu0 %v7252
    %v7791 = vpop.f32.mrb[0].mxu0
    %v7792 = vadd.f32 0.0, %v7791
    %v7793 = vpop.f32.mrb[0].mxu0
    %v7794 = vpop.f32.mrb[0].mxu0
    %v7795 = vadd.f32 0.0, %v7794
    %v7796 = vpop.f32.mrb[0].mxu0
    %7797 = vmatprep.mubr.bf16.mxu0 %v7373
    %7798 = vmatmul.mubr.bf16.gmra.mrb[0].mxu0 %v7256
    %v7799 = vpop.f32.mrb[0].mxu0
    %v7800 = vadd.f32 0.0, %v7799
    %v7801 = vpop.f32.mrb[0].mxu0
    %v7802 = vpop.f32.mrb[0].mxu0
    %v7803 = vadd.f32 0.0, %v7802
    %v7804 = vpop.f32.mrb[0].mxu0
    %7805 = vmatprep.mubr.bf16.mxu0 %v7376
    %7806 = vmatmul.mubr.bf16.gmra.mrb[0].mxu0 %v7260
    %v7807 = vpop.f32.mrb[0].mxu0
    %v7808 = vadd.f32 0.0, %v7807
    %v7809 = vpop.f32.mrb[0].mxu0
    %v7810 = vpop.f32.mrb[0].mxu0
    %v7811 = vadd.f32 0.0, %v7810
    %v7812 = vpop.f32.mrb[0].mxu0
    %7813 = vmatprep.mubr.bf16.mxu0 %v7379
    %7814 = vmatmul.mubr.bf16.gmra.mrb[0].mxu0 %v7264
    %v7815 = vpop.f32.mrb[0].mxu0
    %v7816 = vadd.f32 0.0, %v7815
    %v7817 = vpop.f32.mrb[0].mxu0
    %v7818 = vpop.f32.mrb[0].mxu0
    %v7819 = vadd.f32 0.0, %v7818
    %v7820 = vpop.f32.mrb[0].mxu0
    %7821 = vmatprep.mubr.bf16.mxu0 %v7382
    %7822 = vmatmul.mubr.bf16.gmra.mrb[0].mxu0 %v7268
    %v7823 = vpop.f32.mrb[0].mxu0
    %v7824 = vadd.f32 0.0, %v7823
    %v7825 = vpop.f32.mrb[0].mxu0
    %v7826 = vpop.f32.mrb[0].mxu0
    %v7827 = vadd.f32 0.0, %v7826
    %v7828 = vpop.f32.mrb[0].mxu0
    %7829 = vmatprep.mubr.bf16.mxu0 %v7385
    %7830 = vmatmul.mubr.bf16.gmra.mrb[0].mxu0 %v7272
    %v7831 = vpop.f32.mrb[0].mxu0
    %v7832 = vadd.f32 0.0, %v7831
    %v7833 = vpop.f32.mrb[0].mxu0
    %v7834 = vpop.f32.mrb[0].mxu0
    %v7835 = vadd.f32 0.0, %v7834
    %v7836 = vpop.f32.mrb[0].mxu0
    %7837 = vmatprep.mubr.bf16.mxu0 %v7388
    %7838 = vmatmul.mubr.bf16.gmra.mrb[0].mxu0 %v7276
    %v7839 = vpop.f32.mrb[0].mxu0
    %v7840 = vadd.f32 0.0, %v7839
    %v7841 = vpop.f32.mrb[0].mxu0
    %v7842 = vpop.f32.mrb[0].mxu0
    %v7843 = vadd.f32 0.0, %v7842
    %v7844 = vpop.f32.mrb[0].mxu0
    %7845 = vmatprep.mubr.bf16.mxu0 %v7391
    %7846 = vmatmul.mubr.bf16.gmra.mrb[0].mxu0 %v7280
    %v7847 = vpop.f32.mrb[0].mxu0
    %v7848 = vadd.f32 0.0, %v7847
    %v7849 = vpop.f32.mrb[0].mxu0
    %v7850 = vpop.f32.mrb[0].mxu0
    %v7851 = vadd.f32 0.0, %v7850
    %v7852 = vpop.f32.mrb[0].mxu0
    %7853 = vmatprep.mubr.bf16.mxu0 %v7395
    %7854 = vmatmul.mubr.bf16.gmra.mrb[0].mxu0 %v7284
    %v7855 = vpop.f32.mrb[0].mxu0
    %v7856 = vadd.f32 0.0, %v7855
    %v7857 = vpop.f32.mrb[0].mxu0
    %v7858 = vpop.f32.mrb[0].mxu0
    %v7859 = vadd.f32 0.0, %v7858
    %v7860 = vpop.f32.mrb[0].mxu0
    %7861 = vmatprep.mubr.bf16.mxu0 %v7398
    %7862 = vmatmul.mubr.bf16.gmra.mrb[0].mxu0 %v7288
    %v7863 = vpop.f32.mrb[0].mxu0
    %v7864 = vadd.f32 0.0, %v7863
    %v7865 = vpop.f32.mrb[0].mxu0
    %v7866 = vpop.f32.mrb[0].mxu0
    %v7867 = vadd.f32 0.0, %v7866
    %v7868 = vpop.f32.mrb[0].mxu0
    %7869 = vmatprep.mubr.bf16.mxu0 %v7400
    %7870 = vmatmul.mubr.bf16.gmra.mrb[0].mxu0 %v7291
    %v7871 = vpop.f32.mrb[0].mxu0
    %v7872 = vadd.f32 0.0, %v7871
    %v7873 = vpop.f32.mrb[0].mxu0
    %v7874 = vpop.f32.mrb[0].mxu0
    %v7875 = vadd.f32 0.0, %v7874
    %v7876 = vpop.f32.mrb[0].mxu0
    %7877 = vmatprep.mubr.bf16.mxu0 %v7402
    %7878 = vmatmul.mubr.bf16.gmra.mrb[0].mxu0 %v7295
    %v7879 = vpop.f32.mrb[0].mxu0
    %v7880 = vadd.f32 0.0, %v7879
    %v7881 = vpop.f32.mrb[0].mxu0
    %v7882 = vpop.f32.mrb[0].mxu0
    %v7883 = vadd.f32 0.0, %v7882
    %v7884 = vpop.f32.mrb[0].mxu0
    %7885 = vmatprep.mubr.bf16.mxu0 %v7405
    %7886 = vmatmul.mubr.bf16.gmra.mrb[0].mxu0 %v7299
    %v7887 = vpop.f32.mrb[0].mxu0
    %v7888 = vadd.f32 0.0, %v7887
    %v7889 = vpop.f32.mrb[0].mxu0
    %v7890 = vpop.f32.mrb[0].mxu0
    %v7891 = vadd.f32 0.0, %v7890
    %v7892 = vpop.f32.mrb[0].mxu0
    %7893 = vmatprep.mubr.bf16.mxu0 %v7408
    %7894 = vmatmul.mubr.bf16.gmra.mrb[0].mxu0 %v7303
    %v7895 = vpop.f32.mrb[0].mxu0
    %v7896 = vadd.f32 0.0, %v7895
    %v7897 = vpop.f32.mrb[0].mxu0
    %v7898 = vpop.f32.mrb[0].mxu0
    %v7899 = vadd.f32 0.0, %v7898
    %v7900 = vpop.f32.mrb[0].mxu0
    %7901 = vmatprep.mubr.bf16.mxu0 %v7411
    %7902 = vmatmul.mubr.bf16.gmra.mrb[0].mxu0 %v7307
    %v7903 = vpop.f32.mrb[0].mxu0
    %v7904 = vadd.f32 0.0, %v7903
    %v7905 = vpop.f32.mrb[0].mxu0
    %v7906 = vpop.f32.mrb[0].mxu0
    %v7907 = vadd.f32 0.0, %v7906
    %v7908 = vpop.f32.mrb[0].mxu0
    %7909 = vmatprep.mubr.bf16.mxu0 %v7414
    %7910 = vmatmul.mubr.bf16.gmra.mrb[0].mxu0 %v7311
    %v7911 = vpop.f32.mrb[0].mxu0
    %v7912 = vadd.f32 0.0, %v7911
    %v7913 = vpop.f32.mrb[0].mxu0
    %v7914 = vpop.f32.mrb[0].mxu0
    %v7915 = vadd.f32 0.0, %v7914
    %v7916 = vpop.f32.mrb[0].mxu0
    %7917 = vmatprep.mubr.bf16.mxu0 %v7417
    %7918 = vmatmul.mubr.bf16.gmra.mrb[0].mxu0 %v7315
    %v7919 = vpop.f32.mrb[0].mxu0
    %v7920 = vadd.f32 0.0, %v7919
    %v7921 = vpop.f32.mrb[0].mxu0
    %v7922 = vpop.f32.mrb[0].mxu0
    %v7923 = vadd.f32 0.0, %v7922
    %v7924 = vpop.f32.mrb[0].mxu0
    %7925 = vmatprep.mubr.bf16.mxu0 %v7420
    %7926 = vmatmul.mubr.bf16.gmra.mrb[0].mxu0 %v7319
    %v7927 = vpop.f32.mrb[0].mxu0
    %v7928 = vadd.f32 0.0, %v7927
    %v7929 = vpop.f32.mrb[0].mxu0
    %v7930 = vpop.f32.mrb[0].mxu0
    %v7931 = vadd.f32 0.0, %v7930
    %v7932 = vpop.f32.mrb[0].mxu0
    %7933 = vmatprep.mubr.bf16.mxu0 %v7423
    %7934 = vmatmul.mubr.bf16.gmra.mrb[0].mxu0 %v7323
    %v7935 = vpop.f32.mrb[0].mxu0
    %v7936 = vadd.f32 0.0, %v7935
    %v7937 = vpop.f32.mrb[0].mxu0
    %v7938 = vpop.f32.mrb[0].mxu0
    %v7939 = vadd.f32 0.0, %v7938
    %v7940 = vpop.f32.mrb[0].mxu0
    %7941 = vmatprep.mubr.bf16.mxu0 %v7426
    %7942 = vmatmul.mubr.bf16.gmra.mrb[0].mxu0 %v7327
    %v7943 = vpop.f32.mrb[0].mxu0
    %v7944 = vadd.f32 0.0, %v7943
    %v7945 = vpop.f32.mrb[0].mxu0
    %v7946 = vpop.f32.mrb[0].mxu0
    %v7947 = vadd.f32 0.0, %v7946
    %v7948 = vpop.f32.mrb[0].mxu0
    %7949 = vmatprep.mubr.bf16.mxu0 %v7429
    %7950 = vmatmul.mubr.bf16.gmra.mrb[0].mxu0 %v7331
    %v7951 = vpop.f32.mrb[0].mxu0
    %v7952 = vadd.f32 0.0, %v7951
    %v7953 = vpop.f32.mrb[0].mxu0
    %v7954 = vpop.f32.mrb[0].mxu0
    %v7955 = vadd.f32 0.0, %v7954
    %v7956 = vpop.f32.mrb[0].mxu0
    %7957 = vmatprep.mubr.bf16.mxu0 %v7432
    %7958 = vmatmul.mubr.bf16.gmra.mrb[0].mxu0 %v7335
    %v7959 = vpop.f32.mrb[0].mxu0
    %v7960 = vadd.f32 0.0, %v7959
    %v7961 = vpop.f32.mrb[0].mxu0
    %v7962 = vpop.f32.mrb[0].mxu0
    %v7963 = vadd.f32 0.0, %v7962
    %v7964 = vpop.f32.mrb[0].mxu0
    %7965 = vmatprep.mubr.bf16.mxu0 %v7435
    %7966 = vmatmul.mubr.bf16.gmra.mrb[0].mxu0 %v7339
    %v7967 = vpop.f32.mrb[0].mxu0
    %v7968 = vadd.f32 0.0, %v7967
    %v7969 = vpop.f32.mrb[0].mxu0
    %v7970 = vpop.f32.mrb[0].mxu0
    %v7971 = vadd.f32 0.0, %v7970
    %v7972 = vpop.f32.mrb[0].mxu0
    %7973 = vmatprep.mubr.bf16.mxu0 %v7438
    %7974 = vmatmul.mubr.bf16.gmra.mrb[0].mxu0 %v7343
    %v7975 = vpop.f32.mrb[0].mxu0
    %v7976 = vadd.f32 0.0, %v7975
    %v7977 = vpop.f32.mrb[0].mxu0
    %v7978 = vpop.f32.mrb[0].mxu0
    %v7979 = vadd.f32 0.0, %v7978
    %v7980 = vpop.f32.mrb[0].mxu0
    %7981 = vmatprep.mubr.bf16.mxu0 %v7442
    %7982 = vmatmul.mubr.bf16.gmra.mrb[0].mxu0 %v7347
    %v7983 = vpop.f32.mrb[0].mxu0
    %v7984 = vadd.f32 0.0, %v7983
    %v7985 = vpop.f32.mrb[0].mxu0
    %v7986 = vpop.f32.mrb[0].mxu0
    %v7987 = vadd.f32 0.0, %v7986
    %v7988 = vpop.f32.mrb[0].mxu0
    %7989 = vmatprep.mubr.bf16.mxu0 %v7445
    %7990 = vmatmul.mubr.bf16.gmra.mrb[0].mxu0 %v7351
    %v7991 = vpop.f32.mrb[0].mxu0
    %v7992 = vadd.f32 0.0, %v7991
    %v7993 = vpop.f32.mrb[0].mxu0
    %v7994 = vpop.f32.mrb[0].mxu0
    %v7995 = vadd.f32 0.0, %v7994
    %v7996 = vpop.f32.mrb[0].mxu0
    %7997 = vdwg.mxu0
    %7998 = vmatprep.subr.bf16.mxu0 0
    %7999 = vmatpush1.bf16.msra.mxu0 %v7661
    %8000 = vmatprep.subr.bf16.mxu0 0
    %8001 = vmatpush1.bf16.msra.mxu0 %v7662
    %8002 = vmatprep.subr.bf16.mxu0 0
    %8003 = vmatpush1.bf16.msra.mxu0 %v7663
    %8004 = vmatprep.subr.bf16.mxu0 0
    %8005 = vmatpush1.bf16.msra.mxu0 %v7664
    %8006 = vmatprep.subr.bf16.mxu0 0
    %8007 = vmatpush1.bf16.msra.mxu0 %v7665
    %8008 = vmatprep.subr.bf16.mxu0 0
    %8009 = vmatpush1.bf16.msra.mxu0 %v7666
    %8010 = vmatprep.subr.bf16.mxu0 0
    %8011 = vmatpush1.bf16.msra.mxu0 %v7667
    %8012 = vmatprep.subr.bf16.mxu0 0
    %8013 = vmatpush1.bf16.msra.mxu0 %v7668
    %8014 = vmatprep.subr.bf16.mxu0 0
    %8015 = vmatpush1.bf16.msra.mxu0 %v7669
    %8016 = vmatprep.subr.bf16.mxu0 0
    %8017 = vmatpush1.bf16.msra.mxu0 %v7670
    %8018 = vmatprep.subr.bf16.mxu0 0
    %8019 = vmatpush1.bf16.msra.mxu0 %v7671
    %8020 = vmatprep.subr.bf16.mxu0 0
    %8021 = vmatpush1.bf16.msra.mxu0 %v7672
    %8022 = vmatprep.subr.bf16.mxu0 0
    %8023 = vmatpush1.bf16.msra.mxu0 %v7673
    %8024 = vmatprep.subr.bf16.mxu0 0
    %8025 = vmatpush1.bf16.msra.mxu0 %v7674
    %8026 = vmatprep.subr.bf16.mxu0 0
    %8027 = vmatpush1.bf16.msra.mxu0 %v7675
    %8028 = vmatprep.subr.bf16.mxu0 0
    %8029 = vmatpush1.bf16.msra.mxu0 %v7676
    %8030 = vmatprep.mubr.bf16.mxu0 %v7451
    %8031 = vmatmul.mubr.bf16.gmra.mrb[0].mxu0 %v7447
    %v8032 = vpop.f32.mrb[0].mxu0
    %v8033 = vadd.f32 %v7744, %v8032
    %v8034 = vpop.f32.mrb[0].mxu0
    %v8035 = vpop.f32.mrb[0].mxu0
    %v8036 = vadd.f32 %v7747, %v8035
    %v8037 = vpop.f32.mrb[0].mxu0
    %8038 = vmatprep.mubr.bf16.mxu0 %v7453
    %8039 = vmatmul.mubr.bf16.gmra.mrb[0].mxu0 %v7449
    %v8040 = vpop.f32.mrb[0].mxu0
    %v8041 = vadd.f32 %v7752, %v8040
    %v8042 = vpop.f32.mrb[0].mxu0
    %v8043 = vpop.f32.mrb[0].mxu0
    %v8044 = vadd.f32 %v7755, %v8043
    %v8045 = vpop.f32.mrb[0].mxu0
    %8046 = vmatprep.mubr.bf16.mxu0 %v7455
    %8047 = vmatmul.mubr.bf16.gmra.mrb[0].mxu0 %v7451
    %v8048 = vpop.f32.mrb[0].mxu0
    %v8049 = vadd.f32 %v7760, %v8048
    %v8050 = vpop.f32.mrb[0].mxu0
    %v8051 = vpop.f32.mrb[0].mxu0
    %v8052 = vadd.f32 %v7763, %v8051
    %v8053 = vpop.f32.mrb[0].mxu0
    %8054 = vmatprep.mubr.bf16.mxu0 %v7457
    %8055 = vmatmul.mubr.bf16.gmra.mrb[0].mxu0 %v7453
    %v8056 = vpop.f32.mrb[0].mxu0
    %v8057 = vadd.f32 %v7768, %v8056
    %v8058 = vpop.f32.mrb[0].mxu0
    %v8059 = vpop.f32.mrb[0].mxu0
    %v8060 = vadd.f32 %v7771, %v8059
    %v8061 = vpop.f32.mrb[0].mxu0
    %8062 = vmatprep.mubr.bf16.mxu0 %v7459
    %8063 = vmatmul.mubr.bf16.gmra.mrb[0].mxu0 %v7455
    %v8064 = vpop.f32.mrb[0].mxu0
    %v8065 = vadd.f32 %v7776, %v8064
    %v8066 = vpop.f32.mrb[0].mxu0
    %v8067 = vpop.f32.mrb[0].mxu0
    %v8068 = vadd.f32 %v7779, %v8067
    %v8069 = vpop.f32.mrb[0].mxu0
    %8070 = vmatprep.mubr.bf16.mxu0 %v7461
    %8071 = vmatmul.mubr.bf16.gmra.mrb[0].mxu0 %v7457
    %v8072 = vpop.f32.mrb[0].mxu0
    %v8073 = vadd.f32 %v7784, %v8072
    %v8074 = vpop.f32.mrb[0].mxu0
    %v8075 = vpop.f32.mrb[0].mxu0
    %v8076 = vadd.f32 %v7787, %v8075
    %v8077 = vpop.f32.mrb[0].mxu0
    %8078 = vmatprep.mubr.bf16.mxu0 %v7463
    %8079 = vmatmul.mubr.bf16.gmra.mrb[0].mxu0 %v7459
    %v8080 = vpop.f32.mrb[0].mxu0
    %v8081 = vadd.f32 %v7792, %v8080
    %v8082 = vpop.f32.mrb[0].mxu0
    %v8083 = vpop.f32.mrb[0].mxu0
    %v8084 = vadd.f32 %v7795, %v8083
    %v8085 = vpop.f32.mrb[0].mxu0
    %8086 = vmatprep.mubr.bf16.mxu0 %v7465
    %8087 = vmatmul.mubr.bf16.gmra.mrb[0].mxu0 %v7461
    %v8088 = vpop.f32.mrb[0].mxu0
    %v8089 = vadd.f32 %v7800, %v8088
    %v8090 = vpop.f32.mrb[0].mxu0
    %v8091 = vpop.f32.mrb[0].mxu0
    %v8092 = vadd.f32 %v7803, %v8091
    %v8093 = vpop.f32.mrb[0].mxu0
    %8094 = vmatprep.mubr.bf16.mxu0 %v7467
    %8095 = vmatmul.mubr.bf16.gmra.mrb[0].mxu0 %v7463
    %v8096 = vpop.f32.mrb[0].mxu0
    %v8097 = vadd.f32 %v7808, %v8096
    %v8098 = vpop.f32.mrb[0].mxu0
    %v8099 = vpop.f32.mrb[0].mxu0
    %v8100 = vadd.f32 %v7811, %v8099
    %v8101 = vpop.f32.mrb[0].mxu0
    %8102 = vmatprep.mubr.bf16.mxu0 %v7469
    %8103 = vmatmul.mubr.bf16.gmra.mrb[0].mxu0 %v7465
    %v8104 = vpop.f32.mrb[0].mxu0
    %v8105 = vadd.f32 %v7816, %v8104
    %v8106 = vpop.f32.mrb[0].mxu0
    %v8107 = vpop.f32.mrb[0].mxu0
    %v8108 = vadd.f32 %v7819, %v8107
    %v8109 = vpop.f32.mrb[0].mxu0
    %8110 = vmatprep.mubr.bf16.mxu0 %v7471
    %8111 = vmatmul.mubr.bf16.gmra.mrb[0].mxu0 %v7467
    %v8112 = vpop.f32.mrb[0].mxu0
    %v8113 = vadd.f32 %v7824, %v8112
    %v8114 = vpop.f32.mrb[0].mxu0
    %v8115 = vpop.f32.mrb[0].mxu0
    %v8116 = vadd.f32 %v7827, %v8115
    %v8117 = vpop.f32.mrb[0].mxu0
    %8118 = vmatprep.mubr.bf16.mxu0 %v7473
    %8119 = vmatmul.mubr.bf16.gmra.mrb[0].mxu0 %v7469
    %v8120 = vpop.f32.mrb[0].mxu0
    %v8121 = vadd.f32 %v7832, %v8120
    %v8122 = vpop.f32.mrb[0].mxu0
    %v8123 = vpop.f32.mrb[0].mxu0
    %v8124 = vadd.f32 %v7835, %v8123
    %v8125 = vpop.f32.mrb[0].mxu0
    %8126 = vmatprep.mubr.bf16.mxu0 %v7475
    %8127 = vmatmul.mubr.bf16.gmra.mrb[0].mxu0 %v7471
    %v8128 = vpop.f32.mrb[0].mxu0
    %v8129 = vadd.f32 %v7840, %v8128
    %v8130 = vpop.f32.mrb[0].mxu0
    %v8131 = vpop.f32.mrb[0].mxu0
    %v8132 = vadd.f32 %v7843, %v8131
    %v8133 = vpop.f32.mrb[0].mxu0
    %8134 = vmatprep.mubr.bf16.mxu0 %v7477
    %8135 = vmatmul.mubr.bf16.gmra.mrb[0].mxu0 %v7473
    %v8136 = vpop.f32.mrb[0].mxu0
    %v8137 = vadd.f32 %v7848, %v8136
    %v8138 = vpop.f32.mrb[0].mxu0
    %v8139 = vpop.f32.mrb[0].mxu0
    %v8140 = vadd.f32 %v7851, %v8139
    %v8141 = vpop.f32.mrb[0].mxu0
    %8142 = vmatprep.mubr.bf16.mxu0 %v7511
    %8143 = vmatmul.mubr.bf16.gmra.mrb[0].mxu0 %v7475
    %v8144 = vpop.f32.mrb[0].mxu0
    %v8145 = vadd.f32 %v7856, %v8144
    %v8146 = vpop.f32.mrb[0].mxu0
    %v8147 = vpop.f32.mrb[0].mxu0
    %v8148 = vadd.f32 %v7859, %v8147
    %v8149 = vpop.f32.mrb[0].mxu0
    %8150 = vmatprep.mubr.bf16.mxu0 %v7513
    %8151 = vmatmul.mubr.bf16.gmra.mrb[0].mxu0 %v7477
    %v8152 = vpop.f32.mrb[0].mxu0
    %v8153 = vadd.f32 %v7864, %v8152
    %v8154 = vpop.f32.mrb[0].mxu0
    %v8155 = vpop.f32.mrb[0].mxu0
    %v8156 = vadd.f32 %v7867, %v8155
    %v8157 = vpop.f32.mrb[0].mxu0
    %8158 = vmatprep.mubr.bf16.mxu0 %v7483
    %8159 = vmatmul.mubr.bf16.gmra.mrb[0].mxu0 %v7479
    %v8160 = vpop.f32.mrb[0].mxu0
    %v8161 = vadd.f32 %v7872, %v8160
    %v8162 = vpop.f32.mrb[0].mxu0
    %v8163 = vpop.f32.mrb[0].mxu0
    %v8164 = vadd.f32 %v7875, %v8163
    %v8165 = vpop.f32.mrb[0].mxu0
    %8166 = vmatprep.mubr.bf16.mxu0 %v7485
    %8167 = vmatmul.mubr.bf16.gmra.mrb[0].mxu0 %v7481
    %v8168 = vpop.f32.mrb[0].mxu0
    %v8169 = vadd.f32 %v7880, %v8168
    %v8170 = vpop.f32.mrb[0].mxu0
    %v8171 = vpop.f32.mrb[0].mxu0
    %v8172 = vadd.f32 %v7883, %v8171
    %v8173 = vpop.f32.mrb[0].mxu0
    %8174 = vmatprep.mubr.bf16.mxu0 %v7487
    %8175 = vmatmul.mubr.bf16.gmra.mrb[0].mxu0 %v7483
    %v8176 = vpop.f32.mrb[0].mxu0
    %v8177 = vadd.f32 %v7888, %v8176
    %v8178 = vpop.f32.mrb[0].mxu0
    %v8179 = vpop.f32.mrb[0].mxu0
    %v8180 = vadd.f32 %v7891, %v8179
    %v8181 = vpop.f32.mrb[0].mxu0
    %8182 = vmatprep.mubr.bf16.mxu0 %v7489
    %8183 = vmatmul.mubr.bf16.gmra.mrb[0].mxu0 %v7485
    %v8184 = vpop.f32.mrb[0].mxu0
    %v8185 = vadd.f32 %v7896, %v8184
    %v8186 = vpop.f32.mrb[0].mxu0
    %v8187 = vpop.f32.mrb[0].mxu0
    %v8188 = vadd.f32 %v7899, %v8187
    %v8189 = vpop.f32.mrb[0].mxu0
    %8190 = vmatprep.mubr.bf16.mxu0 %v7491
    %8191 = vmatmul.mubr.bf16.gmra.mrb[0].mxu0 %v7487
    %v8192 = vpop.f32.mrb[0].mxu0
    %v8193 = vadd.f32 %v7904, %v8192
    %v8194 = vpop.f32.mrb[0].mxu0
    %v8195 = vpop.f32.mrb[0].mxu0
    %v8196 = vadd.f32 %v7907, %v8195
    %v8197 = vpop.f32.mrb[0].mxu0
    %8198 = vmatprep.mubr.bf16.mxu0 %v7493
    %8199 = vmatmul.mubr.bf16.gmra.mrb[0].mxu0 %v7489
    %v8200 = vpop.f32.mrb[0].mxu0
    %v8201 = vadd.f32 %v7912, %v8200
    %v8202 = vpop.f32.mrb[0].mxu0
    %v8203 = vpop.f32.mrb[0].mxu0
    %v8204 = vadd.f32 %v7915, %v8203
    %v8205 = vpop.f32.mrb[0].mxu0
    %8206 = vmatprep.mubr.bf16.mxu0 %v7495
    %8207 = vmatmul.mubr.bf16.gmra.mrb[0].mxu0 %v7491
    %v8208 = vpop.f32.mrb[0].mxu0
    %v8209 = vadd.f32 %v7920, %v8208
    %v8210 = vpop.f32.mrb[0].mxu0
    %v8211 = vpop.f32.mrb[0].mxu0
    %v8212 = vadd.f32 %v7923, %v8211
    %v8213 = vpop.f32.mrb[0].mxu0
    %8214 = vmatprep.mubr.bf16.mxu0 %v7497
    %8215 = vmatmul.mubr.bf16.gmra.mrb[0].mxu0 %v7493
    %v8216 = vpop.f32.mrb[0].mxu0
    %v8217 = vadd.f32 %v7928, %v8216
    %v8218 = vpop.f32.mrb[0].mxu0
    %v8219 = vpop.f32.mrb[0].mxu0
    %v8220 = vadd.f32 %v7931, %v8219
    %v8221 = vpop.f32.mrb[0].mxu0
    %8222 = vmatprep.mubr.bf16.mxu0 %v7499
    %8223 = vmatmul.mubr.bf16.gmra.mrb[0].mxu0 %v7495
    %v8224 = vpop.f32.mrb[0].mxu0
    %v8225 = vadd.f32 %v7936, %v8224
    %v8226 = vpop.f32.mrb[0].mxu0
    %v8227 = vpop.f32.mrb[0].mxu0
    %v8228 = vadd.f32 %v7939, %v8227
    %v8229 = vpop.f32.mrb[0].mxu0
    %8230 = vmatprep.mubr.bf16.mxu0 %v7501
    %8231 = vmatmul.mubr.bf16.gmra.mrb[0].mxu0 %v7497
    %v8232 = vpop.f32.mrb[0].mxu0
    %v8233 = vadd.f32 %v7944, %v8232
    %v8234 = vpop.f32.mrb[0].mxu0
    %v8235 = vpop.f32.mrb[0].mxu0
    %v8236 = vadd.f32 %v7947, %v8235
    %v8237 = vpop.f32.mrb[0].mxu0
    %8238 = vmatprep.mubr.bf16.mxu0 %v7503
    %8239 = vmatmul.mubr.bf16.gmra.mrb[0].mxu0 %v7499
    %v8240 = vpop.f32.mrb[0].mxu0
    %v8241 = vadd.f32 %v7952, %v8240
    %v8242 = vpop.f32.mrb[0].mxu0
    %v8243 = vpop.f32.mrb[0].mxu0
    %v8244 = vadd.f32 %v7955, %v8243
    %v8245 = vpop.f32.mrb[0].mxu0
    %8246 = vmatprep.mubr.bf16.mxu0 %v7505
    %8247 = vmatmul.mubr.bf16.gmra.mrb[0].mxu0 %v7501
    %v8248 = vpop.f32.mrb[0].mxu0
    %v8249 = vadd.f32 %v7960, %v8248
    %v8250 = vpop.f32.mrb[0].mxu0
    %v8251 = vpop.f32.mrb[0].mxu0
    %v8252 = vadd.f32 %v7963, %v8251
    %v8253 = vpop.f32.mrb[0].mxu0
    %8254 = vmatprep.mubr.bf16.mxu0 %v7507
    %8255 = vmatmul.mubr.bf16.gmra.mrb[0].mxu0 %v7503
    %v8256 = vpop.f32.mrb[0].mxu0
    %v8257 = vadd.f32 %v7968, %v8256
    %v8258 = vpop.f32.mrb[0].mxu0
    %v8259 = vpop.f32.mrb[0].mxu0
    %v8260 = vadd.f32 %v7971, %v8259
    %v8261 = vpop.f32.mrb[0].mxu0
    %8262 = vmatprep.mubr.bf16.mxu0 %v7509
    %8263 = vmatmul.mubr.bf16.gmra.mrb[0].mxu0 %v7505
    %v8264 = vpop.f32.mrb[0].mxu0
    %v8265 = vadd.f32 %v7976, %v8264
    %v8266 = vpop.f32.mrb[0].mxu0
    %v8267 = vpop.f32.mrb[0].mxu0
    %v8268 = vadd.f32 %v7979, %v8267
    %v8269 = vpop.f32.mrb[0].mxu0
    %8270 = vmatprep.mubr.bf16.mxu0 %v7515
    %8271 = vmatmul.mubr.bf16.gmra.mrb[0].mxu0 %v7507
    %v8272 = vpop.f32.mrb[0].mxu0
    %v8273 = vadd.f32 %v7984, %v8272
    %v8274 = vpop.f32.mrb[0].mxu0
    %v8275 = vpop.f32.mrb[0].mxu0
    %v8276 = vadd.f32 %v7987, %v8275
    %v8277 = vpop.f32.mrb[0].mxu0
    %8278 = vmatprep.mubr.bf16.mxu0 %v7513
    %8279 = vmatmul.mubr.bf16.gmra.mrb[0].mxu0 %v7509
    %v8280 = vpop.f32.mrb[0].mxu0
    %v8281 = vadd.f32 %v7992, %v8280
    %v8282 = vpop.f32.mrb[0].mxu0
    %v8283 = vpop.f32.mrb[0].mxu0
    %v8284 = vadd.f32 %v7995, %v8283
    %v8285 = vpop.f32.mrb[0].mxu0
    %8286 = vdwg.mxu0
    %v8287 = vmax.f32 %v8033, 0.0
    %v8288 = vmax.f32 %v8036, 0.0
    %v8289 = vmax.f32 %v8041, 0.0
    %v8290 = vmax.f32 %v8044, 0.0
    %v8291 = vmax.f32 %v8049, 0.0
    %v8292 = vmax.f32 %v8052, 0.0
    %v8293 = vmax.f32 %v8057, 0.0
    %v8294 = vmax.f32 %v8060, 0.0
    %v8295 = vmax.f32 %v8065, 0.0
    %v8296 = vmax.f32 %v8068, 0.0
    %v8297 = vmax.f32 %v8073, 0.0
    %v8298 = vmax.f32 %v8076, 0.0
    %v8299 = vmax.f32 %v8081, 0.0
    %v8300 = vmax.f32 %v8084, 0.0
    %v8301 = vmax.f32 %v8089, 0.0
    %v8302 = vmax.f32 %v8092, 0.0
    %v8303 = vmax.f32 %v8097, 0.0
    %v8304 = vmax.f32 %v8100, 0.0
    %v8305 = vmax.f32 %v8105, 0.0
    %v8306 = vmax.f32 %v8108, 0.0
    %v8307 = vmax.f32 %v8113, 0.0
    %v8308 = vmax.f32 %v8116, 0.0
    %v8309 = vmax.f32 %v8121, 0.0
    %v8310 = vmax.f32 %v8124, 0.0
    %v8311 = vmax.f32 %v8129, 0.0
    %v8312 = vmax.f32 %v8132, 0.0
    %v8313 = vmax.f32 %v8137, 0.0
    %v8314 = vmax.f32 %v8140, 0.0
    %v8315 = vmax.f32 %v8145, 0.0
    %v8316 = vmax.f32 %v8148, 0.0
    %v8317 = vmax.f32 %v8153, 0.0
    %v8318 = vmax.f32 %v8156, 0.0
    %v8319 = vmax.f32 %v8161, 0.0
    %v8320 = vmax.f32 %v8164, 0.0
    %v8321 = vmax.f32 %v8169, 0.0
    %v8322 = vmax.f32 %v8172, 0.0
    %v8323 = vmax.f32 %v8177, 0.0
    %v8324 = vmax.f32 %v8180, 0.0
    %v8325 = vmax.f32 %v8185, 0.0
    %v8326 = vmax.f32 %v8188, 0.0
    %v8327 = vmax.f32 %v8193, 0.0
    %v8328 = vmax.f32 %v8196, 0.0
    %v8329 = vmax.f32 %v8201, 0.0
    %v8330 = vmax.f32 %v8204, 0.0
    %v8331 = vmax.f32 %v8209, 0.0
    %v8332 = vmax.f32 %v8212, 0.0
    %v8333 = vmax.f32 %v8217, 0.0
    %v8334 = vmax.f32 %v8220, 0.0
    %v8335 = vmax.f32 %v8225, 0.0
    %v8336 = vmax.f32 %v8228, 0.0
    %v8337 = vmax.f32 %v8233, 0.0
    %v8338 = vmax.f32 %v8236, 0.0
    %v8339 = vmax.f32 %v8241, 0.0
    %v8340 = vmax.f32 %v8244, 0.0
    %v8341 = vmax.f32 %v8249, 0.0
    %v8342 = vmax.f32 %v8252, 0.0
    %v8343 = vmax.f32 %v8257, 0.0
    %v8344 = vmax.f32 %v8260, 0.0
    %v8345 = vmax.f32 %v8265, 0.0
    %v8346 = vmax.f32 %v8268, 0.0
    %v8347 = vmax.f32 %v8273, 0.0
    %v8348 = vmax.f32 %v8276, 0.0
    %v8349 = vmax.f32 %v8281, 0.0
    %v8350 = vmax.f32 %v8284, 0.0
    %8415 = vrot.lane.b32.xlu0 %v8287, 64
    %v8416 = vpop.permute.xlu0 %8415
    %8417 = vrot.lane.b32.xlu0 %v8288, 64
    %v8418 = vpop.permute.xlu0 %8417
    %8419 = vrot.lane.b32.xlu0 %v8289, 64
    %v8420 = vpop.permute.xlu0 %8419
    %8421 = vrot.lane.b32.xlu0 %v8290, 64
    %v8422 = vpop.permute.xlu0 %8421
    %8423 = vrot.lane.b32.xlu0 %v8291, 64
    %v8424 = vpop.permute.xlu0 %8423
    %8425 = vrot.lane.b32.xlu0 %v8292, 64
    %v8426 = vpop.permute.xlu0 %8425
    %8427 = vrot.lane.b32.xlu0 %v8293, 64
    %v8428 = vpop.permute.xlu0 %8427
    %8429 = vrot.lane.b32.xlu0 %v8294, 64
    %v8430 = vpop.permute.xlu0 %8429
    %8431 = vrot.lane.b32.xlu0 %v8295, 64
    %v8432 = vpop.permute.xlu0 %8431
    %8433 = vrot.lane.b32.xlu0 %v8296, 64
    %v8434 = vpop.permute.xlu0 %8433
    %8435 = vrot.lane.b32.xlu0 %v8297, 64
    %v8436 = vpop.permute.xlu0 %8435
    %8437 = vrot.lane.b32.xlu0 %v8298, 64
    %v8438 = vpop.permute.xlu0 %8437
    %8439 = vrot.lane.b32.xlu0 %v8299, 64
    %v8440 = vpop.permute.xlu0 %8439
    %8441 = vrot.lane.b32.xlu0 %v8300, 64
    %v8442 = vpop.permute.xlu0 %8441
    %8443 = vrot.lane.b32.xlu0 %v8301, 64
    %v8444 = vpop.permute.xlu0 %8443
    %8445 = vrot.lane.b32.xlu0 %v8302, 64
    %v8446 = vpop.permute.xlu0 %8445
    %8447 = vrot.lane.b32.xlu0 %v8303, 64
    %v8448 = vpop.permute.xlu0 %8447
    %8449 = vrot.lane.b32.xlu0 %v8304, 64
    %v8450 = vpop.permute.xlu0 %8449
    %8451 = vrot.lane.b32.xlu0 %v8305, 64
    %v8452 = vpop.permute.xlu0 %8451
    %8453 = vrot.lane.b32.xlu0 %v8306, 64
    %v8454 = vpop.permute.xlu0 %8453
    %8455 = vrot.lane.b32.xlu0 %v8307, 64
    %v8456 = vpop.permute.xlu0 %8455
    %8457 = vrot.lane.b32.xlu0 %v8308, 64
    %v8458 = vpop.permute.xlu0 %8457
    %8459 = vrot.lane.b32.xlu0 %v8309, 64
    %v8460 = vpop.permute.xlu0 %8459
    %8461 = vrot.lane.b32.xlu0 %v8310, 64
    %v8462 = vpop.permute.xlu0 %8461
    %8463 = vrot.lane.b32.xlu0 %v8311, 64
    %v8464 = vpop.permute.xlu0 %8463
    %8465 = vrot.lane.b32.xlu0 %v8312, 64
    %v8466 = vpop.permute.xlu0 %8465
    %8467 = vrot.lane.b32.xlu0 %v8313, 64
    %v8468 = vpop.permute.xlu0 %8467
    %8469 = vrot.lane.b32.xlu0 %v8314, 64
    %v8470 = vpop.permute.xlu0 %8469
    %8471 = vrot.lane.b32.xlu0 %v8315, 64
    %v8472 = vpop.permute.xlu0 %8471
    %8473 = vrot.lane.b32.xlu0 %v8316, 64
    %v8474 = vpop.permute.xlu0 %8473
    %8475 = vrot.lane.b32.xlu0 %v8317, 64
    %v8476 = vpop.permute.xlu0 %8475
    %8477 = vrot.lane.b32.xlu0 %v8318, 64
    %v8478 = vpop.permute.xlu0 %8477
    %8479 = vrot.lane.b32.xlu0 %v8319, 64
    %v8480 = vpop.permute.xlu0 %8479
    %8481 = vrot.lane.b32.xlu0 %v8320, 64
    %v8482 = vpop.permute.xlu0 %8481
    %8483 = vrot.lane.b32.xlu0 %v8321, 64
    %v8484 = vpop.permute.xlu0 %8483
    %8485 = vrot.lane.b32.xlu0 %v8322, 64
    %v8486 = vpop.permute.xlu0 %8485
    %8487 = vrot.lane.b32.xlu0 %v8323, 64
    %v8488 = vpop.permute.xlu0 %8487
    %8489 = vrot.lane.b32.xlu0 %v8324, 64
    %v8490 = vpop.permute.xlu0 %8489
    %8491 = vrot.lane.b32.xlu0 %v8325, 64
    %v8492 = vpop.permute.xlu0 %8491
    %8493 = vrot.lane.b32.xlu0 %v8326, 64
    %v8494 = vpop.permute.xlu0 %8493
    %8495 = vrot.lane.b32.xlu0 %v8327, 64
    %v8496 = vpop.permute.xlu0 %8495
    %8497 = vrot.lane.b32.xlu0 %v8328, 64
    %v8498 = vpop.permute.xlu0 %8497
    %8499 = vrot.lane.b32.xlu0 %v8329, 64
    %v8500 = vpop.permute.xlu0 %8499
    %8501 = vrot.lane.b32.xlu0 %v8330, 64
    %v8502 = vpop.permute.xlu0 %8501
    %8503 = vrot.lane.b32.xlu0 %v8331, 64
    %v8504 = vpop.permute.xlu0 %8503
    %8505 = vrot.lane.b32.xlu0 %v8332, 64
    %v8506 = vpop.permute.xlu0 %8505
    %8507 = vrot.lane.b32.xlu0 %v8333, 64
    %v8508 = vpop.permute.xlu0 %8507
    %8509 = vrot.lane.b32.xlu0 %v8334, 64
    %v8510 = vpop.permute.xlu0 %8509
    %8511 = vrot.lane.b32.xlu0 %v8335, 64
    %v8512 = vpop.permute.xlu0 %8511
    %8513 = vrot.lane.b32.xlu0 %v8336, 64
    %v8514 = vpop.permute.xlu0 %8513
    %8515 = vrot.lane.b32.xlu0 %v8337, 64
    %v8516 = vpop.permute.xlu0 %8515
    %8517 = vrot.lane.b32.xlu0 %v8338, 64
    %v8518 = vpop.permute.xlu0 %8517
    %8519 = vrot.lane.b32.xlu0 %v8339, 64
    %v8520 = vpop.permute.xlu0 %8519
    %8521 = vrot.lane.b32.xlu0 %v8340, 64
    %v8522 = vpop.permute.xlu0 %8521
    %8523 = vrot.lane.b32.xlu0 %v8341, 64
    %v8524 = vpop.permute.xlu0 %8523
    %8525 = vrot.lane.b32.xlu0 %v8342, 64
    %v8526 = vpop.permute.xlu0 %8525
    %8527 = vrot.lane.b32.xlu0 %v8343, 64
    %v8528 = vpop.permute.xlu0 %8527
    %8529 = vrot.lane.b32.xlu0 %v8344, 64
    %v8530 = vpop.permute.xlu0 %8529
    %8531 = vrot.lane.b32.xlu0 %v8345, 64
    %v8532 = vpop.permute.xlu0 %8531
    %8533 = vrot.lane.b32.xlu0 %v8346, 64
    %v8534 = vpop.permute.xlu0 %8533
    %8535 = vrot.lane.b32.xlu0 %v8347, 64
    %v8536 = vpop.permute.xlu0 %8535
    %8537 = vrot.lane.b32.xlu0 %v8348, 64
    %v8538 = vpop.permute.xlu0 %8537
    %8539 = vrot.lane.b32.xlu0 %v8349, 64
    %v8540 = vpop.permute.xlu0 %8539
    %8541 = vrot.lane.b32.xlu0 %v8350, 64
    %v8542 = vpop.permute.xlu0 %8541
    %v8607 = vadd.f32 %v8287, %v8416
    %v8608 = vadd.f32 %v8288, %v8418
    %v8609 = vadd.f32 %v8289, %v8420
    %v8610 = vadd.f32 %v8290, %v8422
    %v8611 = vadd.f32 %v8291, %v8424
    %v8612 = vadd.f32 %v8292, %v8426
    %v8613 = vadd.f32 %v8293, %v8428
    %v8614 = vadd.f32 %v8294, %v8430
    %v8615 = vadd.f32 %v8295, %v8432
    %v8616 = vadd.f32 %v8296, %v8434
    %v8617 = vadd.f32 %v8297, %v8436
    %v8618 = vadd.f32 %v8298, %v8438
    %v8619 = vadd.f32 %v8299, %v8440
    %v8620 = vadd.f32 %v8300, %v8442
    %v8621 = vadd.f32 %v8301, %v8444
    %v8622 = vadd.f32 %v8302, %v8446
    %v8623 = vadd.f32 %v8303, %v8448
    %v8624 = vadd.f32 %v8304, %v8450
    %v8625 = vadd.f32 %v8305, %v8452
    %v8626 = vadd.f32 %v8306, %v8454
    %v8627 = vadd.f32 %v8307, %v8456
    %v8628 = vadd.f32 %v8308, %v8458
    %v8629 = vadd.f32 %v8309, %v8460
    %v8630 = vadd.f32 %v8310, %v8462
    %v8631 = vadd.f32 %v8311, %v8464
    %v8632 = vadd.f32 %v8312, %v8466
    %v8633 = vadd.f32 %v8313, %v8468
    %v8634 = vadd.f32 %v8314, %v8470
    %v8635 = vadd.f32 %v8315, %v8472
    %v8636 = vadd.f32 %v8316, %v8474
    %v8637 = vadd.f32 %v8317, %v8476
    %v8638 = vadd.f32 %v8318, %v8478
    %v8639 = vadd.f32 %v8319, %v8480
    %v8640 = vadd.f32 %v8320, %v8482
    %v8641 = vadd.f32 %v8321, %v8484
    %v8642 = vadd.f32 %v8322, %v8486
    %v8643 = vadd.f32 %v8323, %v8488
    %v8644 = vadd.f32 %v8324, %v8490
    %v8645 = vadd.f32 %v8325, %v8492
    %v8646 = vadd.f32 %v8326, %v8494
    %v8647 = vadd.f32 %v8327, %v8496
    %v8648 = vadd.f32 %v8328, %v8498
    %v8649 = vadd.f32 %v8329, %v8500
    %v8650 = vadd.f32 %v8330, %v8502
    %v8651 = vadd.f32 %v8331, %v8504
    %v8652 = vadd.f32 %v8332, %v8506
    %v8653 = vadd.f32 %v8333, %v8508
    %v8654 = vadd.f32 %v8334, %v8510
    %v8655 = vadd.f32 %v8335, %v8512
    %v8656 = vadd.f32 %v8336, %v8514
    %v8657 = vadd.f32 %v8337, %v8516
    %v8658 = vadd.f32 %v8338, %v8518
    %v8659 = vadd.f32 %v8339, %v8520
    %v8660 = vadd.f32 %v8340, %v8522
    %v8661 = vadd.f32 %v8341, %v8524
    %v8662 = vadd.f32 %v8342, %v8526
    %v8663 = vadd.f32 %v8343, %v8528
    %v8664 = vadd.f32 %v8344, %v8530
    %v8665 = vadd.f32 %v8345, %v8532
    %v8666 = vadd.f32 %v8346, %v8534
    %v8667 = vadd.f32 %v8347, %v8536
    %v8668 = vadd.f32 %v8348, %v8538
    %v8669 = vadd.f32 %v8349, %v8540
    %v8670 = vadd.f32 %v8350, %v8542
    %v8671 = vpack.c.bf16 %v8608, %v8607
    %v8672 = vpack.c.bf16 %v8610, %v8609
    %v8673 = vpack.c.bf16 %v8612, %v8611
    %v8674 = vpack.c.bf16 %v8614, %v8613
    %v8675 = vpack.c.bf16 %v8616, %v8615
    %v8676 = vpack.c.bf16 %v8618, %v8617
    %v8677 = vpack.c.bf16 %v8620, %v8619
    %v8678 = vpack.c.bf16 %v8622, %v8621
    %v8679 = vpack.c.bf16 %v8624, %v8623
    %v8680 = vpack.c.bf16 %v8626, %v8625
    %v8681 = vpack.c.bf16 %v8628, %v8627
    %v8682 = vpack.c.bf16 %v8630, %v8629
    %v8683 = vpack.c.bf16 %v8632, %v8631
    %v8684 = vpack.c.bf16 %v8634, %v8633
    %v8685 = vpack.c.bf16 %v8636, %v8635
    %v8686 = vpack.c.bf16 %v8638, %v8637
    %v8687 = vpack.c.bf16 %v8640, %v8639
    %v8688 = vpack.c.bf16 %v8642, %v8641
    %v8689 = vpack.c.bf16 %v8644, %v8643
    %v8690 = vpack.c.bf16 %v8646, %v8645
    %v8691 = vpack.c.bf16 %v8648, %v8647
    %v8692 = vpack.c.bf16 %v8650, %v8649
    %v8693 = vpack.c.bf16 %v8652, %v8651
    %v8694 = vpack.c.bf16 %v8654, %v8653
    %v8695 = vpack.c.bf16 %v8656, %v8655
    %v8696 = vpack.c.bf16 %v8658, %v8657
    %v8697 = vpack.c.bf16 %v8660, %v8659
    %v8698 = vpack.c.bf16 %v8662, %v8661
    %v8699 = vpack.c.bf16 %v8664, %v8663
    %v8700 = vpack.c.bf16 %v8666, %v8665
    %v8701 = vpack.c.bf16 %v8668, %v8667
    %v8702 = vpack.c.bf16 %v8670, %v8669
    %v8711 = vunpack.c.l.b16 %v6558
    %v8712 = vunpack.c.l.b16 %v6559
    %v8713 = vunpack.c.l.b16 %v6560
    %v8714 = vunpack.c.l.b16 %v6561
    %v8715 = vunpack.c.l.b16 %v6562
    %v8716 = vunpack.c.l.b16 %v6563
    %v8717 = vunpack.c.l.b16 %v6564
    %v8718 = vunpack.c.l.b16 %v6565
    %v8719 = vpack.c.b16 %v8712, %v8711
    %v8720 = vpack.c.b16 %v8714, %v8713
    %v8721 = vpack.c.b16 %v8716, %v8715
    %v8722 = vpack.c.b16 %v8718, %v8717
    %v8728 = vsel %vm2197, %v8671, 0
    %v8731 = vsel %vm2197, %v8672, 0
    %v8734 = vsel %vm2197, %v8673, 0
    %v8737 = vsel %vm2197, %v8674, 0
    %v8740 = vsel %vm2197, %v8675, 0
    %v8743 = vsel %vm2197, %v8676, 0
    %v8746 = vsel %vm2197, %v8677, 0
    %v8749 = vsel %vm2197, %v8678, 0
    %v8752 = vsel %vm2197, %v8679, 0
    %v8755 = vsel %vm2197, %v8680, 0
    %v8758 = vsel %vm2197, %v8681, 0
    %v8761 = vsel %vm2197, %v8682, 0
    %v8764 = vsel %vm2197, %v8683, 0
    %v8767 = vsel %vm2197, %v8684, 0
    %v8770 = vsel %vm2197, %v8685, 0
    %v8773 = vsel %vm2197, %v8686, 0
    %v8776 = vsel %vm2197, %v8687, 0
    %v8779 = vsel %vm2197, %v8688, 0
    %v8782 = vsel %vm2197, %v8689, 0
    %v8785 = vsel %vm2197, %v8690, 0
    %v8788 = vsel %vm2197, %v8691, 0
    %v8791 = vsel %vm2197, %v8692, 0
    %v8794 = vsel %vm2197, %v8693, 0
    %v8797 = vsel %vm2197, %v8694, 0
    %v8800 = vsel %vm2197, %v8695, 0
    %v8803 = vsel %vm2197, %v8696, 0
    %v8806 = vsel %vm2197, %v8697, 0
    %v8809 = vsel %vm2197, %v8698, 0
    %v8812 = vsel %vm2197, %v8699, 0
    %v8815 = vsel %vm2197, %v8700, 0
    %v8818 = vsel %vm2197, %v8701, 0
    %v8821 = vsel %vm2197, %v8702, 0
    %8823 = vmatprep.subr.bf16.mxu0 0
    %8824 = vmatpush1.bf16.msra.mxu0 %v8719
    %8825 = vmatprep.subr.bf16.mxu0 0
    %8826 = vmatpush1.bf16.msra.mxu0 %v8720
    %8827 = vmatprep.subr.bf16.mxu0 0
    %8828 = vmatpush1.bf16.msra.mxu0 %v8721
    %8829 = vmatprep.subr.bf16.mxu0 0
    %8830 = vmatpush1.bf16.msra.mxu0 %v8722
    %8831 = vmatprep.subr.bf16.mxu0 0
    %8832 = vmatpush1.bf16.msra.mxu0 0
    %8833 = vmatprep.subr.bf16.mxu0 0
    %8834 = vmatpush1.bf16.msra.mxu0 0
    %8835 = vmatprep.subr.bf16.mxu0 0
    %8836 = vmatpush1.bf16.msra.mxu0 0
    %8837 = vmatprep.subr.bf16.mxu0 0
    %8838 = vmatpush1.bf16.msra.mxu0 0
    %8839 = vmatprep.subr.bf16.mxu0 0
    %8840 = vmatpush1.bf16.msra.mxu0 0
    %8841 = vmatprep.subr.bf16.mxu0 0
    %8842 = vmatpush1.bf16.msra.mxu0 0
    %8843 = vmatprep.subr.bf16.mxu0 0
    %8844 = vmatpush1.bf16.msra.mxu0 0
    %8845 = vmatprep.subr.bf16.mxu0 0
    %8846 = vmatpush1.bf16.msra.mxu0 0
    %8847 = vmatprep.subr.bf16.mxu0 0
    %8848 = vmatpush1.bf16.msra.mxu0 0
    %8849 = vmatprep.subr.bf16.mxu0 0
    %8850 = vmatpush1.bf16.msra.mxu0 0
    %8851 = vmatprep.subr.bf16.mxu0 0
    %8852 = vmatpush1.bf16.msra.mxu0 0
    %8853 = vmatprep.subr.bf16.mxu0 0
    %8854 = vmatpush1.bf16.msra.mxu0 0
    %8855 = vmatprep.mubr.bf16.mxu0 0
    %8856 = vmatmul.mubr.bf16.gmra.mrb[0].mxu0 %v8728
    %v8857 = vpop.f32.mrb[0].mxu0
    %v8858 = vadd.f32 0.0, %v8857
    %v8859 = vpop.f32.mrb[0].mxu0
    %v8860 = vpop.f32.mrb[0].mxu0
    %v8861 = vadd.f32 0.0, %v8860
    %v8862 = vpop.f32.mrb[0].mxu0
    %8863 = vmatprep.mubr.bf16.mxu0 0
    %8864 = vmatmul.mubr.bf16.gmra.mrb[0].mxu0 %v8731
    %v8865 = vpop.f32.mrb[0].mxu0
    %v8866 = vadd.f32 0.0, %v8865
    %v8867 = vpop.f32.mrb[0].mxu0
    %v8868 = vpop.f32.mrb[0].mxu0
    %v8869 = vadd.f32 0.0, %v8868
    %v8870 = vpop.f32.mrb[0].mxu0
    %8871 = vmatprep.mubr.bf16.mxu0 0
    %8872 = vmatmul.mubr.bf16.gmra.mrb[0].mxu0 %v8734
    %v8873 = vpop.f32.mrb[0].mxu0
    %v8874 = vadd.f32 0.0, %v8873
    %v8875 = vpop.f32.mrb[0].mxu0
    %v8876 = vpop.f32.mrb[0].mxu0
    %v8877 = vadd.f32 0.0, %v8876
    %v8878 = vpop.f32.mrb[0].mxu0
    %8879 = vmatprep.mubr.bf16.mxu0 0
    %8880 = vmatmul.mubr.bf16.gmra.mrb[0].mxu0 %v8737
    %v8881 = vpop.f32.mrb[0].mxu0
    %v8882 = vadd.f32 0.0, %v8881
    %v8883 = vpop.f32.mrb[0].mxu0
    %v8884 = vpop.f32.mrb[0].mxu0
    %v8885 = vadd.f32 0.0, %v8884
    %v8886 = vpop.f32.mrb[0].mxu0
    %8887 = vmatprep.mubr.bf16.mxu0 0
    %8888 = vmatmul.mubr.bf16.gmra.mrb[0].mxu0 %v8740
    %v8889 = vpop.f32.mrb[0].mxu0
    %v8890 = vadd.f32 0.0, %v8889
    %v8891 = vpop.f32.mrb[0].mxu0
    %v8892 = vpop.f32.mrb[0].mxu0
    %v8893 = vadd.f32 0.0, %v8892
    %v8894 = vpop.f32.mrb[0].mxu0
    %8895 = vmatprep.mubr.bf16.mxu0 0
    %8896 = vmatmul.mubr.bf16.gmra.mrb[0].mxu0 %v8743
    %v8897 = vpop.f32.mrb[0].mxu0
    %v8898 = vadd.f32 0.0, %v8897
    %v8899 = vpop.f32.mrb[0].mxu0
    %v8900 = vpop.f32.mrb[0].mxu0
    %v8901 = vadd.f32 0.0, %v8900
    %v8902 = vpop.f32.mrb[0].mxu0
    %8903 = vmatprep.mubr.bf16.mxu0 0
    %8904 = vmatmul.mubr.bf16.gmra.mrb[0].mxu0 %v8746
    %v8905 = vpop.f32.mrb[0].mxu0
    %v8906 = vadd.f32 0.0, %v8905
    %v8907 = vpop.f32.mrb[0].mxu0
    %v8908 = vpop.f32.mrb[0].mxu0
    %v8909 = vadd.f32 0.0, %v8908
    %v8910 = vpop.f32.mrb[0].mxu0
    %8911 = vmatprep.mubr.bf16.mxu0 0
    %8912 = vmatmul.mubr.bf16.gmra.mrb[0].mxu0 %v8749
    %v8913 = vpop.f32.mrb[0].mxu0
    %v8914 = vadd.f32 0.0, %v8913
    %v8915 = vpop.f32.mrb[0].mxu0
    %v8916 = vpop.f32.mrb[0].mxu0
    %v8917 = vadd.f32 0.0, %v8916
    %v8918 = vpop.f32.mrb[0].mxu0
    %8919 = vmatprep.mubr.bf16.mxu0 0
    %8920 = vmatmul.mubr.bf16.gmra.mrb[0].mxu0 %v8752
    %v8921 = vpop.f32.mrb[0].mxu0
    %v8922 = vadd.f32 0.0, %v8921
    %v8923 = vpop.f32.mrb[0].mxu0
    %v8924 = vpop.f32.mrb[0].mxu0
    %v8925 = vadd.f32 0.0, %v8924
    %v8926 = vpop.f32.mrb[0].mxu0
    %8927 = vmatprep.mubr.bf16.mxu0 0
    %8928 = vmatmul.mubr.bf16.gmra.mrb[0].mxu0 %v8755
    %v8929 = vpop.f32.mrb[0].mxu0
    %v8930 = vadd.f32 0.0, %v8929
    %v8931 = vpop.f32.mrb[0].mxu0
    %v8932 = vpop.f32.mrb[0].mxu0
    %v8933 = vadd.f32 0.0, %v8932
    %v8934 = vpop.f32.mrb[0].mxu0
    %8935 = vmatprep.mubr.bf16.mxu0 0
    %8936 = vmatmul.mubr.bf16.gmra.mrb[0].mxu0 %v8758
    %v8937 = vpop.f32.mrb[0].mxu0
    %v8938 = vadd.f32 0.0, %v8937
    %v8939 = vpop.f32.mrb[0].mxu0
    %v8940 = vpop.f32.mrb[0].mxu0
    %v8941 = vadd.f32 0.0, %v8940
    %v8942 = vpop.f32.mrb[0].mxu0
    %8943 = vmatprep.mubr.bf16.mxu0 0
    %8944 = vmatmul.mubr.bf16.gmra.mrb[0].mxu0 %v8761
    %v8945 = vpop.f32.mrb[0].mxu0
    %v8946 = vadd.f32 0.0, %v8945
    %v8947 = vpop.f32.mrb[0].mxu0
    %v8948 = vpop.f32.mrb[0].mxu0
    %v8949 = vadd.f32 0.0, %v8948
    %v8950 = vpop.f32.mrb[0].mxu0
    %8951 = vmatprep.mubr.bf16.mxu0 0
    %8952 = vmatmul.mubr.bf16.gmra.mrb[0].mxu0 %v8764
    %v8953 = vpop.f32.mrb[0].mxu0
    %v8954 = vadd.f32 0.0, %v8953
    %v8955 = vpop.f32.mrb[0].mxu0
    %v8956 = vpop.f32.mrb[0].mxu0
    %v8957 = vadd.f32 0.0, %v8956
    %v8958 = vpop.f32.mrb[0].mxu0
    %8959 = vmatprep.mubr.bf16.mxu0 0
    %8960 = vmatmul.mubr.bf16.gmra.mrb[0].mxu0 %v8767
    %v8961 = vpop.f32.mrb[0].mxu0
    %v8962 = vadd.f32 0.0, %v8961
    %v8963 = vpop.f32.mrb[0].mxu0
    %v8964 = vpop.f32.mrb[0].mxu0
    %v8965 = vadd.f32 0.0, %v8964
    %v8966 = vpop.f32.mrb[0].mxu0
    %8967 = vmatprep.mubr.bf16.mxu0 0
    %8968 = vmatmul.mubr.bf16.gmra.mrb[0].mxu0 %v8770
    %v8969 = vpop.f32.mrb[0].mxu0
    %v8970 = vadd.f32 0.0, %v8969
    %v8971 = vpop.f32.mrb[0].mxu0
    %v8972 = vpop.f32.mrb[0].mxu0
    %v8973 = vadd.f32 0.0, %v8972
    %v8974 = vpop.f32.mrb[0].mxu0
    %8975 = vmatprep.mubr.bf16.mxu0 0
    %8976 = vmatmul.mubr.bf16.gmra.mrb[0].mxu0 %v8773
    %v8977 = vpop.f32.mrb[0].mxu0
    %v8978 = vadd.f32 0.0, %v8977
    %v8979 = vpop.f32.mrb[0].mxu0
    %v8980 = vpop.f32.mrb[0].mxu0
    %v8981 = vadd.f32 0.0, %v8980
    %v8982 = vpop.f32.mrb[0].mxu0
    %8983 = vmatprep.mubr.bf16.mxu0 0
    %8984 = vmatmul.mubr.bf16.gmra.mrb[0].mxu0 %v8776
    %v8985 = vpop.f32.mrb[0].mxu0
    %v8986 = vadd.f32 0.0, %v8985
    %v8987 = vpop.f32.mrb[0].mxu0
    %v8988 = vpop.f32.mrb[0].mxu0
    %v8989 = vadd.f32 0.0, %v8988
    %v8990 = vpop.f32.mrb[0].mxu0
    %8991 = vmatprep.mubr.bf16.mxu0 0
    %8992 = vmatmul.mubr.bf16.gmra.mrb[0].mxu0 %v8779
    %v8993 = vpop.f32.mrb[0].mxu0
    %v8994 = vadd.f32 0.0, %v8993
    %v8995 = vpop.f32.mrb[0].mxu0
    %v8996 = vpop.f32.mrb[0].mxu0
    %v8997 = vadd.f32 0.0, %v8996
    %v8998 = vpop.f32.mrb[0].mxu0
    %8999 = vmatprep.mubr.bf16.mxu0 0
    %9000 = vmatmul.mubr.bf16.gmra.mrb[0].mxu0 %v8782
    %v9001 = vpop.f32.mrb[0].mxu0
    %v9002 = vadd.f32 0.0, %v9001
    %v9003 = vpop.f32.mrb[0].mxu0
    %v9004 = vpop.f32.mrb[0].mxu0
    %v9005 = vadd.f32 0.0, %v9004
    %v9006 = vpop.f32.mrb[0].mxu0
    %9007 = vmatprep.mubr.bf16.mxu0 0
    %9008 = vmatmul.mubr.bf16.gmra.mrb[0].mxu0 %v8785
    %v9009 = vpop.f32.mrb[0].mxu0
    %v9010 = vadd.f32 0.0, %v9009
    %v9011 = vpop.f32.mrb[0].mxu0
    %v9012 = vpop.f32.mrb[0].mxu0
    %v9013 = vadd.f32 0.0, %v9012
    %v9014 = vpop.f32.mrb[0].mxu0
    %9015 = vmatprep.mubr.bf16.mxu0 0
    %9016 = vmatmul.mubr.bf16.gmra.mrb[0].mxu0 %v8788
    %v9017 = vpop.f32.mrb[0].mxu0
    %v9018 = vadd.f32 0.0, %v9017
    %v9019 = vpop.f32.mrb[0].mxu0
    %v9020 = vpop.f32.mrb[0].mxu0
    %v9021 = vadd.f32 0.0, %v9020
    %v9022 = vpop.f32.mrb[0].mxu0
    %9023 = vmatprep.mubr.bf16.mxu0 0
    %9024 = vmatmul.mubr.bf16.gmra.mrb[0].mxu0 %v8791
    %v9025 = vpop.f32.mrb[0].mxu0
    %v9026 = vadd.f32 0.0, %v9025
    %v9027 = vpop.f32.mrb[0].mxu0
    %v9028 = vpop.f32.mrb[0].mxu0
    %v9029 = vadd.f32 0.0, %v9028
    %v9030 = vpop.f32.mrb[0].mxu0
    %9031 = vmatprep.mubr.bf16.mxu0 0
    %9032 = vmatmul.mubr.bf16.gmra.mrb[0].mxu0 %v8794
    %v9033 = vpop.f32.mrb[0].mxu0
    %v9034 = vadd.f32 0.0, %v9033
    %v9035 = vpop.f32.mrb[0].mxu0
    %v9036 = vpop.f32.mrb[0].mxu0
    %v9037 = vadd.f32 0.0, %v9036
    %v9038 = vpop.f32.mrb[0].mxu0
    %9039 = vmatprep.mubr.bf16.mxu0 0
    %9040 = vmatmul.mubr.bf16.gmra.mrb[0].mxu0 %v8797
    %v9041 = vpop.f32.mrb[0].mxu0
    %v9042 = vadd.f32 0.0, %v9041
    %v9043 = vpop.f32.mrb[0].mxu0
    %v9044 = vpop.f32.mrb[0].mxu0
    %v9045 = vadd.f32 0.0, %v9044
    %v9046 = vpop.f32.mrb[0].mxu0
    %9047 = vmatprep.mubr.bf16.mxu0 0
    %9048 = vmatmul.mubr.bf16.gmra.mrb[0].mxu0 %v8800
    %v9049 = vpop.f32.mrb[0].mxu0
    %v9050 = vadd.f32 0.0, %v9049
    %v9051 = vpop.f32.mrb[0].mxu0
    %v9052 = vpop.f32.mrb[0].mxu0
    %v9053 = vadd.f32 0.0, %v9052
    %v9054 = vpop.f32.mrb[0].mxu0
    %9055 = vmatprep.mubr.bf16.mxu0 0
    %9056 = vmatmul.mubr.bf16.gmra.mrb[0].mxu0 %v8803
    %v9057 = vpop.f32.mrb[0].mxu0
    %v9058 = vadd.f32 0.0, %v9057
    %v9059 = vpop.f32.mrb[0].mxu0
    %v9060 = vpop.f32.mrb[0].mxu0
    %v9061 = vadd.f32 0.0, %v9060
    %v9062 = vpop.f32.mrb[0].mxu0
    %9063 = vmatprep.mubr.bf16.mxu0 0
    %9064 = vmatmul.mubr.bf16.gmra.mrb[0].mxu0 %v8806
    %v9065 = vpop.f32.mrb[0].mxu0
    %v9066 = vadd.f32 0.0, %v9065
    %v9067 = vpop.f32.mrb[0].mxu0
    %v9068 = vpop.f32.mrb[0].mxu0
    %v9069 = vadd.f32 0.0, %v9068
    %v9070 = vpop.f32.mrb[0].mxu0
    %9071 = vmatprep.mubr.bf16.mxu0 0
    %9072 = vmatmul.mubr.bf16.gmra.mrb[0].mxu0 %v8809
    %v9073 = vpop.f32.mrb[0].mxu0
    %v9074 = vadd.f32 0.0, %v9073
    %v9075 = vpop.f32.mrb[0].mxu0
    %v9076 = vpop.f32.mrb[0].mxu0
    %v9077 = vadd.f32 0.0, %v9076
    %v9078 = vpop.f32.mrb[0].mxu0
    %9079 = vmatprep.mubr.bf16.mxu0 0
    %9080 = vmatmul.mubr.bf16.gmra.mrb[0].mxu0 %v8812
    %v9081 = vpop.f32.mrb[0].mxu0
    %v9082 = vadd.f32 0.0, %v9081
    %v9083 = vpop.f32.mrb[0].mxu0
    %v9084 = vpop.f32.mrb[0].mxu0
    %v9085 = vadd.f32 0.0, %v9084
    %v9086 = vpop.f32.mrb[0].mxu0
    %9087 = vmatprep.mubr.bf16.mxu0 0
    %9088 = vmatmul.mubr.bf16.gmra.mrb[0].mxu0 %v8815
    %v9089 = vpop.f32.mrb[0].mxu0
    %v9090 = vadd.f32 0.0, %v9089
    %v9091 = vpop.f32.mrb[0].mxu0
    %v9092 = vpop.f32.mrb[0].mxu0
    %v9093 = vadd.f32 0.0, %v9092
    %v9094 = vpop.f32.mrb[0].mxu0
    %9095 = vmatprep.mubr.bf16.mxu0 0
    %9096 = vmatmul.mubr.bf16.gmra.mrb[0].mxu0 %v8818
    %v9097 = vpop.f32.mrb[0].mxu0
    %v9098 = vadd.f32 0.0, %v9097
    %v9099 = vpop.f32.mrb[0].mxu0
    %v9100 = vpop.f32.mrb[0].mxu0
    %v9101 = vadd.f32 0.0, %v9100
    %v9102 = vpop.f32.mrb[0].mxu0
    %9103 = vmatprep.mubr.bf16.mxu0 0
    %9104 = vmatmul.mubr.bf16.gmra.mrb[0].mxu0 %v8821
    %v9105 = vpop.f32.mrb[0].mxu0
    %v9106 = vadd.f32 0.0, %v9105
    %v9107 = vpop.f32.mrb[0].mxu0
    %v9108 = vpop.f32.mrb[0].mxu0
    %v9109 = vadd.f32 0.0, %v9108
    %v9110 = vpop.f32.mrb[0].mxu0
    %9111 = vdwg.mxu0
    %v9112 = vmax.f32 %v8858, 0.0
    %v9113 = vmax.f32 %v8861, 0.0
    %v9114 = vmax.f32 %v8866, 0.0
    %v9115 = vmax.f32 %v8869, 0.0
    %v9116 = vmax.f32 %v8874, 0.0
    %v9117 = vmax.f32 %v8877, 0.0
    %v9118 = vmax.f32 %v8882, 0.0
    %v9119 = vmax.f32 %v8885, 0.0
    %v9120 = vmax.f32 %v8890, 0.0
    %v9121 = vmax.f32 %v8893, 0.0
    %v9122 = vmax.f32 %v8898, 0.0
    %v9123 = vmax.f32 %v8901, 0.0
    %v9124 = vmax.f32 %v8906, 0.0
    %v9125 = vmax.f32 %v8909, 0.0
    %v9126 = vmax.f32 %v8914, 0.0
    %v9127 = vmax.f32 %v8917, 0.0
    %v9128 = vmax.f32 %v8922, 0.0
    %v9129 = vmax.f32 %v8925, 0.0
    %v9130 = vmax.f32 %v8930, 0.0
    %v9131 = vmax.f32 %v8933, 0.0
    %v9132 = vmax.f32 %v8938, 0.0
    %v9133 = vmax.f32 %v8941, 0.0
    %v9134 = vmax.f32 %v8946, 0.0
    %v9135 = vmax.f32 %v8949, 0.0
    %v9136 = vmax.f32 %v8954, 0.0
    %v9137 = vmax.f32 %v8957, 0.0
    %v9138 = vmax.f32 %v8962, 0.0
    %v9139 = vmax.f32 %v8965, 0.0
    %v9140 = vmax.f32 %v8970, 0.0
    %v9141 = vmax.f32 %v8973, 0.0
    %v9142 = vmax.f32 %v8978, 0.0
    %v9143 = vmax.f32 %v8981, 0.0
    %v9144 = vmax.f32 %v8986, 0.0
    %v9145 = vmax.f32 %v8989, 0.0
    %v9146 = vmax.f32 %v8994, 0.0
    %v9147 = vmax.f32 %v8997, 0.0
    %v9148 = vmax.f32 %v9002, 0.0
    %v9149 = vmax.f32 %v9005, 0.0
    %v9150 = vmax.f32 %v9010, 0.0
    %v9151 = vmax.f32 %v9013, 0.0
    %v9152 = vmax.f32 %v9018, 0.0
    %v9153 = vmax.f32 %v9021, 0.0
    %v9154 = vmax.f32 %v9026, 0.0
    %v9155 = vmax.f32 %v9029, 0.0
    %v9156 = vmax.f32 %v9034, 0.0
    %v9157 = vmax.f32 %v9037, 0.0
    %v9158 = vmax.f32 %v9042, 0.0
    %v9159 = vmax.f32 %v9045, 0.0
    %v9160 = vmax.f32 %v9050, 0.0
    %v9161 = vmax.f32 %v9053, 0.0
    %v9162 = vmax.f32 %v9058, 0.0
    %v9163 = vmax.f32 %v9061, 0.0
    %v9164 = vmax.f32 %v9066, 0.0
    %v9165 = vmax.f32 %v9069, 0.0
    %v9166 = vmax.f32 %v9074, 0.0
    %v9167 = vmax.f32 %v9077, 0.0
    %v9168 = vmax.f32 %v9082, 0.0
    %v9169 = vmax.f32 %v9085, 0.0
    %v9170 = vmax.f32 %v9090, 0.0
    %v9171 = vmax.f32 %v9093, 0.0
    %v9172 = vmax.f32 %v9098, 0.0
    %v9173 = vmax.f32 %v9101, 0.0
    %v9174 = vmax.f32 %v9106, 0.0
    %v9175 = vmax.f32 %v9109, 0.0
    %v9176 = vmax.f32 %v9112, 0.0
    %v9177 = vmax.f32 %v9113, 0.0
    %v9178 = vmax.f32 %v9114, %v9116
    %v9179 = vmax.f32 %v9115, %v9117
    %v9180 = vmax.f32 %v9118, %v9120
    %v9181 = vmax.f32 %v9119, %v9121
    %v9182 = vmax.f32 %v9122, %v9124
    %v9183 = vmax.f32 %v9123, %v9125
    %v9184 = vmax.f32 %v9126, %v9128
    %v9185 = vmax.f32 %v9127, %v9129
    %v9186 = vmax.f32 %v9130, %v9132
    %v9187 = vmax.f32 %v9131, %v9133
    %v9188 = vmax.f32 %v9134, %v9136
    %v9189 = vmax.f32 %v9135, %v9137
    %v9190 = vmax.f32 %v9138, %v9140
    %v9191 = vmax.f32 %v9139, %v9141
    %v9192 = vmax.f32 %v9144, 0.0
    %v9193 = vmax.f32 %v9145, 0.0
    %v9194 = vmax.f32 %v9146, %v9148
    %v9195 = vmax.f32 %v9147, %v9149
    %v9196 = vmax.f32 %v9150, %v9152
    %v9197 = vmax.f32 %v9151, %v9153
    %v9198 = vmax.f32 %v9154, %v9156
    %v9199 = vmax.f32 %v9155, %v9157
    %v9200 = vmax.f32 %v9158, %v9160
    %v9201 = vmax.f32 %v9159, %v9161
    %v9202 = vmax.f32 %v9162, %v9164
    %v9203 = vmax.f32 %v9163, %v9165
    %v9204 = vmax.f32 %v9166, %v9168
    %v9205 = vmax.f32 %v9167, %v9169
    %v9206 = vmax.f32 %v9170, %v9172
    %v9207 = vmax.f32 %v9171, %v9173
    %v9208 = vmax.f32 %v9176, %v9114
    %v9209 = vmax.f32 %v9177, %v9115
    %v9210 = vmax.f32 %v9178, %v9118
    %v9211 = vmax.f32 %v9179, %v9119
    %v9212 = vmax.f32 %v9180, %v9122
    %v9213 = vmax.f32 %v9181, %v9123
    %v9214 = vmax.f32 %v9182, %v9126
    %v9215 = vmax.f32 %v9183, %v9127
    %v9216 = vmax.f32 %v9184, %v9130
    %v9217 = vmax.f32 %v9185, %v9131
    %v9218 = vmax.f32 %v9186, %v9134
    %v9219 = vmax.f32 %v9187, %v9135
    %v9220 = vmax.f32 %v9188, %v9138
    %v9221 = vmax.f32 %v9189, %v9139
    %v9222 = vmax.f32 %v9190, %v9142
    %v9223 = vmax.f32 %v9191, %v9143
    %v9224 = vmax.f32 %v9192, %v9146
    %v9225 = vmax.f32 %v9193, %v9147
    %v9226 = vmax.f32 %v9194, %v9150
    %v9227 = vmax.f32 %v9195, %v9151
    %v9228 = vmax.f32 %v9196, %v9154
    %v9229 = vmax.f32 %v9197, %v9155
    %v9230 = vmax.f32 %v9198, %v9158
    %v9231 = vmax.f32 %v9199, %v9159
    %v9232 = vmax.f32 %v9200, %v9162
    %v9233 = vmax.f32 %v9201, %v9163
    %v9234 = vmax.f32 %v9202, %v9166
    %v9235 = vmax.f32 %v9203, %v9167
    %v9236 = vmax.f32 %v9204, %v9170
    %v9237 = vmax.f32 %v9205, %v9171
    %v9238 = vmax.f32 %v9206, %v9174
    %v9239 = vmax.f32 %v9207, %v9175
    %v9240 = vpack.c.bf16 %v9209, %v9208
    %v9241 = vpack.c.bf16 %v9211, %v9210
    %v9242 = vpack.c.bf16 %v9213, %v9212
    %v9243 = vpack.c.bf16 %v9215, %v9214
    %v9244 = vpack.c.bf16 %v9217, %v9216
    %v9245 = vpack.c.bf16 %v9219, %v9218
    %v9246 = vpack.c.bf16 %v9221, %v9220
    %v9247 = vpack.c.bf16 %v9223, %v9222
    %v9248 = vpack.c.bf16 %v9225, %v9224
    %v9249 = vpack.c.bf16 %v9227, %v9226
    %v9250 = vpack.c.bf16 %v9229, %v9228
    %v9251 = vpack.c.bf16 %v9231, %v9230
    %v9252 = vpack.c.bf16 %v9233, %v9232
    %v9253 = vpack.c.bf16 %v9235, %v9234
    %v9254 = vpack.c.bf16 %v9237, %v9236
    %v9255 = vpack.c.bf16 %v9239, %v9238
    %v9272 = vrot.slane %v9240, 7
    %v9273 = vrot.slane %v9241, 7
    %v9274 = vrot.slane %v9242, 7
    %v9275 = vrot.slane %v9243, 7
    %v9276 = vrot.slane %v9244, 7
    %v9277 = vrot.slane %v9245, 7
    %v9278 = vrot.slane %v9246, 7
    %v9279 = vrot.slane %v9247, 7
    %v9280 = vrot.slane %v9248, 7
    %v9281 = vrot.slane %v9249, 7
    %v9282 = vrot.slane %v9250, 7
    %v9283 = vrot.slane %v9251, 7
    %v9284 = vrot.slane %v9252, 7
    %v9285 = vrot.slane %v9253, 7
    %v9286 = vrot.slane %v9254, 7
    %v9287 = vrot.slane %v9255, 7
    %v9289 = vsel %vm5410, 0, %v9272
    %v9291 = vsel %vm5410, 0, %v9273
    %v9293 = vsel %vm5410, 0, %v9274
    %v9295 = vsel %vm5410, 0, %v9275
    %v9297 = vsel %vm5410, 0, %v9276
    %v9299 = vsel %vm5410, 0, %v9277
    %v9301 = vsel %vm5410, 0, %v9278
    %v9303 = vsel %vm5410, 0, %v9279
    %v9305 = vsel %vm5410, 0, %v9280
    %v9307 = vsel %vm5410, 0, %v9281
    %v9309 = vsel %vm5410, 0, %v9282
    %v9311 = vsel %vm5410, 0, %v9283
    %v9313 = vsel %vm5410, 0, %v9284
    %v9315 = vsel %vm5410, 0, %v9285
    %v9317 = vsel %vm5410, 0, %v9286
    %v9319 = vsel %vm5410, 0, %v9287
    %v9321 = vshrl.u32 %v9240, 16
    %v9323 = vrot.slane %v9321, 7
    %v9324 = vshll.u32 %v9240, 16
    %v9326 = vor.u32 %v9323, %v9324
    %v9328 = vshrl.u32 %v9241, 16
    %v9330 = vrot.slane %v9328, 7
    %v9331 = vshll.u32 %v9241, 16
    %v9333 = vor.u32 %v9330, %v9331
    %v9335 = vshrl.u32 %v9242, 16
    %v9337 = vrot.slane %v9335, 7
    %v9338 = vshll.u32 %v9242, 16
    %v9340 = vor.u32 %v9337, %v9338
    %v9342 = vshrl.u32 %v9243, 16
    %v9344 = vrot.slane %v9342, 7
    %v9345 = vshll.u32 %v9243, 16
    %v9347 = vor.u32 %v9344, %v9345
    %v9349 = vshrl.u32 %v9244, 16
    %v9351 = vrot.slane %v9349, 7
    %v9352 = vshll.u32 %v9244, 16
    %v9354 = vor.u32 %v9351, %v9352
    %v9356 = vshrl.u32 %v9245, 16
    %v9358 = vrot.slane %v9356, 7
    %v9359 = vshll.u32 %v9245, 16
    %v9361 = vor.u32 %v9358, %v9359
    %v9363 = vshrl.u32 %v9246, 16
    %v9365 = vrot.slane %v9363, 7
    %v9366 = vshll.u32 %v9246, 16
    %v9368 = vor.u32 %v9365, %v9366
    %v9370 = vshrl.u32 %v9247, 16
    %v9372 = vrot.slane %v9370, 7
    %v9373 = vshll.u32 %v9247, 16
    %v9375 = vor.u32 %v9372, %v9373
    %v9377 = vshrl.u32 %v9248, 16
    %v9379 = vrot.slane %v9377, 7
    %v9380 = vshll.u32 %v9248, 16
    %v9382 = vor.u32 %v9379, %v9380
    %v9384 = vshrl.u32 %v9249, 16
    %v9386 = vrot.slane %v9384, 7
    %v9387 = vshll.u32 %v9249, 16
    %v9389 = vor.u32 %v9386, %v9387
    %v9391 = vshrl.u32 %v9250, 16
    %v9393 = vrot.slane %v9391, 7
    %v9394 = vshll.u32 %v9250, 16
    %v9396 = vor.u32 %v9393, %v9394
    %v9398 = vshrl.u32 %v9251, 16
    %v9400 = vrot.slane %v9398, 7
    %v9401 = vshll.u32 %v9251, 16
    %v9403 = vor.u32 %v9400, %v9401
    %v9405 = vshrl.u32 %v9252, 16
    %v9407 = vrot.slane %v9405, 7
    %v9408 = vshll.u32 %v9252, 16
    %v9410 = vor.u32 %v9407, %v9408
    %v9412 = vshrl.u32 %v9253, 16
    %v9414 = vrot.slane %v9412, 7
    %v9415 = vshll.u32 %v9253, 16
    %v9417 = vor.u32 %v9414, %v9415
    %v9419 = vshrl.u32 %v9254, 16
    %v9421 = vrot.slane %v9419, 7
    %v9422 = vshll.u32 %v9254, 16
    %v9424 = vor.u32 %v9421, %v9422
    %v9426 = vshrl.u32 %v9255, 16
    %v9428 = vrot.slane %v9426, 7
    %v9429 = vshll.u32 %v9255, 16
    %v9431 = vor.u32 %v9428, %v9429
    %v9448 = vsel %vm5733, 0, %v9326
    %v9449 = vsel %vm5733, 0, %v9333
    %v9450 = vsel %vm5733, 0, %v9340
    %v9451 = vsel %vm5733, 0, %v9347
    %v9452 = vsel %vm5733, 0, %v9354
    %v9453 = vsel %vm5733, 0, %v9361
    %v9454 = vsel %vm5733, 0, %v9368
    %v9455 = vsel %vm5733, 0, %v9375
    %v9456 = vsel %vm5733, 0, %v9382
    %v9457 = vsel %vm5733, 0, %v9389
    %v9458 = vsel %vm5733, 0, %v9396
    %v9459 = vsel %vm5733, 0, %v9403
    %v9460 = vsel %vm5733, 0, %v9410
    %v9461 = vsel %vm5733, 0, %v9417
    %v9462 = vsel %vm5733, 0, %v9424
    %v9463 = vsel %vm5733, 0, %v9431
    %v9464 = vrot.slane %v9324, 1
    %v9465 = vor.u32 %v9321, %v9464
    %v9466 = vrot.slane %v9331, 1
    %v9467 = vor.u32 %v9328, %v9466
    %v9468 = vrot.slane %v9338, 1
    %v9469 = vor.u32 %v9335, %v9468
    %v9470 = vrot.slane %v9345, 1
    %v9471 = vor.u32 %v9342, %v9470
    %v9472 = vrot.slane %v9352, 1
    %v9473 = vor.u32 %v9349, %v9472
    %v9474 = vrot.slane %v9359, 1
    %v9475 = vor.u32 %v9356, %v9474
    %v9476 = vrot.slane %v9366, 1
    %v9477 = vor.u32 %v9363, %v9476
    %v9478 = vrot.slane %v9373, 1
    %v9479 = vor.u32 %v9370, %v9478
    %v9480 = vrot.slane %v9380, 1
    %v9481 = vor.u32 %v9377, %v9480
    %v9482 = vrot.slane %v9387, 1
    %v9483 = vor.u32 %v9384, %v9482
    %v9484 = vrot.slane %v9394, 1
    %v9485 = vor.u32 %v9391, %v9484
    %v9486 = vrot.slane %v9401, 1
    %v9487 = vor.u32 %v9398, %v9486
    %v9488 = vrot.slane %v9408, 1
    %v9489 = vor.u32 %v9405, %v9488
    %v9490 = vrot.slane %v9415, 1
    %v9491 = vor.u32 %v9412, %v9490
    %v9492 = vrot.slane %v9422, 1
    %v9493 = vor.u32 %v9419, %v9492
    %v9494 = vrot.slane %v9429, 1
    %v9495 = vor.u32 %v9426, %v9494
    %v9512 = vsel %vm5864, %v9465, 0
    %v9513 = vsel %vm5864, %v9467, 0
    %v9514 = vsel %vm5864, %v9469, 0
    %v9515 = vsel %vm5864, %v9471, 0
    %v9516 = vsel %vm5864, %v9473, 0
    %v9517 = vsel %vm5864, %v9475, 0
    %v9518 = vsel %vm5864, %v9477, 0
    %v9519 = vsel %vm5864, %v9479, 0
    %v9520 = vsel %vm5864, %v9481, 0
    %v9521 = vsel %vm5864, %v9483, 0
    %v9522 = vsel %vm5864, %v9485, 0
    %v9523 = vsel %vm5864, %v9487, 0
    %v9524 = vsel %vm5864, %v9489, 0
    %v9525 = vsel %vm5864, %v9491, 0
    %v9526 = vsel %vm5864, %v9493, 0
    %v9527 = vsel %vm5864, %v9495, 0
    %v9528 = vrot.slane %v9240, 1
    %v9529 = vrot.slane %v9241, 1
    %v9530 = vrot.slane %v9242, 1
    %v9531 = vrot.slane %v9243, 1
    %v9532 = vrot.slane %v9244, 1
    %v9533 = vrot.slane %v9245, 1
    %v9534 = vrot.slane %v9246, 1
    %v9535 = vrot.slane %v9247, 1
    %v9536 = vrot.slane %v9248, 1
    %v9537 = vrot.slane %v9249, 1
    %v9538 = vrot.slane %v9250, 1
    %v9539 = vrot.slane %v9251, 1
    %v9540 = vrot.slane %v9252, 1
    %v9541 = vrot.slane %v9253, 1
    %v9542 = vrot.slane %v9254, 1
    %v9543 = vrot.slane %v9255, 1
    %v9545 = vsel %vm5929, %v9528, 0
    %v9547 = vsel %vm5929, %v9529, 0
    %v9549 = vsel %vm5929, %v9530, 0
    %v9551 = vsel %vm5929, %v9531, 0
    %v9553 = vsel %vm5929, %v9532, 0
    %v9555 = vsel %vm5929, %v9533, 0
    %v9557 = vsel %vm5929, %v9534, 0
    %v9559 = vsel %vm5929, %v9535, 0
    %v9561 = vsel %vm5929, %v9536, 0
    %v9563 = vsel %vm5929, %v9537, 0
    %v9565 = vsel %vm5929, %v9538, 0
    %v9567 = vsel %vm5929, %v9539, 0
    %v9569 = vsel %vm5929, %v9540, 0
    %v9571 = vsel %vm5929, %v9541, 0
    %v9573 = vsel %vm5929, %v9542, 0
    %v9575 = vsel %vm5929, %v9543, 0
    %9592 = vrot.lane.b32.xlu0 %v9448, 64
    %v9593 = vpop.permute.xlu0 %9592
    %9594 = vrot.lane.b32.xlu0 %v9449, 64
    %v9595 = vpop.permute.xlu0 %9594
    %9596 = vrot.lane.b32.xlu0 %v9450, 64
    %v9597 = vpop.permute.xlu0 %9596
    %9598 = vrot.lane.b32.xlu0 %v9451, 64
    %v9599 = vpop.permute.xlu0 %9598
    %9600 = vrot.lane.b32.xlu0 %v9452, 64
    %v9601 = vpop.permute.xlu0 %9600
    %9602 = vrot.lane.b32.xlu0 %v9453, 64
    %v9603 = vpop.permute.xlu0 %9602
    %9604 = vrot.lane.b32.xlu0 %v9454, 64
    %v9605 = vpop.permute.xlu0 %9604
    %9606 = vrot.lane.b32.xlu0 %v9455, 64
    %v9607 = vpop.permute.xlu0 %9606
    %9608 = vrot.lane.b32.xlu0 %v9456, 64
    %v9609 = vpop.permute.xlu0 %9608
    %9610 = vrot.lane.b32.xlu0 %v9457, 64
    %v9611 = vpop.permute.xlu0 %9610
    %9612 = vrot.lane.b32.xlu0 %v9458, 64
    %v9613 = vpop.permute.xlu0 %9612
    %9614 = vrot.lane.b32.xlu0 %v9459, 64
    %v9615 = vpop.permute.xlu0 %9614
    %9616 = vrot.lane.b32.xlu0 %v9460, 64
    %v9617 = vpop.permute.xlu0 %9616
    %9618 = vrot.lane.b32.xlu0 %v9461, 64
    %v9619 = vpop.permute.xlu0 %9618
    %9620 = vrot.lane.b32.xlu0 %v9462, 64
    %v9621 = vpop.permute.xlu0 %9620
    %9622 = vrot.lane.b32.xlu0 %v9463, 64
    %v9623 = vpop.permute.xlu0 %9622
    %9640 = vrot.lane.b32.xlu0 %v9512, 64
    %v9641 = vpop.permute.xlu0 %9640
    %9642 = vrot.lane.b32.xlu0 %v9513, 64
    %v9643 = vpop.permute.xlu0 %9642
    %9644 = vrot.lane.b32.xlu0 %v9514, 64
    %v9645 = vpop.permute.xlu0 %9644
    %9646 = vrot.lane.b32.xlu0 %v9515, 64
    %v9647 = vpop.permute.xlu0 %9646
    %9648 = vrot.lane.b32.xlu0 %v9516, 64
    %v9649 = vpop.permute.xlu0 %9648
    %9650 = vrot.lane.b32.xlu0 %v9517, 64
    %v9651 = vpop.permute.xlu0 %9650
    %9652 = vrot.lane.b32.xlu0 %v9518, 64
    %v9653 = vpop.permute.xlu0 %9652
    %9654 = vrot.lane.b32.xlu0 %v9519, 64
    %v9655 = vpop.permute.xlu0 %9654
    %9656 = vrot.lane.b32.xlu0 %v9520, 64
    %v9657 = vpop.permute.xlu0 %9656
    %9658 = vrot.lane.b32.xlu0 %v9521, 64
    %v9659 = vpop.permute.xlu0 %9658
    %9660 = vrot.lane.b32.xlu0 %v9522, 64
    %v9661 = vpop.permute.xlu0 %9660
    %9662 = vrot.lane.b32.xlu0 %v9523, 64
    %v9663 = vpop.permute.xlu0 %9662
    %9664 = vrot.lane.b32.xlu0 %v9524, 64
    %v9665 = vpop.permute.xlu0 %9664
    %9666 = vrot.lane.b32.xlu0 %v9525, 64
    %v9667 = vpop.permute.xlu0 %9666
    %9668 = vrot.lane.b32.xlu0 %v9526, 64
    %v9669 = vpop.permute.xlu0 %9668
    %9670 = vrot.lane.b32.xlu0 %v9527, 64
    %v9671 = vpop.permute.xlu0 %9670
    %v9673 = vsel %vm2197, %v9289, %v9593
    %v9676 = vsel %vm2197, %v9291, %v9595
    %v9679 = vsel %vm2197, %v9293, %v9597
    %v9682 = vsel %vm2197, %v9295, %v9599
    %v9685 = vsel %vm2197, %v9297, %v9601
    %v9688 = vsel %vm2197, %v9299, %v9603
    %v9691 = vsel %vm2197, %v9301, %v9605
    %v9694 = vsel %vm2197, %v9303, %v9607
    %v9697 = vsel %vm2197, %v9305, %v9609
    %v9700 = vsel %vm2197, %v9307, %v9611
    %v9703 = vsel %vm2197, %v9309, %v9613
    %v9706 = vsel %vm2197, %v9311, %v9615
    %v9709 = vsel %vm2197, %v9313, %v9617
    %v9712 = vsel %vm2197, %v9315, %v9619
    %v9715 = vsel %vm2197, %v9317, %v9621
    %v9718 = vsel %vm2197, %v9319, %v9623
    %v9721 = vsel %vm2197, %v9240, %v9641
    %v9724 = vsel %vm2197, %v9241, %v9643
    %v9727 = vsel %vm2197, %v9242, %v9645
    %v9730 = vsel %vm2197, %v9243, %v9647
    %v9733 = vsel %vm2197, %v9244, %v9649
    %v9736 = vsel %vm2197, %v9245, %v9651
    %v9739 = vsel %vm2197, %v9246, %v9653
    %v9742 = vsel %vm2197, %v9247, %v9655
    %v9745 = vsel %vm2197, %v9248, %v9657
    %v9748 = vsel %vm2197, %v9249, %v9659
    %v9751 = vsel %vm2197, %v9250, %v9661
    %v9754 = vsel %vm2197, %v9251, %v9663
    %v9757 = vsel %vm2197, %v9252, %v9665
    %v9760 = vsel %vm2197, %v9253, %v9667
    %v9763 = vsel %vm2197, %v9254, %v9669
    %v9766 = vsel %vm2197, %v9255, %v9671
    %v9768 = vld [vmem:[%s3] sm:$0xff]
    %v9769 = vld [vmem:[%s3 + $0x8] sm:$0xff]
    %v9770 = vld [vmem:[%s3 + $0x10] sm:$0xff]
    %v9771 = vld [vmem:[%s3 + $0x18] sm:$0xff]
    %v9772 = vld [vmem:[%s3 + $0x20] sm:$0xff]
    %v9773 = vld [vmem:[%s3 + $0x28] sm:$0xff]
    %v9774 = vld [vmem:[%s3 + $0x30] sm:$0xff]
    %v9775 = vld [vmem:[%s3 + $0x38] sm:$0xff]
    %v9776 = vld [vmem:[%s3 + $0x40] sm:$0xff]
    %v9777 = vld [vmem:[%s3 + $0x48] sm:$0xff]
    %v9778 = vld [vmem:[%s3 + $0x50] sm:$0xff]
    %v9779 = vld [vmem:[%s3 + $0x58] sm:$0xff]
    %v9780 = vld [vmem:[%s3 + $0x60] sm:$0xff]
    %v9781 = vld [vmem:[%s3 + $0x68] sm:$0xff]
    %v9782 = vld [vmem:[%s3 + $0x70] sm:$0xff]
    %v9783 = vld [vmem:[%s3 + $0x78] sm:$0xff]
    %v9784 = vld [vmem:[%s3 + $0x80] sm:$0xff]
    %v9785 = vld [vmem:[%s3 + $0x88] sm:$0xff]
    %v9786 = vld [vmem:[%s3 + $0x90] sm:$0xff]
    %v9787 = vld [vmem:[%s3 + $0x98] sm:$0xff]
    %v9788 = vld [vmem:[%s3 + $0xa0] sm:$0xff]
    %v9789 = vld [vmem:[%s3 + $0xa8] sm:$0xff]
    %v9790 = vld [vmem:[%s3 + $0xb0] sm:$0xff]
    %v9791 = vld [vmem:[%s3 + $0xb8] sm:$0xff]
    %v9792 = vld [vmem:[%s3 + $0xc0] sm:$0xff]
    %v9793 = vld [vmem:[%s3 + $0xc8] sm:$0xff]
    %v9794 = vld [vmem:[%s3 + $0xd0] sm:$0xff]
    %v9795 = vld [vmem:[%s3 + $0xd8] sm:$0xff]
    %v9796 = vld [vmem:[%s3 + $0xe0] sm:$0xff]
    %v9797 = vld [vmem:[%s3 + $0xe8] sm:$0xff]
    %v9798 = vld [vmem:[%s3 + $0xf0] sm:$0xff]
    %v9799 = vld [vmem:[%s3 + $0xf8] sm:$0xff]
    %v9800 = vld [vmem:[%s3 + $0x100] sm:$0xff]
    %v9801 = vld [vmem:[%s3 + $0x108] sm:$0xff]
    %v9802 = vld [vmem:[%s3 + $0x110] sm:$0xff]
    %v9803 = vld [vmem:[%s3 + $0x118] sm:$0xff]
    %v9804 = vld [vmem:[%s3 + $0x120] sm:$0xff]
    %v9805 = vld [vmem:[%s3 + $0x128] sm:$0xff]
    %v9806 = vld [vmem:[%s3 + $0x130] sm:$0xff]
    %v9807 = vld [vmem:[%s3 + $0x138] sm:$0xff]
    %v9808 = vld [vmem:[%s3 + $0x140] sm:$0xff]
    %v9809 = vld [vmem:[%s3 + $0x148] sm:$0xff]
    %v9810 = vld [vmem:[%s3 + $0x150] sm:$0xff]
    %v9811 = vld [vmem:[%s3 + $0x158] sm:$0xff]
    %v9812 = vld [vmem:[%s3 + $0x160] sm:$0xff]
    %v9813 = vld [vmem:[%s3 + $0x168] sm:$0xff]
    %v9814 = vld [vmem:[%s3 + $0x170] sm:$0xff]
    %v9815 = vld [vmem:[%s3 + $0x178] sm:$0xff]
    %v9816 = vld [vmem:[%s3 + $0x180] sm:$0xff]
    %v9817 = vld [vmem:[%s3 + $0x188] sm:$0xff]
    %v9818 = vld [vmem:[%s3 + $0x190] sm:$0xff]
    %v9819 = vld [vmem:[%s3 + $0x198] sm:$0xff]
    %v9820 = vld [vmem:[%s3 + $0x1a0] sm:$0xff]
    %v9821 = vld [vmem:[%s3 + $0x1a8] sm:$0xff]
    %v9822 = vld [vmem:[%s3 + $0x1b0] sm:$0xff]
    %v9823 = vld [vmem:[%s3 + $0x1b8] sm:$0xff]
    %v9824 = vld [vmem:[%s3 + $0x1c0] sm:$0xff]
    %v9825 = vld [vmem:[%s3 + $0x1c8] sm:$0xff]
    %v9826 = vld [vmem:[%s3 + $0x1d0] sm:$0xff]
    %v9827 = vld [vmem:[%s3 + $0x1d8] sm:$0xff]
    %v9828 = vld [vmem:[%s3 + $0x1e0] sm:$0xff]
    %v9829 = vld [vmem:[%s3 + $0x1e8] sm:$0xff]
    %v9830 = vld [vmem:[%s3 + $0x1f0] sm:$0xff]
    %v9831 = vld [vmem:[%s3 + $0x1f8] sm:$0xff]
    %v9832 = vld [vmem:[%s3 + $0x200] sm:$0xff]
    %v9833 = vld [vmem:[%s3 + $0x208] sm:$0xff]
    %v9834 = vld [vmem:[%s3 + $0x210] sm:$0xff]
    %v9835 = vld [vmem:[%s3 + $0x218] sm:$0xff]
    %v9836 = vld [vmem:[%s3 + $0x220] sm:$0xff]
    %v9837 = vld [vmem:[%s3 + $0x228] sm:$0xff]
    %v9838 = vld [vmem:[%s3 + $0x230] sm:$0xff]
    %v9839 = vld [vmem:[%s3 + $0x238] sm:$0xff]
    %v9840 = vld [vmem:[%s3 + $0x240] sm:$0xff]
    %v9841 = vld [vmem:[%s3 + $0x248] sm:$0xff]
    %v9842 = vld [vmem:[%s3 + $0x250] sm:$0xff]
    %v9843 = vld [vmem:[%s3 + $0x258] sm:$0xff]
    %v9844 = vld [vmem:[%s3 + $0x260] sm:$0xff]
    %v9845 = vld [vmem:[%s3 + $0x268] sm:$0xff]
    %v9846 = vld [vmem:[%s3 + $0x270] sm:$0xff]
    %v9847 = vld [vmem:[%s3 + $0x278] sm:$0xff]
    %v9848 = vld [vmem:[%s3 + $0x280] sm:$0xff]
    %v9849 = vld [vmem:[%s3 + $0x288] sm:$0xff]
    %v9850 = vld [vmem:[%s3 + $0x290] sm:$0xff]
    %v9851 = vld [vmem:[%s3 + $0x298] sm:$0xff]
    %v9852 = vld [vmem:[%s3 + $0x2a0] sm:$0xff]
    %v9853 = vld [vmem:[%s3 + $0x2a8] sm:$0xff]
    %v9854 = vld [vmem:[%s3 + $0x2b0] sm:$0xff]
    %v9855 = vld [vmem:[%s3 + $0x2b8] sm:$0xff]
    %v9856 = vld [vmem:[%s3 + $0x2c0] sm:$0xff]
    %v9857 = vld [vmem:[%s3 + $0x2c8] sm:$0xff]
    %v9858 = vld [vmem:[%s3 + $0x2d0] sm:$0xff]
    %v9859 = vld [vmem:[%s3 + $0x2d8] sm:$0xff]
    %v9860 = vld [vmem:[%s3 + $0x2e0] sm:$0xff]
    %v9861 = vld [vmem:[%s3 + $0x2e8] sm:$0xff]
    %v9862 = vld [vmem:[%s3 + $0x2f0] sm:$0xff]
    %v9863 = vld [vmem:[%s3 + $0x2f8] sm:$0xff]
    %v9864 = vld [vmem:[%s3 + $0x300] sm:$0xff]
    %v9865 = vld [vmem:[%s3 + $0x308] sm:$0xff]
    %v9866 = vld [vmem:[%s3 + $0x310] sm:$0xff]
    %v9867 = vld [vmem:[%s3 + $0x318] sm:$0xff]
    %v9868 = vld [vmem:[%s3 + $0x320] sm:$0xff]
    %v9869 = vld [vmem:[%s3 + $0x328] sm:$0xff]
    %v9870 = vld [vmem:[%s3 + $0x330] sm:$0xff]
    %v9871 = vld [vmem:[%s3 + $0x338] sm:$0xff]
    %v9872 = vld [vmem:[%s3 + $0x340] sm:$0xff]
    %v9873 = vld [vmem:[%s3 + $0x348] sm:$0xff]
    %v9874 = vld [vmem:[%s3 + $0x350] sm:$0xff]
    %v9875 = vld [vmem:[%s3 + $0x358] sm:$0xff]
    %v9876 = vld [vmem:[%s3 + $0x360] sm:$0xff]
    %v9877 = vld [vmem:[%s3 + $0x368] sm:$0xff]
    %v9878 = vld [vmem:[%s3 + $0x370] sm:$0xff]
    %v9879 = vld [vmem:[%s3 + $0x378] sm:$0xff]
    %v9880 = vld [vmem:[%s3 + $0x380] sm:$0xff]
    %v9881 = vld [vmem:[%s3 + $0x388] sm:$0xff]
    %v9882 = vld [vmem:[%s3 + $0x390] sm:$0xff]
    %v9883 = vld [vmem:[%s3 + $0x398] sm:$0xff]
    %v9884 = vld [vmem:[%s3 + $0x3a0] sm:$0xff]
    %v9885 = vld [vmem:[%s3 + $0x3a8] sm:$0xff]
    %v9886 = vld [vmem:[%s3 + $0x3b0] sm:$0xff]
    %v9887 = vld [vmem:[%s3 + $0x3b8] sm:$0xff]
    %v9888 = vld [vmem:[%s3 + $0x3c0] sm:$0xff]
    %v9889 = vld [vmem:[%s3 + $0x3c8] sm:$0xff]
    %v9890 = vld [vmem:[%s3 + $0x3d0] sm:$0xff]
    %v9891 = vld [vmem:[%s3 + $0x3d8] sm:$0xff]
    %v9892 = vld [vmem:[%s3 + $0x3e0] sm:$0xff]
    %v9893 = vld [vmem:[%s3 + $0x3e8] sm:$0xff]
    %v9894 = vld [vmem:[%s3 + $0x3f0] sm:$0xff]
    %v9895 = vld [vmem:[%s3 + $0x3f8] sm:$0xff]
    %v9896 = vld [vmem:[%s3 + $0x400] sm:$0xff]
    %v9897 = vld [vmem:[%s3 + $0x408] sm:$0xff]
    %v9898 = vld [vmem:[%s3 + $0x410] sm:$0xff]
    %v9899 = vld [vmem:[%s3 + $0x418] sm:$0xff]
    %v9900 = vld [vmem:[%s3 + $0x420] sm:$0xff]
    %v9901 = vld [vmem:[%s3 + $0x428] sm:$0xff]
    %v9902 = vld [vmem:[%s3 + $0x430] sm:$0xff]
    %v9903 = vld [vmem:[%s3 + $0x438] sm:$0xff]
    %v9904 = vld [vmem:[%s3 + $0x440] sm:$0xff]
    %v9905 = vld [vmem:[%s3 + $0x448] sm:$0xff]
    %v9906 = vld [vmem:[%s3 + $0x450] sm:$0xff]
    %v9907 = vld [vmem:[%s3 + $0x458] sm:$0xff]
    %v9908 = vld [vmem:[%s3 + $0x460] sm:$0xff]
    %v9909 = vld [vmem:[%s3 + $0x468] sm:$0xff]
    %v9910 = vld [vmem:[%s3 + $0x470] sm:$0xff]
    %v9911 = vld [vmem:[%s3 + $0x478] sm:$0xff]
    %v9912 = vld [vmem:[%s3 + $0x480] sm:$0xff]
    %v9913 = vld [vmem:[%s3 + $0x488] sm:$0xff]
    %v9914 = vld [vmem:[%s3 + $0x490] sm:$0xff]
    %v9915 = vld [vmem:[%s3 + $0x498] sm:$0xff]
    %v9916 = vld [vmem:[%s3 + $0x4a0] sm:$0xff]
    %v9917 = vld [vmem:[%s3 + $0x4a8] sm:$0xff]
    %v9918 = vld [vmem:[%s3 + $0x4b0] sm:$0xff]
    %v9919 = vld [vmem:[%s3 + $0x4b8] sm:$0xff]
    %v9920 = vld [vmem:[%s3 + $0x4c0] sm:$0xff]
    %v9921 = vld [vmem:[%s3 + $0x4c8] sm:$0xff]
    %v9922 = vld [vmem:[%s3 + $0x4d0] sm:$0xff]
    %v9923 = vld [vmem:[%s3 + $0x4d8] sm:$0xff]
    %v9924 = vld [vmem:[%s3 + $0x4e0] sm:$0xff]
    %v9925 = vld [vmem:[%s3 + $0x4e8] sm:$0xff]
    %v9926 = vld [vmem:[%s3 + $0x4f0] sm:$0xff]
    %v9927 = vld [vmem:[%s3 + $0x4f8] sm:$0xff]
    %v9928 = vld [vmem:[%s3 + $0x500] sm:$0xff]
    %v9929 = vld [vmem:[%s3 + $0x508] sm:$0xff]
    %v9930 = vld [vmem:[%s3 + $0x510] sm:$0xff]
    %v9931 = vld [vmem:[%s3 + $0x518] sm:$0xff]
    %v9932 = vld [vmem:[%s3 + $0x520] sm:$0xff]
    %v9933 = vld [vmem:[%s3 + $0x528] sm:$0xff]
    %v9934 = vld [vmem:[%s3 + $0x530] sm:$0xff]
    %v9935 = vld [vmem:[%s3 + $0x538] sm:$0xff]
    %v9936 = vld [vmem:[%s3 + $0x540] sm:$0xff]
    %v9937 = vld [vmem:[%s3 + $0x548] sm:$0xff]
    %v9938 = vld [vmem:[%s3 + $0x550] sm:$0xff]
    %v9939 = vld [vmem:[%s3 + $0x558] sm:$0xff]
    %v9940 = vld [vmem:[%s3 + $0x560] sm:$0xff]
    %v9941 = vld [vmem:[%s3 + $0x568] sm:$0xff]
    %v9942 = vld [vmem:[%s3 + $0x570] sm:$0xff]
    %v9943 = vld [vmem:[%s3 + $0x578] sm:$0xff]
    %v9944 = vld [vmem:[%s3 + $0x580] sm:$0xff]
    %v9945 = vld [vmem:[%s3 + $0x588] sm:$0xff]
    %v9946 = vld [vmem:[%s3 + $0x590] sm:$0xff]
    %v9947 = vld [vmem:[%s3 + $0x598] sm:$0xff]
    %v9948 = vld [vmem:[%s3 + $0x5a0] sm:$0xff]
    %v9949 = vld [vmem:[%s3 + $0x5a8] sm:$0xff]
    %v9950 = vld [vmem:[%s3 + $0x5b0] sm:$0xff]
    %v9951 = vld [vmem:[%s3 + $0x5b8] sm:$0xff]
    %v9992 = vunpack.c.l.b16 %v9768
    %v9993 = vunpack.c.h.b16 %v9768
    %v9994 = vunpack.c.l.b16 %v9769
    %v9995 = vunpack.c.h.b16 %v9769
    %v9996 = vunpack.c.l.b16 %v9770
    %v9997 = vunpack.c.h.b16 %v9770
    %v9998 = vunpack.c.l.b16 %v9771
    %v9999 = vunpack.c.h.b16 %v9771
    %v10000 = vunpack.c.l.b16 %v9772
    %v10001 = vunpack.c.h.b16 %v9772
    %v10002 = vunpack.c.l.b16 %v9773
    %v10003 = vunpack.c.h.b16 %v9773
    %v10004 = vunpack.c.l.b16 %v9774
    %v10005 = vunpack.c.h.b16 %v9774
    %v10006 = vunpack.c.l.b16 %v9775
    %v10007 = vunpack.c.h.b16 %v9775
    %v10008 = vunpack.c.l.b16 %v9776
    %v10009 = vunpack.c.h.b16 %v9776
    %v10010 = vunpack.c.l.b16 %v9777
    %v10011 = vunpack.c.h.b16 %v9777
    %v10012 = vunpack.c.l.b16 %v9778
    %v10013 = vunpack.c.h.b16 %v9778
    %v10014 = vunpack.c.l.b16 %v9779
    %v10015 = vunpack.c.h.b16 %v9779
    %v10016 = vunpack.c.l.b16 %v9780
    %v10017 = vunpack.c.h.b16 %v9780
    %v10018 = vunpack.c.l.b16 %v9781
    %v10019 = vunpack.c.h.b16 %v9781
    %v10020 = vunpack.c.l.b16 %v9782
    %v10021 = vunpack.c.h.b16 %v9782
    %v10022 = vunpack.c.l.b16 %v9783
    %v10023 = vunpack.c.h.b16 %v9783
    %v10024 = vunpack.c.l.b16 %v9784
    %v10025 = vunpack.c.h.b16 %v9784
    %v10026 = vunpack.c.l.b16 %v9785
    %v10027 = vunpack.c.h.b16 %v9785
    %v10028 = vunpack.c.l.b16 %v9786
    %v10029 = vunpack.c.h.b16 %v9786
    %v10030 = vunpack.c.l.b16 %v9787
    %v10031 = vunpack.c.h.b16 %v9787
    %v10032 = vunpack.c.l.b16 %v9788
    %v10033 = vunpack.c.h.b16 %v9788
    %v10034 = vunpack.c.l.b16 %v9789
    %v10035 = vunpack.c.h.b16 %v9789
    %v10036 = vunpack.c.l.b16 %v9790
    %v10037 = vunpack.c.h.b16 %v9790
    %v10038 = vunpack.c.l.b16 %v9791
    %v10039 = vunpack.c.h.b16 %v9791
    %v10040 = vunpack.c.l.b16 %v9792
    %v10041 = vunpack.c.h.b16 %v9792
    %v10042 = vunpack.c.l.b16 %v9793
    %v10043 = vunpack.c.h.b16 %v9793
    %v10044 = vunpack.c.l.b16 %v9794
    %v10045 = vunpack.c.h.b16 %v9794
    %v10046 = vunpack.c.l.b16 %v9795
    %v10047 = vunpack.c.h.b16 %v9795
    %v10048 = vunpack.c.l.b16 %v9796
    %v10049 = vunpack.c.h.b16 %v9796
    %v10050 = vunpack.c.l.b16 %v9797
    %v10051 = vunpack.c.h.b16 %v9797
    %v10052 = vunpack.c.l.b16 %v9798
    %v10053 = vunpack.c.h.b16 %v9798
    %v10054 = vunpack.c.l.b16 %v9799
    %v10055 = vunpack.c.h.b16 %v9799
    %v10056 = vunpack.c.l.b16 %v9800
    %v10057 = vunpack.c.h.b16 %v9800
    %v10058 = vunpack.c.l.b16 %v9801
    %v10059 = vunpack.c.h.b16 %v9801
    %v10060 = vunpack.c.l.b16 %v9802
    %v10061 = vunpack.c.h.b16 %v9802
    %v10062 = vunpack.c.l.b16 %v9803
    %v10063 = vunpack.c.h.b16 %v9803
    %v10064 = vunpack.c.l.b16 %v9804
    %v10065 = vunpack.c.h.b16 %v9804
    %v10066 = vunpack.c.l.b16 %v9805
    %v10067 = vunpack.c.h.b16 %v9805
    %v10068 = vunpack.c.l.b16 %v9806
    %v10069 = vunpack.c.h.b16 %v9806
    %v10070 = vunpack.c.l.b16 %v9807
    %v10071 = vunpack.c.h.b16 %v9807
    %v10072 = vpack.c.b16 %v9994, %v9992
    %v10073 = vpack.c.b16 %v9995, %v9993
    %v10074 = vpack.c.b16 %v9998, %v9996
    %v10075 = vpack.c.b16 %v9999, %v9997
    %v10076 = vpack.c.b16 %v10002, %v10000
    %v10077 = vpack.c.b16 %v10003, %v10001
    %v10078 = vpack.c.b16 %v10006, %v10004
    %v10079 = vpack.c.b16 %v10007, %v10005
    %v10080 = vpack.c.b16 %v10010, %v10008
    %v10081 = vpack.c.b16 %v10011, %v10009
    %v10082 = vpack.c.b16 %v10014, %v10012
    %v10083 = vpack.c.b16 %v10015, %v10013
    %v10084 = vpack.c.b16 %v10018, %v10016
    %v10085 = vpack.c.b16 %v10019, %v10017
    %v10086 = vpack.c.b16 %v10022, %v10020
    %v10087 = vpack.c.b16 %v10023, %v10021
    %v10088 = vpack.c.b16 %v10026, %v10024
    %v10089 = vpack.c.b16 %v10027, %v10025
    %v10090 = vpack.c.b16 %v10030, %v10028
    %v10091 = vpack.c.b16 %v10031, %v10029
    %v10092 = vpack.c.b16 %v10034, %v10032
    %v10093 = vpack.c.b16 %v10035, %v10033
    %v10094 = vpack.c.b16 %v10038, %v10036
    %v10095 = vpack.c.b16 %v10039, %v10037
    %v10096 = vpack.c.b16 %v10042, %v10040
    %v10097 = vpack.c.b16 %v10043, %v10041
    %v10098 = vpack.c.b16 %v10046, %v10044
    %v10099 = vpack.c.b16 %v10047, %v10045
    %v10100 = vpack.c.b16 %v10050, %v10048
    %v10101 = vpack.c.b16 %v10051, %v10049
    %v10102 = vpack.c.b16 %v10054, %v10052
    %v10103 = vpack.c.b16 %v10055, %v10053
    %v10104 = vpack.c.b16 %v10058, %v10056
    %v10105 = vpack.c.b16 %v10059, %v10057
    %v10106 = vpack.c.b16 %v10062, %v10060
    %v10107 = vpack.c.b16 %v10063, %v10061
    %v10108 = vpack.c.b16 %v10066, %v10064
    %v10109 = vpack.c.b16 %v10067, %v10065
    %v10110 = vpack.c.b16 %v10070, %v10068
    %v10111 = vpack.c.b16 %v10071, %v10069
    %v10152 = vsel %vm2197, %v9545, 0
    %v10154 = vsel %vm2197, %v9547, 0
    %v10156 = vsel %vm2197, %v9549, 0
    %v10158 = vsel %vm2197, %v9551, 0
    %v10160 = vsel %vm2197, %v9553, 0
    %v10162 = vsel %vm2197, %v9555, 0
    %v10164 = vsel %vm2197, %v9557, 0
    %v10166 = vsel %vm2197, %v9559, 0
    %v10168 = vsel %vm2197, %v9561, 0
    %v10170 = vsel %vm2197, %v9563, 0
    %v10172 = vsel %vm2197, %v9565, 0
    %v10174 = vsel %vm2197, %v9567, 0
    %v10176 = vsel %vm2197, %v9569, 0
    %v10178 = vsel %vm2197, %v9571, 0
    %v10180 = vsel %vm2197, %v9573, 0
    %v10182 = vsel %vm2197, %v9575, 0
    %10184 = vmatprep.subr.bf16.mxu0 %v10073
    %10185 = vmatpush1.bf16.msra.mxu0 %v10072
    %10186 = vmatprep.subr.bf16.mxu0 %v10075
    %10187 = vmatpush1.bf16.msra.mxu0 %v10074
    %10188 = vmatprep.subr.bf16.mxu0 %v10077
    %10189 = vmatpush1.bf16.msra.mxu0 %v10076
    %10190 = vmatprep.subr.bf16.mxu0 %v10079
    %10191 = vmatpush1.bf16.msra.mxu0 %v10078
    %10192 = vmatprep.subr.bf16.mxu0 %v10081
    %10193 = vmatpush1.bf16.msra.mxu0 %v10080
    %10194 = vmatprep.subr.bf16.mxu0 %v10083
    %10195 = vmatpush1.bf16.msra.mxu0 %v10082
    %10196 = vmatprep.subr.bf16.mxu0 %v10085
    %10197 = vmatpush1.bf16.msra.mxu0 %v10084
    %10198 = vmatprep.subr.bf16.mxu0 %v10087
    %10199 = vmatpush1.bf16.msra.mxu0 %v10086
    %10200 = vmatprep.subr.bf16.mxu0 %v10089
    %10201 = vmatpush1.bf16.msra.mxu0 %v10088
    %10202 = vmatprep.subr.bf16.mxu0 %v10091
    %10203 = vmatpush1.bf16.msra.mxu0 %v10090
    %10204 = vmatprep.subr.bf16.mxu0 %v10093
    %10205 = vmatpush1.bf16.msra.mxu0 %v10092
    %10206 = vmatprep.subr.bf16.mxu0 %v10095
    %10207 = vmatpush1.bf16.msra.mxu0 %v10094
    %10208 = vmatprep.subr.bf16.mxu0 %v10097
    %10209 = vmatpush1.bf16.msra.mxu0 %v10096
    %10210 = vmatprep.subr.bf16.mxu0 %v10099
    %10211 = vmatpush1.bf16.msra.mxu0 %v10098
    %10212 = vmatprep.subr.bf16.mxu0 %v10101
    %10213 = vmatpush1.bf16.msra.mxu0 %v10100
    %10214 = vmatprep.subr.bf16.mxu0 %v10103
    %10215 = vmatpush1.bf16.msra.mxu0 %v10102
    %10216 = vmatprep.mubr.bf16.mxu0 %v9721
    %10217 = vmatmul.mubr.bf16.gmra.mrb[0].mxu0 %v9673
    %v10218 = vpop.f32.mrb[0].mxu0
    %v10219 = vadd.f32 0.0, %v10218
    %v10220 = vpop.f32.mrb[0].mxu0
    %v10221 = vadd.f32 0.0, %v10220
    %v10222 = vpop.f32.mrb[0].mxu0
    %v10223 = vadd.f32 0.0, %v10222
    %v10224 = vpop.f32.mrb[0].mxu0
    %v10225 = vadd.f32 0.0, %v10224
    %10226 = vmatprep.mubr.bf16.mxu0 %v9724
    %10227 = vmatmul.mubr.bf16.gmra.mrb[0].mxu0 %v9676
    %v10228 = vpop.f32.mrb[0].mxu0
    %v10229 = vadd.f32 0.0, %v10228
    %v10230 = vpop.f32.mrb[0].mxu0
    %v10231 = vadd.f32 0.0, %v10230
    %v10232 = vpop.f32.mrb[0].mxu0
    %v10233 = vadd.f32 0.0, %v10232
    %v10234 = vpop.f32.mrb[0].mxu0
    %v10235 = vadd.f32 0.0, %v10234
    %10236 = vmatprep.mubr.bf16.mxu0 %v9727
    %10237 = vmatmul.mubr.bf16.gmra.mrb[0].mxu0 %v9679
    %v10238 = vpop.f32.mrb[0].mxu0
    %v10239 = vadd.f32 0.0, %v10238
    %v10240 = vpop.f32.mrb[0].mxu0
    %v10241 = vadd.f32 0.0, %v10240
    %v10242 = vpop.f32.mrb[0].mxu0
    %v10243 = vadd.f32 0.0, %v10242
    %v10244 = vpop.f32.mrb[0].mxu0
    %v10245 = vadd.f32 0.0, %v10244
    %10246 = vmatprep.mubr.bf16.mxu0 %v9730
    %10247 = vmatmul.mubr.bf16.gmra.mrb[0].mxu0 %v9682
    %v10248 = vpop.f32.mrb[0].mxu0
    %v10249 = vadd.f32 0.0, %v10248
    %v10250 = vpop.f32.mrb[0].mxu0
    %v10251 = vadd.f32 0.0, %v10250
    %v10252 = vpop.f32.mrb[0].mxu0
    %v10253 = vadd.f32 0.0, %v10252
    %v10254 = vpop.f32.mrb[0].mxu0
    %v10255 = vadd.f32 0.0, %v10254
    %10256 = vmatprep.mubr.bf16.mxu0 %v9733
    %10257 = vmatmul.mubr.bf16.gmra.mrb[0].mxu0 %v9685
    %v10258 = vpop.f32.mrb[0].mxu0
    %v10259 = vadd.f32 0.0, %v10258
    %v10260 = vpop.f32.mrb[0].mxu0
    %v10261 = vadd.f32 0.0, %v10260
    %v10262 = vpop.f32.mrb[0].mxu0
    %v10263 = vadd.f32 0.0, %v10262
    %v10264 = vpop.f32.mrb[0].mxu0
    %v10265 = vadd.f32 0.0, %v10264
    %10266 = vmatprep.mubr.bf16.mxu0 %v9736
    %10267 = vmatmul.mubr.bf16.gmra.mrb[0].mxu0 %v9688
    %v10268 = vpop.f32.mrb[0].mxu0
    %v10269 = vadd.f32 0.0, %v10268
    %v10270 = vpop.f32.mrb[0].mxu0
    %v10271 = vadd.f32 0.0, %v10270
    %v10272 = vpop.f32.mrb[0].mxu0
    %v10273 = vadd.f32 0.0, %v10272
    %v10274 = vpop.f32.mrb[0].mxu0
    %v10275 = vadd.f32 0.0, %v10274
    %10276 = vmatprep.mubr.bf16.mxu0 %v9739
    %10277 = vmatmul.mubr.bf16.gmra.mrb[0].mxu0 %v9691
    %v10278 = vpop.f32.mrb[0].mxu0
    %v10279 = vadd.f32 0.0, %v10278
    %v10280 = vpop.f32.mrb[0].mxu0
    %v10281 = vadd.f32 0.0, %v10280
    %v10282 = vpop.f32.mrb[0].mxu0
    %v10283 = vadd.f32 0.0, %v10282
    %v10284 = vpop.f32.mrb[0].mxu0
    %v10285 = vadd.f32 0.0, %v10284
    %10286 = vmatprep.mubr.bf16.mxu0 %v9742
    %10287 = vmatmul.mubr.bf16.gmra.mrb[0].mxu0 %v9694
    %v10288 = vpop.f32.mrb[0].mxu0
    %v10289 = vadd.f32 0.0, %v10288
    %v10290 = vpop.f32.mrb[0].mxu0
    %v10291 = vadd.f32 0.0, %v10290
    %v10292 = vpop.f32.mrb[0].mxu0
    %v10293 = vadd.f32 0.0, %v10292
    %v10294 = vpop.f32.mrb[0].mxu0
    %v10295 = vadd.f32 0.0, %v10294
    %10296 = vmatprep.mubr.bf16.mxu0 %v9745
    %10297 = vmatmul.mubr.bf16.gmra.mrb[0].mxu0 %v9697
    %v10298 = vpop.f32.mrb[0].mxu0
    %v10299 = vadd.f32 0.0, %v10298
    %v10300 = vpop.f32.mrb[0].mxu0
    %v10301 = vadd.f32 0.0, %v10300
    %v10302 = vpop.f32.mrb[0].mxu0
    %v10303 = vadd.f32 0.0, %v10302
    %v10304 = vpop.f32.mrb[0].mxu0
    %v10305 = vadd.f32 0.0, %v10304
    %10306 = vmatprep.mubr.bf16.mxu0 %v9748
    %10307 = vmatmul.mubr.bf16.gmra.mrb[0].mxu0 %v9700
    %v10308 = vpop.f32.mrb[0].mxu0
    %v10309 = vadd.f32 0.0, %v10308
    %v10310 = vpop.f32.mrb[0].mxu0
    %v10311 = vadd.f32 0.0, %v10310
    %v10312 = vpop.f32.mrb[0].mxu0
    %v10313 = vadd.f32 0.0, %v10312
    %v10314 = vpop.f32.mrb[0].mxu0
    %v10315 = vadd.f32 0.0, %v10314
    %10316 = vmatprep.mubr.bf16.mxu0 %v9751
    %10317 = vmatmul.mubr.bf16.gmra.mrb[0].mxu0 %v9703
    %v10318 = vpop.f32.mrb[0].mxu0
    %v10319 = vadd.f32 0.0, %v10318
    %v10320 = vpop.f32.mrb[0].mxu0
    %v10321 = vadd.f32 0.0, %v10320
    %v10322 = vpop.f32.mrb[0].mxu0
    %v10323 = vadd.f32 0.0, %v10322
    %v10324 = vpop.f32.mrb[0].mxu0
    %v10325 = vadd.f32 0.0, %v10324
    %10326 = vmatprep.mubr.bf16.mxu0 %v9754
    %10327 = vmatmul.mubr.bf16.gmra.mrb[0].mxu0 %v9706
    %v10328 = vpop.f32.mrb[0].mxu0
    %v10329 = vadd.f32 0.0, %v10328
    %v10330 = vpop.f32.mrb[0].mxu0
    %v10331 = vadd.f32 0.0, %v10330
    %v10332 = vpop.f32.mrb[0].mxu0
    %v10333 = vadd.f32 0.0, %v10332
    %v10334 = vpop.f32.mrb[0].mxu0
    %v10335 = vadd.f32 0.0, %v10334
    %10336 = vmatprep.mubr.bf16.mxu0 %v9757
    %10337 = vmatmul.mubr.bf16.gmra.mrb[0].mxu0 %v9709
    %v10338 = vpop.f32.mrb[0].mxu0
    %v10339 = vadd.f32 0.0, %v10338
    %v10340 = vpop.f32.mrb[0].mxu0
    %v10341 = vadd.f32 0.0, %v10340
    %v10342 = vpop.f32.mrb[0].mxu0
    %v10343 = vadd.f32 0.0, %v10342
    %v10344 = vpop.f32.mrb[0].mxu0
    %v10345 = vadd.f32 0.0, %v10344
    %10346 = vmatprep.mubr.bf16.mxu0 %v9760
    %10347 = vmatmul.mubr.bf16.gmra.mrb[0].mxu0 %v9712
    %v10348 = vpop.f32.mrb[0].mxu0
    %v10349 = vadd.f32 0.0, %v10348
    %v10350 = vpop.f32.mrb[0].mxu0
    %v10351 = vadd.f32 0.0, %v10350
    %v10352 = vpop.f32.mrb[0].mxu0
    %v10353 = vadd.f32 0.0, %v10352
    %v10354 = vpop.f32.mrb[0].mxu0
    %v10355 = vadd.f32 0.0, %v10354
    %10356 = vmatprep.mubr.bf16.mxu0 %v9763
    %10357 = vmatmul.mubr.bf16.gmra.mrb[0].mxu0 %v9715
    %v10358 = vpop.f32.mrb[0].mxu0
    %v10359 = vadd.f32 0.0, %v10358
    %v10360 = vpop.f32.mrb[0].mxu0
    %v10361 = vadd.f32 0.0, %v10360
    %v10362 = vpop.f32.mrb[0].mxu0
    %v10363 = vadd.f32 0.0, %v10362
    %v10364 = vpop.f32.mrb[0].mxu0
    %v10365 = vadd.f32 0.0, %v10364
    %10366 = vmatprep.mubr.bf16.mxu0 %v9766
    %10367 = vmatmul.mubr.bf16.gmra.mrb[0].mxu0 %v9718
    %v10368 = vpop.f32.mrb[0].mxu0
    %v10369 = vadd.f32 0.0, %v10368
    %v10370 = vpop.f32.mrb[0].mxu0
    %v10371 = vadd.f32 0.0, %v10370
    %v10372 = vpop.f32.mrb[0].mxu0
    %v10373 = vadd.f32 0.0, %v10372
    %v10374 = vpop.f32.mrb[0].mxu0
    %v10375 = vadd.f32 0.0, %v10374
    %10376 = vdwg.mxu0
    %10377 = vmatprep.subr.bf16.mxu0 %v10105
    %10378 = vmatpush1.bf16.msra.mxu0 %v10104
    %10379 = vmatprep.subr.bf16.mxu0 %v10107
    %10380 = vmatpush1.bf16.msra.mxu0 %v10106
    %10381 = vmatprep.subr.bf16.mxu0 %v10109
    %10382 = vmatpush1.bf16.msra.mxu0 %v10108
    %10383 = vmatprep.subr.bf16.mxu0 %v10111
    %10384 = vmatpush1.bf16.msra.mxu0 %v10110
    %10385 = vmatprep.subr.bf16.mxu0 0
    %10386 = vmatpush1.bf16.msra.mxu0 0
    %10387 = vmatprep.subr.bf16.mxu0 0
    %10388 = vmatpush1.bf16.msra.mxu0 0
    %10389 = vmatprep.subr.bf16.mxu0 0
    %10390 = vmatpush1.bf16.msra.mxu0 0
    %10391 = vmatprep.subr.bf16.mxu0 0
    %10392 = vmatpush1.bf16.msra.mxu0 0
    %10393 = vmatprep.subr.bf16.mxu0 0
    %10394 = vmatpush1.bf16.msra.mxu0 0
    %10395 = vmatprep.subr.bf16.mxu0 0
    %10396 = vmatpush1.bf16.msra.mxu0 0
    %10397 = vmatprep.subr.bf16.mxu0 0
    %10398 = vmatpush1.bf16.msra.mxu0 0
    %10399 = vmatprep.subr.bf16.mxu0 0
    %10400 = vmatpush1.bf16.msra.mxu0 0
    %10401 = vmatprep.subr.bf16.mxu0 0
    %10402 = vmatpush1.bf16.msra.mxu0 0
    %10403 = vmatprep.subr.bf16.mxu0 0
    %10404 = vmatpush1.bf16.msra.mxu0 0
    %10405 = vmatprep.subr.bf16.mxu0 0
    %10406 = vmatpush1.bf16.msra.mxu0 0
    %10407 = vmatprep.subr.bf16.mxu0 0
    %10408 = vmatpush1.bf16.msra.mxu0 0
    %10409 = vmatprep.mubr.bf16.mxu0 0
    %10410 = vmatmul.mubr.bf16.gmra.mrb[0].mxu0 %v10152
    %v10411 = vpop.f32.mrb[0].mxu0
    %v10412 = vadd.f32 %v10219, %v10411
    %v10413 = vpop.f32.mrb[0].mxu0
    %v10414 = vadd.f32 %v10221, %v10413
    %v10415 = vpop.f32.mrb[0].mxu0
    %v10416 = vadd.f32 %v10223, %v10415
    %v10417 = vpop.f32.mrb[0].mxu0
    %v10418 = vadd.f32 %v10225, %v10417
    %10419 = vmatprep.mubr.bf16.mxu0 0
    %10420 = vmatmul.mubr.bf16.gmra.mrb[0].mxu0 %v10154
    %v10421 = vpop.f32.mrb[0].mxu0
    %v10422 = vadd.f32 %v10229, %v10421
    %v10423 = vpop.f32.mrb[0].mxu0
    %v10424 = vadd.f32 %v10231, %v10423
    %v10425 = vpop.f32.mrb[0].mxu0
    %v10426 = vadd.f32 %v10233, %v10425
    %v10427 = vpop.f32.mrb[0].mxu0
    %v10428 = vadd.f32 %v10235, %v10427
    %10429 = vmatprep.mubr.bf16.mxu0 0
    %10430 = vmatmul.mubr.bf16.gmra.mrb[0].mxu0 %v10156
    %v10431 = vpop.f32.mrb[0].mxu0
    %v10432 = vadd.f32 %v10239, %v10431
    %v10433 = vpop.f32.mrb[0].mxu0
    %v10434 = vadd.f32 %v10241, %v10433
    %v10435 = vpop.f32.mrb[0].mxu0
    %v10436 = vadd.f32 %v10243, %v10435
    %v10437 = vpop.f32.mrb[0].mxu0
    %v10438 = vadd.f32 %v10245, %v10437
    %10439 = vmatprep.mubr.bf16.mxu0 0
    %10440 = vmatmul.mubr.bf16.gmra.mrb[0].mxu0 %v10158
    %v10441 = vpop.f32.mrb[0].mxu0
    %v10442 = vadd.f32 %v10249, %v10441
    %v10443 = vpop.f32.mrb[0].mxu0
    %v10444 = vadd.f32 %v10251, %v10443
    %v10445 = vpop.f32.mrb[0].mxu0
    %v10446 = vadd.f32 %v10253, %v10445
    %v10447 = vpop.f32.mrb[0].mxu0
    %v10448 = vadd.f32 %v10255, %v10447
    %10449 = vmatprep.mubr.bf16.mxu0 0
    %10450 = vmatmul.mubr.bf16.gmra.mrb[0].mxu0 %v10160
    %v10451 = vpop.f32.mrb[0].mxu0
    %v10452 = vadd.f32 %v10259, %v10451
    %v10453 = vpop.f32.mrb[0].mxu0
    %v10454 = vadd.f32 %v10261, %v10453
    %v10455 = vpop.f32.mrb[0].mxu0
    %v10456 = vadd.f32 %v10263, %v10455
    %v10457 = vpop.f32.mrb[0].mxu0
    %v10458 = vadd.f32 %v10265, %v10457
    %10459 = vmatprep.mubr.bf16.mxu0 0
    %10460 = vmatmul.mubr.bf16.gmra.mrb[0].mxu0 %v10162
    %v10461 = vpop.f32.mrb[0].mxu0
    %v10462 = vadd.f32 %v10269, %v10461
    %v10463 = vpop.f32.mrb[0].mxu0
    %v10464 = vadd.f32 %v10271, %v10463
    %v10465 = vpop.f32.mrb[0].mxu0
    %v10466 = vadd.f32 %v10273, %v10465
    %v10467 = vpop.f32.mrb[0].mxu0
    %v10468 = vadd.f32 %v10275, %v10467
    %10469 = vmatprep.mubr.bf16.mxu0 0
    %10470 = vmatmul.mubr.bf16.gmra.mrb[0].mxu0 %v10164
    %v10471 = vpop.f32.mrb[0].mxu0
    %v10472 = vadd.f32 %v10279, %v10471
    %v10473 = vpop.f32.mrb[0].mxu0
    %v10474 = vadd.f32 %v10281, %v10473
    %v10475 = vpop.f32.mrb[0].mxu0
    %v10476 = vadd.f32 %v10283, %v10475
    %v10477 = vpop.f32.mrb[0].mxu0
    %v10478 = vadd.f32 %v10285, %v10477
    %10479 = vmatprep.mubr.bf16.mxu0 0
    %10480 = vmatmul.mubr.bf16.gmra.mrb[0].mxu0 %v10166
    %v10481 = vpop.f32.mrb[0].mxu0
    %v10482 = vadd.f32 %v10289, %v10481
    %v10483 = vpop.f32.mrb[0].mxu0
    %v10484 = vadd.f32 %v10291, %v10483
    %v10485 = vpop.f32.mrb[0].mxu0
    %v10486 = vadd.f32 %v10293, %v10485
    %v10487 = vpop.f32.mrb[0].mxu0
    %v10488 = vadd.f32 %v10295, %v10487
    %10489 = vmatprep.mubr.bf16.mxu0 0
    %10490 = vmatmul.mubr.bf16.gmra.mrb[0].mxu0 %v10168
    %v10491 = vpop.f32.mrb[0].mxu0
    %v10492 = vadd.f32 %v10299, %v10491
    %v10493 = vpop.f32.mrb[0].mxu0
    %v10494 = vadd.f32 %v10301, %v10493
    %v10495 = vpop.f32.mrb[0].mxu0
    %v10496 = vadd.f32 %v10303, %v10495
    %v10497 = vpop.f32.mrb[0].mxu0
    %v10498 = vadd.f32 %v10305, %v10497
    %10499 = vmatprep.mubr.bf16.mxu0 0
    %10500 = vmatmul.mubr.bf16.gmra.mrb[0].mxu0 %v10170
    %v10501 = vpop.f32.mrb[0].mxu0
    %v10502 = vadd.f32 %v10309, %v10501
    %v10503 = vpop.f32.mrb[0].mxu0
    %v10504 = vadd.f32 %v10311, %v10503
    %v10505 = vpop.f32.mrb[0].mxu0
    %v10506 = vadd.f32 %v10313, %v10505
    %v10507 = vpop.f32.mrb[0].mxu0
    %v10508 = vadd.f32 %v10315, %v10507
    %10509 = vmatprep.mubr.bf16.mxu0 0
    %10510 = vmatmul.mubr.bf16.gmra.mrb[0].mxu0 %v10172
    %v10511 = vpop.f32.mrb[0].mxu0
    %v10512 = vadd.f32 %v10319, %v10511
    %v10513 = vpop.f32.mrb[0].mxu0
    %v10514 = vadd.f32 %v10321, %v10513
    %v10515 = vpop.f32.mrb[0].mxu0
    %v10516 = vadd.f32 %v10323, %v10515
    %v10517 = vpop.f32.mrb[0].mxu0
    %v10518 = vadd.f32 %v10325, %v10517
    %10519 = vmatprep.mubr.bf16.mxu0 0
    %10520 = vmatmul.mubr.bf16.gmra.mrb[0].mxu0 %v10174
    %v10521 = vpop.f32.mrb[0].mxu0
    %v10522 = vadd.f32 %v10329, %v10521
    %v10523 = vpop.f32.mrb[0].mxu0
    %v10524 = vadd.f32 %v10331, %v10523
    %v10525 = vpop.f32.mrb[0].mxu0
    %v10526 = vadd.f32 %v10333, %v10525
    %v10527 = vpop.f32.mrb[0].mxu0
    %v10528 = vadd.f32 %v10335, %v10527
    %10529 = vmatprep.mubr.bf16.mxu0 0
    %10530 = vmatmul.mubr.bf16.gmra.mrb[0].mxu0 %v10176
    %v10531 = vpop.f32.mrb[0].mxu0
    %v10532 = vadd.f32 %v10339, %v10531
    %v10533 = vpop.f32.mrb[0].mxu0
    %v10534 = vadd.f32 %v10341, %v10533
    %v10535 = vpop.f32.mrb[0].mxu0
    %v10536 = vadd.f32 %v10343, %v10535
    %v10537 = vpop.f32.mrb[0].mxu0
    %v10538 = vadd.f32 %v10345, %v10537
    %10539 = vmatprep.mubr.bf16.mxu0 0
    %10540 = vmatmul.mubr.bf16.gmra.mrb[0].mxu0 %v10178
    %v10541 = vpop.f32.mrb[0].mxu0
    %v10542 = vadd.f32 %v10349, %v10541
    %v10543 = vpop.f32.mrb[0].mxu0
    %v10544 = vadd.f32 %v10351, %v10543
    %v10545 = vpop.f32.mrb[0].mxu0
    %v10546 = vadd.f32 %v10353, %v10545
    %v10547 = vpop.f32.mrb[0].mxu0
    %v10548 = vadd.f32 %v10355, %v10547
    %10549 = vmatprep.mubr.bf16.mxu0 0
    %10550 = vmatmul.mubr.bf16.gmra.mrb[0].mxu0 %v10180
    %v10551 = vpop.f32.mrb[0].mxu0
    %v10552 = vadd.f32 %v10359, %v10551
    %v10553 = vpop.f32.mrb[0].mxu0
    %v10554 = vadd.f32 %v10361, %v10553
    %v10555 = vpop.f32.mrb[0].mxu0
    %v10556 = vadd.f32 %v10363, %v10555
    %v10557 = vpop.f32.mrb[0].mxu0
    %v10558 = vadd.f32 %v10365, %v10557
    %10559 = vmatprep.mubr.bf16.mxu0 0
    %10560 = vmatmul.mubr.bf16.gmra.mrb[0].mxu0 %v10182
    %v10561 = vpop.f32.mrb[0].mxu0
    %v10562 = vadd.f32 %v10369, %v10561
    %v10563 = vpop.f32.mrb[0].mxu0
    %v10564 = vadd.f32 %v10371, %v10563
    %v10565 = vpop.f32.mrb[0].mxu0
    %v10566 = vadd.f32 %v10373, %v10565
    %v10567 = vpop.f32.mrb[0].mxu0
    %v10568 = vadd.f32 %v10375, %v10567
    %10569 = vdwg.mxu0
    %v10570 = vmax.f32 %v10412, 0.0
    %v10571 = vmax.f32 %v10414, 0.0
    %v10572 = vmax.f32 %v10416, 0.0
    %v10573 = vmax.f32 %v10418, 0.0
    %v10574 = vmax.f32 %v10422, 0.0
    %v10575 = vmax.f32 %v10424, 0.0
    %v10576 = vmax.f32 %v10426, 0.0
    %v10577 = vmax.f32 %v10428, 0.0
    %v10578 = vmax.f32 %v10432, 0.0
    %v10579 = vmax.f32 %v10434, 0.0
    %v10580 = vmax.f32 %v10436, 0.0
    %v10581 = vmax.f32 %v10438, 0.0
    %v10582 = vmax.f32 %v10442, 0.0
    %v10583 = vmax.f32 %v10444, 0.0
    %v10584 = vmax.f32 %v10446, 0.0
    %v10585 = vmax.f32 %v10448, 0.0
    %v10586 = vmax.f32 %v10452, 0.0
    %v10587 = vmax.f32 %v10454, 0.0
    %v10588 = vmax.f32 %v10456, 0.0
    %v10589 = vmax.f32 %v10458, 0.0
    %v10590 = vmax.f32 %v10462, 0.0
    %v10591 = vmax.f32 %v10464, 0.0
    %v10592 = vmax.f32 %v10466, 0.0
    %v10593 = vmax.f32 %v10468, 0.0
    %v10594 = vmax.f32 %v10472, 0.0
    %v10595 = vmax.f32 %v10474, 0.0
    %v10596 = vmax.f32 %v10476, 0.0
    %v10597 = vmax.f32 %v10478, 0.0
    %v10598 = vmax.f32 %v10482, 0.0
    %v10599 = vmax.f32 %v10484, 0.0
    %v10600 = vmax.f32 %v10486, 0.0
    %v10601 = vmax.f32 %v10488, 0.0
    %v10602 = vmax.f32 %v10492, 0.0
    %v10603 = vmax.f32 %v10494, 0.0
    %v10604 = vmax.f32 %v10496, 0.0
    %v10605 = vmax.f32 %v10498, 0.0
    %v10606 = vmax.f32 %v10502, 0.0
    %v10607 = vmax.f32 %v10504, 0.0
    %v10608 = vmax.f32 %v10506, 0.0
    %v10609 = vmax.f32 %v10508, 0.0
    %v10610 = vmax.f32 %v10512, 0.0
    %v10611 = vmax.f32 %v10514, 0.0
    %v10612 = vmax.f32 %v10516, 0.0
    %v10613 = vmax.f32 %v10518, 0.0
    %v10614 = vmax.f32 %v10522, 0.0
    %v10615 = vmax.f32 %v10524, 0.0
    %v10616 = vmax.f32 %v10526, 0.0
    %v10617 = vmax.f32 %v10528, 0.0
    %v10618 = vmax.f32 %v10532, 0.0
    %v10619 = vmax.f32 %v10534, 0.0
    %v10620 = vmax.f32 %v10536, 0.0
    %v10621 = vmax.f32 %v10538, 0.0
    %v10622 = vmax.f32 %v10542, 0.0
    %v10623 = vmax.f32 %v10544, 0.0
    %v10624 = vmax.f32 %v10546, 0.0
    %v10625 = vmax.f32 %v10548, 0.0
    %v10626 = vmax.f32 %v10552, 0.0
    %v10627 = vmax.f32 %v10554, 0.0
    %v10628 = vmax.f32 %v10556, 0.0
    %v10629 = vmax.f32 %v10558, 0.0
    %v10630 = vmax.f32 %v10562, 0.0
    %v10631 = vmax.f32 %v10564, 0.0
    %v10632 = vmax.f32 %v10566, 0.0
    %v10633 = vmax.f32 %v10568, 0.0
    %v10634 = vpack.c.bf16 %v10572, %v10570
    %v10635 = vpack.c.bf16 %v10573, %v10571
    %v10636 = vpack.c.bf16 %v10576, %v10574
    %v10637 = vpack.c.bf16 %v10577, %v10575
    %v10638 = vpack.c.bf16 %v10580, %v10578
    %v10639 = vpack.c.bf16 %v10581, %v10579
    %v10640 = vpack.c.bf16 %v10584, %v10582
    %v10641 = vpack.c.bf16 %v10585, %v10583
    %v10642 = vpack.c.bf16 %v10588, %v10586
    %v10643 = vpack.c.bf16 %v10589, %v10587
    %v10644 = vpack.c.bf16 %v10592, %v10590
    %v10645 = vpack.c.bf16 %v10593, %v10591
    %v10646 = vpack.c.bf16 %v10596, %v10594
    %v10647 = vpack.c.bf16 %v10597, %v10595
    %v10648 = vpack.c.bf16 %v10600, %v10598
    %v10649 = vpack.c.bf16 %v10601, %v10599
    %v10650 = vpack.c.bf16 %v10604, %v10602
    %v10651 = vpack.c.bf16 %v10605, %v10603
    %v10652 = vpack.c.bf16 %v10608, %v10606
    %v10653 = vpack.c.bf16 %v10609, %v10607
    %v10654 = vpack.c.bf16 %v10612, %v10610
    %v10655 = vpack.c.bf16 %v10613, %v10611
    %v10656 = vpack.c.bf16 %v10616, %v10614
    %v10657 = vpack.c.bf16 %v10617, %v10615
    %v10658 = vpack.c.bf16 %v10620, %v10618
    %v10659 = vpack.c.bf16 %v10621, %v10619
    %v10660 = vpack.c.bf16 %v10624, %v10622
    %v10661 = vpack.c.bf16 %v10625, %v10623
    %v10662 = vpack.c.bf16 %v10628, %v10626
    %v10663 = vpack.c.bf16 %v10629, %v10627
    %v10664 = vpack.c.bf16 %v10632, %v10630
    %v10665 = vpack.c.bf16 %v10633, %v10631
    %v10794 = vunpack.c.l.b16 %v9808
    %v10795 = vunpack.c.h.b16 %v9808
    %v10796 = vunpack.c.l.b16 %v9809
    %v10797 = vunpack.c.h.b16 %v9809
    %v10798 = vunpack.c.l.b16 %v9810
    %v10799 = vunpack.c.h.b16 %v9810
    %v10800 = vunpack.c.l.b16 %v9811
    %v10801 = vunpack.c.h.b16 %v9811
    %v10802 = vunpack.c.l.b16 %v9812
    %v10803 = vunpack.c.h.b16 %v9812
    %v10804 = vunpack.c.l.b16 %v9813
    %v10805 = vunpack.c.h.b16 %v9813
    %v10806 = vunpack.c.l.b16 %v9814
    %v10807 = vunpack.c.h.b16 %v9814
    %v10808 = vunpack.c.l.b16 %v9815
    %v10809 = vunpack.c.h.b16 %v9815
    %v10810 = vunpack.c.l.b16 %v9816
    %v10811 = vunpack.c.h.b16 %v9816
    %v10812 = vunpack.c.l.b16 %v9817
    %v10813 = vunpack.c.h.b16 %v9817
    %v10814 = vunpack.c.l.b16 %v9818
    %v10815 = vunpack.c.h.b16 %v9818
    %v10816 = vunpack.c.l.b16 %v9819
    %v10817 = vunpack.c.h.b16 %v9819
    %v10818 = vunpack.c.l.b16 %v9820
    %v10819 = vunpack.c.h.b16 %v9820
    %v10820 = vunpack.c.l.b16 %v9821
    %v10821 = vunpack.c.h.b16 %v9821
    %v10822 = vunpack.c.l.b16 %v9822
    %v10823 = vunpack.c.h.b16 %v9822
    %v10824 = vunpack.c.l.b16 %v9823
    %v10825 = vunpack.c.h.b16 %v9823
    %v10826 = vunpack.c.l.b16 %v9824
    %v10827 = vunpack.c.h.b16 %v9824
    %v10828 = vunpack.c.l.b16 %v9825
    %v10829 = vunpack.c.h.b16 %v9825
    %v10830 = vunpack.c.l.b16 %v9826
    %v10831 = vunpack.c.h.b16 %v9826
    %v10832 = vunpack.c.l.b16 %v9827
    %v10833 = vunpack.c.h.b16 %v9827
    %v10834 = vunpack.c.l.b16 %v9828
    %v10835 = vunpack.c.h.b16 %v9828
    %v10836 = vunpack.c.l.b16 %v9829
    %v10837 = vunpack.c.h.b16 %v9829
    %v10838 = vunpack.c.l.b16 %v9830
    %v10839 = vunpack.c.h.b16 %v9830
    %v10840 = vunpack.c.l.b16 %v9831
    %v10841 = vunpack.c.h.b16 %v9831
    %v10842 = vunpack.c.l.b16 %v9832
    %v10843 = vunpack.c.h.b16 %v9832
    %v10844 = vunpack.c.l.b16 %v9833
    %v10845 = vunpack.c.h.b16 %v9833
    %v10846 = vunpack.c.l.b16 %v9834
    %v10847 = vunpack.c.h.b16 %v9834
    %v10848 = vunpack.c.l.b16 %v9835
    %v10849 = vunpack.c.h.b16 %v9835
    %v10850 = vunpack.c.l.b16 %v9836
    %v10851 = vunpack.c.h.b16 %v9836
    %v10852 = vunpack.c.l.b16 %v9837
    %v10853 = vunpack.c.h.b16 %v9837
    %v10854 = vunpack.c.l.b16 %v9838
    %v10855 = vunpack.c.h.b16 %v9838
    %v10856 = vunpack.c.l.b16 %v9839
    %v10857 = vunpack.c.h.b16 %v9839
    %v10858 = vunpack.c.l.b16 %v9840
    %v10859 = vunpack.c.h.b16 %v9840
    %v10860 = vunpack.c.l.b16 %v9841
    %v10861 = vunpack.c.h.b16 %v9841
    %v10862 = vunpack.c.l.b16 %v9842
    %v10863 = vunpack.c.h.b16 %v9842
    %v10864 = vunpack.c.l.b16 %v9843
    %v10865 = vunpack.c.h.b16 %v9843
    %v10866 = vunpack.c.l.b16 %v9844
    %v10867 = vunpack.c.h.b16 %v9844
    %v10868 = vunpack.c.l.b16 %v9845
    %v10869 = vunpack.c.h.b16 %v9845
    %v10870 = vunpack.c.l.b16 %v9846
    %v10871 = vunpack.c.h.b16 %v9846
    %v10872 = vunpack.c.l.b16 %v9847
    %v10873 = vunpack.c.h.b16 %v9847
    %v10874 = vunpack.c.l.b16 %v9848
    %v10875 = vunpack.c.h.b16 %v9848
    %v10876 = vunpack.c.l.b16 %v9849
    %v10877 = vunpack.c.h.b16 %v9849
    %v10878 = vunpack.c.l.b16 %v9850
    %v10879 = vunpack.c.h.b16 %v9850
    %v10880 = vunpack.c.l.b16 %v9851
    %v10881 = vunpack.c.h.b16 %v9851
    %v10882 = vunpack.c.l.b16 %v9852
    %v10883 = vunpack.c.h.b16 %v9852
    %v10884 = vunpack.c.l.b16 %v9853
    %v10885 = vunpack.c.h.b16 %v9853
    %v10886 = vunpack.c.l.b16 %v9854
    %v10887 = vunpack.c.h.b16 %v9854
    %v10888 = vunpack.c.l.b16 %v9855
    %v10889 = vunpack.c.h.b16 %v9855
    %v10890 = vunpack.c.l.b16 %v9856
    %v10891 = vunpack.c.h.b16 %v9856
    %v10892 = vunpack.c.l.b16 %v9857
    %v10893 = vunpack.c.h.b16 %v9857
    %v10894 = vunpack.c.l.b16 %v9858
    %v10895 = vunpack.c.h.b16 %v9858
    %v10896 = vunpack.c.l.b16 %v9859
    %v10897 = vunpack.c.h.b16 %v9859
    %v10898 = vunpack.c.l.b16 %v9860
    %v10899 = vunpack.c.h.b16 %v9860
    %v10900 = vunpack.c.l.b16 %v9861
    %v10901 = vunpack.c.h.b16 %v9861
    %v10902 = vunpack.c.l.b16 %v9862
    %v10903 = vunpack.c.h.b16 %v9862
    %v10904 = vunpack.c.l.b16 %v9863
    %v10905 = vunpack.c.h.b16 %v9863
    %v10906 = vunpack.c.l.b16 %v9864
    %v10907 = vunpack.c.h.b16 %v9864
    %v10908 = vunpack.c.l.b16 %v9865
    %v10909 = vunpack.c.h.b16 %v9865
    %v10910 = vunpack.c.l.b16 %v9866
    %v10911 = vunpack.c.h.b16 %v9866
    %v10912 = vunpack.c.l.b16 %v9867
    %v10913 = vunpack.c.h.b16 %v9867
    %v10914 = vunpack.c.l.b16 %v9868
    %v10915 = vunpack.c.h.b16 %v9868
    %v10916 = vunpack.c.l.b16 %v9869
    %v10917 = vunpack.c.h.b16 %v9869
    %v10918 = vunpack.c.l.b16 %v9870
    %v10919 = vunpack.c.h.b16 %v9870
    %v10920 = vunpack.c.l.b16 %v9871
    %v10921 = vunpack.c.h.b16 %v9871
    %v10922 = vunpack.c.l.b16 %v9872
    %v10923 = vunpack.c.h.b16 %v9872
    %v10924 = vunpack.c.l.b16 %v9873
    %v10925 = vunpack.c.h.b16 %v9873
    %v10926 = vunpack.c.l.b16 %v9874
    %v10927 = vunpack.c.h.b16 %v9874
    %v10928 = vunpack.c.l.b16 %v9875
    %v10929 = vunpack.c.h.b16 %v9875
    %v10930 = vunpack.c.l.b16 %v9876
    %v10931 = vunpack.c.h.b16 %v9876
    %v10932 = vunpack.c.l.b16 %v9877
    %v10933 = vunpack.c.h.b16 %v9877
    %v10934 = vunpack.c.l.b16 %v9878
    %v10935 = vunpack.c.h.b16 %v9878
    %v10936 = vunpack.c.l.b16 %v9879
    %v10937 = vunpack.c.h.b16 %v9879
    %v10938 = vunpack.c.l.b16 %v9880
    %v10939 = vunpack.c.h.b16 %v9880
    %v10940 = vunpack.c.l.b16 %v9881
    %v10941 = vunpack.c.h.b16 %v9881
    %v10942 = vunpack.c.l.b16 %v9882
    %v10943 = vunpack.c.h.b16 %v9882
    %v10944 = vunpack.c.l.b16 %v9883
    %v10945 = vunpack.c.h.b16 %v9883
    %v10946 = vunpack.c.l.b16 %v9884
    %v10947 = vunpack.c.h.b16 %v9884
    %v10948 = vunpack.c.l.b16 %v9885
    %v10949 = vunpack.c.h.b16 %v9885
    %v10950 = vunpack.c.l.b16 %v9886
    %v10951 = vunpack.c.h.b16 %v9886
    %v10952 = vunpack.c.l.b16 %v9887
    %v10953 = vunpack.c.h.b16 %v9887
    %v10954 = vunpack.c.l.b16 %v9888
    %v10955 = vunpack.c.h.b16 %v9888
    %v10956 = vunpack.c.l.b16 %v9889
    %v10957 = vunpack.c.h.b16 %v9889
    %v10958 = vunpack.c.l.b16 %v9890
    %v10959 = vunpack.c.h.b16 %v9890
    %v10960 = vunpack.c.l.b16 %v9891
    %v10961 = vunpack.c.h.b16 %v9891
    %v10962 = vunpack.c.l.b16 %v9892
    %v10963 = vunpack.c.h.b16 %v9892
    %v10964 = vunpack.c.l.b16 %v9893
    %v10965 = vunpack.c.h.b16 %v9893
    %v10966 = vunpack.c.l.b16 %v9894
    %v10967 = vunpack.c.h.b16 %v9894
    %v10968 = vunpack.c.l.b16 %v9895
    %v10969 = vunpack.c.h.b16 %v9895
    %v10970 = vunpack.c.l.b16 %v9896
    %v10971 = vunpack.c.h.b16 %v9896
    %v10972 = vunpack.c.l.b16 %v9897
    %v10973 = vunpack.c.h.b16 %v9897
    %v10974 = vunpack.c.l.b16 %v9898
    %v10975 = vunpack.c.h.b16 %v9898
    %v10976 = vunpack.c.l.b16 %v9899
    %v10977 = vunpack.c.h.b16 %v9899
    %v10978 = vunpack.c.l.b16 %v9900
    %v10979 = vunpack.c.h.b16 %v9900
    %v10980 = vunpack.c.l.b16 %v9901
    %v10981 = vunpack.c.h.b16 %v9901
    %v10982 = vunpack.c.l.b16 %v9902
    %v10983 = vunpack.c.h.b16 %v9902
    %v10984 = vunpack.c.l.b16 %v9903
    %v10985 = vunpack.c.h.b16 %v9903
    %v10986 = vunpack.c.l.b16 %v9904
    %v10987 = vunpack.c.h.b16 %v9904
    %v10988 = vunpack.c.l.b16 %v9905
    %v10989 = vunpack.c.h.b16 %v9905
    %v10990 = vunpack.c.l.b16 %v9906
    %v10991 = vunpack.c.h.b16 %v9906
    %v10992 = vunpack.c.l.b16 %v9907
    %v10993 = vunpack.c.h.b16 %v9907
    %v10994 = vunpack.c.l.b16 %v9908
    %v10995 = vunpack.c.h.b16 %v9908
    %v10996 = vunpack.c.l.b16 %v9909
    %v10997 = vunpack.c.h.b16 %v9909
    %v10998 = vunpack.c.l.b16 %v9910
    %v10999 = vunpack.c.h.b16 %v9910
    %v11000 = vunpack.c.l.b16 %v9911
    %v11001 = vunpack.c.h.b16 %v9911
    %v11002 = vunpack.c.l.b16 %v9912
    %v11003 = vunpack.c.h.b16 %v9912
    %v11004 = vunpack.c.l.b16 %v9913
    %v11005 = vunpack.c.h.b16 %v9913
    %v11006 = vunpack.c.l.b16 %v9914
    %v11007 = vunpack.c.h.b16 %v9914
    %v11008 = vunpack.c.l.b16 %v9915
    %v11009 = vunpack.c.h.b16 %v9915
    %v11010 = vunpack.c.l.b16 %v9916
    %v11011 = vunpack.c.h.b16 %v9916
    %v11012 = vunpack.c.l.b16 %v9917
    %v11013 = vunpack.c.h.b16 %v9917
    %v11014 = vunpack.c.l.b16 %v9918
    %v11015 = vunpack.c.h.b16 %v9918
    %v11016 = vunpack.c.l.b16 %v9919
    %v11017 = vunpack.c.h.b16 %v9919
    %v11018 = vunpack.c.l.b16 %v9920
    %v11019 = vunpack.c.h.b16 %v9920
    %v11020 = vunpack.c.l.b16 %v9921
    %v11021 = vunpack.c.h.b16 %v9921
    %v11022 = vunpack.c.l.b16 %v9922
    %v11023 = vunpack.c.h.b16 %v9922
    %v11024 = vunpack.c.l.b16 %v9923
    %v11025 = vunpack.c.h.b16 %v9923
    %v11026 = vunpack.c.l.b16 %v9924
    %v11027 = vunpack.c.h.b16 %v9924
    %v11028 = vunpack.c.l.b16 %v9925
    %v11029 = vunpack.c.h.b16 %v9925
    %v11030 = vunpack.c.l.b16 %v9926
    %v11031 = vunpack.c.h.b16 %v9926
    %v11032 = vunpack.c.l.b16 %v9927
    %v11033 = vunpack.c.h.b16 %v9927
    %v11034 = vunpack.c.l.b16 %v9928
    %v11035 = vunpack.c.h.b16 %v9928
    %v11036 = vunpack.c.l.b16 %v9929
    %v11037 = vunpack.c.h.b16 %v9929
    %v11038 = vunpack.c.l.b16 %v9930
    %v11039 = vunpack.c.h.b16 %v9930
    %v11040 = vunpack.c.l.b16 %v9931
    %v11041 = vunpack.c.h.b16 %v9931
    %v11042 = vunpack.c.l.b16 %v9932
    %v11043 = vunpack.c.h.b16 %v9932
    %v11044 = vunpack.c.l.b16 %v9933
    %v11045 = vunpack.c.h.b16 %v9933
    %v11046 = vunpack.c.l.b16 %v9934
    %v11047 = vunpack.c.h.b16 %v9934
    %v11048 = vunpack.c.l.b16 %v9935
    %v11049 = vunpack.c.h.b16 %v9935
    %v11050 = vpack.c.b16 %v10796, %v10794
    %v11051 = vpack.c.b16 %v10797, %v10795
    %v11052 = vpack.c.b16 %v10800, %v10798
    %v11053 = vpack.c.b16 %v10801, %v10799
    %v11054 = vpack.c.b16 %v10804, %v10802
    %v11055 = vpack.c.b16 %v10805, %v10803
    %v11056 = vpack.c.b16 %v10808, %v10806
    %v11057 = vpack.c.b16 %v10809, %v10807
    %v11058 = vpack.c.b16 %v10812, %v10810
    %v11059 = vpack.c.b16 %v10813, %v10811
    %v11060 = vpack.c.b16 %v10816, %v10814
    %v11061 = vpack.c.b16 %v10817, %v10815
    %v11062 = vpack.c.b16 %v10820, %v10818
    %v11063 = vpack.c.b16 %v10821, %v10819
    %v11064 = vpack.c.b16 %v10824, %v10822
    %v11065 = vpack.c.b16 %v10825, %v10823
    %v11066 = vpack.c.b16 %v10828, %v10826
    %v11067 = vpack.c.b16 %v10829, %v10827
    %v11068 = vpack.c.b16 %v10832, %v10830
    %v11069 = vpack.c.b16 %v10833, %v10831
    %v11070 = vpack.c.b16 %v10836, %v10834
    %v11071 = vpack.c.b16 %v10837, %v10835
    %v11072 = vpack.c.b16 %v10840, %v10838
    %v11073 = vpack.c.b16 %v10841, %v10839
    %v11074 = vpack.c.b16 %v10844, %v10842
    %v11075 = vpack.c.b16 %v10845, %v10843
    %v11076 = vpack.c.b16 %v10848, %v10846
    %v11077 = vpack.c.b16 %v10849, %v10847
    %v11078 = vpack.c.b16 %v10852, %v10850
    %v11079 = vpack.c.b16 %v10853, %v10851
    %v11080 = vpack.c.b16 %v10856, %v10854
    %v11081 = vpack.c.b16 %v10857, %v10855
    %v11082 = vpack.c.b16 %v10860, %v10858
    %v11083 = vpack.c.b16 %v10861, %v10859
    %v11084 = vpack.c.b16 %v10864, %v10862
    %v11085 = vpack.c.b16 %v10865, %v10863
    %v11086 = vpack.c.b16 %v10868, %v10866
    %v11087 = vpack.c.b16 %v10869, %v10867
    %v11088 = vpack.c.b16 %v10872, %v10870
    %v11089 = vpack.c.b16 %v10873, %v10871
    %v11090 = vpack.c.b16 %v10876, %v10874
    %v11091 = vpack.c.b16 %v10877, %v10875
    %v11092 = vpack.c.b16 %v10880, %v10878
    %v11093 = vpack.c.b16 %v10881, %v10879
    %v11094 = vpack.c.b16 %v10884, %v10882
    %v11095 = vpack.c.b16 %v10885, %v10883
    %v11096 = vpack.c.b16 %v10888, %v10886
    %v11097 = vpack.c.b16 %v10889, %v10887
    %v11098 = vpack.c.b16 %v10892, %v10890
    %v11099 = vpack.c.b16 %v10893, %v10891
    %v11100 = vpack.c.b16 %v10896, %v10894
    %v11101 = vpack.c.b16 %v10897, %v10895
    %v11102 = vpack.c.b16 %v10900, %v10898
    %v11103 = vpack.c.b16 %v10901, %v10899
    %v11104 = vpack.c.b16 %v10904, %v10902
    %v11105 = vpack.c.b16 %v10905, %v10903
    %v11106 = vpack.c.b16 %v10908, %v10906
    %v11107 = vpack.c.b16 %v10909, %v10907
    %v11108 = vpack.c.b16 %v10912, %v10910
    %v11109 = vpack.c.b16 %v10913, %v10911
    %v11110 = vpack.c.b16 %v10916, %v10914
    %v11111 = vpack.c.b16 %v10917, %v10915
    %v11112 = vpack.c.b16 %v10920, %v10918
    %v11113 = vpack.c.b16 %v10921, %v10919
    %v11114 = vpack.c.b16 %v10924, %v10922
    %v11115 = vpack.c.b16 %v10925, %v10923
    %v11116 = vpack.c.b16 %v10928, %v10926
    %v11117 = vpack.c.b16 %v10929, %v10927
    %v11118 = vpack.c.b16 %v10932, %v10930
    %v11119 = vpack.c.b16 %v10933, %v10931
    %v11120 = vpack.c.b16 %v10936, %v10934
    %v11121 = vpack.c.b16 %v10937, %v10935
    %v11122 = vpack.c.b16 %v10940, %v10938
    %v11123 = vpack.c.b16 %v10941, %v10939
    %v11124 = vpack.c.b16 %v10944, %v10942
    %v11125 = vpack.c.b16 %v10945, %v10943
    %v11126 = vpack.c.b16 %v10948, %v10946
    %v11127 = vpack.c.b16 %v10949, %v10947
    %v11128 = vpack.c.b16 %v10952, %v10950
    %v11129 = vpack.c.b16 %v10953, %v10951
    %v11130 = vpack.c.b16 %v10956, %v10954
    %v11131 = vpack.c.b16 %v10957, %v10955
    %v11132 = vpack.c.b16 %v10960, %v10958
    %v11133 = vpack.c.b16 %v10961, %v10959
    %v11134 = vpack.c.b16 %v10964, %v10962
    %v11135 = vpack.c.b16 %v10965, %v10963
    %v11136 = vpack.c.b16 %v10968, %v10966
    %v11137 = vpack.c.b16 %v10969, %v10967
    %v11138 = vpack.c.b16 %v10972, %v10970
    %v11139 = vpack.c.b16 %v10973, %v10971
    %v11140 = vpack.c.b16 %v10976, %v10974
    %v11141 = vpack.c.b16 %v10977, %v10975
    %v11142 = vpack.c.b16 %v10980, %v10978
    %v11143 = vpack.c.b16 %v10981, %v10979
    %v11144 = vpack.c.b16 %v10984, %v10982
    %v11145 = vpack.c.b16 %v10985, %v10983
    %v11146 = vpack.c.b16 %v10988, %v10986
    %v11147 = vpack.c.b16 %v10989, %v10987
    %v11148 = vpack.c.b16 %v10992, %v10990
    %v11149 = vpack.c.b16 %v10993, %v10991
    %v11150 = vpack.c.b16 %v10996, %v10994
    %v11151 = vpack.c.b16 %v10997, %v10995
    %v11152 = vpack.c.b16 %v11000, %v10998
    %v11153 = vpack.c.b16 %v11001, %v10999
    %v11154 = vpack.c.b16 %v11004, %v11002
    %v11155 = vpack.c.b16 %v11005, %v11003
    %v11156 = vpack.c.b16 %v11008, %v11006
    %v11157 = vpack.c.b16 %v11009, %v11007
    %v11158 = vpack.c.b16 %v11012, %v11010
    %v11159 = vpack.c.b16 %v11013, %v11011
    %v11160 = vpack.c.b16 %v11016, %v11014
    %v11161 = vpack.c.b16 %v11017, %v11015
    %v11162 = vpack.c.b16 %v11020, %v11018
    %v11163 = vpack.c.b16 %v11021, %v11019
    %v11164 = vpack.c.b16 %v11024, %v11022
    %v11165 = vpack.c.b16 %v11025, %v11023
    %v11166 = vpack.c.b16 %v11028, %v11026
    %v11167 = vpack.c.b16 %v11029, %v11027
    %v11168 = vpack.c.b16 %v11032, %v11030
    %v11169 = vpack.c.b16 %v11033, %v11031
    %v11170 = vpack.c.b16 %v11036, %v11034
    %v11171 = vpack.c.b16 %v11037, %v11035
    %v11172 = vpack.c.b16 %v11040, %v11038
    %v11173 = vpack.c.b16 %v11041, %v11039
    %v11174 = vpack.c.b16 %v11044, %v11042
    %v11175 = vpack.c.b16 %v11045, %v11043
    %v11176 = vpack.c.b16 %v11048, %v11046
    %v11177 = vpack.c.b16 %v11049, %v11047
    %11306 = vmatprep.subr.bf16.mxu0 %v11051
    %11307 = vmatpush1.bf16.msra.mxu0 %v11050
    %11308 = vmatprep.subr.bf16.mxu0 %v11053
    %11309 = vmatpush1.bf16.msra.mxu0 %v11052
    %11310 = vmatprep.subr.bf16.mxu0 %v11055
    %11311 = vmatpush1.bf16.msra.mxu0 %v11054
    %11312 = vmatprep.subr.bf16.mxu0 %v11057
    %11313 = vmatpush1.bf16.msra.mxu0 %v11056
    %11314 = vmatprep.subr.bf16.mxu0 %v11059
    %11315 = vmatpush1.bf16.msra.mxu0 %v11058
    %11316 = vmatprep.subr.bf16.mxu0 %v11061
    %11317 = vmatpush1.bf16.msra.mxu0 %v11060
    %11318 = vmatprep.subr.bf16.mxu0 %v11063
    %11319 = vmatpush1.bf16.msra.mxu0 %v11062
    %11320 = vmatprep.subr.bf16.mxu0 %v11065
    %11321 = vmatpush1.bf16.msra.mxu0 %v11064
    %11322 = vmatprep.subr.bf16.mxu0 %v11067
    %11323 = vmatpush1.bf16.msra.mxu0 %v11066
    %11324 = vmatprep.subr.bf16.mxu0 %v11069
    %11325 = vmatpush1.bf16.msra.mxu0 %v11068
    %11326 = vmatprep.subr.bf16.mxu0 %v11071
    %11327 = vmatpush1.bf16.msra.mxu0 %v11070
    %11328 = vmatprep.subr.bf16.mxu0 %v11073
    %11329 = vmatpush1.bf16.msra.mxu0 %v11072
    %11330 = vmatprep.subr.bf16.mxu0 %v11075
    %11331 = vmatpush1.bf16.msra.mxu0 %v11074
    %11332 = vmatprep.subr.bf16.mxu0 %v11077
    %11333 = vmatpush1.bf16.msra.mxu0 %v11076
    %11334 = vmatprep.subr.bf16.mxu0 %v11079
    %11335 = vmatpush1.bf16.msra.mxu0 %v11078
    %11336 = vmatprep.subr.bf16.mxu0 %v11081
    %11337 = vmatpush1.bf16.msra.mxu0 %v11080
    %11338 = vmatprep.mubr.bf16.mxu0 %v10634
    %11339 = vmatmul.mubr.bf16.gmra.mrb[0].mxu0 0
    %v11340 = vpop.f32.mrb[0].mxu0
    %v11341 = vadd.f32 0.0, %v11340
    %v11342 = vpop.f32.mrb[0].mxu0
    %v11343 = vadd.f32 0.0, %v11342
    %v11344 = vpop.f32.mrb[0].mxu0
    %v11345 = vadd.f32 0.0, %v11344
    %v11346 = vpop.f32.mrb[0].mxu0
    %v11347 = vadd.f32 0.0, %v11346
    %11348 = vmatprep.mubr.bf16.mxu0 %v10636
    %11349 = vmatmul.mubr.bf16.gmra.mrb[0].mxu0 %v10634
    %v11350 = vpop.f32.mrb[0].mxu0
    %v11351 = vadd.f32 0.0, %v11350
    %v11352 = vpop.f32.mrb[0].mxu0
    %v11353 = vadd.f32 0.0, %v11352
    %v11354 = vpop.f32.mrb[0].mxu0
    %v11355 = vadd.f32 0.0, %v11354
    %v11356 = vpop.f32.mrb[0].mxu0
    %v11357 = vadd.f32 0.0, %v11356
    %11358 = vmatprep.mubr.bf16.mxu0 %v10638
    %11359 = vmatmul.mubr.bf16.gmra.mrb[0].mxu0 %v10636
    %v11360 = vpop.f32.mrb[0].mxu0
    %v11361 = vadd.f32 0.0, %v11360
    %v11362 = vpop.f32.mrb[0].mxu0
    %v11363 = vadd.f32 0.0, %v11362
    %v11364 = vpop.f32.mrb[0].mxu0
    %v11365 = vadd.f32 0.0, %v11364
    %v11366 = vpop.f32.mrb[0].mxu0
    %v11367 = vadd.f32 0.0, %v11366
    %11368 = vmatprep.mubr.bf16.mxu0 %v10640
    %11369 = vmatmul.mubr.bf16.gmra.mrb[0].mxu0 %v10638
    %v11370 = vpop.f32.mrb[0].mxu0
    %v11371 = vadd.f32 0.0, %v11370
    %v11372 = vpop.f32.mrb[0].mxu0
    %v11373 = vadd.f32 0.0, %v11372
    %v11374 = vpop.f32.mrb[0].mxu0
    %v11375 = vadd.f32 0.0, %v11374
    %v11376 = vpop.f32.mrb[0].mxu0
    %v11377 = vadd.f32 0.0, %v11376
    %11378 = vmatprep.mubr.bf16.mxu0 %v10642
    %11379 = vmatmul.mubr.bf16.gmra.mrb[0].mxu0 %v10640
    %v11380 = vpop.f32.mrb[0].mxu0
    %v11381 = vadd.f32 0.0, %v11380
    %v11382 = vpop.f32.mrb[0].mxu0
    %v11383 = vadd.f32 0.0, %v11382
    %v11384 = vpop.f32.mrb[0].mxu0
    %v11385 = vadd.f32 0.0, %v11384
    %v11386 = vpop.f32.mrb[0].mxu0
    %v11387 = vadd.f32 0.0, %v11386
    %11388 = vmatprep.mubr.bf16.mxu0 %v10644
    %11389 = vmatmul.mubr.bf16.gmra.mrb[0].mxu0 %v10642
    %v11390 = vpop.f32.mrb[0].mxu0
    %v11391 = vadd.f32 0.0, %v11390
    %v11392 = vpop.f32.mrb[0].mxu0
    %v11393 = vadd.f32 0.0, %v11392
    %v11394 = vpop.f32.mrb[0].mxu0
    %v11395 = vadd.f32 0.0, %v11394
    %v11396 = vpop.f32.mrb[0].mxu0
    %v11397 = vadd.f32 0.0, %v11396
    %11398 = vmatprep.mubr.bf16.mxu0 %v10646
    %11399 = vmatmul.mubr.bf16.gmra.mrb[0].mxu0 %v10644
    %v11400 = vpop.f32.mrb[0].mxu0
    %v11401 = vadd.f32 0.0, %v11400
    %v11402 = vpop.f32.mrb[0].mxu0
    %v11403 = vadd.f32 0.0, %v11402
    %v11404 = vpop.f32.mrb[0].mxu0
    %v11405 = vadd.f32 0.0, %v11404
    %v11406 = vpop.f32.mrb[0].mxu0
    %v11407 = vadd.f32 0.0, %v11406
    %11408 = vmatprep.mubr.bf16.mxu0 %v10648
    %11409 = vmatmul.mubr.bf16.gmra.mrb[0].mxu0 %v10646
    %v11410 = vpop.f32.mrb[0].mxu0
    %v11411 = vadd.f32 0.0, %v11410
    %v11412 = vpop.f32.mrb[0].mxu0
    %v11413 = vadd.f32 0.0, %v11412
    %v11414 = vpop.f32.mrb[0].mxu0
    %v11415 = vadd.f32 0.0, %v11414
    %v11416 = vpop.f32.mrb[0].mxu0
    %v11417 = vadd.f32 0.0, %v11416
    %11418 = vmatprep.mubr.bf16.mxu0 %v10650
    %11419 = vmatmul.mubr.bf16.gmra.mrb[0].mxu0 0
    %v11420 = vpop.f32.mrb[0].mxu0
    %v11421 = vadd.f32 0.0, %v11420
    %v11422 = vpop.f32.mrb[0].mxu0
    %v11423 = vadd.f32 0.0, %v11422
    %v11424 = vpop.f32.mrb[0].mxu0
    %v11425 = vadd.f32 0.0, %v11424
    %v11426 = vpop.f32.mrb[0].mxu0
    %v11427 = vadd.f32 0.0, %v11426
    %11428 = vmatprep.mubr.bf16.mxu0 %v10652
    %11429 = vmatmul.mubr.bf16.gmra.mrb[0].mxu0 %v10650
    %v11430 = vpop.f32.mrb[0].mxu0
    %v11431 = vadd.f32 0.0, %v11430
    %v11432 = vpop.f32.mrb[0].mxu0
    %v11433 = vadd.f32 0.0, %v11432
    %v11434 = vpop.f32.mrb[0].mxu0
    %v11435 = vadd.f32 0.0, %v11434
    %v11436 = vpop.f32.mrb[0].mxu0
    %v11437 = vadd.f32 0.0, %v11436
    %11438 = vmatprep.mubr.bf16.mxu0 %v10654
    %11439 = vmatmul.mubr.bf16.gmra.mrb[0].mxu0 %v10652
    %v11440 = vpop.f32.mrb[0].mxu0
    %v11441 = vadd.f32 0.0, %v11440
    %v11442 = vpop.f32.mrb[0].mxu0
    %v11443 = vadd.f32 0.0, %v11442
    %v11444 = vpop.f32.mrb[0].mxu0
    %v11445 = vadd.f32 0.0, %v11444
    %v11446 = vpop.f32.mrb[0].mxu0
    %v11447 = vadd.f32 0.0, %v11446
    %11448 = vmatprep.mubr.bf16.mxu0 %v10656
    %11449 = vmatmul.mubr.bf16.gmra.mrb[0].mxu0 %v10654
    %v11450 = vpop.f32.mrb[0].mxu0
    %v11451 = vadd.f32 0.0, %v11450
    %v11452 = vpop.f32.mrb[0].mxu0
    %v11453 = vadd.f32 0.0, %v11452
    %v11454 = vpop.f32.mrb[0].mxu0
    %v11455 = vadd.f32 0.0, %v11454
    %v11456 = vpop.f32.mrb[0].mxu0
    %v11457 = vadd.f32 0.0, %v11456
    %11458 = vmatprep.mubr.bf16.mxu0 %v10658
    %11459 = vmatmul.mubr.bf16.gmra.mrb[0].mxu0 %v10656
    %v11460 = vpop.f32.mrb[0].mxu0
    %v11461 = vadd.f32 0.0, %v11460
    %v11462 = vpop.f32.mrb[0].mxu0
    %v11463 = vadd.f32 0.0, %v11462
    %v11464 = vpop.f32.mrb[0].mxu0
    %v11465 = vadd.f32 0.0, %v11464
    %v11466 = vpop.f32.mrb[0].mxu0
    %v11467 = vadd.f32 0.0, %v11466
    %11468 = vmatprep.mubr.bf16.mxu0 %v10660
    %11469 = vmatmul.mubr.bf16.gmra.mrb[0].mxu0 %v10658
    %v11470 = vpop.f32.mrb[0].mxu0
    %v11471 = vadd.f32 0.0, %v11470
    %v11472 = vpop.f32.mrb[0].mxu0
    %v11473 = vadd.f32 0.0, %v11472
    %v11474 = vpop.f32.mrb[0].mxu0
    %v11475 = vadd.f32 0.0, %v11474
    %v11476 = vpop.f32.mrb[0].mxu0
    %v11477 = vadd.f32 0.0, %v11476
    %11478 = vmatprep.mubr.bf16.mxu0 %v10662
    %11479 = vmatmul.mubr.bf16.gmra.mrb[0].mxu0 %v10660
    %v11480 = vpop.f32.mrb[0].mxu0
    %v11481 = vadd.f32 0.0, %v11480
    %v11482 = vpop.f32.mrb[0].mxu0
    %v11483 = vadd.f32 0.0, %v11482
    %v11484 = vpop.f32.mrb[0].mxu0
    %v11485 = vadd.f32 0.0, %v11484
    %v11486 = vpop.f32.mrb[0].mxu0
    %v11487 = vadd.f32 0.0, %v11486
    %11488 = vmatprep.mubr.bf16.mxu0 %v10664
    %11489 = vmatmul.mubr.bf16.gmra.mrb[0].mxu0 %v10662
    %v11490 = vpop.f32.mrb[0].mxu0
    %v11491 = vadd.f32 0.0, %v11490
    %v11492 = vpop.f32.mrb[0].mxu0
    %v11493 = vadd.f32 0.0, %v11492
    %v11494 = vpop.f32.mrb[0].mxu0
    %v11495 = vadd.f32 0.0, %v11494
    %v11496 = vpop.f32.mrb[0].mxu0
    %v11497 = vadd.f32 0.0, %v11496
    %11498 = vdwg.mxu0
    %11499 = vmatprep.subr.bf16.mxu0 %v11083
    %11500 = vmatpush1.bf16.msra.mxu0 %v11082
    %11501 = vmatprep.subr.bf16.mxu0 %v11085
    %11502 = vmatpush1.bf16.msra.mxu0 %v11084
    %11503 = vmatprep.subr.bf16.mxu0 %v11087
    %11504 = vmatpush1.bf16.msra.mxu0 %v11086
    %11505 = vmatprep.subr.bf16.mxu0 %v11089
    %11506 = vmatpush1.bf16.msra.mxu0 %v11088
    %11507 = vmatprep.subr.bf16.mxu0 %v11091
    %11508 = vmatpush1.bf16.msra.mxu0 %v11090
    %11509 = vmatprep.subr.bf16.mxu0 %v11093
    %11510 = vmatpush1.bf16.msra.mxu0 %v11092
    %11511 = vmatprep.subr.bf16.mxu0 %v11095
    %11512 = vmatpush1.bf16.msra.mxu0 %v11094
    %11513 = vmatprep.subr.bf16.mxu0 %v11097
    %11514 = vmatpush1.bf16.msra.mxu0 %v11096
    %11515 = vmatprep.subr.bf16.mxu0 %v11099
    %11516 = vmatpush1.bf16.msra.mxu0 %v11098
    %11517 = vmatprep.subr.bf16.mxu0 %v11101
    %11518 = vmatpush1.bf16.msra.mxu0 %v11100
    %11519 = vmatprep.subr.bf16.mxu0 %v11103
    %11520 = vmatpush1.bf16.msra.mxu0 %v11102
    %11521 = vmatprep.subr.bf16.mxu0 %v11105
    %11522 = vmatpush1.bf16.msra.mxu0 %v11104
    %11523 = vmatprep.subr.bf16.mxu0 %v11107
    %11524 = vmatpush1.bf16.msra.mxu0 %v11106
    %11525 = vmatprep.subr.bf16.mxu0 %v11109
    %11526 = vmatpush1.bf16.msra.mxu0 %v11108
    %11527 = vmatprep.subr.bf16.mxu0 %v11111
    %11528 = vmatpush1.bf16.msra.mxu0 %v11110
    %11529 = vmatprep.subr.bf16.mxu0 %v11113
    %11530 = vmatpush1.bf16.msra.mxu0 %v11112
    %11531 = vmatprep.mubr.bf16.mxu0 0
    %11532 = vmatmul.mubr.bf16.gmra.mrb[0].mxu0 %v10636
    %v11533 = vpop.f32.mrb[0].mxu0
    %v11534 = vadd.f32 %v11341, %v11533
    %v11535 = vpop.f32.mrb[0].mxu0
    %v11536 = vadd.f32 %v11343, %v11535
    %v11537 = vpop.f32.mrb[0].mxu0
    %v11538 = vadd.f32 %v11345, %v11537
    %v11539 = vpop.f32.mrb[0].mxu0
    %v11540 = vadd.f32 %v11347, %v11539
    %11541 = vmatprep.mubr.bf16.mxu0 0
    %11542 = vmatmul.mubr.bf16.gmra.mrb[0].mxu0 %v10638
    %v11543 = vpop.f32.mrb[0].mxu0
    %v11544 = vadd.f32 %v11351, %v11543
    %v11545 = vpop.f32.mrb[0].mxu0
    %v11546 = vadd.f32 %v11353, %v11545
    %v11547 = vpop.f32.mrb[0].mxu0
    %v11548 = vadd.f32 %v11355, %v11547
    %v11549 = vpop.f32.mrb[0].mxu0
    %v11550 = vadd.f32 %v11357, %v11549
    %11551 = vmatprep.mubr.bf16.mxu0 %v10635
    %11552 = vmatmul.mubr.bf16.gmra.mrb[0].mxu0 %v10640
    %v11553 = vpop.f32.mrb[0].mxu0
    %v11554 = vadd.f32 %v11361, %v11553
    %v11555 = vpop.f32.mrb[0].mxu0
    %v11556 = vadd.f32 %v11363, %v11555
    %v11557 = vpop.f32.mrb[0].mxu0
    %v11558 = vadd.f32 %v11365, %v11557
    %v11559 = vpop.f32.mrb[0].mxu0
    %v11560 = vadd.f32 %v11367, %v11559
    %11561 = vmatprep.mubr.bf16.mxu0 %v10637
    %11562 = vmatmul.mubr.bf16.gmra.mrb[0].mxu0 %v10642
    %v11563 = vpop.f32.mrb[0].mxu0
    %v11564 = vadd.f32 %v11371, %v11563
    %v11565 = vpop.f32.mrb[0].mxu0
    %v11566 = vadd.f32 %v11373, %v11565
    %v11567 = vpop.f32.mrb[0].mxu0
    %v11568 = vadd.f32 %v11375, %v11567
    %v11569 = vpop.f32.mrb[0].mxu0
    %v11570 = vadd.f32 %v11377, %v11569
    %11571 = vmatprep.mubr.bf16.mxu0 %v10639
    %11572 = vmatmul.mubr.bf16.gmra.mrb[0].mxu0 %v10644
    %v11573 = vpop.f32.mrb[0].mxu0
    %v11574 = vadd.f32 %v11381, %v11573
    %v11575 = vpop.f32.mrb[0].mxu0
    %v11576 = vadd.f32 %v11383, %v11575
    %v11577 = vpop.f32.mrb[0].mxu0
    %v11578 = vadd.f32 %v11385, %v11577
    %v11579 = vpop.f32.mrb[0].mxu0
    %v11580 = vadd.f32 %v11387, %v11579
    %11581 = vmatprep.mubr.bf16.mxu0 %v10641
    %11582 = vmatmul.mubr.bf16.gmra.mrb[0].mxu0 %v10646
    %v11583 = vpop.f32.mrb[0].mxu0
    %v11584 = vadd.f32 %v11391, %v11583
    %v11585 = vpop.f32.mrb[0].mxu0
    %v11586 = vadd.f32 %v11393, %v11585
    %v11587 = vpop.f32.mrb[0].mxu0
    %v11588 = vadd.f32 %v11395, %v11587
    %v11589 = vpop.f32.mrb[0].mxu0
    %v11590 = vadd.f32 %v11397, %v11589
    %11591 = vmatprep.mubr.bf16.mxu0 %v10643
    %11592 = vmatmul.mubr.bf16.gmra.mrb[0].mxu0 %v10648
    %v11593 = vpop.f32.mrb[0].mxu0
    %v11594 = vadd.f32 %v11401, %v11593
    %v11595 = vpop.f32.mrb[0].mxu0
    %v11596 = vadd.f32 %v11403, %v11595
    %v11597 = vpop.f32.mrb[0].mxu0
    %v11598 = vadd.f32 %v11405, %v11597
    %v11599 = vpop.f32.mrb[0].mxu0
    %v11600 = vadd.f32 %v11407, %v11599
    %11601 = vmatprep.mubr.bf16.mxu0 %v10645
    %11602 = vmatmul.mubr.bf16.gmra.mrb[0].mxu0 0
    %v11603 = vpop.f32.mrb[0].mxu0
    %v11604 = vadd.f32 %v11411, %v11603
    %v11605 = vpop.f32.mrb[0].mxu0
    %v11606 = vadd.f32 %v11413, %v11605
    %v11607 = vpop.f32.mrb[0].mxu0
    %v11608 = vadd.f32 %v11415, %v11607
    %v11609 = vpop.f32.mrb[0].mxu0
    %v11610 = vadd.f32 %v11417, %v11609
    %11611 = vmatprep.mubr.bf16.mxu0 0
    %11612 = vmatmul.mubr.bf16.gmra.mrb[0].mxu0 %v10652
    %v11613 = vpop.f32.mrb[0].mxu0
    %v11614 = vadd.f32 %v11421, %v11613
    %v11615 = vpop.f32.mrb[0].mxu0
    %v11616 = vadd.f32 %v11423, %v11615
    %v11617 = vpop.f32.mrb[0].mxu0
    %v11618 = vadd.f32 %v11425, %v11617
    %v11619 = vpop.f32.mrb[0].mxu0
    %v11620 = vadd.f32 %v11427, %v11619
    %11621 = vmatprep.mubr.bf16.mxu0 0
    %11622 = vmatmul.mubr.bf16.gmra.mrb[0].mxu0 %v10654
    %v11623 = vpop.f32.mrb[0].mxu0
    %v11624 = vadd.f32 %v11431, %v11623
    %v11625 = vpop.f32.mrb[0].mxu0
    %v11626 = vadd.f32 %v11433, %v11625
    %v11627 = vpop.f32.mrb[0].mxu0
    %v11628 = vadd.f32 %v11435, %v11627
    %v11629 = vpop.f32.mrb[0].mxu0
    %v11630 = vadd.f32 %v11437, %v11629
    %11631 = vmatprep.mubr.bf16.mxu0 %v10651
    %11632 = vmatmul.mubr.bf16.gmra.mrb[0].mxu0 %v10656
    %v11633 = vpop.f32.mrb[0].mxu0
    %v11634 = vadd.f32 %v11441, %v11633
    %v11635 = vpop.f32.mrb[0].mxu0
    %v11636 = vadd.f32 %v11443, %v11635
    %v11637 = vpop.f32.mrb[0].mxu0
    %v11638 = vadd.f32 %v11445, %v11637
    %v11639 = vpop.f32.mrb[0].mxu0
    %v11640 = vadd.f32 %v11447, %v11639
    %11641 = vmatprep.mubr.bf16.mxu0 %v10653
    %11642 = vmatmul.mubr.bf16.gmra.mrb[0].mxu0 %v10658
    %v11643 = vpop.f32.mrb[0].mxu0
    %v11644 = vadd.f32 %v11451, %v11643
    %v11645 = vpop.f32.mrb[0].mxu0
    %v11646 = vadd.f32 %v11453, %v11645
    %v11647 = vpop.f32.mrb[0].mxu0
    %v11648 = vadd.f32 %v11455, %v11647
    %v11649 = vpop.f32.mrb[0].mxu0
    %v11650 = vadd.f32 %v11457, %v11649
    %11651 = vmatprep.mubr.bf16.mxu0 %v10655
    %11652 = vmatmul.mubr.bf16.gmra.mrb[0].mxu0 %v10660
    %v11653 = vpop.f32.mrb[0].mxu0
    %v11654 = vadd.f32 %v11461, %v11653
    %v11655 = vpop.f32.mrb[0].mxu0
    %v11656 = vadd.f32 %v11463, %v11655
    %v11657 = vpop.f32.mrb[0].mxu0
    %v11658 = vadd.f32 %v11465, %v11657
    %v11659 = vpop.f32.mrb[0].mxu0
    %v11660 = vadd.f32 %v11467, %v11659
    %11661 = vmatprep.mubr.bf16.mxu0 %v10657
    %11662 = vmatmul.mubr.bf16.gmra.mrb[0].mxu0 %v10662
    %v11663 = vpop.f32.mrb[0].mxu0
    %v11664 = vadd.f32 %v11471, %v11663
    %v11665 = vpop.f32.mrb[0].mxu0
    %v11666 = vadd.f32 %v11473, %v11665
    %v11667 = vpop.f32.mrb[0].mxu0
    %v11668 = vadd.f32 %v11475, %v11667
    %v11669 = vpop.f32.mrb[0].mxu0
    %v11670 = vadd.f32 %v11477, %v11669
    %11671 = vmatprep.mubr.bf16.mxu0 %v10659
    %11672 = vmatmul.mubr.bf16.gmra.mrb[0].mxu0 %v10664
    %v11673 = vpop.f32.mrb[0].mxu0
    %v11674 = vadd.f32 %v11481, %v11673
    %v11675 = vpop.f32.mrb[0].mxu0
    %v11676 = vadd.f32 %v11483, %v11675
    %v11677 = vpop.f32.mrb[0].mxu0
    %v11678 = vadd.f32 %v11485, %v11677
    %v11679 = vpop.f32.mrb[0].mxu0
    %v11680 = vadd.f32 %v11487, %v11679
    %11681 = vmatprep.mubr.bf16.mxu0 %v10661
    %11682 = vmatmul.mubr.bf16.gmra.mrb[0].mxu0 0
    %v11683 = vpop.f32.mrb[0].mxu0
    %v11684 = vadd.f32 %v11491, %v11683
    %v11685 = vpop.f32.mrb[0].mxu0
    %v11686 = vadd.f32 %v11493, %v11685
    %v11687 = vpop.f32.mrb[0].mxu0
    %v11688 = vadd.f32 %v11495, %v11687
    %v11689 = vpop.f32.mrb[0].mxu0
    %v11690 = vadd.f32 %v11497, %v11689
    %11691 = vdwg.mxu0
    %11692 = vmatprep.subr.bf16.mxu0 %v11115
    %11693 = vmatpush1.bf16.msra.mxu0 %v11114
    %11694 = vmatprep.subr.bf16.mxu0 %v11117
    %11695 = vmatpush1.bf16.msra.mxu0 %v11116
    %11696 = vmatprep.subr.bf16.mxu0 %v11119
    %11697 = vmatpush1.bf16.msra.mxu0 %v11118
    %11698 = vmatprep.subr.bf16.mxu0 %v11121
    %11699 = vmatpush1.bf16.msra.mxu0 %v11120
    %11700 = vmatprep.subr.bf16.mxu0 %v11123
    %11701 = vmatpush1.bf16.msra.mxu0 %v11122
    %11702 = vmatprep.subr.bf16.mxu0 %v11125
    %11703 = vmatpush1.bf16.msra.mxu0 %v11124
    %11704 = vmatprep.subr.bf16.mxu0 %v11127
    %11705 = vmatpush1.bf16.msra.mxu0 %v11126
    %11706 = vmatprep.subr.bf16.mxu0 %v11129
    %11707 = vmatpush1.bf16.msra.mxu0 %v11128
    %11708 = vmatprep.subr.bf16.mxu0 %v11131
    %11709 = vmatpush1.bf16.msra.mxu0 %v11130
    %11710 = vmatprep.subr.bf16.mxu0 %v11133
    %11711 = vmatpush1.bf16.msra.mxu0 %v11132
    %11712 = vmatprep.subr.bf16.mxu0 %v11135
    %11713 = vmatpush1.bf16.msra.mxu0 %v11134
    %11714 = vmatprep.subr.bf16.mxu0 %v11137
    %11715 = vmatpush1.bf16.msra.mxu0 %v11136
    %11716 = vmatprep.subr.bf16.mxu0 %v11139
    %11717 = vmatpush1.bf16.msra.mxu0 %v11138
    %11718 = vmatprep.subr.bf16.mxu0 %v11141
    %11719 = vmatpush1.bf16.msra.mxu0 %v11140
    %11720 = vmatprep.subr.bf16.mxu0 %v11143
    %11721 = vmatpush1.bf16.msra.mxu0 %v11142
    %11722 = vmatprep.subr.bf16.mxu0 %v11145
    %11723 = vmatpush1.bf16.msra.mxu0 %v11144
    %11724 = vmatprep.mubr.bf16.mxu0 %v10635
    %11725 = vmatmul.mubr.bf16.gmra.mrb[0].mxu0 0
    %v11726 = vpop.f32.mrb[0].mxu0
    %v11727 = vadd.f32 %v11534, %v11726
    %v11728 = vpop.f32.mrb[0].mxu0
    %v11729 = vadd.f32 %v11536, %v11728
    %v11730 = vpop.f32.mrb[0].mxu0
    %v11731 = vadd.f32 %v11538, %v11730
    %v11732 = vpop.f32.mrb[0].mxu0
    %v11733 = vadd.f32 %v11540, %v11732
    %11734 = vmatprep.mubr.bf16.mxu0 %v10637
    %11735 = vmatmul.mubr.bf16.gmra.mrb[0].mxu0 %v10635
    %v11736 = vpop.f32.mrb[0].mxu0
    %v11737 = vadd.f32 %v11544, %v11736
    %v11738 = vpop.f32.mrb[0].mxu0
    %v11739 = vadd.f32 %v11546, %v11738
    %v11740 = vpop.f32.mrb[0].mxu0
    %v11741 = vadd.f32 %v11548, %v11740
    %v11742 = vpop.f32.mrb[0].mxu0
    %v11743 = vadd.f32 %v11550, %v11742
    %11744 = vmatprep.mubr.bf16.mxu0 %v10639
    %11745 = vmatmul.mubr.bf16.gmra.mrb[0].mxu0 %v10637
    %v11746 = vpop.f32.mrb[0].mxu0
    %v11747 = vadd.f32 %v11554, %v11746
    %v11748 = vpop.f32.mrb[0].mxu0
    %v11749 = vadd.f32 %v11556, %v11748
    %v11750 = vpop.f32.mrb[0].mxu0
    %v11751 = vadd.f32 %v11558, %v11750
    %v11752 = vpop.f32.mrb[0].mxu0
    %v11753 = vadd.f32 %v11560, %v11752
    %11754 = vmatprep.mubr.bf16.mxu0 %v10641
    %11755 = vmatmul.mubr.bf16.gmra.mrb[0].mxu0 %v10639
    %v11756 = vpop.f32.mrb[0].mxu0
    %v11757 = vadd.f32 %v11564, %v11756
    %v11758 = vpop.f32.mrb[0].mxu0
    %v11759 = vadd.f32 %v11566, %v11758
    %v11760 = vpop.f32.mrb[0].mxu0
    %v11761 = vadd.f32 %v11568, %v11760
    %v11762 = vpop.f32.mrb[0].mxu0
    %v11763 = vadd.f32 %v11570, %v11762
    %11764 = vmatprep.mubr.bf16.mxu0 %v10643
    %11765 = vmatmul.mubr.bf16.gmra.mrb[0].mxu0 %v10641
    %v11766 = vpop.f32.mrb[0].mxu0
    %v11767 = vadd.f32 %v11574, %v11766
    %v11768 = vpop.f32.mrb[0].mxu0
    %v11769 = vadd.f32 %v11576, %v11768
    %v11770 = vpop.f32.mrb[0].mxu0
    %v11771 = vadd.f32 %v11578, %v11770
    %v11772 = vpop.f32.mrb[0].mxu0
    %v11773 = vadd.f32 %v11580, %v11772
    %11774 = vmatprep.mubr.bf16.mxu0 %v10645
    %11775 = vmatmul.mubr.bf16.gmra.mrb[0].mxu0 %v10643
    %v11776 = vpop.f32.mrb[0].mxu0
    %v11777 = vadd.f32 %v11584, %v11776
    %v11778 = vpop.f32.mrb[0].mxu0
    %v11779 = vadd.f32 %v11586, %v11778
    %v11780 = vpop.f32.mrb[0].mxu0
    %v11781 = vadd.f32 %v11588, %v11780
    %v11782 = vpop.f32.mrb[0].mxu0
    %v11783 = vadd.f32 %v11590, %v11782
    %11784 = vmatprep.mubr.bf16.mxu0 %v10647
    %11785 = vmatmul.mubr.bf16.gmra.mrb[0].mxu0 %v10645
    %v11786 = vpop.f32.mrb[0].mxu0
    %v11787 = vadd.f32 %v11594, %v11786
    %v11788 = vpop.f32.mrb[0].mxu0
    %v11789 = vadd.f32 %v11596, %v11788
    %v11790 = vpop.f32.mrb[0].mxu0
    %v11791 = vadd.f32 %v11598, %v11790
    %v11792 = vpop.f32.mrb[0].mxu0
    %v11793 = vadd.f32 %v11600, %v11792
    %11794 = vmatprep.mubr.bf16.mxu0 %v10649
    %11795 = vmatmul.mubr.bf16.gmra.mrb[0].mxu0 %v10647
    %v11796 = vpop.f32.mrb[0].mxu0
    %v11797 = vadd.f32 %v11604, %v11796
    %v11798 = vpop.f32.mrb[0].mxu0
    %v11799 = vadd.f32 %v11606, %v11798
    %v11800 = vpop.f32.mrb[0].mxu0
    %v11801 = vadd.f32 %v11608, %v11800
    %v11802 = vpop.f32.mrb[0].mxu0
    %v11803 = vadd.f32 %v11610, %v11802
    %11804 = vmatprep.mubr.bf16.mxu0 %v10651
    %11805 = vmatmul.mubr.bf16.gmra.mrb[0].mxu0 0
    %v11806 = vpop.f32.mrb[0].mxu0
    %v11807 = vadd.f32 %v11614, %v11806
    %v11808 = vpop.f32.mrb[0].mxu0
    %v11809 = vadd.f32 %v11616, %v11808
    %v11810 = vpop.f32.mrb[0].mxu0
    %v11811 = vadd.f32 %v11618, %v11810
    %v11812 = vpop.f32.mrb[0].mxu0
    %v11813 = vadd.f32 %v11620, %v11812
    %11814 = vmatprep.mubr.bf16.mxu0 %v10653
    %11815 = vmatmul.mubr.bf16.gmra.mrb[0].mxu0 %v10651
    %v11816 = vpop.f32.mrb[0].mxu0
    %v11817 = vadd.f32 %v11624, %v11816
    %v11818 = vpop.f32.mrb[0].mxu0
    %v11819 = vadd.f32 %v11626, %v11818
    %v11820 = vpop.f32.mrb[0].mxu0
    %v11821 = vadd.f32 %v11628, %v11820
    %v11822 = vpop.f32.mrb[0].mxu0
    %v11823 = vadd.f32 %v11630, %v11822
    %11824 = vmatprep.mubr.bf16.mxu0 %v10655
    %11825 = vmatmul.mubr.bf16.gmra.mrb[0].mxu0 %v10653
    %v11826 = vpop.f32.mrb[0].mxu0
    %v11827 = vadd.f32 %v11634, %v11826
    %v11828 = vpop.f32.mrb[0].mxu0
    %v11829 = vadd.f32 %v11636, %v11828
    %v11830 = vpop.f32.mrb[0].mxu0
    %v11831 = vadd.f32 %v11638, %v11830
    %v11832 = vpop.f32.mrb[0].mxu0
    %v11833 = vadd.f32 %v11640, %v11832
    %11834 = vmatprep.mubr.bf16.mxu0 %v10657
    %11835 = vmatmul.mubr.bf16.gmra.mrb[0].mxu0 %v10655
    %v11836 = vpop.f32.mrb[0].mxu0
    %v11837 = vadd.f32 %v11644, %v11836
    %v11838 = vpop.f32.mrb[0].mxu0
    %v11839 = vadd.f32 %v11646, %v11838
    %v11840 = vpop.f32.mrb[0].mxu0
    %v11841 = vadd.f32 %v11648, %v11840
    %v11842 = vpop.f32.mrb[0].mxu0
    %v11843 = vadd.f32 %v11650, %v11842
    %11844 = vmatprep.mubr.bf16.mxu0 %v10659
    %11845 = vmatmul.mubr.bf16.gmra.mrb[0].mxu0 %v10657
    %v11846 = vpop.f32.mrb[0].mxu0
    %v11847 = vadd.f32 %v11654, %v11846
    %v11848 = vpop.f32.mrb[0].mxu0
    %v11849 = vadd.f32 %v11656, %v11848
    %v11850 = vpop.f32.mrb[0].mxu0
    %v11851 = vadd.f32 %v11658, %v11850
    %v11852 = vpop.f32.mrb[0].mxu0
    %v11853 = vadd.f32 %v11660, %v11852
    %11854 = vmatprep.mubr.bf16.mxu0 %v10661
    %11855 = vmatmul.mubr.bf16.gmra.mrb[0].mxu0 %v10659
    %v11856 = vpop.f32.mrb[0].mxu0
    %v11857 = vadd.f32 %v11664, %v11856
    %v11858 = vpop.f32.mrb[0].mxu0
    %v11859 = vadd.f32 %v11666, %v11858
    %v11860 = vpop.f32.mrb[0].mxu0
    %v11861 = vadd.f32 %v11668, %v11860
    %v11862 = vpop.f32.mrb[0].mxu0
    %v11863 = vadd.f32 %v11670, %v11862
    %11864 = vmatprep.mubr.bf16.mxu0 %v10663
    %11865 = vmatmul.mubr.bf16.gmra.mrb[0].mxu0 %v10661
    %v11866 = vpop.f32.mrb[0].mxu0
    %v11867 = vadd.f32 %v11674, %v11866
    %v11868 = vpop.f32.mrb[0].mxu0
    %v11869 = vadd.f32 %v11676, %v11868
    %v11870 = vpop.f32.mrb[0].mxu0
    %v11871 = vadd.f32 %v11678, %v11870
    %v11872 = vpop.f32.mrb[0].mxu0
    %v11873 = vadd.f32 %v11680, %v11872
    %11874 = vmatprep.mubr.bf16.mxu0 %v10665
    %11875 = vmatmul.mubr.bf16.gmra.mrb[0].mxu0 %v10663
    %v11876 = vpop.f32.mrb[0].mxu0
    %v11877 = vadd.f32 %v11684, %v11876
    %v11878 = vpop.f32.mrb[0].mxu0
    %v11879 = vadd.f32 %v11686, %v11878
    %v11880 = vpop.f32.mrb[0].mxu0
    %v11881 = vadd.f32 %v11688, %v11880
    %v11882 = vpop.f32.mrb[0].mxu0
    %v11883 = vadd.f32 %v11690, %v11882
    %11884 = vdwg.mxu0
    %11885 = vmatprep.subr.bf16.mxu0 %v11147
    %11886 = vmatpush1.bf16.msra.mxu0 %v11146
    %11887 = vmatprep.subr.bf16.mxu0 %v11149
    %11888 = vmatpush1.bf16.msra.mxu0 %v11148
    %11889 = vmatprep.subr.bf16.mxu0 %v11151
    %11890 = vmatpush1.bf16.msra.mxu0 %v11150
    %11891 = vmatprep.subr.bf16.mxu0 %v11153
    %11892 = vmatpush1.bf16.msra.mxu0 %v11152
    %11893 = vmatprep.subr.bf16.mxu0 %v11155
    %11894 = vmatpush1.bf16.msra.mxu0 %v11154
    %11895 = vmatprep.subr.bf16.mxu0 %v11157
    %11896 = vmatpush1.bf16.msra.mxu0 %v11156
    %11897 = vmatprep.subr.bf16.mxu0 %v11159
    %11898 = vmatpush1.bf16.msra.mxu0 %v11158
    %11899 = vmatprep.subr.bf16.mxu0 %v11161
    %11900 = vmatpush1.bf16.msra.mxu0 %v11160
    %11901 = vmatprep.subr.bf16.mxu0 %v11163
    %11902 = vmatpush1.bf16.msra.mxu0 %v11162
    %11903 = vmatprep.subr.bf16.mxu0 %v11165
    %11904 = vmatpush1.bf16.msra.mxu0 %v11164
    %11905 = vmatprep.subr.bf16.mxu0 %v11167
    %11906 = vmatpush1.bf16.msra.mxu0 %v11166
    %11907 = vmatprep.subr.bf16.mxu0 %v11169
    %11908 = vmatpush1.bf16.msra.mxu0 %v11168
    %11909 = vmatprep.subr.bf16.mxu0 %v11171
    %11910 = vmatpush1.bf16.msra.mxu0 %v11170
    %11911 = vmatprep.subr.bf16.mxu0 %v11173
    %11912 = vmatpush1.bf16.msra.mxu0 %v11172
    %11913 = vmatprep.subr.bf16.mxu0 %v11175
    %11914 = vmatpush1.bf16.msra.mxu0 %v11174
    %11915 = vmatprep.subr.bf16.mxu0 %v11177
    %11916 = vmatpush1.bf16.msra.mxu0 %v11176
    %11917 = vmatprep.mubr.bf16.mxu0 %v10639
    %11918 = vmatmul.mubr.bf16.gmra.mrb[0].mxu0 %v10637
    %v11919 = vpop.f32.mrb[0].mxu0
    %v11920 = vadd.f32 %v11727, %v11919
    %v11921 = vpop.f32.mrb[0].mxu0
    %v11922 = vadd.f32 %v11729, %v11921
    %v11923 = vpop.f32.mrb[0].mxu0
    %v11924 = vadd.f32 %v11731, %v11923
    %v11925 = vpop.f32.mrb[0].mxu0
    %v11926 = vadd.f32 %v11733, %v11925
    %11927 = vmatprep.mubr.bf16.mxu0 %v10641
    %11928 = vmatmul.mubr.bf16.gmra.mrb[0].mxu0 %v10639
    %v11929 = vpop.f32.mrb[0].mxu0
    %v11930 = vadd.f32 %v11737, %v11929
    %v11931 = vpop.f32.mrb[0].mxu0
    %v11932 = vadd.f32 %v11739, %v11931
    %v11933 = vpop.f32.mrb[0].mxu0
    %v11934 = vadd.f32 %v11741, %v11933
    %v11935 = vpop.f32.mrb[0].mxu0
    %v11936 = vadd.f32 %v11743, %v11935
    %11937 = vmatprep.mubr.bf16.mxu0 %v10643
    %11938 = vmatmul.mubr.bf16.gmra.mrb[0].mxu0 %v10641
    %v11939 = vpop.f32.mrb[0].mxu0
    %v11940 = vadd.f32 %v11747, %v11939
    %v11941 = vpop.f32.mrb[0].mxu0
    %v11942 = vadd.f32 %v11749, %v11941
    %v11943 = vpop.f32.mrb[0].mxu0
    %v11944 = vadd.f32 %v11751, %v11943
    %v11945 = vpop.f32.mrb[0].mxu0
    %v11946 = vadd.f32 %v11753, %v11945
    %11947 = vmatprep.mubr.bf16.mxu0 %v10645
    %11948 = vmatmul.mubr.bf16.gmra.mrb[0].mxu0 %v10643
    %v11949 = vpop.f32.mrb[0].mxu0
    %v11950 = vadd.f32 %v11757, %v11949
    %v11951 = vpop.f32.mrb[0].mxu0
    %v11952 = vadd.f32 %v11759, %v11951
    %v11953 = vpop.f32.mrb[0].mxu0
    %v11954 = vadd.f32 %v11761, %v11953
    %v11955 = vpop.f32.mrb[0].mxu0
    %v11956 = vadd.f32 %v11763, %v11955
    %11957 = vmatprep.mubr.bf16.mxu0 %v10647
    %11958 = vmatmul.mubr.bf16.gmra.mrb[0].mxu0 %v10645
    %v11959 = vpop.f32.mrb[0].mxu0
    %v11960 = vadd.f32 %v11767, %v11959
    %v11961 = vpop.f32.mrb[0].mxu0
    %v11962 = vadd.f32 %v11769, %v11961
    %v11963 = vpop.f32.mrb[0].mxu0
    %v11964 = vadd.f32 %v11771, %v11963
    %v11965 = vpop.f32.mrb[0].mxu0
    %v11966 = vadd.f32 %v11773, %v11965
    %11967 = vmatprep.mubr.bf16.mxu0 %v10649
    %11968 = vmatmul.mubr.bf16.gmra.mrb[0].mxu0 %v10647
    %v11969 = vpop.f32.mrb[0].mxu0
    %v11970 = vadd.f32 %v11777, %v11969
    %v11971 = vpop.f32.mrb[0].mxu0
    %v11972 = vadd.f32 %v11779, %v11971
    %v11973 = vpop.f32.mrb[0].mxu0
    %v11974 = vadd.f32 %v11781, %v11973
    %v11975 = vpop.f32.mrb[0].mxu0
    %v11976 = vadd.f32 %v11783, %v11975
    %11977 = vmatprep.mubr.bf16.mxu0 0
    %11978 = vmatmul.mubr.bf16.gmra.mrb[0].mxu0 %v10649
    %v11979 = vpop.f32.mrb[0].mxu0
    %v11980 = vadd.f32 %v11787, %v11979
    %v11981 = vpop.f32.mrb[0].mxu0
    %v11982 = vadd.f32 %v11789, %v11981
    %v11983 = vpop.f32.mrb[0].mxu0
    %v11984 = vadd.f32 %v11791, %v11983
    %v11985 = vpop.f32.mrb[0].mxu0
    %v11986 = vadd.f32 %v11793, %v11985
    %11987 = vmatprep.mubr.bf16.mxu0 0
    %11988 = vmatmul.mubr.bf16.gmra.mrb[0].mxu0 0
    %v11989 = vpop.f32.mrb[0].mxu0
    %v11990 = vadd.f32 %v11797, %v11989
    %v11991 = vpop.f32.mrb[0].mxu0
    %v11992 = vadd.f32 %v11799, %v11991
    %v11993 = vpop.f32.mrb[0].mxu0
    %v11994 = vadd.f32 %v11801, %v11993
    %v11995 = vpop.f32.mrb[0].mxu0
    %v11996 = vadd.f32 %v11803, %v11995
    %11997 = vmatprep.mubr.bf16.mxu0 %v10655
    %11998 = vmatmul.mubr.bf16.gmra.mrb[0].mxu0 %v10653
    %v11999 = vpop.f32.mrb[0].mxu0
    %v12000 = vadd.f32 %v11807, %v11999
    %v12001 = vpop.f32.mrb[0].mxu0
    %v12002 = vadd.f32 %v11809, %v12001
    %v12003 = vpop.f32.mrb[0].mxu0
    %v12004 = vadd.f32 %v11811, %v12003
    %v12005 = vpop.f32.mrb[0].mxu0
    %v12006 = vadd.f32 %v11813, %v12005
    %12007 = vmatprep.mubr.bf16.mxu0 %v10657
    %12008 = vmatmul.mubr.bf16.gmra.mrb[0].mxu0 %v10655
    %v12009 = vpop.f32.mrb[0].mxu0
    %v12010 = vadd.f32 %v11817, %v12009
    %v12011 = vpop.f32.mrb[0].mxu0
    %v12012 = vadd.f32 %v11819, %v12011
    %v12013 = vpop.f32.mrb[0].mxu0
    %v12014 = vadd.f32 %v11821, %v12013
    %v12015 = vpop.f32.mrb[0].mxu0
    %v12016 = vadd.f32 %v11823, %v12015
    %12017 = vmatprep.mubr.bf16.mxu0 %v10659
    %12018 = vmatmul.mubr.bf16.gmra.mrb[0].mxu0 %v10657
    %v12019 = vpop.f32.mrb[0].mxu0
    %v12020 = vadd.f32 %v11827, %v12019
    %v12021 = vpop.f32.mrb[0].mxu0
    %v12022 = vadd.f32 %v11829, %v12021
    %v12023 = vpop.f32.mrb[0].mxu0
    %v12024 = vadd.f32 %v11831, %v12023
    %v12025 = vpop.f32.mrb[0].mxu0
    %v12026 = vadd.f32 %v11833, %v12025
    %12027 = vmatprep.mubr.bf16.mxu0 %v10661
    %12028 = vmatmul.mubr.bf16.gmra.mrb[0].mxu0 %v10659
    %v12029 = vpop.f32.mrb[0].mxu0
    %v12030 = vadd.f32 %v11837, %v12029
    %v12031 = vpop.f32.mrb[0].mxu0
    %v12032 = vadd.f32 %v11839, %v12031
    %v12033 = vpop.f32.mrb[0].mxu0
    %v12034 = vadd.f32 %v11841, %v12033
    %v12035 = vpop.f32.mrb[0].mxu0
    %v12036 = vadd.f32 %v11843, %v12035
    %12037 = vmatprep.mubr.bf16.mxu0 %v10663
    %12038 = vmatmul.mubr.bf16.gmra.mrb[0].mxu0 %v10661
    %v12039 = vpop.f32.mrb[0].mxu0
    %v12040 = vadd.f32 %v11847, %v12039
    %v12041 = vpop.f32.mrb[0].mxu0
    %v12042 = vadd.f32 %v11849, %v12041
    %v12043 = vpop.f32.mrb[0].mxu0
    %v12044 = vadd.f32 %v11851, %v12043
    %v12045 = vpop.f32.mrb[0].mxu0
    %v12046 = vadd.f32 %v11853, %v12045
    %12047 = vmatprep.mubr.bf16.mxu0 %v10665
    %12048 = vmatmul.mubr.bf16.gmra.mrb[0].mxu0 %v10663
    %v12049 = vpop.f32.mrb[0].mxu0
    %v12050 = vadd.f32 %v11857, %v12049
    %v12051 = vpop.f32.mrb[0].mxu0
    %v12052 = vadd.f32 %v11859, %v12051
    %v12053 = vpop.f32.mrb[0].mxu0
    %v12054 = vadd.f32 %v11861, %v12053
    %v12055 = vpop.f32.mrb[0].mxu0
    %v12056 = vadd.f32 %v11863, %v12055
    %12057 = vmatprep.mubr.bf16.mxu0 0
    %12058 = vmatmul.mubr.bf16.gmra.mrb[0].mxu0 %v10665
    %v12059 = vpop.f32.mrb[0].mxu0
    %v12060 = vadd.f32 %v11867, %v12059
    %v12061 = vpop.f32.mrb[0].mxu0
    %v12062 = vadd.f32 %v11869, %v12061
    %v12063 = vpop.f32.mrb[0].mxu0
    %v12064 = vadd.f32 %v11871, %v12063
    %v12065 = vpop.f32.mrb[0].mxu0
    %v12066 = vadd.f32 %v11873, %v12065
    %12067 = vmatprep.mubr.bf16.mxu0 0
    %12068 = vmatmul.mubr.bf16.gmra.mrb[0].mxu0 0
    %v12069 = vpop.f32.mrb[0].mxu0
    %v12070 = vadd.f32 %v11877, %v12069
    %v12071 = vpop.f32.mrb[0].mxu0
    %v12072 = vadd.f32 %v11879, %v12071
    %v12073 = vpop.f32.mrb[0].mxu0
    %v12074 = vadd.f32 %v11881, %v12073
    %v12075 = vpop.f32.mrb[0].mxu0
    %v12076 = vadd.f32 %v11883, %v12075
    %12077 = vdwg.mxu0
    %v12078 = vmax.f32 %v11920, 0.0
    %v12079 = vmax.f32 %v11922, 0.0
    %v12080 = vmax.f32 %v11924, 0.0
    %v12081 = vmax.f32 %v11926, 0.0
    %v12082 = vmax.f32 %v11930, 0.0
    %v12083 = vmax.f32 %v11932, 0.0
    %v12084 = vmax.f32 %v11934, 0.0
    %v12085 = vmax.f32 %v11936, 0.0
    %v12086 = vmax.f32 %v11940, 0.0
    %v12087 = vmax.f32 %v11942, 0.0
    %v12088 = vmax.f32 %v11944, 0.0
    %v12089 = vmax.f32 %v11946, 0.0
    %v12090 = vmax.f32 %v11950, 0.0
    %v12091 = vmax.f32 %v11952, 0.0
    %v12092 = vmax.f32 %v11954, 0.0
    %v12093 = vmax.f32 %v11956, 0.0
    %v12094 = vmax.f32 %v11960, 0.0
    %v12095 = vmax.f32 %v11962, 0.0
    %v12096 = vmax.f32 %v11964, 0.0
    %v12097 = vmax.f32 %v11966, 0.0
    %v12098 = vmax.f32 %v11970, 0.0
    %v12099 = vmax.f32 %v11972, 0.0
    %v12100 = vmax.f32 %v11974, 0.0
    %v12101 = vmax.f32 %v11976, 0.0
    %v12102 = vmax.f32 %v11980, 0.0
    %v12103 = vmax.f32 %v11982, 0.0
    %v12104 = vmax.f32 %v11984, 0.0
    %v12105 = vmax.f32 %v11986, 0.0
    %v12106 = vmax.f32 %v11990, 0.0
    %v12107 = vmax.f32 %v11992, 0.0
    %v12108 = vmax.f32 %v11994, 0.0
    %v12109 = vmax.f32 %v11996, 0.0
    %v12110 = vmax.f32 %v12000, 0.0
    %v12111 = vmax.f32 %v12002, 0.0
    %v12112 = vmax.f32 %v12004, 0.0
    %v12113 = vmax.f32 %v12006, 0.0
    %v12114 = vmax.f32 %v12010, 0.0
    %v12115 = vmax.f32 %v12012, 0.0
    %v12116 = vmax.f32 %v12014, 0.0
    %v12117 = vmax.f32 %v12016, 0.0
    %v12118 = vmax.f32 %v12020, 0.0
    %v12119 = vmax.f32 %v12022, 0.0
    %v12120 = vmax.f32 %v12024, 0.0
    %v12121 = vmax.f32 %v12026, 0.0
    %v12122 = vmax.f32 %v12030, 0.0
    %v12123 = vmax.f32 %v12032, 0.0
    %v12124 = vmax.f32 %v12034, 0.0
    %v12125 = vmax.f32 %v12036, 0.0
    %v12126 = vmax.f32 %v12040, 0.0
    %v12127 = vmax.f32 %v12042, 0.0
    %v12128 = vmax.f32 %v12044, 0.0
    %v12129 = vmax.f32 %v12046, 0.0
    %v12130 = vmax.f32 %v12050, 0.0
    %v12131 = vmax.f32 %v12052, 0.0
    %v12132 = vmax.f32 %v12054, 0.0
    %v12133 = vmax.f32 %v12056, 0.0
    %v12134 = vmax.f32 %v12060, 0.0
    %v12135 = vmax.f32 %v12062, 0.0
    %v12136 = vmax.f32 %v12064, 0.0
    %v12137 = vmax.f32 %v12066, 0.0
    %v12138 = vmax.f32 %v12070, 0.0
    %v12139 = vmax.f32 %v12072, 0.0
    %v12140 = vmax.f32 %v12074, 0.0
    %v12141 = vmax.f32 %v12076, 0.0
    %v12142 = vadd.f32 %v12078, %v12079
    %v12143 = vadd.f32 %v12080, %v12081
    %v12144 = vadd.f32 %v12082, %v12083
    %v12145 = vadd.f32 %v12084, %v12085
    %v12146 = vadd.f32 %v12086, %v12087
    %v12147 = vadd.f32 %v12088, %v12089
    %v12148 = vadd.f32 %v12090, %v12091
    %v12149 = vadd.f32 %v12092, %v12093
    %v12150 = vadd.f32 %v12094, %v12095
    %v12151 = vadd.f32 %v12096, %v12097
    %v12152 = vadd.f32 %v12098, %v12099
    %v12153 = vadd.f32 %v12100, %v12101
    %v12154 = vadd.f32 %v12102, %v12103
    %v12155 = vadd.f32 %v12104, %v12105
    %v12156 = vadd.f32 %v12106, %v12107
    %v12157 = vadd.f32 %v12108, %v12109
    %v12158 = vadd.f32 %v12110, %v12111
    %v12159 = vadd.f32 %v12112, %v12113
    %v12160 = vadd.f32 %v12114, %v12115
    %v12161 = vadd.f32 %v12116, %v12117
    %v12162 = vadd.f32 %v12118, %v12119
    %v12163 = vadd.f32 %v12120, %v12121
    %v12164 = vadd.f32 %v12122, %v12123
    %v12165 = vadd.f32 %v12124, %v12125
    %v12166 = vadd.f32 %v12126, %v12127
    %v12167 = vadd.f32 %v12128, %v12129
    %v12168 = vadd.f32 %v12130, %v12131
    %v12169 = vadd.f32 %v12132, %v12133
    %v12170 = vadd.f32 %v12134, %v12135
    %v12171 = vadd.f32 %v12136, %v12137
    %v12172 = vadd.f32 %v12138, %v12139
    %v12173 = vadd.f32 %v12140, %v12141
    %v12174 = vpack.c.bf16 %v12143, %v12142
    %v12175 = vpack.c.bf16 %v12145, %v12144
    %v12176 = vpack.c.bf16 %v12147, %v12146
    %v12177 = vpack.c.bf16 %v12149, %v12148
    %v12178 = vpack.c.bf16 %v12151, %v12150
    %v12179 = vpack.c.bf16 %v12153, %v12152
    %v12180 = vpack.c.bf16 %v12155, %v12154
    %v12181 = vpack.c.bf16 %v12157, %v12156
    %v12182 = vpack.c.bf16 %v12159, %v12158
    %v12183 = vpack.c.bf16 %v12161, %v12160
    %v12184 = vpack.c.bf16 %v12163, %v12162
    %v12185 = vpack.c.bf16 %v12165, %v12164
    %v12186 = vpack.c.bf16 %v12167, %v12166
    %v12187 = vpack.c.bf16 %v12169, %v12168
    %v12188 = vpack.c.bf16 %v12171, %v12170
    %v12189 = vpack.c.bf16 %v12173, %v12172
    %v12206 = vunpack.c.l.b16 %v9936
    %v12207 = vunpack.c.h.b16 %v9936
    %v12208 = vunpack.c.l.b16 %v9937
    %v12209 = vunpack.c.h.b16 %v9937
    %v12210 = vunpack.c.l.b16 %v9938
    %v12211 = vunpack.c.h.b16 %v9938
    %v12212 = vunpack.c.l.b16 %v9939
    %v12213 = vunpack.c.h.b16 %v9939
    %v12214 = vunpack.c.l.b16 %v9940
    %v12215 = vunpack.c.h.b16 %v9940
    %v12216 = vunpack.c.l.b16 %v9941
    %v12217 = vunpack.c.h.b16 %v9941
    %v12218 = vunpack.c.l.b16 %v9942
    %v12219 = vunpack.c.h.b16 %v9942
    %v12220 = vunpack.c.l.b16 %v9943
    %v12221 = vunpack.c.h.b16 %v9943
    %v12222 = vunpack.c.l.b16 %v9944
    %v12223 = vunpack.c.h.b16 %v9944
    %v12224 = vunpack.c.l.b16 %v9945
    %v12225 = vunpack.c.h.b16 %v9945
    %v12226 = vunpack.c.l.b16 %v9946
    %v12227 = vunpack.c.h.b16 %v9946
    %v12228 = vunpack.c.l.b16 %v9947
    %v12229 = vunpack.c.h.b16 %v9947
    %v12230 = vunpack.c.l.b16 %v9948
    %v12231 = vunpack.c.h.b16 %v9948
    %v12232 = vunpack.c.l.b16 %v9949
    %v12233 = vunpack.c.h.b16 %v9949
    %v12234 = vunpack.c.l.b16 %v9950
    %v12235 = vunpack.c.h.b16 %v9950
    %v12236 = vunpack.c.l.b16 %v9951
    %v12237 = vunpack.c.h.b16 %v9951
    %v12238 = vpack.c.b16 %v12208, %v12206
    %v12239 = vpack.c.b16 %v12209, %v12207
    %v12240 = vpack.c.b16 %v12212, %v12210
    %v12241 = vpack.c.b16 %v12213, %v12211
    %v12242 = vpack.c.b16 %v12216, %v12214
    %v12243 = vpack.c.b16 %v12217, %v12215
    %v12244 = vpack.c.b16 %v12220, %v12218
    %v12245 = vpack.c.b16 %v12221, %v12219
    %v12246 = vpack.c.b16 %v12224, %v12222
    %v12247 = vpack.c.b16 %v12225, %v12223
    %v12248 = vpack.c.b16 %v12228, %v12226
    %v12249 = vpack.c.b16 %v12229, %v12227
    %v12250 = vpack.c.b16 %v12232, %v12230
    %v12251 = vpack.c.b16 %v12233, %v12231
    %v12252 = vpack.c.b16 %v12236, %v12234
    %v12253 = vpack.c.b16 %v12237, %v12235
    %12270 = vmatprep.subr.bf16.mxu0 %v12239
    %12271 = vmatpush1.bf16.msra.mxu0 %v12238
    %12272 = vmatprep.subr.bf16.mxu0 %v12241
    %12273 = vmatpush1.bf16.msra.mxu0 %v12240
    %12274 = vmatprep.subr.bf16.mxu0 %v12243
    %12275 = vmatpush1.bf16.msra.mxu0 %v12242
    %12276 = vmatprep.subr.bf16.mxu0 %v12245
    %12277 = vmatpush1.bf16.msra.mxu0 %v12244
    %12278 = vmatprep.subr.bf16.mxu0 %v12247
    %12279 = vmatpush1.bf16.msra.mxu0 %v12246
    %12280 = vmatprep.subr.bf16.mxu0 %v12249
    %12281 = vmatpush1.bf16.msra.mxu0 %v12248
    %12282 = vmatprep.subr.bf16.mxu0 %v12251
    %12283 = vmatpush1.bf16.msra.mxu0 %v12250
    %12284 = vmatprep.subr.bf16.mxu0 %v12253
    %12285 = vmatpush1.bf16.msra.mxu0 %v12252
    %12286 = vmatprep.subr.bf16.mxu0 0
    %12287 = vmatpush1.bf16.msra.mxu0 0
    %12288 = vmatprep.subr.bf16.mxu0 0
    %12289 = vmatpush1.bf16.msra.mxu0 0
    %12290 = vmatprep.subr.bf16.mxu0 0
    %12291 = vmatpush1.bf16.msra.mxu0 0
    %12292 = vmatprep.subr.bf16.mxu0 0
    %12293 = vmatpush1.bf16.msra.mxu0 0
    %12294 = vmatprep.subr.bf16.mxu0 0
    %12295 = vmatpush1.bf16.msra.mxu0 0
    %12296 = vmatprep.subr.bf16.mxu0 0
    %12297 = vmatpush1.bf16.msra.mxu0 0
    %12298 = vmatprep.subr.bf16.mxu0 0
    %12299 = vmatpush1.bf16.msra.mxu0 0
    %12300 = vmatprep.subr.bf16.mxu0 0
    %12301 = vmatpush1.bf16.msra.mxu0 0
    %12302 = vmatprep.mubr.bf16.mxu0 0
    %12303 = vmatmul.mubr.bf16.gmra.mrb[0].mxu0 %v12174
    %v12304 = vpop.f32.mrb[0].mxu0
    %v12305 = vadd.f32 0.0, %v12304
    %v12306 = vpop.f32.mrb[0].mxu0
    %v12307 = vpop.f32.mrb[0].mxu0
    %v12308 = vadd.f32 0.0, %v12307
    %v12309 = vpop.f32.mrb[0].mxu0
    %12310 = vmatprep.mubr.bf16.mxu0 0
    %12311 = vmatmul.mubr.bf16.gmra.mrb[0].mxu0 %v12175
    %v12312 = vpop.f32.mrb[0].mxu0
    %v12313 = vadd.f32 0.0, %v12312
    %v12314 = vpop.f32.mrb[0].mxu0
    %v12315 = vpop.f32.mrb[0].mxu0
    %v12316 = vadd.f32 0.0, %v12315
    %v12317 = vpop.f32.mrb[0].mxu0
    %12318 = vmatprep.mubr.bf16.mxu0 0
    %12319 = vmatmul.mubr.bf16.gmra.mrb[0].mxu0 %v12176
    %v12320 = vpop.f32.mrb[0].mxu0
    %v12321 = vadd.f32 0.0, %v12320
    %v12322 = vpop.f32.mrb[0].mxu0
    %v12323 = vpop.f32.mrb[0].mxu0
    %v12324 = vadd.f32 0.0, %v12323
    %v12325 = vpop.f32.mrb[0].mxu0
    %12326 = vmatprep.mubr.bf16.mxu0 0
    %12327 = vmatmul.mubr.bf16.gmra.mrb[0].mxu0 %v12177
    %v12328 = vpop.f32.mrb[0].mxu0
    %v12329 = vadd.f32 0.0, %v12328
    %v12330 = vpop.f32.mrb[0].mxu0
    %v12331 = vpop.f32.mrb[0].mxu0
    %v12332 = vadd.f32 0.0, %v12331
    %v12333 = vpop.f32.mrb[0].mxu0
    %12334 = vmatprep.mubr.bf16.mxu0 0
    %12335 = vmatmul.mubr.bf16.gmra.mrb[0].mxu0 %v12178
    %v12336 = vpop.f32.mrb[0].mxu0
    %v12337 = vadd.f32 0.0, %v12336
    %v12338 = vpop.f32.mrb[0].mxu0
    %v12339 = vpop.f32.mrb[0].mxu0
    %v12340 = vadd.f32 0.0, %v12339
    %v12341 = vpop.f32.mrb[0].mxu0
    %12342 = vmatprep.mubr.bf16.mxu0 0
    %12343 = vmatmul.mubr.bf16.gmra.mrb[0].mxu0 %v12179
    %v12344 = vpop.f32.mrb[0].mxu0
    %v12345 = vadd.f32 0.0, %v12344
    %v12346 = vpop.f32.mrb[0].mxu0
    %v12347 = vpop.f32.mrb[0].mxu0
    %v12348 = vadd.f32 0.0, %v12347
    %v12349 = vpop.f32.mrb[0].mxu0
    %12350 = vmatprep.mubr.bf16.mxu0 0
    %12351 = vmatmul.mubr.bf16.gmra.mrb[0].mxu0 %v12180
    %v12352 = vpop.f32.mrb[0].mxu0
    %v12353 = vadd.f32 0.0, %v12352
    %v12354 = vpop.f32.mrb[0].mxu0
    %v12355 = vpop.f32.mrb[0].mxu0
    %v12356 = vadd.f32 0.0, %v12355
    %v12357 = vpop.f32.mrb[0].mxu0
    %12358 = vmatprep.mubr.bf16.mxu0 0
    %12359 = vmatmul.mubr.bf16.gmra.mrb[0].mxu0 %v12181
    %v12360 = vpop.f32.mrb[0].mxu0
    %v12361 = vadd.f32 0.0, %v12360
    %v12362 = vpop.f32.mrb[0].mxu0
    %v12363 = vpop.f32.mrb[0].mxu0
    %v12364 = vadd.f32 0.0, %v12363
    %v12365 = vpop.f32.mrb[0].mxu0
    %12366 = vmatprep.mubr.bf16.mxu0 0
    %12367 = vmatmul.mubr.bf16.gmra.mrb[0].mxu0 %v12182
    %v12368 = vpop.f32.mrb[0].mxu0
    %v12369 = vadd.f32 0.0, %v12368
    %v12370 = vpop.f32.mrb[0].mxu0
    %v12371 = vpop.f32.mrb[0].mxu0
    %v12372 = vadd.f32 0.0, %v12371
    %v12373 = vpop.f32.mrb[0].mxu0
    %12374 = vmatprep.mubr.bf16.mxu0 0
    %12375 = vmatmul.mubr.bf16.gmra.mrb[0].mxu0 %v12183
    %v12376 = vpop.f32.mrb[0].mxu0
    %v12377 = vadd.f32 0.0, %v12376
    %v12378 = vpop.f32.mrb[0].mxu0
    %v12379 = vpop.f32.mrb[0].mxu0
    %v12380 = vadd.f32 0.0, %v12379
    %v12381 = vpop.f32.mrb[0].mxu0
    %12382 = vmatprep.mubr.bf16.mxu0 0
    %12383 = vmatmul.mubr.bf16.gmra.mrb[0].mxu0 %v12184
    %v12384 = vpop.f32.mrb[0].mxu0
    %v12385 = vadd.f32 0.0, %v12384
    %v12386 = vpop.f32.mrb[0].mxu0
    %v12387 = vpop.f32.mrb[0].mxu0
    %v12388 = vadd.f32 0.0, %v12387
    %v12389 = vpop.f32.mrb[0].mxu0
    %12390 = vmatprep.mubr.bf16.mxu0 0
    %12391 = vmatmul.mubr.bf16.gmra.mrb[0].mxu0 %v12185
    %v12392 = vpop.f32.mrb[0].mxu0
    %v12393 = vadd.f32 0.0, %v12392
    %v12394 = vpop.f32.mrb[0].mxu0
    %v12395 = vpop.f32.mrb[0].mxu0
    %v12396 = vadd.f32 0.0, %v12395
    %v12397 = vpop.f32.mrb[0].mxu0
    %12398 = vmatprep.mubr.bf16.mxu0 0
    %12399 = vmatmul.mubr.bf16.gmra.mrb[0].mxu0 %v12186
    %v12400 = vpop.f32.mrb[0].mxu0
    %v12401 = vadd.f32 0.0, %v12400
    %v12402 = vpop.f32.mrb[0].mxu0
    %v12403 = vpop.f32.mrb[0].mxu0
    %v12404 = vadd.f32 0.0, %v12403
    %v12405 = vpop.f32.mrb[0].mxu0
    %12406 = vmatprep.mubr.bf16.mxu0 0
    %12407 = vmatmul.mubr.bf16.gmra.mrb[0].mxu0 %v12187
    %v12408 = vpop.f32.mrb[0].mxu0
    %v12409 = vadd.f32 0.0, %v12408
    %v12410 = vpop.f32.mrb[0].mxu0
    %v12411 = vpop.f32.mrb[0].mxu0
    %v12412 = vadd.f32 0.0, %v12411
    %v12413 = vpop.f32.mrb[0].mxu0
    %12414 = vmatprep.mubr.bf16.mxu0 0
    %12415 = vmatmul.mubr.bf16.gmra.mrb[0].mxu0 %v12188
    %v12416 = vpop.f32.mrb[0].mxu0
    %v12417 = vadd.f32 0.0, %v12416
    %v12418 = vpop.f32.mrb[0].mxu0
    %v12419 = vpop.f32.mrb[0].mxu0
    %v12420 = vadd.f32 0.0, %v12419
    %v12421 = vpop.f32.mrb[0].mxu0
    %12422 = vmatprep.mubr.bf16.mxu0 0
    %12423 = vmatmul.mubr.bf16.gmra.mrb[0].mxu0 %v12189
    %v12424 = vpop.f32.mrb[0].mxu0
    %v12425 = vadd.f32 0.0, %v12424
    %v12426 = vpop.f32.mrb[0].mxu0
    %v12427 = vpop.f32.mrb[0].mxu0
    %v12428 = vadd.f32 0.0, %v12427
    %v12429 = vpop.f32.mrb[0].mxu0
    %12430 = vdwg.mxu0
    %v12431 = vmax.f32 %v12305, 0.0
    %v12432 = vmax.f32 %v12308, 0.0
    %v12433 = vmax.f32 %v12313, 0.0
    %v12434 = vmax.f32 %v12316, 0.0
    %v12435 = vmax.f32 %v12321, 0.0
    %v12436 = vmax.f32 %v12324, 0.0
    %v12437 = vmax.f32 %v12329, 0.0
    %v12438 = vmax.f32 %v12332, 0.0
    %v12439 = vmax.f32 %v12337, 0.0
    %v12440 = vmax.f32 %v12340, 0.0
    %v12441 = vmax.f32 %v12345, 0.0
    %v12442 = vmax.f32 %v12348, 0.0
    %v12443 = vmax.f32 %v12353, 0.0
    %v12444 = vmax.f32 %v12356, 0.0
    %v12445 = vmax.f32 %v12361, 0.0
    %v12446 = vmax.f32 %v12364, 0.0
    %v12447 = vmax.f32 %v12369, 0.0
    %v12448 = vmax.f32 %v12372, 0.0
    %v12449 = vmax.f32 %v12377, 0.0
    %v12450 = vmax.f32 %v12380, 0.0
    %v12451 = vmax.f32 %v12385, 0.0
    %v12452 = vmax.f32 %v12388, 0.0
    %v12453 = vmax.f32 %v12393, 0.0
    %v12454 = vmax.f32 %v12396, 0.0
    %v12455 = vmax.f32 %v12401, 0.0
    %v12456 = vmax.f32 %v12404, 0.0
    %v12457 = vmax.f32 %v12409, 0.0
    %v12458 = vmax.f32 %v12412, 0.0
    %v12459 = vmax.f32 %v12417, 0.0
    %v12460 = vmax.f32 %v12420, 0.0
    %v12461 = vmax.f32 %v12425, 0.0
    %v12462 = vmax.f32 %v12428, 0.0
    %v12463 = vadd.f32 %v12431, %v12432
    %v12464 = vrot.slane %v12463, 4
    %v12465 = vadd.f32 %v12463, %v12464
    %v12466 = vrot.slane %v12465, 2
    %v12467 = vadd.f32 %v12465, %v12466
    %v12468 = vrot.slane %v12467, 1
    %v12469 = vadd.f32 %v12467, %v12468
    %v12470 = vadd.f32 %v12433, %v12434
    %v12471 = vrot.slane %v12470, 4
    %v12472 = vadd.f32 %v12470, %v12471
    %v12473 = vrot.slane %v12472, 2
    %v12474 = vadd.f32 %v12472, %v12473
    %v12475 = vrot.slane %v12474, 1
    %v12476 = vadd.f32 %v12474, %v12475
    %v12477 = vadd.f32 %v12435, %v12436
    %v12478 = vrot.slane %v12477, 4
    %v12479 = vadd.f32 %v12477, %v12478
    %v12480 = vrot.slane %v12479, 2
    %v12481 = vadd.f32 %v12479, %v12480
    %v12482 = vrot.slane %v12481, 1
    %v12483 = vadd.f32 %v12481, %v12482
    %v12484 = vadd.f32 %v12437, %v12438
    %v12485 = vrot.slane %v12484, 4
    %v12486 = vadd.f32 %v12484, %v12485
    %v12487 = vrot.slane %v12486, 2
    %v12488 = vadd.f32 %v12486, %v12487
    %v12489 = vrot.slane %v12488, 1
    %v12490 = vadd.f32 %v12488, %v12489
    %v12491 = vadd.f32 %v12439, %v12440
    %v12492 = vrot.slane %v12491, 4
    %v12493 = vadd.f32 %v12491, %v12492
    %v12494 = vrot.slane %v12493, 2
    %v12495 = vadd.f32 %v12493, %v12494
    %v12496 = vrot.slane %v12495, 1
    %v12497 = vadd.f32 %v12495, %v12496
    %v12498 = vadd.f32 %v12441, %v12442
    %v12499 = vrot.slane %v12498, 4
    %v12500 = vadd.f32 %v12498, %v12499
    %v12501 = vrot.slane %v12500, 2
    %v12502 = vadd.f32 %v12500, %v12501
    %v12503 = vrot.slane %v12502, 1
    %v12504 = vadd.f32 %v12502, %v12503
    %v12505 = vadd.f32 %v12443, %v12444
    %v12506 = vrot.slane %v12505, 4
    %v12507 = vadd.f32 %v12505, %v12506
    %v12508 = vrot.slane %v12507, 2
    %v12509 = vadd.f32 %v12507, %v12508
    %v12510 = vrot.slane %v12509, 1
    %v12511 = vadd.f32 %v12509, %v12510
    %v12512 = vadd.f32 %v12445, %v12446
    %v12513 = vrot.slane %v12512, 4
    %v12514 = vadd.f32 %v12512, %v12513
    %v12515 = vrot.slane %v12514, 2
    %v12516 = vadd.f32 %v12514, %v12515
    %v12517 = vrot.slane %v12516, 1
    %v12518 = vadd.f32 %v12516, %v12517
    %v12519 = vadd.f32 %v12447, %v12448
    %v12520 = vrot.slane %v12519, 4
    %v12521 = vadd.f32 %v12519, %v12520
    %v12522 = vrot.slane %v12521, 2
    %v12523 = vadd.f32 %v12521, %v12522
    %v12524 = vrot.slane %v12523, 1
    %v12525 = vadd.f32 %v12523, %v12524
    %v12526 = vadd.f32 %v12449, %v12450
    %v12527 = vrot.slane %v12526, 4
    %v12528 = vadd.f32 %v12526, %v12527
    %v12529 = vrot.slane %v12528, 2
    %v12530 = vadd.f32 %v12528, %v12529
    %v12531 = vrot.slane %v12530, 1
    %v12532 = vadd.f32 %v12530, %v12531
    %v12533 = vadd.f32 %v12451, %v12452
    %v12534 = vrot.slane %v12533, 4
    %v12535 = vadd.f32 %v12533, %v12534
    %v12536 = vrot.slane %v12535, 2
    %v12537 = vadd.f32 %v12535, %v12536
    %v12538 = vrot.slane %v12537, 1
    %v12539 = vadd.f32 %v12537, %v12538
    %v12540 = vadd.f32 %v12453, %v12454
    %v12541 = vrot.slane %v12540, 4
    %v12542 = vadd.f32 %v12540, %v12541
    %v12543 = vrot.slane %v12542, 2
    %v12544 = vadd.f32 %v12542, %v12543
    %v12545 = vrot.slane %v12544, 1
    %v12546 = vadd.f32 %v12544, %v12545
    %v12547 = vadd.f32 %v12455, %v12456
    %v12548 = vrot.slane %v12547, 4
    %v12549 = vadd.f32 %v12547, %v12548
    %v12550 = vrot.slane %v12549, 2
    %v12551 = vadd.f32 %v12549, %v12550
    %v12552 = vrot.slane %v12551, 1
    %v12553 = vadd.f32 %v12551, %v12552
    %v12554 = vadd.f32 %v12457, %v12458
    %v12555 = vrot.slane %v12554, 4
    %v12556 = vadd.f32 %v12554, %v12555
    %v12557 = vrot.slane %v12556, 2
    %v12558 = vadd.f32 %v12556, %v12557
    %v12559 = vrot.slane %v12558, 1
    %v12560 = vadd.f32 %v12558, %v12559
    %v12561 = vadd.f32 %v12459, %v12460
    %v12562 = vrot.slane %v12561, 4
    %v12563 = vadd.f32 %v12561, %v12562
    %v12564 = vrot.slane %v12563, 2
    %v12565 = vadd.f32 %v12563, %v12564
    %v12566 = vrot.slane %v12565, 1
    %v12567 = vadd.f32 %v12565, %v12566
    %v12568 = vadd.f32 %v12461, %v12462
    %v12569 = vrot.slane %v12568, 4
    %v12570 = vadd.f32 %v12568, %v12569
    %v12571 = vrot.slane %v12570, 2
    %v12572 = vadd.f32 %v12570, %v12571
    %v12573 = vrot.slane %v12572, 1
    %v12574 = vadd.f32 %v12572, %v12573
    %v12575 = vrcp.pop 16.0
    %v12576 = vmul.f32 %v12469, %v12575
    %v12577 = vmul.f32 %v12476, %v12575
    %v12578 = vmul.f32 %v12483, %v12575
    %v12579 = vmul.f32 %v12490, %v12575
    %v12580 = vmul.f32 %v12497, %v12575
    %v12581 = vmul.f32 %v12504, %v12575
    %v12582 = vmul.f32 %v12511, %v12575
    %v12583 = vmul.f32 %v12518, %v12575
    %v12584 = vmul.f32 %v12525, %v12575
    %v12585 = vmul.f32 %v12532, %v12575
    %v12586 = vmul.f32 %v12539, %v12575
    %v12587 = vmul.f32 %v12546, %v12575
    %v12588 = vmul.f32 %v12553, %v12575
    %v12589 = vmul.f32 %v12560, %v12575
    %v12590 = vmul.f32 %v12567, %v12575
    %v12591 = vmul.f32 %v12574, %v12575
    %vm12608 = vcmask 1041409
    %v12609 = vsel %vm12608, %v12577, %v12576
    %vm12610 = vcmask 1042434
    %v12611 = vsel %vm12610, %v12578, %v12609
    %vm12612 = vcmask 1043459
    %v12613 = vsel %vm12612, %v12579, %v12611
    %vm12614 = vcmask 1044484
    %v12615 = vsel %vm12614, %v12580, %v12613
    %vm12616 = vcmask 1045509
    %v12617 = vsel %vm12616, %v12581, %v12615
    %vm12618 = vcmask 1046534
    %v12619 = vsel %vm12618, %v12582, %v12617
    %vm12620 = vcmask 1047559
    %v12621 = vsel %vm12620, %v12583, %v12619
    %v12622 = vsel %vm12608, %v12585, %v12584
    %v12623 = vsel %vm12610, %v12586, %v12622
    %v12624 = vsel %vm12612, %v12587, %v12623
    %v12625 = vsel %vm12614, %v12588, %v12624
    %v12626 = vsel %vm12616, %v12589, %v12625
    %v12627 = vsel %vm12618, %v12590, %v12626
    %v12628 = vsel %vm12620, %v12591, %v12627
    %12631 = vst [vmem:[#allocation2] sm:$0xff] %v12621
    %12632 = vst [vmem:[#allocation2 + $0x8] sm:$0xff] %v12628
    // Predicated region
    $region18: #{audio_encoder_forward.1} parent=1 // pred_check
      _
    $region19: #{audio_encoder_forward.1} parent=1 // pred_check_branch
      %12634 = sbr.rel (0) target = $region21
    $region20: #{audio_encoder_forward.1} parent=1 // pred_region
      %s12636 = ssub.s32 256, 256
      %12637 = vsyncadd [#allocation3], %s12636
      %s12638 = sshll.u32 [#allocation2], 4
      %s12639 = int_to_ptr.vmem [resolvable:$true] %s12638
      %12644 = dma.vmem_to_hbm [thread:$0]  %s12639, 256, %s4, [#allocation3], 128, 128, 8
    $region21: #{audio_encoder_forward.1} parent=1 // pred_fallthru
      _
    // Predicated region
    $region22: #{audio_encoder_forward.1} parent=1 // pred_check
      _
    $region23: #{audio_encoder_forward.1} parent=1 // pred_check_branch
      %12646 = sbr.rel (0) target = $region25
    $region24: #{audio_encoder_forward.1} parent=1 // pred_region
      %12647 = dma.done [#allocation3], 256
    $region25: #{audio_encoder_forward.1} parent=1 // pred_fallthru
      _
    %12648 = vsyncpa [#allocation3], 1

</llo_original>
